<compile_context>
chip_gen: v6e
topology: v6e:2x2x1
jax: 0.10.0
libtpu: 0.0.40
codegen_flags: <defaults>
</compile_context>

<pallas_src>
import jax
import jax.numpy as jnp
from jax.experimental import pallas as pl
from jax.experimental.pallas import tpu as pltpu

EPS = 1e-5  # nn.InstanceNorm2d default


def _round_up(a, m):
    return (a + m - 1) // m * m


# ----------------------------- fused kernel ---------------------------------

def _make_fused_kernel(H, W, Cp, Wp8, PAD, E, mm_dtype):
    Hp, Wp = H + 2, W + 2
    G = Hp * Wp8               # full padded grid, flat (aligned row stride Wp8)
    G1 = H * Wp8               # interior grid rows only (what we compute/store)
    ROW1 = PAD + Wp8           # flat buffer offset of padded-grid row 1
    inv_count = 1.0 / float(H * W)

    def kernel(x_ref, w1_ref, w2_ref, p_ref, o_ref, h1_ref):
        # Column-only interior mask over the H interior rows (border rows are
        # never computed, so no row mask is needed).
        col = jax.lax.broadcasted_iota(jnp.int32, (G1, 1), 0) % Wp8
        interior = (col >= 1) & (col <= W)

        pv = p_ref[...]                                   # (8, Cp) f32
        b1, g1, be1 = pv[0:1, :], pv[1:2, :], pv[2:3, :]
        b2, g2, be2 = pv[3:4, :], pv[4:5, :], pv[5:6, :]

        def inorm(y, gamma, beta):
            # Masked single-pass sum / sum-of-squares (biased var), all f32.
            # TODO(synk): the masked reductions could be moved to the MXU as
            # (1, M) @ (M, Cp) dots to free VALU/XLU slots on v5e.
            ym = jnp.where(interior, y, 0.0)
            mean = jnp.sum(ym, axis=0, keepdims=True) * inv_count
            msq = jnp.sum(ym * ym, axis=0, keepdims=True) * inv_count
            var = msq - mean * mean
            return (y - mean) * jax.lax.rsqrt(var + EPS) * gamma + beta

        def conv3x3(slice_fn, w_ref):
            # K-folded 3x3 conv: per dh, lane-concat the 3 column taps into a
            # (G1, 3*Cp) slab and do one K=3*Cp matmul; dots stay chained into
            # a single f32 accumulator (MRB-friendly on v7x).
            acc = None
            for dh in range(3):
                off = ROW1 + (dh - 1) * Wp8               # sublane-aligned
                slab = jnp.concatenate(
                    [slice_fn(off - 1), slice_fn(off), slice_fn(off + 1)],
                    axis=-1)
                part = jnp.dot(slab, w_ref[dh],
                               preferred_element_type=jnp.float32)
                acc = part if acc is None else acc + part
            return acc

        # ---- conv1 -> IN1 -> ReLU over interior rows only ----
        y1 = conv3x3(lambda o: x_ref[pl.ds(o, G1), :], w1_ref) + b1
        h1 = jnp.maximum(inorm(y1, g1, be1), 0.0).astype(mm_dtype)

        # ---- stage h1 in VMEM; narrow reflect fill of the 1-pixel border ----
        zrow = jnp.zeros((8, Cp), mm_dtype)
        h1_ref[pl.ds(PAD - 8, 8), :] = zrow               # head guard (read by taps)
        h1_ref[pl.ds(PAD + G, 8), :] = zrow               # tail guard
        h1_ref[pl.ds(ROW1, G1), :] = h1                   # interior rows 1..H
        # reflect rows: padded row 0 <- row 2, padded row Hp-1 <- row Hp-3
        h1_ref[pl.ds(PAD, Wp8), :] = h1_ref[pl.ds(PAD + 2 * Wp8, Wp8), :]
        h1_ref[pl.ds(PAD + (Hp - 1) * Wp8, Wp8), :] = \
            h1_ref[pl.ds(PAD + (Hp - 3) * Wp8, Wp8), :]
        # reflect cols: col 0 <- col 2, col Wp-1 <- col Wp-3 (per padded row;
        # static single-row copies, corners inherit from the row fill above)
        for r in range(Hp):
            base = PAD + r * Wp8
            h1_ref[pl.ds(base, 1), :] = h1_ref[pl.ds(base + 2, 1), :]
            h1_ref[pl.ds(base + Wp - 1, 1), :] = h1_ref[pl.ds(base + Wp - 3, 1), :]

        # ---- conv2 -> IN2 -> + residual -> ReLU ----
        y2 = conv3x3(lambda o: h1_ref[pl.ds(o, G1), :], w2_ref) + b2
        y2 = inorm(y2, g2, be2)
        resid = x_ref[pl.ds(ROW1, G1), :].astype(jnp.float32)
        o_ref[...] = jnp.maximum(y2 + resid, 0.0).astype(o_ref.dtype)

    return kernel


# ----------------------------- wrapper ---------------------------------------

def residual_block(x, params, matmul_dtype=jnp.bfloat16):
    """ResidualBlock.forward(x) — x: (N, C, H, W) float32 -> (N, C, H, W) float32."""
    N, C, H, W = x.shape
    w1, b1, g1, be1, w2, b2, g2, be2 = params

    Cp = _round_up(C, 128)          # lane-dense channel padding
    Hp, Wp = H + 2, W + 2
    Wp8 = _round_up(Wp, 8)          # sublane-aligned flat row stride
    G = Hp * Wp8                    # flat padded grid size
    G1 = H * Wp8                    # interior rows only (kernel output rows)
    PAD = 8                         # aligned head/tail guard rows (>= 1 needed)
    E = G + 2 * PAD

    # NCHW -> reflect pad -> (Hp, Wp8) aligned flat grid x channel-padded lanes.
    xp = jnp.pad(x, ((0, 0), (0, 0), (1, 1), (1, 1)), mode="reflect")
    xp = jnp.transpose(xp, (0, 2, 3, 1))                              # (N,Hp,Wp,C)
    xp = jnp.pad(xp, ((0, 0), (0, 0), (0, Wp8 - Wp), (0, Cp - C)))
    xp = xp.reshape(N, G, Cp)
    xp = jnp.pad(xp, ((0, 0), (PAD, PAD), (0, 0)))
    xp = xp.astype(matmul_dtype)    # bf16 input DMA in the production path

    def wmat(w):
        # OIHW (C, C, 3, 3) -> K-folded (3, 3*Cp, Cp), rows indexed [dw*Cp + ci].
        wt = jnp.transpose(w, (2, 3, 1, 0))                            # (3,3,ci,co)
        wt = jnp.pad(wt, ((0, 0), (0, 0), (0, Cp - C), (0, Cp - C)))
        return wt.reshape(3, 3 * Cp, Cp).astype(matmul_dtype)

    pvec = jnp.zeros((8, Cp), jnp.float32)
    for i, v in enumerate((b1, g1, be1, b2, g2, be2)):
        pvec = pvec.at[i, :C].set(v.astype(jnp.float32))

    kernel = _make_fused_kernel(H, W, Cp, Wp8, PAD, E, matmul_dtype)

    out_flat = pl.pallas_call(
        kernel,
        out_shape=jax.ShapeDtypeStruct((N, G1, Cp), jnp.float32),
        grid_spec=pltpu.PrefetchScalarGridSpec(
            num_scalar_prefetch=0,
            grid=(N,),
            in_specs=[
                pl.BlockSpec((None, E, Cp), lambda n: (n, 0, 0)),       # padded x
                pl.BlockSpec((3, 3 * Cp, Cp), lambda n: (0, 0, 0)),     # conv1 W
                pl.BlockSpec((3, 3 * Cp, Cp), lambda n: (0, 0, 0)),     # conv2 W
                pl.BlockSpec((8, Cp), lambda n: (0, 0)),                # bias/γ/β
            ],
            out_specs=pl.BlockSpec((None, G1, Cp), lambda n: (n, 0, 0)),
            scratch_shapes=[pltpu.VMEM((E, Cp), matmul_dtype)],         # h1 staging
        ),
        compiler_params=pltpu.CompilerParams(
            dimension_semantics=("parallel",),
            vmem_limit_bytes=48 * 1024 * 1024,   # stay under v7x's 64 MiB/TC
        ),
    )(xp, wmat(w1), wmat(w2), pvec)

    # Only interior rows were written; drop the column padding and go back to NCHW.
    out = out_flat.reshape(N, H, Wp8, Cp)[:, :, 1:W + 1, :C]
    return jnp.transpose(out, (0, 3, 1, 2))


# ----------------------------- pure-JAX reference ----------------------------

def ref_forward(x, params):
    w1, b1, g1, be1, w2, b2, g2, be2 = params

    def conv(a, w, b):
        p = jnp.pad(a, ((0, 0), (0, 0), (1, 1), (1, 1)), mode="reflect")
        y = jax.lax.conv_general_dilated(p, w, (1, 1), "VALID",
                                         dimension_numbers=("NCHW", "OIHW", "NCHW"))
        return y + b.reshape(1, -1, 1, 1)

    def inorm(a, g, be):
        m = a.mean(axis=(2, 3), keepdims=True)
        v = ((a - m) ** 2).mean(axis=(2, 3), keepdims=True)
        return (a - m) * jax.lax.rsqrt(v + EPS) * g.reshape(1, -1, 1, 1) + be.reshape(1, -1, 1, 1)

    h = jax.nn.relu(inorm(conv(x, w1, b1), g1, be1))
    h = inorm(conv(h, w2, b2), g2, be2)
    return jax.nn.relu(h + x)


# ----------------------------- main -------------------------------------------

if __name__ == "__main__":
    N, C, H, W = 2, 4, 16, 16
    key = jax.random.PRNGKey(0)
    ks = jax.random.split(key, 9)

    x = jax.random.normal(ks[0], (N, C, H, W), jnp.float32)

    # ConvLayer(channels, channels, kernel_size=3): weight (C, C, 3, 3), bias (C,)
    w1 = 0.2 * jax.random.normal(ks[1], (C, C, 3, 3), jnp.float32)
    b1 = 0.1 * jax.random.normal(ks[2], (C,), jnp.float32)
    w2 = 0.2 * jax.random.normal(ks[3], (C, C, 3, 3), jnp.float32)
    b2 = 0.1 * jax.random.normal(ks[4], (C,), jnp.float32)
    # InstanceNorm2d(affine=True): gamma (C,), beta (C,)
    g1 = 1.0 + 0.1 * jax.random.normal(ks[5], (C,), jnp.float32)
    be1 = 0.1 * jax.random.normal(ks[6], (C,), jnp.float32)
    g2 = 1.0 + 0.1 * jax.random.normal(ks[7], (C,), jnp.float32)
    be2 = 0.1 * jax.random.normal(ks[8], (C,), jnp.float32)
    params = (w1, b1, g1, be1, w2, b2, g2, be2)

    ref = ref_forward(x, params)

    # Exact-parity path: f32 MXU operands, must match the f32 reference tightly.
    out_f32 = jax.block_until_ready(residual_block(x, params, matmul_dtype=jnp.float32))
    assert out_f32.shape == (N, C, H, W)
    err32 = float(jnp.max(jnp.abs(out_f32 - ref)))
    assert jnp.allclose(out_f32, ref, atol=1e-4, rtol=1e-4), f"f32 max abs err {err32}"

    # Production path: bf16 inputs/weights/residual on the MXU, f32 accumulation/stats.
    out_bf16 = jax.block_until_ready(residual_block(x, params, matmul_dtype=jnp.bfloat16))
    errbf = float(jnp.max(jnp.abs(out_bf16 - ref)))
    assert jnp.allclose(out_bf16, ref, atol=1e-1, rtol=1e-1), f"bf16 max abs err {errbf}"

    print("KERNEL_OK")
</pallas_src>

<mosaic_0001>
module attributes {stable_mosaic.version = 11 : i64} {
  func.func @kernel(%arg0: i32, %arg1: memref<1x448x128xf32, #tpu.memory_space<vmem>>, %arg2: memref<3x384x128xf32, #tpu.memory_space<vmem>>, %arg3: memref<3x384x128xf32, #tpu.memory_space<vmem>>, %arg4: memref<8x128xf32, #tpu.memory_space<vmem>>, %arg5: memref<1x384x128xf32, #tpu.memory_space<vmem>>, %arg6: memref<448x128xf32, #tpu.memory_space<vmem>>) attributes {dimension_semantics = [#tpu.dimension_semantics<parallel>], iteration_bounds = array<i64: 2>, scalar_prefetch = 0 : i64, scratch_operands = 1 : i64, tpu.core_type = #tpu.core_type<tc>, window_params = [{transform_indices = @transform_0, window_bounds = array<i64: 1, 448, 128>}, {pipeline_mode = #tpu.pipeline_mode<synchronous>, transform_indices = @transform_1, window_bounds = array<i64: 3, 384, 128>}, {pipeline_mode = #tpu.pipeline_mode<synchronous>, transform_indices = @transform_2, window_bounds = array<i64: 3, 384, 128>}, {pipeline_mode = #tpu.pipeline_mode<synchronous>, transform_indices = @transform_3, window_bounds = array<i64: 8, 128>}, {transform_indices = @transform_4, window_bounds = array<i64: 1, 384, 128>}]} {
    %0 = tpu.iota {dimensions = array<i32: 0>} : vector<384x1xi32>
    %c24_i32 = arith.constant 24 : i32
    %c0_i32 = arith.constant 0 : i32
    %1 = arith.cmpi eq, %c24_i32, %c0_i32 : i32
    %c1_i32 = arith.constant 1 : i32
    %2 = arith.select %1, %c1_i32, %c24_i32 : i32
    %3 = vector.broadcast %2 : i32 to vector<384x1xi32>
    %4 = arith.remsi %0, %3 : vector<384x1xi32>
    %c0_i32_0 = arith.constant 0 : i32
    %5 = vector.broadcast %c0_i32_0 : i32 to vector<384x1xi32>
    %6 = arith.cmpi ne, %4, %5 : vector<384x1xi32>
    %c0_i32_1 = arith.constant 0 : i32
    %7 = vector.broadcast %c0_i32_1 : i32 to vector<384x1xi32>
    %8 = arith.cmpi slt, %4, %7 : vector<384x1xi32>
    %c0_i32_2 = arith.constant 0 : i32
    %9 = arith.cmpi slt, %2, %c0_i32_2 : i32
    %10 = vector.broadcast %9 : i1 to vector<384x1xi1>
    %11 = vector.broadcast %10 : vector<384x1xi1> to vector<384x1xi1>
    %12 = arith.xori %8, %11 : vector<384x1xi1>
    %13 = arith.andi %12, %6 : vector<384x1xi1>
    %14 = vector.broadcast %2 : i32 to vector<384x1xi32>
    %15 = arith.addi %4, %14 : vector<384x1xi32>
    %16 = arith.select %13, %15, %4 : vector<384x1xi1>, vector<384x1xi32>
    %c1_i32_3 = arith.constant 1 : i32
    %17 = vector.broadcast %c1_i32_3 : i32 to vector<384x1xi32>
    %18 = arith.cmpi sge, %16, %17 : vector<384x1xi32>
    %c16_i32 = arith.constant 16 : i32
    %19 = vector.broadcast %c16_i32 : i32 to vector<384x1xi32>
    %20 = arith.cmpi sle, %16, %19 : vector<384x1xi32>
    %21 = arith.andi %18, %20 : vector<384x1xi1>
    %c0 = arith.constant 0 : index
    %c0_4 = arith.constant 0 : index
    %22 = vector.load %arg4[%c0, %c0_4] : memref<8x128xf32, #tpu.memory_space<vmem>>, vector<8x128xf32>
    %23 = vector.extract_strided_slice %22 {offsets = [0, 0], sizes = [1, 128], strides = [1, 1]} : vector<8x128xf32> to vector<1x128xf32>
    %24 = vector.extract_strided_slice %22 {offsets = [1, 0], sizes = [1, 128], strides = [1, 1]} : vector<8x128xf32> to vector<1x128xf32>
    %25 = vector.extract_strided_slice %22 {offsets = [2, 0], sizes = [1, 128], strides = [1, 1]} : vector<8x128xf32> to vector<1x128xf32>
    %26 = vector.extract_strided_slice %22 {offsets = [3, 0], sizes = [1, 128], strides = [1, 1]} : vector<8x128xf32> to vector<1x128xf32>
    %27 = vector.extract_strided_slice %22 {offsets = [4, 0], sizes = [1, 128], strides = [1, 1]} : vector<8x128xf32> to vector<1x128xf32>
    %28 = vector.extract_strided_slice %22 {offsets = [5, 0], sizes = [1, 128], strides = [1, 1]} : vector<8x128xf32> to vector<1x128xf32>
    %c0_5 = arith.constant 0 : index
    %c7 = arith.constant 7 : index
    %c0_6 = arith.constant 0 : index
    %29 = vector.load %arg1[%c0_5, %c7, %c0_6] : memref<1x448x128xf32, #tpu.memory_space<vmem>>, vector<1x384x128xf32>
    %30 = vector.shape_cast %29 : vector<1x384x128xf32> to vector<384x128xf32>
    %c0_7 = arith.constant 0 : index
    %c8 = arith.constant 8 : index
    %c0_8 = arith.constant 0 : index
    %31 = vector.load %arg1[%c0_7, %c8, %c0_8] : memref<1x448x128xf32, #tpu.memory_space<vmem>>, vector<1x384x128xf32>
    %32 = vector.shape_cast %31 : vector<1x384x128xf32> to vector<384x128xf32>
    %c0_9 = arith.constant 0 : index
    %c9 = arith.constant 9 : index
    %c0_10 = arith.constant 0 : index
    %33 = vector.load %arg1[%c0_9, %c9, %c0_10] : memref<1x448x128xf32, #tpu.memory_space<vmem>>, vector<1x384x128xf32>
    %34 = vector.shape_cast %33 : vector<1x384x128xf32> to vector<384x128xf32>
    %35 = tpu.concatenate %30, %32, %34 in 1 : vector<384x128xf32>, vector<384x128xf32>, vector<384x128xf32> -> vector<384x384xf32>
    %c0_11 = arith.constant 0 : index
    %c0_12 = arith.constant 0 : index
    %c0_13 = arith.constant 0 : index
    %36 = vector.load %arg2[%c0_11, %c0_12, %c0_13] : memref<3x384x128xf32, #tpu.memory_space<vmem>>, vector<1x384x128xf32>
    %37 = vector.shape_cast %36 : vector<1x384x128xf32> to vector<384x128xf32>
    %cst = arith.constant dense<0.000000e+00> : vector<384x128xf32>
    %38 = tpu.matmul %35, %37, %cst {dimension_numbers = #tpu.dot_dimension_numbers<[1], [0], [0], [1], [0, 0, 1, 1], [], []>} : vector<384x384xf32>, vector<384x128xf32>, vector<384x128xf32> -> vector<384x128xf32>
    %c0_14 = arith.constant 0 : index
    %c31 = arith.constant 31 : index
    %c0_15 = arith.constant 0 : index
    %39 = vector.load %arg1[%c0_14, %c31, %c0_15] : memref<1x448x128xf32, #tpu.memory_space<vmem>>, vector<1x384x128xf32>
    %40 = vector.shape_cast %39 : vector<1x384x128xf32> to vector<384x128xf32>
    %c0_16 = arith.constant 0 : index
    %c32 = arith.constant 32 : index
    %c0_17 = arith.constant 0 : index
    %41 = vector.load %arg1[%c0_16, %c32, %c0_17] : memref<1x448x128xf32, #tpu.memory_space<vmem>>, vector<1x384x128xf32>
    %42 = vector.shape_cast %41 : vector<1x384x128xf32> to vector<384x128xf32>
    %c0_18 = arith.constant 0 : index
    %c33 = arith.constant 33 : index
    %c0_19 = arith.constant 0 : index
    %43 = vector.load %arg1[%c0_18, %c33, %c0_19] : memref<1x448x128xf32, #tpu.memory_space<vmem>>, vector<1x384x128xf32>
    %44 = vector.shape_cast %43 : vector<1x384x128xf32> to vector<384x128xf32>
    %45 = tpu.concatenate %40, %42, %44 in 1 : vector<384x128xf32>, vector<384x128xf32>, vector<384x128xf32> -> vector<384x384xf32>
    %c1 = arith.constant 1 : index
    %c0_20 = arith.constant 0 : index
    %c0_21 = arith.constant 0 : index
    %46 = vector.load %arg2[%c1, %c0_20, %c0_21] : memref<3x384x128xf32, #tpu.memory_space<vmem>>, vector<1x384x128xf32>
    %47 = vector.shape_cast %46 : vector<1x384x128xf32> to vector<384x128xf32>
    %cst_22 = arith.constant dense<0.000000e+00> : vector<384x128xf32>
    %48 = tpu.matmul %45, %47, %cst_22 {dimension_numbers = #tpu.dot_dimension_numbers<[1], [0], [0], [1], [0, 0, 1, 1], [], []>} : vector<384x384xf32>, vector<384x128xf32>, vector<384x128xf32> -> vector<384x128xf32>
    %49 = arith.addf %38, %48 : vector<384x128xf32>
    %c0_23 = arith.constant 0 : index
    %c55 = arith.constant 55 : index
    %c0_24 = arith.constant 0 : index
    %50 = vector.load %arg1[%c0_23, %c55, %c0_24] : memref<1x448x128xf32, #tpu.memory_space<vmem>>, vector<1x384x128xf32>
    %51 = vector.shape_cast %50 : vector<1x384x128xf32> to vector<384x128xf32>
    %c0_25 = arith.constant 0 : index
    %c56 = arith.constant 56 : index
    %c0_26 = arith.constant 0 : index
    %52 = vector.load %arg1[%c0_25, %c56, %c0_26] : memref<1x448x128xf32, #tpu.memory_space<vmem>>, vector<1x384x128xf32>
    %53 = vector.shape_cast %52 : vector<1x384x128xf32> to vector<384x128xf32>
    %c0_27 = arith.constant 0 : index
    %c57 = arith.constant 57 : index
    %c0_28 = arith.constant 0 : index
    %54 = vector.load %arg1[%c0_27, %c57, %c0_28] : memref<1x448x128xf32, #tpu.memory_space<vmem>>, vector<1x384x128xf32>
    %55 = vector.shape_cast %54 : vector<1x384x128xf32> to vector<384x128xf32>
    %56 = tpu.concatenate %51, %53, %55 in 1 : vector<384x128xf32>, vector<384x128xf32>, vector<384x128xf32> -> vector<384x384xf32>
    %c2 = arith.constant 2 : index
    %c0_29 = arith.constant 0 : index
    %c0_30 = arith.constant 0 : index
    %57 = vector.load %arg2[%c2, %c0_29, %c0_30] : memref<3x384x128xf32, #tpu.memory_space<vmem>>, vector<1x384x128xf32>
    %58 = vector.shape_cast %57 : vector<1x384x128xf32> to vector<384x128xf32>
    %cst_31 = arith.constant dense<0.000000e+00> : vector<384x128xf32>
    %59 = tpu.matmul %56, %58, %cst_31 {dimension_numbers = #tpu.dot_dimension_numbers<[1], [0], [0], [1], [0, 0, 1, 1], [], []>} : vector<384x384xf32>, vector<384x128xf32>, vector<384x128xf32> -> vector<384x128xf32>
    %60 = arith.addf %49, %59 : vector<384x128xf32>
    %61 = vector.broadcast %23 : vector<1x128xf32> to vector<384x128xf32>
    %62 = arith.addf %60, %61 : vector<384x128xf32>
    %cst_32 = arith.constant 0.000000e+00 : f32
    %63 = vector.shape_cast %21 : vector<384x1xi1> to vector<384x1xi1>
    %64 = vector.broadcast %63 : vector<384x1xi1> to vector<384x128xi1>
    %65 = vector.broadcast %cst_32 : f32 to vector<384x128xf32>
    %66 = arith.select %64, %62, %65 : vector<384x128xi1>, vector<384x128xf32>
    %cst_33 = arith.constant dense<0.000000e+00> : vector<128xf32>
    %67 = vector.multi_reduction <add>, %66, %cst_33 [0] : vector<384x128xf32> to vector<128xf32>
    %68 = vector.shape_cast %67 : vector<128xf32> to vector<1x128xf32>
    %cst_34 = arith.constant 3.906250e-03 : f32
    %69 = vector.broadcast %cst_34 : f32 to vector<1x128xf32>
    %70 = arith.mulf %68, %69 : vector<1x128xf32>
    %71 = arith.mulf %66, %66 : vector<384x128xf32>
    %cst_35 = arith.constant dense<0.000000e+00> : vector<128xf32>
    %72 = vector.multi_reduction <add>, %71, %cst_35 [0] : vector<384x128xf32> to vector<128xf32>
    %73 = vector.shape_cast %72 : vector<128xf32> to vector<1x128xf32>
    %cst_36 = arith.constant 3.906250e-03 : f32
    %74 = vector.broadcast %cst_36 : f32 to vector<1x128xf32>
    %75 = arith.mulf %73, %74 : vector<1x128xf32>
    %76 = arith.mulf %70, %70 : vector<1x128xf32>
    %77 = arith.subf %75, %76 : vector<1x128xf32>
    %78 = vector.broadcast %70 : vector<1x128xf32> to vector<384x128xf32>
    %79 = arith.subf %62, %78 : vector<384x128xf32>
    %cst_37 = arith.constant 9.99999974E-6 : f32
    %80 = vector.broadcast %cst_37 : f32 to vector<1x128xf32>
    %81 = arith.addf %77, %80 : vector<1x128xf32>
    %82 = math.rsqrt %81 : vector<1x128xf32>
    %83 = vector.broadcast %82 : vector<1x128xf32> to vector<384x128xf32>
    %84 = arith.mulf %79, %83 : vector<384x128xf32>
    %85 = vector.broadcast %24 : vector<1x128xf32> to vector<384x128xf32>
    %86 = arith.mulf %84, %85 : vector<384x128xf32>
    %87 = vector.broadcast %25 : vector<1x128xf32> to vector<384x128xf32>
    %88 = arith.addf %86, %87 : vector<384x128xf32>
    %cst_38 = arith.constant 0.000000e+00 : f32
    %89 = vector.broadcast %cst_38 : f32 to vector<384x128xf32>
    %90 = arith.maximumf %88, %89 : vector<384x128xf32>
    %cst_39 = arith.constant 0.000000e+00 : f32
    %91 = vector.broadcast %cst_39 : f32 to vector<8x128xf32>
    %c0_40 = arith.constant 0 : index
    %c0_41 = arith.constant 0 : index
    %92 = vector.load %arg6[%c0_40, %c0_41] : memref<448x128xf32, #tpu.memory_space<vmem>>, vector<8x128xf32>
    tpu.vector_store %arg6[%c0_40, %c0_41], %91 {strides = array<i32>} : memref<448x128xf32, #tpu.memory_space<vmem>>, vector<8x128xf32>,
    %c440 = arith.constant 440 : index
    %c0_42 = arith.constant 0 : index
    %93 = vector.load %arg6[%c440, %c0_42] : memref<448x128xf32, #tpu.memory_space<vmem>>, vector<8x128xf32>
    tpu.vector_store %arg6[%c440, %c0_42], %91 {strides = array<i32>} : memref<448x128xf32, #tpu.memory_space<vmem>>, vector<8x128xf32>,
    %c32_43 = arith.constant 32 : index
    %c0_44 = arith.constant 0 : index
    %94 = vector.load %arg6[%c32_43, %c0_44] : memref<448x128xf32, #tpu.memory_space<vmem>>, vector<384x128xf32>
    tpu.vector_store %arg6[%c32_43, %c0_44], %90 {strides = array<i32>} : memref<448x128xf32, #tpu.memory_space<vmem>>, vector<384x128xf32>,
    %c56_45 = arith.constant 56 : index
    %c0_46 = arith.constant 0 : index
    %95 = vector.load %arg6[%c56_45, %c0_46] : memref<448x128xf32, #tpu.memory_space<vmem>>, vector<24x128xf32>
    %c8_47 = arith.constant 8 : index
    %c0_48 = arith.constant 0 : index
    %96 = vector.load %arg6[%c8_47, %c0_48] : memref<448x128xf32, #tpu.memory_space<vmem>>, vector<24x128xf32>
    tpu.vector_store %arg6[%c8_47, %c0_48], %95 {strides = array<i32>} : memref<448x128xf32, #tpu.memory_space<vmem>>, vector<24x128xf32>,
    %c368 = arith.constant 368 : index
    %c0_49 = arith.constant 0 : index
    %97 = vector.load %arg6[%c368, %c0_49] : memref<448x128xf32, #tpu.memory_space<vmem>>, vector<24x128xf32>
    %c416 = arith.constant 416 : index
    %c0_50 = arith.constant 0 : index
    %98 = vector.load %arg6[%c416, %c0_50] : memref<448x128xf32, #tpu.memory_space<vmem>>, vector<24x128xf32>
    tpu.vector_store %arg6[%c416, %c0_50], %97 {strides = array<i32>} : memref<448x128xf32, #tpu.memory_space<vmem>>, vector<24x128xf32>,
    %c10 = arith.constant 10 : index
    %c0_51 = arith.constant 0 : index
    %99 = vector.load %arg6[%c10, %c0_51] : memref<448x128xf32, #tpu.memory_space<vmem>>, vector<1x128xf32>
    %c8_52 = arith.constant 8 : index
    %c0_53 = arith.constant 0 : index
    %100 = vector.load %arg6[%c8_52, %c0_53] : memref<448x128xf32, #tpu.memory_space<vmem>>, vector<1x128xf32>
    tpu.vector_store %arg6[%c8_52, %c0_53], %99 {strides = array<i32>} : memref<448x128xf32, #tpu.memory_space<vmem>>, vector<1x128xf32>,
    %c23 = arith.constant 23 : index
    %c0_54 = arith.constant 0 : index
    %101 = vector.load %arg6[%c23, %c0_54] : memref<448x128xf32, #tpu.memory_space<vmem>>, vector<1x128xf32>
    %c25 = arith.constant 25 : index
    %c0_55 = arith.constant 0 : index
    %102 = vector.load %arg6[%c25, %c0_55] : memref<448x128xf32, #tpu.memory_space<vmem>>, vector<1x128xf32>
    tpu.vector_store %arg6[%c25, %c0_55], %101 {strides = array<i32>} : memref<448x128xf32, #tpu.memory_space<vmem>>, vector<1x128xf32>,
    %c34 = arith.constant 34 : index
    %c0_56 = arith.constant 0 : index
    %103 = vector.load %arg6[%c34, %c0_56] : memref<448x128xf32, #tpu.memory_space<vmem>>, vector<1x128xf32>
    %c32_57 = arith.constant 32 : index
    %c0_58 = arith.constant 0 : index
    %104 = vector.load %arg6[%c32_57, %c0_58] : memref<448x128xf32, #tpu.memory_space<vmem>>, vector<1x128xf32>
    tpu.vector_store %arg6[%c32_57, %c0_58], %103 {strides = array<i32>} : memref<448x128xf32, #tpu.memory_space<vmem>>, vector<1x128xf32>,
    %c47 = arith.constant 47 : index
    %c0_59 = arith.constant 0 : index
    %105 = vector.load %arg6[%c47, %c0_59] : memref<448x128xf32, #tpu.memory_space<vmem>>, vector<1x128xf32>
    %c49 = arith.constant 49 : index
    %c0_60 = arith.constant 0 : index
    %106 = vector.load %arg6[%c49, %c0_60] : memref<448x128xf32, #tpu.memory_space<vmem>>, vector<1x128xf32>
    tpu.vector_store %arg6[%c49, %c0_60], %105 {strides = array<i32>} : memref<448x128xf32, #tpu.memory_space<vmem>>, vector<1x128xf32>,
    %c58 = arith.constant 58 : index
    %c0_61 = arith.constant 0 : index
    %107 = vector.load %arg6[%c58, %c0_61] : memref<448x128xf32, #tpu.memory_space<vmem>>, vector<1x128xf32>
    %c56_62 = arith.constant 56 : index
    %c0_63 = arith.constant 0 : index
    %108 = vector.load %arg6[%c56_62, %c0_63] : memref<448x128xf32, #tpu.memory_space<vmem>>, vector<1x128xf32>
    tpu.vector_store %arg6[%c56_62, %c0_63], %107 {strides = array<i32>} : memref<448x128xf32, #tpu.memory_space<vmem>>, vector<1x128xf32>,
    %c71 = arith.constant 71 : index
    %c0_64 = arith.constant 0 : index
    %109 = vector.load %arg6[%c71, %c0_64] : memref<448x128xf32, #tpu.memory_space<vmem>>, vector<1x128xf32>
    %c73 = arith.constant 73 : index
    %c0_65 = arith.constant 0 : index
    %110 = vector.load %arg6[%c73, %c0_65] : memref<448x128xf32, #tpu.memory_space<vmem>>, vector<1x128xf32>
    tpu.vector_store %arg6[%c73, %c0_65], %109 {strides = array<i32>} : memref<448x128xf32, #tpu.memory_space<vmem>>, vector<1x128xf32>,
    %c82 = arith.constant 82 : index
    %c0_66 = arith.constant 0 : index
    %111 = vector.load %arg6[%c82, %c0_66] : memref<448x128xf32, #tpu.memory_space<vmem>>, vector<1x128xf32>
    %c80 = arith.constant 80 : index
    %c0_67 = arith.constant 0 : index
    %112 = vector.load %arg6[%c80, %c0_67] : memref<448x128xf32, #tpu.memory_space<vmem>>, vector<1x128xf32>
    tpu.vector_store %arg6[%c80, %c0_67], %111 {strides = array<i32>} : memref<448x128xf32, #tpu.memory_space<vmem>>, vector<1x128xf32>,
    %c95 = arith.constant 95 : index
    %c0_68 = arith.constant 0 : index
    %113 = vector.load %arg6[%c95, %c0_68] : memref<448x128xf32, #tpu.memory_space<vmem>>, vector<1x128xf32>
    %c97 = arith.constant 97 : index
    %c0_69 = arith.constant 0 : index
    %114 = vector.load %arg6[%c97, %c0_69] : memref<448x128xf32, #tpu.memory_space<vmem>>, vector<1x128xf32>
    tpu.vector_store %arg6[%c97, %c0_69], %113 {strides = array<i32>} : memref<448x128xf32, #tpu.memory_space<vmem>>, vector<1x128xf32>,
    %c106 = arith.constant 106 : index
    %c0_70 = arith.constant 0 : index
    %115 = vector.load %arg6[%c106, %c0_70] : memref<448x128xf32, #tpu.memory_space<vmem>>, vector<1x128xf32>
    %c104 = arith.constant 104 : index
    %c0_71 = arith.constant 0 : index
    %116 = vector.load %arg6[%c104, %c0_71] : memref<448x128xf32, #tpu.memory_space<vmem>>, vector<1x128xf32>
    tpu.vector_store %arg6[%c104, %c0_71], %115 {strides = array<i32>} : memref<448x128xf32, #tpu.memory_space<vmem>>, vector<1x128xf32>,
    %c119 = arith.constant 119 : index
    %c0_72 = arith.constant 0 : index
    %117 = vector.load %arg6[%c119, %c0_72] : memref<448x128xf32, #tpu.memory_space<vmem>>, vector<1x128xf32>
    %c121 = arith.constant 121 : index
    %c0_73 = arith.constant 0 : index
    %118 = vector.load %arg6[%c121, %c0_73] : memref<448x128xf32, #tpu.memory_space<vmem>>, vector<1x128xf32>
    tpu.vector_store %arg6[%c121, %c0_73], %117 {strides = array<i32>} : memref<448x128xf32, #tpu.memory_space<vmem>>, vector<1x128xf32>,
    %c130 = arith.constant 130 : index
    %c0_74 = arith.constant 0 : index
    %119 = vector.load %arg6[%c130, %c0_74] : memref<448x128xf32, #tpu.memory_space<vmem>>, vector<1x128xf32>
    %c128 = arith.constant 128 : index
    %c0_75 = arith.constant 0 : index
    %120 = vector.load %arg6[%c128, %c0_75] : memref<448x128xf32, #tpu.memory_space<vmem>>, vector<1x128xf32>
    tpu.vector_store %arg6[%c128, %c0_75], %119 {strides = array<i32>} : memref<448x128xf32, #tpu.memory_space<vmem>>, vector<1x128xf32>,
    %c143 = arith.constant 143 : index
    %c0_76 = arith.constant 0 : index
    %121 = vector.load %arg6[%c143, %c0_76] : memref<448x128xf32, #tpu.memory_space<vmem>>, vector<1x128xf32>
    %c145 = arith.constant 145 : index
    %c0_77 = arith.constant 0 : index
    %122 = vector.load %arg6[%c145, %c0_77] : memref<448x128xf32, #tpu.memory_space<vmem>>, vector<1x128xf32>
    tpu.vector_store %arg6[%c145, %c0_77], %121 {strides = array<i32>} : memref<448x128xf32, #tpu.memory_space<vmem>>, vector<1x128xf32>,
    %c154 = arith.constant 154 : index
    %c0_78 = arith.constant 0 : index
    %123 = vector.load %arg6[%c154, %c0_78] : memref<448x128xf32, #tpu.memory_space<vmem>>, vector<1x128xf32>
    %c152 = arith.constant 152 : index
    %c0_79 = arith.constant 0 : index
    %124 = vector.load %arg6[%c152, %c0_79] : memref<448x128xf32, #tpu.memory_space<vmem>>, vector<1x128xf32>
    tpu.vector_store %arg6[%c152, %c0_79], %123 {strides = array<i32>} : memref<448x128xf32, #tpu.memory_space<vmem>>, vector<1x128xf32>,
    %c167 = arith.constant 167 : index
    %c0_80 = arith.constant 0 : index
    %125 = vector.load %arg6[%c167, %c0_80] : memref<448x128xf32, #tpu.memory_space<vmem>>, vector<1x128xf32>
    %c169 = arith.constant 169 : index
    %c0_81 = arith.constant 0 : index
    %126 = vector.load %arg6[%c169, %c0_81] : memref<448x128xf32, #tpu.memory_space<vmem>>, vector<1x128xf32>
    tpu.vector_store %arg6[%c169, %c0_81], %125 {strides = array<i32>} : memref<448x128xf32, #tpu.memory_space<vmem>>, vector<1x128xf32>,
    %c178 = arith.constant 178 : index
    %c0_82 = arith.constant 0 : index
    %127 = vector.load %arg6[%c178, %c0_82] : memref<448x128xf32, #tpu.memory_space<vmem>>, vector<1x128xf32>
    %c176 = arith.constant 176 : index
    %c0_83 = arith.constant 0 : index
    %128 = vector.load %arg6[%c176, %c0_83] : memref<448x128xf32, #tpu.memory_space<vmem>>, vector<1x128xf32>
    tpu.vector_store %arg6[%c176, %c0_83], %127 {strides = array<i32>} : memref<448x128xf32, #tpu.memory_space<vmem>>, vector<1x128xf32>,
    %c191 = arith.constant 191 : index
    %c0_84 = arith.constant 0 : index
    %129 = vector.load %arg6[%c191, %c0_84] : memref<448x128xf32, #tpu.memory_space<vmem>>, vector<1x128xf32>
    %c193 = arith.constant 193 : index
    %c0_85 = arith.constant 0 : index
    %130 = vector.load %arg6[%c193, %c0_85] : memref<448x128xf32, #tpu.memory_space<vmem>>, vector<1x128xf32>
    tpu.vector_store %arg6[%c193, %c0_85], %129 {strides = array<i32>} : memref<448x128xf32, #tpu.memory_space<vmem>>, vector<1x128xf32>,
    %c202 = arith.constant 202 : index
    %c0_86 = arith.constant 0 : index
    %131 = vector.load %arg6[%c202, %c0_86] : memref<448x128xf32, #tpu.memory_space<vmem>>, vector<1x128xf32>
    %c200 = arith.constant 200 : index
    %c0_87 = arith.constant 0 : index
    %132 = vector.load %arg6[%c200, %c0_87] : memref<448x128xf32, #tpu.memory_space<vmem>>, vector<1x128xf32>
    tpu.vector_store %arg6[%c200, %c0_87], %131 {strides = array<i32>} : memref<448x128xf32, #tpu.memory_space<vmem>>, vector<1x128xf32>,
    %c215 = arith.constant 215 : index
    %c0_88 = arith.constant 0 : index
    %133 = vector.load %arg6[%c215, %c0_88] : memref<448x128xf32, #tpu.memory_space<vmem>>, vector<1x128xf32>
    %c217 = arith.constant 217 : index
    %c0_89 = arith.constant 0 : index
    %134 = vector.load %arg6[%c217, %c0_89] : memref<448x128xf32, #tpu.memory_space<vmem>>, vector<1x128xf32>
    tpu.vector_store %arg6[%c217, %c0_89], %133 {strides = array<i32>} : memref<448x128xf32, #tpu.memory_space<vmem>>, vector<1x128xf32>,
    %c226 = arith.constant 226 : index
    %c0_90 = arith.constant 0 : index
    %135 = vector.load %arg6[%c226, %c0_90] : memref<448x128xf32, #tpu.memory_space<vmem>>, vector<1x128xf32>
    %c224 = arith.constant 224 : index
    %c0_91 = arith.constant 0 : index
    %136 = vector.load %arg6[%c224, %c0_91] : memref<448x128xf32, #tpu.memory_space<vmem>>, vector<1x128xf32>
    tpu.vector_store %arg6[%c224, %c0_91], %135 {strides = array<i32>} : memref<448x128xf32, #tpu.memory_space<vmem>>, vector<1x128xf32>,
    %c239 = arith.constant 239 : index
    %c0_92 = arith.constant 0 : index
    %137 = vector.load %arg6[%c239, %c0_92] : memref<448x128xf32, #tpu.memory_space<vmem>>, vector<1x128xf32>
    %c241 = arith.constant 241 : index
    %c0_93 = arith.constant 0 : index
    %138 = vector.load %arg6[%c241, %c0_93] : memref<448x128xf32, #tpu.memory_space<vmem>>, vector<1x128xf32>
    tpu.vector_store %arg6[%c241, %c0_93], %137 {strides = array<i32>} : memref<448x128xf32, #tpu.memory_space<vmem>>, vector<1x128xf32>,
    %c250 = arith.constant 250 : index
    %c0_94 = arith.constant 0 : index
    %139 = vector.load %arg6[%c250, %c0_94] : memref<448x128xf32, #tpu.memory_space<vmem>>, vector<1x128xf32>
    %c248 = arith.constant 248 : index
    %c0_95 = arith.constant 0 : index
    %140 = vector.load %arg6[%c248, %c0_95] : memref<448x128xf32, #tpu.memory_space<vmem>>, vector<1x128xf32>
    tpu.vector_store %arg6[%c248, %c0_95], %139 {strides = array<i32>} : memref<448x128xf32, #tpu.memory_space<vmem>>, vector<1x128xf32>,
    %c263 = arith.constant 263 : index
    %c0_96 = arith.constant 0 : index
    %141 = vector.load %arg6[%c263, %c0_96] : memref<448x128xf32, #tpu.memory_space<vmem>>, vector<1x128xf32>
    %c265 = arith.constant 265 : index
    %c0_97 = arith.constant 0 : index
    %142 = vector.load %arg6[%c265, %c0_97] : memref<448x128xf32, #tpu.memory_space<vmem>>, vector<1x128xf32>
    tpu.vector_store %arg6[%c265, %c0_97], %141 {strides = array<i32>} : memref<448x128xf32, #tpu.memory_space<vmem>>, vector<1x128xf32>,
    %c274 = arith.constant 274 : index
    %c0_98 = arith.constant 0 : index
    %143 = vector.load %arg6[%c274, %c0_98] : memref<448x128xf32, #tpu.memory_space<vmem>>, vector<1x128xf32>
    %c272 = arith.constant 272 : index
    %c0_99 = arith.constant 0 : index
    %144 = vector.load %arg6[%c272, %c0_99] : memref<448x128xf32, #tpu.memory_space<vmem>>, vector<1x128xf32>
    tpu.vector_store %arg6[%c272, %c0_99], %143 {strides = array<i32>} : memref<448x128xf32, #tpu.memory_space<vmem>>, vector<1x128xf32>,
    %c287 = arith.constant 287 : index
    %c0_100 = arith.constant 0 : index
    %145 = vector.load %arg6[%c287, %c0_100] : memref<448x128xf32, #tpu.memory_space<vmem>>, vector<1x128xf32>
    %c289 = arith.constant 289 : index
    %c0_101 = arith.constant 0 : index
    %146 = vector.load %arg6[%c289, %c0_101] : memref<448x128xf32, #tpu.memory_space<vmem>>, vector<1x128xf32>
    tpu.vector_store %arg6[%c289, %c0_101], %145 {strides = array<i32>} : memref<448x128xf32, #tpu.memory_space<vmem>>, vector<1x128xf32>,
    %c298 = arith.constant 298 : index
    %c0_102 = arith.constant 0 : index
    %147 = vector.load %arg6[%c298, %c0_102] : memref<448x128xf32, #tpu.memory_space<vmem>>, vector<1x128xf32>
    %c296 = arith.constant 296 : index
    %c0_103 = arith.constant 0 : index
    %148 = vector.load %arg6[%c296, %c0_103] : memref<448x128xf32, #tpu.memory_space<vmem>>, vector<1x128xf32>
    tpu.vector_store %arg6[%c296, %c0_103], %147 {strides = array<i32>} : memref<448x128xf32, #tpu.memory_space<vmem>>, vector<1x128xf32>,
    %c311 = arith.constant 311 : index
    %c0_104 = arith.constant 0 : index
    %149 = vector.load %arg6[%c311, %c0_104] : memref<448x128xf32, #tpu.memory_space<vmem>>, vector<1x128xf32>
    %c313 = arith.constant 313 : index
    %c0_105 = arith.constant 0 : index
    %150 = vector.load %arg6[%c313, %c0_105] : memref<448x128xf32, #tpu.memory_space<vmem>>, vector<1x128xf32>
    tpu.vector_store %arg6[%c313, %c0_105], %149 {strides = array<i32>} : memref<448x128xf32, #tpu.memory_space<vmem>>, vector<1x128xf32>,
    %c322 = arith.constant 322 : index
    %c0_106 = arith.constant 0 : index
    %151 = vector.load %arg6[%c322, %c0_106] : memref<448x128xf32, #tpu.memory_space<vmem>>, vector<1x128xf32>
    %c320 = arith.constant 320 : index
    %c0_107 = arith.constant 0 : index
    %152 = vector.load %arg6[%c320, %c0_107] : memref<448x128xf32, #tpu.memory_space<vmem>>, vector<1x128xf32>
    tpu.vector_store %arg6[%c320, %c0_107], %151 {strides = array<i32>} : memref<448x128xf32, #tpu.memory_space<vmem>>, vector<1x128xf32>,
    %c335 = arith.constant 335 : index
    %c0_108 = arith.constant 0 : index
    %153 = vector.load %arg6[%c335, %c0_108] : memref<448x128xf32, #tpu.memory_space<vmem>>, vector<1x128xf32>
    %c337 = arith.constant 337 : index
    %c0_109 = arith.constant 0 : index
    %154 = vector.load %arg6[%c337, %c0_109] : memref<448x128xf32, #tpu.memory_space<vmem>>, vector<1x128xf32>
    tpu.vector_store %arg6[%c337, %c0_109], %153 {strides = array<i32>} : memref<448x128xf32, #tpu.memory_space<vmem>>, vector<1x128xf32>,
    %c346 = arith.constant 346 : index
    %c0_110 = arith.constant 0 : index
    %155 = vector.load %arg6[%c346, %c0_110] : memref<448x128xf32, #tpu.memory_space<vmem>>, vector<1x128xf32>
    %c344 = arith.constant 344 : index
    %c0_111 = arith.constant 0 : index
    %156 = vector.load %arg6[%c344, %c0_111] : memref<448x128xf32, #tpu.memory_space<vmem>>, vector<1x128xf32>
    tpu.vector_store %arg6[%c344, %c0_111], %155 {strides = array<i32>} : memref<448x128xf32, #tpu.memory_space<vmem>>, vector<1x128xf32>,
    %c359 = arith.constant 359 : index
    %c0_112 = arith.constant 0 : index
    %157 = vector.load %arg6[%c359, %c0_112] : memref<448x128xf32, #tpu.memory_space<vmem>>, vector<1x128xf32>
    %c361 = arith.constant 361 : index
    %c0_113 = arith.constant 0 : index
    %158 = vector.load %arg6[%c361, %c0_113] : memref<448x128xf32, #tpu.memory_space<vmem>>, vector<1x128xf32>
    tpu.vector_store %arg6[%c361, %c0_113], %157 {strides = array<i32>} : memref<448x128xf32, #tpu.memory_space<vmem>>, vector<1x128xf32>,
    %c370 = arith.constant 370 : index
    %c0_114 = arith.constant 0 : index
    %159 = vector.load %arg6[%c370, %c0_114] : memref<448x128xf32, #tpu.memory_space<vmem>>, vector<1x128xf32>
    %c368_115 = arith.constant 368 : index
    %c0_116 = arith.constant 0 : index
    %160 = vector.load %arg6[%c368_115, %c0_116] : memref<448x128xf32, #tpu.memory_space<vmem>>, vector<1x128xf32>
    tpu.vector_store %arg6[%c368_115, %c0_116], %159 {strides = array<i32>} : memref<448x128xf32, #tpu.memory_space<vmem>>, vector<1x128xf32>,
    %c383 = arith.constant 383 : index
    %c0_117 = arith.constant 0 : index
    %161 = vector.load %arg6[%c383, %c0_117] : memref<448x128xf32, #tpu.memory_space<vmem>>, vector<1x128xf32>
    %c385 = arith.constant 385 : index
    %c0_118 = arith.constant 0 : index
    %162 = vector.load %arg6[%c385, %c0_118] : memref<448x128xf32, #tpu.memory_space<vmem>>, vector<1x128xf32>
    tpu.vector_store %arg6[%c385, %c0_118], %161 {strides = array<i32>} : memref<448x128xf32, #tpu.memory_space<vmem>>, vector<1x128xf32>,
    %c394 = arith.constant 394 : index
    %c0_119 = arith.constant 0 : index
    %163 = vector.load %arg6[%c394, %c0_119] : memref<448x128xf32, #tpu.memory_space<vmem>>, vector<1x128xf32>
    %c392 = arith.constant 392 : index
    %c0_120 = arith.constant 0 : index
    %164 = vector.load %arg6[%c392, %c0_120] : memref<448x128xf32, #tpu.memory_space<vmem>>, vector<1x128xf32>
    tpu.vector_store %arg6[%c392, %c0_120], %163 {strides = array<i32>} : memref<448x128xf32, #tpu.memory_space<vmem>>, vector<1x128xf32>,
    %c407 = arith.constant 407 : index
    %c0_121 = arith.constant 0 : index
    %165 = vector.load %arg6[%c407, %c0_121] : memref<448x128xf32, #tpu.memory_space<vmem>>, vector<1x128xf32>
    %c409 = arith.constant 409 : index
    %c0_122 = arith.constant 0 : index
    %166 = vector.load %arg6[%c409, %c0_122] : memref<448x128xf32, #tpu.memory_space<vmem>>, vector<1x128xf32>
    tpu.vector_store %arg6[%c409, %c0_122], %165 {strides = array<i32>} : memref<448x128xf32, #tpu.memory_space<vmem>>, vector<1x128xf32>,
    %c418 = arith.constant 418 : index
    %c0_123 = arith.constant 0 : index
    %167 = vector.load %arg6[%c418, %c0_123] : memref<448x128xf32, #tpu.memory_space<vmem>>, vector<1x128xf32>
    %c416_124 = arith.constant 416 : index
    %c0_125 = arith.constant 0 : index
    %168 = vector.load %arg6[%c416_124, %c0_125] : memref<448x128xf32, #tpu.memory_space<vmem>>, vector<1x128xf32>
    tpu.vector_store %arg6[%c416_124, %c0_125], %167 {strides = array<i32>} : memref<448x128xf32, #tpu.memory_space<vmem>>, vector<1x128xf32>,
    %c431 = arith.constant 431 : index
    %c0_126 = arith.constant 0 : index
    %169 = vector.load %arg6[%c431, %c0_126] : memref<448x128xf32, #tpu.memory_space<vmem>>, vector<1x128xf32>
    %c433 = arith.constant 433 : index
    %c0_127 = arith.constant 0 : index
    %170 = vector.load %arg6[%c433, %c0_127] : memref<448x128xf32, #tpu.memory_space<vmem>>, vector<1x128xf32>
    tpu.vector_store %arg6[%c433, %c0_127], %169 {strides = array<i32>} : memref<448x128xf32, #tpu.memory_space<vmem>>, vector<1x128xf32>,
    %c7_128 = arith.constant 7 : index
    %c0_129 = arith.constant 0 : index
    %171 = vector.load %arg6[%c7_128, %c0_129] : memref<448x128xf32, #tpu.memory_space<vmem>>, vector<384x128xf32>
    %c8_130 = arith.constant 8 : index
    %c0_131 = arith.constant 0 : index
    %172 = vector.load %arg6[%c8_130, %c0_131] : memref<448x128xf32, #tpu.memory_space<vmem>>, vector<384x128xf32>
    %c9_132 = arith.constant 9 : index
    %c0_133 = arith.constant 0 : index
    %173 = vector.load %arg6[%c9_132, %c0_133] : memref<448x128xf32, #tpu.memory_space<vmem>>, vector<384x128xf32>
    %174 = tpu.concatenate %171, %172, %173 in 1 : vector<384x128xf32>, vector<384x128xf32>, vector<384x128xf32> -> vector<384x384xf32>
    %c0_134 = arith.constant 0 : index
    %c0_135 = arith.constant 0 : index
    %c0_136 = arith.constant 0 : index
    %175 = vector.load %arg3[%c0_134, %c0_135, %c0_136] : memref<3x384x128xf32, #tpu.memory_space<vmem>>, vector<1x384x128xf32>
    %176 = vector.shape_cast %175 : vector<1x384x128xf32> to vector<384x128xf32>
    %cst_137 = arith.constant dense<0.000000e+00> : vector<384x128xf32>
    %177 = tpu.matmul %174, %176, %cst_137 {dimension_numbers = #tpu.dot_dimension_numbers<[1], [0], [0], [1], [0, 0, 1, 1], [], []>} : vector<384x384xf32>, vector<384x128xf32>, vector<384x128xf32> -> vector<384x128xf32>
    %c31_138 = arith.constant 31 : index
    %c0_139 = arith.constant 0 : index
    %178 = vector.load %arg6[%c31_138, %c0_139] : memref<448x128xf32, #tpu.memory_space<vmem>>, vector<384x128xf32>
    %c32_140 = arith.constant 32 : index
    %c0_141 = arith.constant 0 : index
    %179 = vector.load %arg6[%c32_140, %c0_141] : memref<448x128xf32, #tpu.memory_space<vmem>>, vector<384x128xf32>
    %c33_142 = arith.constant 33 : index
    %c0_143 = arith.constant 0 : index
    %180 = vector.load %arg6[%c33_142, %c0_143] : memref<448x128xf32, #tpu.memory_space<vmem>>, vector<384x128xf32>
    %181 = tpu.concatenate %178, %179, %180 in 1 : vector<384x128xf32>, vector<384x128xf32>, vector<384x128xf32> -> vector<384x384xf32>
    %c1_144 = arith.constant 1 : index
    %c0_145 = arith.constant 0 : index
    %c0_146 = arith.constant 0 : index
    %182 = vector.load %arg3[%c1_144, %c0_145, %c0_146] : memref<3x384x128xf32, #tpu.memory_space<vmem>>, vector<1x384x128xf32>
    %183 = vector.shape_cast %182 : vector<1x384x128xf32> to vector<384x128xf32>
    %cst_147 = arith.constant dense<0.000000e+00> : vector<384x128xf32>
    %184 = tpu.matmul %181, %183, %cst_147 {dimension_numbers = #tpu.dot_dimension_numbers<[1], [0], [0], [1], [0, 0, 1, 1], [], []>} : vector<384x384xf32>, vector<384x128xf32>, vector<384x128xf32> -> vector<384x128xf32>
    %185 = arith.addf %177, %184 : vector<384x128xf32>
    %c55_148 = arith.constant 55 : index
    %c0_149 = arith.constant 0 : index
    %186 = vector.load %arg6[%c55_148, %c0_149] : memref<448x128xf32, #tpu.memory_space<vmem>>, vector<384x128xf32>
    %c56_150 = arith.constant 56 : index
    %c0_151 = arith.constant 0 : index
    %187 = vector.load %arg6[%c56_150, %c0_151] : memref<448x128xf32, #tpu.memory_space<vmem>>, vector<384x128xf32>
    %c57_152 = arith.constant 57 : index
    %c0_153 = arith.constant 0 : index
    %188 = vector.load %arg6[%c57_152, %c0_153] : memref<448x128xf32, #tpu.memory_space<vmem>>, vector<384x128xf32>
    %189 = tpu.concatenate %186, %187, %188 in 1 : vector<384x128xf32>, vector<384x128xf32>, vector<384x128xf32> -> vector<384x384xf32>
    %c2_154 = arith.constant 2 : index
    %c0_155 = arith.constant 0 : index
    %c0_156 = arith.constant 0 : index
    %190 = vector.load %arg3[%c2_154, %c0_155, %c0_156] : memref<3x384x128xf32, #tpu.memory_space<vmem>>, vector<1x384x128xf32>
    %191 = vector.shape_cast %190 : vector<1x384x128xf32> to vector<384x128xf32>
    %cst_157 = arith.constant dense<0.000000e+00> : vector<384x128xf32>
    %192 = tpu.matmul %189, %191, %cst_157 {dimension_numbers = #tpu.dot_dimension_numbers<[1], [0], [0], [1], [0, 0, 1, 1], [], []>} : vector<384x384xf32>, vector<384x128xf32>, vector<384x128xf32> -> vector<384x128xf32>
    %193 = arith.addf %185, %192 : vector<384x128xf32>
    %194 = vector.broadcast %26 : vector<1x128xf32> to vector<384x128xf32>
    %195 = arith.addf %193, %194 : vector<384x128xf32>
    %cst_158 = arith.constant 0.000000e+00 : f32
    %196 = vector.shape_cast %21 : vector<384x1xi1> to vector<384x1xi1>
    %197 = vector.broadcast %196 : vector<384x1xi1> to vector<384x128xi1>
    %198 = vector.broadcast %cst_158 : f32 to vector<384x128xf32>
    %199 = arith.select %197, %195, %198 : vector<384x128xi1>, vector<384x128xf32>
    %cst_159 = arith.constant dense<0.000000e+00> : vector<128xf32>
    %200 = vector.multi_reduction <add>, %199, %cst_159 [0] : vector<384x128xf32> to vector<128xf32>
    %201 = vector.shape_cast %200 : vector<128xf32> to vector<1x128xf32>
    %cst_160 = arith.constant 3.906250e-03 : f32
    %202 = vector.broadcast %cst_160 : f32 to vector<1x128xf32>
    %203 = arith.mulf %201, %202 : vector<1x128xf32>
    %204 = arith.mulf %199, %199 : vector<384x128xf32>
    %cst_161 = arith.constant dense<0.000000e+00> : vector<128xf32>
    %205 = vector.multi_reduction <add>, %204, %cst_161 [0] : vector<384x128xf32> to vector<128xf32>
    %206 = vector.shape_cast %205 : vector<128xf32> to vector<1x128xf32>
    %cst_162 = arith.constant 3.906250e-03 : f32
    %207 = vector.broadcast %cst_162 : f32 to vector<1x128xf32>
    %208 = arith.mulf %206, %207 : vector<1x128xf32>
    %209 = arith.mulf %203, %203 : vector<1x128xf32>
    %210 = arith.subf %208, %209 : vector<1x128xf32>
    %211 = vector.broadcast %203 : vector<1x128xf32> to vector<384x128xf32>
    %212 = arith.subf %195, %211 : vector<384x128xf32>
    %cst_163 = arith.constant 9.99999974E-6 : f32
    %213 = vector.broadcast %cst_163 : f32 to vector<1x128xf32>
    %214 = arith.addf %210, %213 : vector<1x128xf32>
    %215 = math.rsqrt %214 : vector<1x128xf32>
    %216 = vector.broadcast %215 : vector<1x128xf32> to vector<384x128xf32>
    %217 = arith.mulf %212, %216 : vector<384x128xf32>
    %218 = vector.broadcast %27 : vector<1x128xf32> to vector<384x128xf32>
    %219 = arith.mulf %217, %218 : vector<384x128xf32>
    %220 = vector.broadcast %28 : vector<1x128xf32> to vector<384x128xf32>
    %221 = arith.addf %219, %220 : vector<384x128xf32>
    %c0_164 = arith.constant 0 : index
    %c32_165 = arith.constant 32 : index
    %c0_166 = arith.constant 0 : index
    %222 = vector.load %arg1[%c0_164, %c32_165, %c0_166] : memref<1x448x128xf32, #tpu.memory_space<vmem>>, vector<1x384x128xf32>
    %223 = vector.shape_cast %222 : vector<1x384x128xf32> to vector<384x128xf32>
    %224 = arith.addf %221, %223 : vector<384x128xf32>
    %cst_167 = arith.constant 0.000000e+00 : f32
    %225 = vector.broadcast %cst_167 : f32 to vector<384x128xf32>
    %226 = arith.maximumf %224, %225 : vector<384x128xf32>
    %c0_168 = arith.constant 0 : index
    %c0_169 = arith.constant 0 : index
    %c0_170 = arith.constant 0 : index
    %227 = vector.load %arg5[%c0_168, %c0_169, %c0_170] : memref<1x384x128xf32, #tpu.memory_space<vmem>>, vector<1x384x128xf32>
    %228 = vector.shape_cast %227 : vector<1x384x128xf32> to vector<384x128xf32>
    %229 = vector.shape_cast %226 : vector<384x128xf32> to vector<1x384x128xf32>
    tpu.vector_store %arg5[%c0_168, %c0_169, %c0_170], %229 {strides = array<i32>} : memref<1x384x128xf32, #tpu.memory_space<vmem>>, vector<1x384x128xf32>,
    return
  }
  func.func @transform_0(%arg0: i32) -> (i32, i32, i32) {
    %c0_i32 = arith.constant 0 : i32
    %c0_i32_0 = arith.constant 0 : i32
    %c0_i32_1 = arith.constant 0 : i32
    return %arg0, %c0_i32, %c0_i32_0 : i32, i32, i32
  }
  func.func @transform_1(%arg0: i32) -> (i32, i32, i32) {
    %c0_i32 = arith.constant 0 : i32
    %c0_i32_0 = arith.constant 0 : i32
    %c0_i32_1 = arith.constant 0 : i32
    %c0_i32_2 = arith.constant 0 : i32
    return %c0_i32, %c0_i32_0, %c0_i32_1 : i32, i32, i32
  }
  func.func @transform_2(%arg0: i32) -> (i32, i32, i32) {
    %c0_i32 = arith.constant 0 : i32
    %c0_i32_0 = arith.constant 0 : i32
    %c0_i32_1 = arith.constant 0 : i32
    %c0_i32_2 = arith.constant 0 : i32
    return %c0_i32, %c0_i32_0, %c0_i32_1 : i32, i32, i32
  }
  func.func @transform_3(%arg0: i32) -> (i32, i32) {
    %c0_i32 = arith.constant 0 : i32
    %c0_i32_0 = arith.constant 0 : i32
    %c0_i32_1 = arith.constant 0 : i32
    return %c0_i32, %c0_i32_0 : i32, i32
  }
  func.func @transform_4(%arg0: i32) -> (i32, i32, i32) {
    %c0_i32 = arith.constant 0 : i32
    %c0_i32_0 = arith.constant 0 : i32
    %c0_i32_1 = arith.constant 0 : i32
    return %arg0, %c0_i32, %c0_i32_0 : i32, i32, i32
  }
}

</mosaic_0001>

<llo_original>
// kernel: tpu_custom_call.1
$region0: #{tpu_custom_call.1}
  #allocation0 [shape = 'u32[]', space=smem, size = 0x4, offset = 0x4, fixed_abs, tag = 'smem constant byte address 0x4 - core index']
  #allocation1 [shape = 'u32[144,128]{1,0:T(1,128)}', space=vmem, size = 0x12000, scoped, tag = 'internal scratch']
  #allocation2 [shape = 'f32[448,128]{1,0:T(8,128)}', space=vmem, size = 0x38000, scoped, tag = 'scratch operand']
  %s0 = inlined_call_operand.hbm [shape: f32[2,448,128], index: 0, kind: input, shape index: {}]
  %s1 = inlined_call_operand.hbm [shape: f32[3,384,128], index: 1, kind: input, shape index: {}]
  %s2 = inlined_call_operand.hbm [shape: f32[3,384,128], index: 2, kind: input, shape index: {}]
  %s3 = inlined_call_operand.hbm [shape: f32[8,128], index: 3, kind: input, shape index: {}]
  %s4 = inlined_call_operand.hbm [shape: f32[2,384,128], index: 4, kind: output, shape index: {}]
  %s5 = sld [smem:[#allocation0]]
  $region65: #{tpu_custom_call.1} parent=0
    _
  %s7 = ssub.s32 1, %s5
  %s8 = scalar_select 0, %s7, %s5
  $region1: #{tpu_custom_call.1} parent=0
    #allocation3 [shape = 'u8[458752]{0}', space=vmem, size = 0x70000, scoped, tag = 'input window, operand 0']
    #allocation4 [shape = 's32[2]{0}', space=sflag, size = 0x8, scoped, tag = 'scoped memory for tpu_custom_call.1']
    #allocation5 [shape = 's32[2]{0}', space=sflag, size = 0x8, scoped, tag = 'scoped memory for tpu_custom_call.1']
    #allocation6 [shape = 'u8[589824]{0}', space=vmem, size = 0x90000, scoped, tag = 'input window, operand 1, single buffered']
    #allocation7 [shape = 's32[1]{0}', space=sflag, size = 0x4, scoped, tag = 'scoped memory for tpu_custom_call.1']
    #allocation8 [shape = 'u8[589824]{0}', space=vmem, size = 0x90000, scoped, tag = 'input window, operand 2, single buffered']
    #allocation9 [shape = 'u8[4096]{0}', space=vmem, size = 0x1000, scoped, tag = 'input window, operand 3, single buffered']
    #allocation10 [shape = 's32[1]{0}', space=sflag, size = 0x4, scoped, tag = 'scoped memory for tpu_custom_call.1']
    #allocation11 [shape = 'u8[393216]{0}', space=vmem, size = 0x60000, scoped, tag = 'output window, operand 0']
    %9 = vsyncpa [#allocation4], 0
    %s10 = scalar_lea.sflag [#allocation4], 1
    %11 = vsyncpa %s10, 0
    %12 = vsyncpa [#allocation7], 0
    %13 = vsyncpa [#allocation10], 0
    %14 = vsyncpa [#allocation5], 0
    %s15 = scalar_lea.sflag [#allocation5], 1
    %16 = vsyncpa %s15, 0
    loop: start=0, step=1, limit=4
    $region2: #{tpu_custom_call.1} parent=1 // loop_pre_header
      _
    $region3: #{tpu_custom_call.1} parent=1 // loop_header
      %s18 = sphi 0, %s22
      %p19 = scmp.ge.s32.totalorder %s18, 4
      %s28 = sphi 0, %s30
      %s31 = sphi 0, %s28
      %s32 = sphi 0, %s31
      %s48 = sphi 0, %s32
      %s52 = sphi 0, %s52
      %s54 = sphi 0, %s52
      %s55 = sphi 0, %s54
      %s69 = sphi 0, %s55
      %s73 = sphi 0, %s73
      %s75 = sphi 0, %s73
      %s76 = sphi 0, %s75
      %s90 = sphi 0, %s76
      %s94 = sphi 0, %s94
      %s96 = sphi 0, %s94
      %s97 = sphi 0, %s96
      %s111 = sphi 0, %s97
      %s117 = sphi 0, %s119
      %s120 = sphi 0, %s117
      %s121 = sphi 0, %s120
      %s137 = sphi 0, %s121
    $region4: #{tpu_custom_call.1} parent=1 // loop_header_branch
      %21 = sbr.rel (%p19) target = $region8
    $region5: #{tpu_custom_call.1} parent=1 // loop_body
      %s23 = ssub.s32 %s18, 1
      %s24 = ssub.s32 %s18, 2
      %s25 = sadd.s32 %s18, 1
      %s26 = ssub.s32 %s18, %s25
      %p27 = scmp.eq.s32.totalorder %s26, 0
      %s29 = sadd.s32 %s28, 1
      %s30 = scalar_select %p27, %s28, %s29
      %p33 = pneg %p27
      %p34 = scmp.eq.s32.totalorder %s18, 1
      %p35 = por %p33, %p34
      %p36 = scmp.ne.s32.totalorder %s28, %s31
      %p37 = scmp.eq.s32.totalorder %s18, 0
      %p38 = por %p36, %p37
      %p39 = scmp.ne.s32.totalorder %s28, %s31
      %p40 = scmp.eq.s32.totalorder %s23, 1
      %p41 = por %p39, %p40
      %p42 = scmp.ne.s32.totalorder %s31, %s32
      %p43 = scmp.eq.s32.totalorder %s23, 0
      %p44 = por %p42, %p43
      %p45 = scmp.ne.s32.totalorder %s31, %s32
      %p46 = scmp.eq.s32.totalorder %s24, 1
      %p47 = por %p45, %p46
      %p49 = scmp.ne.s32.totalorder %s32, %s48
      %p50 = scmp.eq.s32.totalorder %s24, 0
      %p51 = por %p49, %p50
      %s53 = sadd.s32 %s52, 1
      %p56 = scmp.eq.s32.totalorder %s18, 1
      %p57 = scmp.ne.s32.totalorder %s52, %s54
      %p58 = scmp.eq.s32.totalorder %s18, 0
      %p59 = por %p57, %p58
      %p60 = scmp.ne.s32.totalorder %s52, %s54
      %p61 = scmp.eq.s32.totalorder %s23, 1
      %p62 = por %p60, %p61
      %p63 = scmp.ne.s32.totalorder %s54, %s55
      %p64 = scmp.eq.s32.totalorder %s23, 0
      %p65 = por %p63, %p64
      %p66 = scmp.ne.s32.totalorder %s54, %s55
      %p67 = scmp.eq.s32.totalorder %s24, 1
      %p68 = por %p66, %p67
      %p70 = scmp.ne.s32.totalorder %s55, %s69
      %p71 = scmp.eq.s32.totalorder %s24, 0
      %p72 = por %p70, %p71
      %s74 = sadd.s32 %s73, 1
      %p77 = scmp.eq.s32.totalorder %s18, 1
      %p78 = scmp.ne.s32.totalorder %s73, %s75
      %p79 = scmp.eq.s32.totalorder %s18, 0
      %p80 = por %p78, %p79
      %p81 = scmp.ne.s32.totalorder %s73, %s75
      %p82 = scmp.eq.s32.totalorder %s23, 1
      %p83 = por %p81, %p82
      %p84 = scmp.ne.s32.totalorder %s75, %s76
      %p85 = scmp.eq.s32.totalorder %s23, 0
      %p86 = por %p84, %p85
      %p87 = scmp.ne.s32.totalorder %s75, %s76
      %p88 = scmp.eq.s32.totalorder %s24, 1
      %p89 = por %p87, %p88
      %p91 = scmp.ne.s32.totalorder %s76, %s90
      %p92 = scmp.eq.s32.totalorder %s24, 0
      %p93 = por %p91, %p92
      %s95 = sadd.s32 %s94, 1
      %p98 = scmp.eq.s32.totalorder %s18, 1
      %p99 = scmp.ne.s32.totalorder %s94, %s96
      %p100 = scmp.eq.s32.totalorder %s18, 0
      %p101 = por %p99, %p100
      %p102 = scmp.ne.s32.totalorder %s94, %s96
      %p103 = scmp.eq.s32.totalorder %s23, 1
      %p104 = por %p102, %p103
      %p105 = scmp.ne.s32.totalorder %s96, %s97
      %p106 = scmp.eq.s32.totalorder %s23, 0
      %p107 = por %p105, %p106
      %p108 = scmp.ne.s32.totalorder %s96, %s97
      %p109 = scmp.eq.s32.totalorder %s24, 1
      %p110 = por %p108, %p109
      %p112 = scmp.ne.s32.totalorder %s97, %s111
      %p113 = scmp.eq.s32.totalorder %s24, 0
      %p114 = por %p112, %p113
      %s115 = ssub.s32 %s18, %s25
      %p116 = scmp.eq.s32.totalorder %s115, 0
      %s118 = sadd.s32 %s117, 1
      %s119 = scalar_select %p116, %s117, %s118
      %p122 = pneg %p116
      %p123 = scmp.eq.s32.totalorder %s18, 1
      %p124 = por %p122, %p123
      %p125 = scmp.ne.s32.totalorder %s117, %s120
      %p126 = scmp.eq.s32.totalorder %s18, 0
      %p127 = por %p125, %p126
      %p128 = scmp.ne.s32.totalorder %s117, %s120
      %p129 = scmp.eq.s32.totalorder %s23, 1
      %p130 = por %p128, %p129
      %p131 = scmp.ne.s32.totalorder %s120, %s121
      %p132 = scmp.eq.s32.totalorder %s23, 0
      %p133 = por %p131, %p132
      %p134 = scmp.ne.s32.totalorder %s120, %s121
      %p135 = scmp.eq.s32.totalorder %s24, 1
      %p136 = por %p134, %p135
      %p138 = scmp.ne.s32.totalorder %s121, %s137
      %p139 = scmp.eq.s32.totalorder %s24, 0
      %p140 = por %p138, %p139
      %p141 = scmp.le.s32.totalorder 1, %s18
      %p142 = scmp.lt.s32.totalorder %s18, 3
      %p143 = pnand %p141, %p142
      %p144 = pneg %p143
      // Predicated region
      $region9: #{tpu_custom_call.1} parent=5 // pred_check
        _
      $region10: #{tpu_custom_call.1} parent=5 // pred_check_branch
        %146 = sbr.rel (%p143) target = $region12
      $region11: #{tpu_custom_call.1} parent=5 // pred_region
        %s147 = ssub.s32 %s18, 1
        // Predicated region
        $region13: #{tpu_custom_call.1} parent=11 // pred_check
          %p148 = pneg %p65
        $region14: #{tpu_custom_call.1} parent=11 // pred_check_branch
          %150 = sbr.rel (%p148) target = $region16
        $region15: #{tpu_custom_call.1} parent=11 // pred_region
          %s152 = ssub.s32 18432, 18432
          %153 = vsyncadd [#allocation7], %s152
          %s154 = sshll.u32 [#allocation6], 4
          %s155 = int_to_ptr.vmem [resolvable:$true] %s154
          %160 = dma.hbm_to_vmem [thread:$0]  %s1, 18432, %s155, [#allocation7], 128, 128, 8
        $region16: #{tpu_custom_call.1} parent=11 // pred_fallthru
          _
        // Predicated region
        $region17: #{tpu_custom_call.1} parent=11 // pred_check
          %p161 = pneg %p86
        $region18: #{tpu_custom_call.1} parent=11 // pred_check_branch
          %163 = sbr.rel (%p161) target = $region20
        $region19: #{tpu_custom_call.1} parent=11 // pred_region
          %s165 = ssub.s32 18432, 18432
          %166 = vsyncadd [#allocation7], %s165
          %s167 = sshll.u32 [#allocation8], 4
          %s168 = int_to_ptr.vmem [resolvable:$true] %s167
          %173 = dma.hbm_to_vmem [thread:$0]  %s2, 18432, %s168, [#allocation7], 128, 128, 8
        $region20: #{tpu_custom_call.1} parent=11 // pred_fallthru
          _
        // Predicated region
        $region21: #{tpu_custom_call.1} parent=11 // pred_check
          %p174 = pneg %p107
        $region22: #{tpu_custom_call.1} parent=11 // pred_check_branch
          %176 = sbr.rel (%p174) target = $region24
        $region23: #{tpu_custom_call.1} parent=11 // pred_region
          %s178 = ssub.s32 128, 128
          %179 = vsyncadd [#allocation10], %s178
          %s181 = sshll.u32 [#allocation9], 4
          %s182 = int_to_ptr.vmem [resolvable:$true] %s181
          %184 = dma.hbm_to_vmem [thread:$0]  %s3, 128, %s182, [#allocation10]
        $region24: #{tpu_custom_call.1} parent=11 // pred_fallthru
          _
      $region12: #{tpu_custom_call.1} parent=5 // pred_fallthru
        _
      %p185 = scmp.lt.s32.totalorder %s18, 2
      // Predicated region
      $region25: #{tpu_custom_call.1} parent=5 // pred_check
        %p186 = pneg %p185
      $region26: #{tpu_custom_call.1} parent=5 // pred_check_branch
        %188 = sbr.rel (%p186) target = $region28
      $region27: #{tpu_custom_call.1} parent=5 // pred_region
        // Predicated region
        $region29: #{tpu_custom_call.1} parent=27 // pred_check
          %p189 = pneg %p38
        $region30: #{tpu_custom_call.1} parent=27 // pred_check_branch
          %191 = sbr.rel (%p189) target = $region32
        $region31: #{tpu_custom_call.1} parent=27 // pred_region
          %s192 = sand.u32 %s28, 1
          %s193 = scalar_lea.sflag [#allocation4], %s192
          %s194 = sand.u32 %s28, 1
          %s195 = smul.addr %s194, 448
          %s196 = scalar_lea.vmem [#allocation3], %s195
          %s198 = ssub.s32 7168, 7168
          %199 = vsyncadd %s193, %s198
          %s200 = smul.addr %s18, 56
          %s201 = smul.addr %s200, 128
          %s202 = scalar_lea.hbm %s0, %s201
          %s203 = sshll.u32 %s196, 4
          %s204 = int_to_ptr.vmem [resolvable:$true] %s203
          %209 = dma.hbm_to_vmem [thread:$0]  %s202, 7168, %s204, %s193, 128, 128, 8
        $region32: #{tpu_custom_call.1} parent=27 // pred_fallthru
          _
      $region28: #{tpu_custom_call.1} parent=5 // pred_fallthru
        _
      %p210 = scmp.le.s32.totalorder 1, %s18
      %p211 = scmp.lt.s32.totalorder %s18, 3
      %p212 = pnand %p210, %p211
      %p213 = pneg %p212
      // Predicated region
      $region33: #{tpu_custom_call.1} parent=5 // pred_check
        _
      $region34: #{tpu_custom_call.1} parent=5 // pred_check_branch
        %215 = sbr.rel (%p212) target = $region36
      $region35: #{tpu_custom_call.1} parent=5 // pred_region
        %s216 = ssub.s32 %s18, 1
        %s217 = sand.u32 %s31, 1
        %s218 = scalar_lea.sflag [#allocation4], %s217
        %s219 = sand.u32 %s31, 1
        %s220 = smul.addr %s219, 448
        %s221 = scalar_lea.vmem [#allocation3], %s220
        // Predicated region
        $region37: #{tpu_custom_call.1} parent=35 // pred_check
          %p222 = pneg %p44
        $region38: #{tpu_custom_call.1} parent=35 // pred_check_branch
          %224 = sbr.rel (%p222) target = $region40
        $region39: #{tpu_custom_call.1} parent=35 // pred_region
          %225 = dma.done %s218, 7168
        $region40: #{tpu_custom_call.1} parent=35 // pred_fallthru
          _
        // Predicated region
        $region41: #{tpu_custom_call.1} parent=35 // pred_check
          %p226 = pneg %p65
        $region42: #{tpu_custom_call.1} parent=35 // pred_check_branch
          %228 = sbr.rel (%p226) target = $region44
        $region43: #{tpu_custom_call.1} parent=35 // pred_region
          %229 = dma.done [#allocation7], 18432
        $region44: #{tpu_custom_call.1} parent=35 // pred_fallthru
          _
        // Predicated region
        $region45: #{tpu_custom_call.1} parent=35 // pred_check
          %p230 = pneg %p86
        $region46: #{tpu_custom_call.1} parent=35 // pred_check_branch
          %232 = sbr.rel (%p230) target = $region48
        $region47: #{tpu_custom_call.1} parent=35 // pred_region
          %233 = dma.done [#allocation7], 18432
        $region48: #{tpu_custom_call.1} parent=35 // pred_fallthru
          _
        // Predicated region
        $region49: #{tpu_custom_call.1} parent=35 // pred_check
          %p234 = pneg %p107
        $region50: #{tpu_custom_call.1} parent=35 // pred_check_branch
          %236 = sbr.rel (%p234) target = $region52
        $region51: #{tpu_custom_call.1} parent=35 // pred_region
          %237 = dma.done [#allocation10], 128
        $region52: #{tpu_custom_call.1} parent=35 // pred_fallthru
          _
        %s238 = sand.u32 %s31, 1
        %s239 = scalar_lea.sflag [#allocation4], %s238
        %s240 = sand.u32 %s31, 1
        %s241 = smul.addr %s240, 448
        %s242 = scalar_lea.vmem [#allocation3], %s241
        %p243 = pneg %p44
        %p244 = pneg %p41
        %p245 = pneg %p65
        %p246 = pneg %p62
        %p247 = pneg %p86
        %p248 = pneg %p83
        %p249 = pneg %p107
        %p250 = pneg %p104
        %p251 = pneg %p133
        %p252 = pneg %p130
        %s253 = sand.u32 %s120, 1
        %s254 = scalar_lea.sflag [#allocation5], %s253
        %s255 = sand.u32 %s120, 1
        %s256 = smul.addr %s255, 384
        %s257 = scalar_lea.vmem [#allocation11], %s256
        %v258 = vlaneseq
        %v259 = vshrl.u32 %v258, 7
        %v260 = vadd.s32 %v259, 8
        %v261 = vadd.s32 %v259, 16
        %v262 = vadd.s32 %v259, 24
        %v263 = vadd.s32 %v259, 32
        %v264 = vadd.s32 %v259, 40
        %v265 = vadd.s32 %v259, 48
        %v266 = vadd.s32 %v259, 56
        %v267 = vadd.s32 %v259, 64
        %v268 = vadd.s32 %v259, 72
        %v269 = vadd.s32 %v259, 80
        %v270 = vadd.s32 %v259, 88
        %v271 = vadd.s32 %v259, 96
        %v272 = vadd.s32 %v259, 104
        %v273 = vadd.s32 %v259, 112
        %v274 = vadd.s32 %v259, 120
        %v275 = vadd.s32 %v259, 128
        %v276 = vadd.s32 %v259, 136
        %v277 = vadd.s32 %v259, 144
        %v278 = vadd.s32 %v259, 152
        %v279 = vadd.s32 %v259, 160
        %v280 = vadd.s32 %v259, 168
        %v281 = vadd.s32 %v259, 176
        %v282 = vadd.s32 %v259, 184
        %v283 = vadd.s32 %v259, 192
        %v284 = vadd.s32 %v259, 200
        %v285 = vadd.s32 %v259, 208
        %v286 = vadd.s32 %v259, 216
        %v287 = vadd.s32 %v259, 224
        %v288 = vadd.s32 %v259, 232
        %v289 = vadd.s32 %v259, 240
        %v290 = vadd.s32 %v259, 248
        %v291 = vadd.s32 %v259, 256
        %v292 = vadd.s32 %v259, 264
        %v293 = vadd.s32 %v259, 272
        %v294 = vadd.s32 %v259, 280
        %v295 = vadd.s32 %v259, 288
        %v296 = vadd.s32 %v259, 296
        %v297 = vadd.s32 %v259, 304
        %v298 = vadd.s32 %v259, 312
        %v299 = vadd.s32 %v259, 320
        %v300 = vadd.s32 %v259, 328
        %v301 = vadd.s32 %v259, 336
        %v302 = vadd.s32 %v259, 344
        %v303 = vadd.s32 %v259, 352
        %v304 = vadd.s32 %v259, 360
        %v305 = vadd.s32 %v259, 368
        %v306 = vadd.s32 %v259, 376
        %vm307 = vcmp.lt.s32.totalorder %v259, 0
        %v308 = vsub.s32 0, %v259
        %v309 = vsel %vm307, %v308, %v259
        %v310 = vmul.u32.u64.compose %v309, 2863311531
        %v311 = vextract.low.u32 %v310
        %v312 = vextract.high.u32 %v310
        %v313 = vshrl.u32 %v312, 4
        %v314 = vmul.u32 %v313, 24
        %v315 = vsub.s32 %v309, %v314
        %v316 = vsub.s32 0, %v315
        %v317 = vsel %vm307, %v316, %v315
        %vm318 = vcmp.lt.s32.totalorder %v260, 0
        %v319 = vsub.s32 0, %v260
        %v320 = vsel %vm318, %v319, %v260
        %v321 = vmul.u32.u64.compose %v320, 2863311531
        %v322 = vextract.low.u32 %v321
        %v323 = vextract.high.u32 %v321
        %v324 = vshrl.u32 %v323, 4
        %v325 = vmul.u32 %v324, 24
        %v326 = vsub.s32 %v320, %v325
        %v327 = vsub.s32 0, %v326
        %v328 = vsel %vm318, %v327, %v326
        %vm329 = vcmp.lt.s32.totalorder %v261, 0
        %v330 = vsub.s32 0, %v261
        %v331 = vsel %vm329, %v330, %v261
        %v332 = vmul.u32.u64.compose %v331, 2863311531
        %v333 = vextract.low.u32 %v332
        %v334 = vextract.high.u32 %v332
        %v335 = vshrl.u32 %v334, 4
        %v336 = vmul.u32 %v335, 24
        %v337 = vsub.s32 %v331, %v336
        %v338 = vsub.s32 0, %v337
        %v339 = vsel %vm329, %v338, %v337
        %vm340 = vcmp.lt.s32.totalorder %v262, 0
        %v341 = vsub.s32 0, %v262
        %v342 = vsel %vm340, %v341, %v262
        %v343 = vmul.u32.u64.compose %v342, 2863311531
        %v344 = vextract.low.u32 %v343
        %v345 = vextract.high.u32 %v343
        %v346 = vshrl.u32 %v345, 4
        %v347 = vmul.u32 %v346, 24
        %v348 = vsub.s32 %v342, %v347
        %v349 = vsub.s32 0, %v348
        %v350 = vsel %vm340, %v349, %v348
        %vm351 = vcmp.lt.s32.totalorder %v263, 0
        %v352 = vsub.s32 0, %v263
        %v353 = vsel %vm351, %v352, %v263
        %v354 = vmul.u32.u64.compose %v353, 2863311531
        %v355 = vextract.low.u32 %v354
        %v356 = vextract.high.u32 %v354
        %v357 = vshrl.u32 %v356, 4
        %v358 = vmul.u32 %v357, 24
        %v359 = vsub.s32 %v353, %v358
        %v360 = vsub.s32 0, %v359
        %v361 = vsel %vm351, %v360, %v359
        %vm362 = vcmp.lt.s32.totalorder %v264, 0
        %v363 = vsub.s32 0, %v264
        %v364 = vsel %vm362, %v363, %v264
        %v365 = vmul.u32.u64.compose %v364, 2863311531
        %v366 = vextract.low.u32 %v365
        %v367 = vextract.high.u32 %v365
        %v368 = vshrl.u32 %v367, 4
        %v369 = vmul.u32 %v368, 24
        %v370 = vsub.s32 %v364, %v369
        %v371 = vsub.s32 0, %v370
        %v372 = vsel %vm362, %v371, %v370
        %vm373 = vcmp.lt.s32.totalorder %v265, 0
        %v374 = vsub.s32 0, %v265
        %v375 = vsel %vm373, %v374, %v265
        %v376 = vmul.u32.u64.compose %v375, 2863311531
        %v377 = vextract.low.u32 %v376
        %v378 = vextract.high.u32 %v376
        %v379 = vshrl.u32 %v378, 4
        %v380 = vmul.u32 %v379, 24
        %v381 = vsub.s32 %v375, %v380
        %v382 = vsub.s32 0, %v381
        %v383 = vsel %vm373, %v382, %v381
        %vm384 = vcmp.lt.s32.totalorder %v266, 0
        %v385 = vsub.s32 0, %v266
        %v386 = vsel %vm384, %v385, %v266
        %v387 = vmul.u32.u64.compose %v386, 2863311531
        %v388 = vextract.low.u32 %v387
        %v389 = vextract.high.u32 %v387
        %v390 = vshrl.u32 %v389, 4
        %v391 = vmul.u32 %v390, 24
        %v392 = vsub.s32 %v386, %v391
        %v393 = vsub.s32 0, %v392
        %v394 = vsel %vm384, %v393, %v392
        %vm395 = vcmp.lt.s32.totalorder %v267, 0
        %v396 = vsub.s32 0, %v267
        %v397 = vsel %vm395, %v396, %v267
        %v398 = vmul.u32.u64.compose %v397, 2863311531
        %v399 = vextract.low.u32 %v398
        %v400 = vextract.high.u32 %v398
        %v401 = vshrl.u32 %v400, 4
        %v402 = vmul.u32 %v401, 24
        %v403 = vsub.s32 %v397, %v402
        %v404 = vsub.s32 0, %v403
        %v405 = vsel %vm395, %v404, %v403
        %vm406 = vcmp.lt.s32.totalorder %v268, 0
        %v407 = vsub.s32 0, %v268
        %v408 = vsel %vm406, %v407, %v268
        %v409 = vmul.u32.u64.compose %v408, 2863311531
        %v410 = vextract.low.u32 %v409
        %v411 = vextract.high.u32 %v409
        %v412 = vshrl.u32 %v411, 4
        %v413 = vmul.u32 %v412, 24
        %v414 = vsub.s32 %v408, %v413
        %v415 = vsub.s32 0, %v414
        %v416 = vsel %vm406, %v415, %v414
        %vm417 = vcmp.lt.s32.totalorder %v269, 0
        %v418 = vsub.s32 0, %v269
        %v419 = vsel %vm417, %v418, %v269
        %v420 = vmul.u32.u64.compose %v419, 2863311531
        %v421 = vextract.low.u32 %v420
        %v422 = vextract.high.u32 %v420
        %v423 = vshrl.u32 %v422, 4
        %v424 = vmul.u32 %v423, 24
        %v425 = vsub.s32 %v419, %v424
        %v426 = vsub.s32 0, %v425
        %v427 = vsel %vm417, %v426, %v425
        %vm428 = vcmp.lt.s32.totalorder %v270, 0
        %v429 = vsub.s32 0, %v270
        %v430 = vsel %vm428, %v429, %v270
        %v431 = vmul.u32.u64.compose %v430, 2863311531
        %v432 = vextract.low.u32 %v431
        %v433 = vextract.high.u32 %v431
        %v434 = vshrl.u32 %v433, 4
        %v435 = vmul.u32 %v434, 24
        %v436 = vsub.s32 %v430, %v435
        %v437 = vsub.s32 0, %v436
        %v438 = vsel %vm428, %v437, %v436
        %vm439 = vcmp.lt.s32.totalorder %v271, 0
        %v440 = vsub.s32 0, %v271
        %v441 = vsel %vm439, %v440, %v271
        %v442 = vmul.u32.u64.compose %v441, 2863311531
        %v443 = vextract.low.u32 %v442
        %v444 = vextract.high.u32 %v442
        %v445 = vshrl.u32 %v444, 4
        %v446 = vmul.u32 %v445, 24
        %v447 = vsub.s32 %v441, %v446
        %v448 = vsub.s32 0, %v447
        %v449 = vsel %vm439, %v448, %v447
        %vm450 = vcmp.lt.s32.totalorder %v272, 0
        %v451 = vsub.s32 0, %v272
        %v452 = vsel %vm450, %v451, %v272
        %v453 = vmul.u32.u64.compose %v452, 2863311531
        %v454 = vextract.low.u32 %v453
        %v455 = vextract.high.u32 %v453
        %v456 = vshrl.u32 %v455, 4
        %v457 = vmul.u32 %v456, 24
        %v458 = vsub.s32 %v452, %v457
        %v459 = vsub.s32 0, %v458
        %v460 = vsel %vm450, %v459, %v458
        %vm461 = vcmp.lt.s32.totalorder %v273, 0
        %v462 = vsub.s32 0, %v273
        %v463 = vsel %vm461, %v462, %v273
        %v464 = vmul.u32.u64.compose %v463, 2863311531
        %v465 = vextract.low.u32 %v464
        %v466 = vextract.high.u32 %v464
        %v467 = vshrl.u32 %v466, 4
        %v468 = vmul.u32 %v467, 24
        %v469 = vsub.s32 %v463, %v468
        %v470 = vsub.s32 0, %v469
        %v471 = vsel %vm461, %v470, %v469
        %vm472 = vcmp.lt.s32.totalorder %v274, 0
        %v473 = vsub.s32 0, %v274
        %v474 = vsel %vm472, %v473, %v274
        %v475 = vmul.u32.u64.compose %v474, 2863311531
        %v476 = vextract.low.u32 %v475
        %v477 = vextract.high.u32 %v475
        %v478 = vshrl.u32 %v477, 4
        %v479 = vmul.u32 %v478, 24
        %v480 = vsub.s32 %v474, %v479
        %v481 = vsub.s32 0, %v480
        %v482 = vsel %vm472, %v481, %v480
        %vm483 = vcmp.lt.s32.totalorder %v275, 0
        %v484 = vsub.s32 0, %v275
        %v485 = vsel %vm483, %v484, %v275
        %v486 = vmul.u32.u64.compose %v485, 2863311531
        %v487 = vextract.low.u32 %v486
        %v488 = vextract.high.u32 %v486
        %v489 = vshrl.u32 %v488, 4
        %v490 = vmul.u32 %v489, 24
        %v491 = vsub.s32 %v485, %v490
        %v492 = vsub.s32 0, %v491
        %v493 = vsel %vm483, %v492, %v491
        %vm494 = vcmp.lt.s32.totalorder %v276, 0
        %v495 = vsub.s32 0, %v276
        %v496 = vsel %vm494, %v495, %v276
        %v497 = vmul.u32.u64.compose %v496, 2863311531
        %v498 = vextract.low.u32 %v497
        %v499 = vextract.high.u32 %v497
        %v500 = vshrl.u32 %v499, 4
        %v501 = vmul.u32 %v500, 24
        %v502 = vsub.s32 %v496, %v501
        %v503 = vsub.s32 0, %v502
        %v504 = vsel %vm494, %v503, %v502
        %vm505 = vcmp.lt.s32.totalorder %v277, 0
        %v506 = vsub.s32 0, %v277
        %v507 = vsel %vm505, %v506, %v277
        %v508 = vmul.u32.u64.compose %v507, 2863311531
        %v509 = vextract.low.u32 %v508
        %v510 = vextract.high.u32 %v508
        %v511 = vshrl.u32 %v510, 4
        %v512 = vmul.u32 %v511, 24
        %v513 = vsub.s32 %v507, %v512
        %v514 = vsub.s32 0, %v513
        %v515 = vsel %vm505, %v514, %v513
        %vm516 = vcmp.lt.s32.totalorder %v278, 0
        %v517 = vsub.s32 0, %v278
        %v518 = vsel %vm516, %v517, %v278
        %v519 = vmul.u32.u64.compose %v518, 2863311531
        %v520 = vextract.low.u32 %v519
        %v521 = vextract.high.u32 %v519
        %v522 = vshrl.u32 %v521, 4
        %v523 = vmul.u32 %v522, 24
        %v524 = vsub.s32 %v518, %v523
        %v525 = vsub.s32 0, %v524
        %v526 = vsel %vm516, %v525, %v524
        %vm527 = vcmp.lt.s32.totalorder %v279, 0
        %v528 = vsub.s32 0, %v279
        %v529 = vsel %vm527, %v528, %v279
        %v530 = vmul.u32.u64.compose %v529, 2863311531
        %v531 = vextract.low.u32 %v530
        %v532 = vextract.high.u32 %v530
        %v533 = vshrl.u32 %v532, 4
        %v534 = vmul.u32 %v533, 24
        %v535 = vsub.s32 %v529, %v534
        %v536 = vsub.s32 0, %v535
        %v537 = vsel %vm527, %v536, %v535
        %vm538 = vcmp.lt.s32.totalorder %v280, 0
        %v539 = vsub.s32 0, %v280
        %v540 = vsel %vm538, %v539, %v280
        %v541 = vmul.u32.u64.compose %v540, 2863311531
        %v542 = vextract.low.u32 %v541
        %v543 = vextract.high.u32 %v541
        %v544 = vshrl.u32 %v543, 4
        %v545 = vmul.u32 %v544, 24
        %v546 = vsub.s32 %v540, %v545
        %v547 = vsub.s32 0, %v546
        %v548 = vsel %vm538, %v547, %v546
        %vm549 = vcmp.lt.s32.totalorder %v281, 0
        %v550 = vsub.s32 0, %v281
        %v551 = vsel %vm549, %v550, %v281
        %v552 = vmul.u32.u64.compose %v551, 2863311531
        %v553 = vextract.low.u32 %v552
        %v554 = vextract.high.u32 %v552
        %v555 = vshrl.u32 %v554, 4
        %v556 = vmul.u32 %v555, 24
        %v557 = vsub.s32 %v551, %v556
        %v558 = vsub.s32 0, %v557
        %v559 = vsel %vm549, %v558, %v557
        %vm560 = vcmp.lt.s32.totalorder %v282, 0
        %v561 = vsub.s32 0, %v282
        %v562 = vsel %vm560, %v561, %v282
        %v563 = vmul.u32.u64.compose %v562, 2863311531
        %v564 = vextract.low.u32 %v563
        %v565 = vextract.high.u32 %v563
        %v566 = vshrl.u32 %v565, 4
        %v567 = vmul.u32 %v566, 24
        %v568 = vsub.s32 %v562, %v567
        %v569 = vsub.s32 0, %v568
        %v570 = vsel %vm560, %v569, %v568
        %vm571 = vcmp.lt.s32.totalorder %v283, 0
        %v572 = vsub.s32 0, %v283
        %v573 = vsel %vm571, %v572, %v283
        %v574 = vmul.u32.u64.compose %v573, 2863311531
        %v575 = vextract.low.u32 %v574
        %v576 = vextract.high.u32 %v574
        %v577 = vshrl.u32 %v576, 4
        %v578 = vmul.u32 %v577, 24
        %v579 = vsub.s32 %v573, %v578
        %v580 = vsub.s32 0, %v579
        %v581 = vsel %vm571, %v580, %v579
        %vm582 = vcmp.lt.s32.totalorder %v284, 0
        %v583 = vsub.s32 0, %v284
        %v584 = vsel %vm582, %v583, %v284
        %v585 = vmul.u32.u64.compose %v584, 2863311531
        %v586 = vextract.low.u32 %v585
        %v587 = vextract.high.u32 %v585
        %v588 = vshrl.u32 %v587, 4
        %v589 = vmul.u32 %v588, 24
        %v590 = vsub.s32 %v584, %v589
        %v591 = vsub.s32 0, %v590
        %v592 = vsel %vm582, %v591, %v590
        %vm593 = vcmp.lt.s32.totalorder %v285, 0
        %v594 = vsub.s32 0, %v285
        %v595 = vsel %vm593, %v594, %v285
        %v596 = vmul.u32.u64.compose %v595, 2863311531
        %v597 = vextract.low.u32 %v596
        %v598 = vextract.high.u32 %v596
        %v599 = vshrl.u32 %v598, 4
        %v600 = vmul.u32 %v599, 24
        %v601 = vsub.s32 %v595, %v600
        %v602 = vsub.s32 0, %v601
        %v603 = vsel %vm593, %v602, %v601
        %vm604 = vcmp.lt.s32.totalorder %v286, 0
        %v605 = vsub.s32 0, %v286
        %v606 = vsel %vm604, %v605, %v286
        %v607 = vmul.u32.u64.compose %v606, 2863311531
        %v608 = vextract.low.u32 %v607
        %v609 = vextract.high.u32 %v607
        %v610 = vshrl.u32 %v609, 4
        %v611 = vmul.u32 %v610, 24
        %v612 = vsub.s32 %v606, %v611
        %v613 = vsub.s32 0, %v612
        %v614 = vsel %vm604, %v613, %v612
        %vm615 = vcmp.lt.s32.totalorder %v287, 0
        %v616 = vsub.s32 0, %v287
        %v617 = vsel %vm615, %v616, %v287
        %v618 = vmul.u32.u64.compose %v617, 2863311531
        %v619 = vextract.low.u32 %v618
        %v620 = vextract.high.u32 %v618
        %v621 = vshrl.u32 %v620, 4
        %v622 = vmul.u32 %v621, 24
        %v623 = vsub.s32 %v617, %v622
        %v624 = vsub.s32 0, %v623
        %v625 = vsel %vm615, %v624, %v623
        %vm626 = vcmp.lt.s32.totalorder %v288, 0
        %v627 = vsub.s32 0, %v288
        %v628 = vsel %vm626, %v627, %v288
        %v629 = vmul.u32.u64.compose %v628, 2863311531
        %v630 = vextract.low.u32 %v629
        %v631 = vextract.high.u32 %v629
        %v632 = vshrl.u32 %v631, 4
        %v633 = vmul.u32 %v632, 24
        %v634 = vsub.s32 %v628, %v633
        %v635 = vsub.s32 0, %v634
        %v636 = vsel %vm626, %v635, %v634
        %vm637 = vcmp.lt.s32.totalorder %v289, 0
        %v638 = vsub.s32 0, %v289
        %v639 = vsel %vm637, %v638, %v289
        %v640 = vmul.u32.u64.compose %v639, 2863311531
        %v641 = vextract.low.u32 %v640
        %v642 = vextract.high.u32 %v640
        %v643 = vshrl.u32 %v642, 4
        %v644 = vmul.u32 %v643, 24
        %v645 = vsub.s32 %v639, %v644
        %v646 = vsub.s32 0, %v645
        %v647 = vsel %vm637, %v646, %v645
        %vm648 = vcmp.lt.s32.totalorder %v290, 0
        %v649 = vsub.s32 0, %v290
        %v650 = vsel %vm648, %v649, %v290
        %v651 = vmul.u32.u64.compose %v650, 2863311531
        %v652 = vextract.low.u32 %v651
        %v653 = vextract.high.u32 %v651
        %v654 = vshrl.u32 %v653, 4
        %v655 = vmul.u32 %v654, 24
        %v656 = vsub.s32 %v650, %v655
        %v657 = vsub.s32 0, %v656
        %v658 = vsel %vm648, %v657, %v656
        %vm659 = vcmp.lt.s32.totalorder %v291, 0
        %v660 = vsub.s32 0, %v291
        %v661 = vsel %vm659, %v660, %v291
        %v662 = vmul.u32.u64.compose %v661, 2863311531
        %v663 = vextract.low.u32 %v662
        %v664 = vextract.high.u32 %v662
        %v665 = vshrl.u32 %v664, 4
        %v666 = vmul.u32 %v665, 24
        %v667 = vsub.s32 %v661, %v666
        %v668 = vsub.s32 0, %v667
        %v669 = vsel %vm659, %v668, %v667
        %vm670 = vcmp.lt.s32.totalorder %v292, 0
        %v671 = vsub.s32 0, %v292
        %v672 = vsel %vm670, %v671, %v292
        %v673 = vmul.u32.u64.compose %v672, 2863311531
        %v674 = vextract.low.u32 %v673
        %v675 = vextract.high.u32 %v673
        %v676 = vshrl.u32 %v675, 4
        %v677 = vmul.u32 %v676, 24
        %v678 = vsub.s32 %v672, %v677
        %v679 = vsub.s32 0, %v678
        %v680 = vsel %vm670, %v679, %v678
        %vm681 = vcmp.lt.s32.totalorder %v293, 0
        %v682 = vsub.s32 0, %v293
        %v683 = vsel %vm681, %v682, %v293
        %v684 = vmul.u32.u64.compose %v683, 2863311531
        %v685 = vextract.low.u32 %v684
        %v686 = vextract.high.u32 %v684
        %v687 = vshrl.u32 %v686, 4
        %v688 = vmul.u32 %v687, 24
        %v689 = vsub.s32 %v683, %v688
        %v690 = vsub.s32 0, %v689
        %v691 = vsel %vm681, %v690, %v689
        %vm692 = vcmp.lt.s32.totalorder %v294, 0
        %v693 = vsub.s32 0, %v294
        %v694 = vsel %vm692, %v693, %v294
        %v695 = vmul.u32.u64.compose %v694, 2863311531
        %v696 = vextract.low.u32 %v695
        %v697 = vextract.high.u32 %v695
        %v698 = vshrl.u32 %v697, 4
        %v699 = vmul.u32 %v698, 24
        %v700 = vsub.s32 %v694, %v699
        %v701 = vsub.s32 0, %v700
        %v702 = vsel %vm692, %v701, %v700
        %vm703 = vcmp.lt.s32.totalorder %v295, 0
        %v704 = vsub.s32 0, %v295
        %v705 = vsel %vm703, %v704, %v295
        %v706 = vmul.u32.u64.compose %v705, 2863311531
        %v707 = vextract.low.u32 %v706
        %v708 = vextract.high.u32 %v706
        %v709 = vshrl.u32 %v708, 4
        %v710 = vmul.u32 %v709, 24
        %v711 = vsub.s32 %v705, %v710
        %v712 = vsub.s32 0, %v711
        %v713 = vsel %vm703, %v712, %v711
        %vm714 = vcmp.lt.s32.totalorder %v296, 0
        %v715 = vsub.s32 0, %v296
        %v716 = vsel %vm714, %v715, %v296
        %v717 = vmul.u32.u64.compose %v716, 2863311531
        %v718 = vextract.low.u32 %v717
        %v719 = vextract.high.u32 %v717
        %v720 = vshrl.u32 %v719, 4
        %v721 = vmul.u32 %v720, 24
        %v722 = vsub.s32 %v716, %v721
        %v723 = vsub.s32 0, %v722
        %v724 = vsel %vm714, %v723, %v722
        %vm725 = vcmp.lt.s32.totalorder %v297, 0
        %v726 = vsub.s32 0, %v297
        %v727 = vsel %vm725, %v726, %v297
        %v728 = vmul.u32.u64.compose %v727, 2863311531
        %v729 = vextract.low.u32 %v728
        %v730 = vextract.high.u32 %v728
        %v731 = vshrl.u32 %v730, 4
        %v732 = vmul.u32 %v731, 24
        %v733 = vsub.s32 %v727, %v732
        %v734 = vsub.s32 0, %v733
        %v735 = vsel %vm725, %v734, %v733
        %vm736 = vcmp.lt.s32.totalorder %v298, 0
        %v737 = vsub.s32 0, %v298
        %v738 = vsel %vm736, %v737, %v298
        %v739 = vmul.u32.u64.compose %v738, 2863311531
        %v740 = vextract.low.u32 %v739
        %v741 = vextract.high.u32 %v739
        %v742 = vshrl.u32 %v741, 4
        %v743 = vmul.u32 %v742, 24
        %v744 = vsub.s32 %v738, %v743
        %v745 = vsub.s32 0, %v744
        %v746 = vsel %vm736, %v745, %v744
        %vm747 = vcmp.lt.s32.totalorder %v299, 0
        %v748 = vsub.s32 0, %v299
        %v749 = vsel %vm747, %v748, %v299
        %v750 = vmul.u32.u64.compose %v749, 2863311531
        %v751 = vextract.low.u32 %v750
        %v752 = vextract.high.u32 %v750
        %v753 = vshrl.u32 %v752, 4
        %v754 = vmul.u32 %v753, 24
        %v755 = vsub.s32 %v749, %v754
        %v756 = vsub.s32 0, %v755
        %v757 = vsel %vm747, %v756, %v755
        %vm758 = vcmp.lt.s32.totalorder %v300, 0
        %v759 = vsub.s32 0, %v300
        %v760 = vsel %vm758, %v759, %v300
        %v761 = vmul.u32.u64.compose %v760, 2863311531
        %v762 = vextract.low.u32 %v761
        %v763 = vextract.high.u32 %v761
        %v764 = vshrl.u32 %v763, 4
        %v765 = vmul.u32 %v764, 24
        %v766 = vsub.s32 %v760, %v765
        %v767 = vsub.s32 0, %v766
        %v768 = vsel %vm758, %v767, %v766
        %vm769 = vcmp.lt.s32.totalorder %v301, 0
        %v770 = vsub.s32 0, %v301
        %v771 = vsel %vm769, %v770, %v301
        %v772 = vmul.u32.u64.compose %v771, 2863311531
        %v773 = vextract.low.u32 %v772
        %v774 = vextract.high.u32 %v772
        %v775 = vshrl.u32 %v774, 4
        %v776 = vmul.u32 %v775, 24
        %v777 = vsub.s32 %v771, %v776
        %v778 = vsub.s32 0, %v777
        %v779 = vsel %vm769, %v778, %v777
        %vm780 = vcmp.lt.s32.totalorder %v302, 0
        %v781 = vsub.s32 0, %v302
        %v782 = vsel %vm780, %v781, %v302
        %v783 = vmul.u32.u64.compose %v782, 2863311531
        %v784 = vextract.low.u32 %v783
        %v785 = vextract.high.u32 %v783
        %v786 = vshrl.u32 %v785, 4
        %v787 = vmul.u32 %v786, 24
        %v788 = vsub.s32 %v782, %v787
        %v789 = vsub.s32 0, %v788
        %v790 = vsel %vm780, %v789, %v788
        %vm791 = vcmp.lt.s32.totalorder %v303, 0
        %v792 = vsub.s32 0, %v303
        %v793 = vsel %vm791, %v792, %v303
        %v794 = vmul.u32.u64.compose %v793, 2863311531
        %v795 = vextract.low.u32 %v794
        %v796 = vextract.high.u32 %v794
        %v797 = vshrl.u32 %v796, 4
        %v798 = vmul.u32 %v797, 24
        %v799 = vsub.s32 %v793, %v798
        %v800 = vsub.s32 0, %v799
        %v801 = vsel %vm791, %v800, %v799
        %vm802 = vcmp.lt.s32.totalorder %v304, 0
        %v803 = vsub.s32 0, %v304
        %v804 = vsel %vm802, %v803, %v304
        %v805 = vmul.u32.u64.compose %v804, 2863311531
        %v806 = vextract.low.u32 %v805
        %v807 = vextract.high.u32 %v805
        %v808 = vshrl.u32 %v807, 4
        %v809 = vmul.u32 %v808, 24
        %v810 = vsub.s32 %v804, %v809
        %v811 = vsub.s32 0, %v810
        %v812 = vsel %vm802, %v811, %v810
        %vm813 = vcmp.lt.s32.totalorder %v305, 0
        %v814 = vsub.s32 0, %v305
        %v815 = vsel %vm813, %v814, %v305
        %v816 = vmul.u32.u64.compose %v815, 2863311531
        %v817 = vextract.low.u32 %v816
        %v818 = vextract.high.u32 %v816
        %v819 = vshrl.u32 %v818, 4
        %v820 = vmul.u32 %v819, 24
        %v821 = vsub.s32 %v815, %v820
        %v822 = vsub.s32 0, %v821
        %v823 = vsel %vm813, %v822, %v821
        %vm824 = vcmp.lt.s32.totalorder %v306, 0
        %v825 = vsub.s32 0, %v306
        %v826 = vsel %vm824, %v825, %v306
        %v827 = vmul.u32.u64.compose %v826, 2863311531
        %v828 = vextract.low.u32 %v827
        %v829 = vextract.high.u32 %v827
        %v830 = vshrl.u32 %v829, 4
        %v831 = vmul.u32 %v830, 24
        %v832 = vsub.s32 %v826, %v831
        %v833 = vsub.s32 0, %v832
        %v834 = vsel %vm824, %v833, %v832
        %vm835 = vcmp.ne.s32.totalorder %v317, 0
        %vm836 = vcmp.ne.s32.totalorder %v328, 0
        %vm837 = vcmp.ne.s32.totalorder %v339, 0
        %vm838 = vcmp.ne.s32.totalorder %v350, 0
        %vm839 = vcmp.ne.s32.totalorder %v361, 0
        %vm840 = vcmp.ne.s32.totalorder %v372, 0
        %vm841 = vcmp.ne.s32.totalorder %v383, 0
        %vm842 = vcmp.ne.s32.totalorder %v394, 0
        %vm843 = vcmp.ne.s32.totalorder %v405, 0
        %vm844 = vcmp.ne.s32.totalorder %v416, 0
        %vm845 = vcmp.ne.s32.totalorder %v427, 0
        %vm846 = vcmp.ne.s32.totalorder %v438, 0
        %vm847 = vcmp.ne.s32.totalorder %v449, 0
        %vm848 = vcmp.ne.s32.totalorder %v460, 0
        %vm849 = vcmp.ne.s32.totalorder %v471, 0
        %vm850 = vcmp.ne.s32.totalorder %v482, 0
        %vm851 = vcmp.ne.s32.totalorder %v493, 0
        %vm852 = vcmp.ne.s32.totalorder %v504, 0
        %vm853 = vcmp.ne.s32.totalorder %v515, 0
        %vm854 = vcmp.ne.s32.totalorder %v526, 0
        %vm855 = vcmp.ne.s32.totalorder %v537, 0
        %vm856 = vcmp.ne.s32.totalorder %v548, 0
        %vm857 = vcmp.ne.s32.totalorder %v559, 0
        %vm858 = vcmp.ne.s32.totalorder %v570, 0
        %vm859 = vcmp.ne.s32.totalorder %v581, 0
        %vm860 = vcmp.ne.s32.totalorder %v592, 0
        %vm861 = vcmp.ne.s32.totalorder %v603, 0
        %vm862 = vcmp.ne.s32.totalorder %v614, 0
        %vm863 = vcmp.ne.s32.totalorder %v625, 0
        %vm864 = vcmp.ne.s32.totalorder %v636, 0
        %vm865 = vcmp.ne.s32.totalorder %v647, 0
        %vm866 = vcmp.ne.s32.totalorder %v658, 0
        %vm867 = vcmp.ne.s32.totalorder %v669, 0
        %vm868 = vcmp.ne.s32.totalorder %v680, 0
        %vm869 = vcmp.ne.s32.totalorder %v691, 0
        %vm870 = vcmp.ne.s32.totalorder %v702, 0
        %vm871 = vcmp.ne.s32.totalorder %v713, 0
        %vm872 = vcmp.ne.s32.totalorder %v724, 0
        %vm873 = vcmp.ne.s32.totalorder %v735, 0
        %vm874 = vcmp.ne.s32.totalorder %v746, 0
        %vm875 = vcmp.ne.s32.totalorder %v757, 0
        %vm876 = vcmp.ne.s32.totalorder %v768, 0
        %vm877 = vcmp.ne.s32.totalorder %v779, 0
        %vm878 = vcmp.ne.s32.totalorder %v790, 0
        %vm879 = vcmp.ne.s32.totalorder %v801, 0
        %vm880 = vcmp.ne.s32.totalorder %v812, 0
        %vm881 = vcmp.ne.s32.totalorder %v823, 0
        %vm882 = vcmp.ne.s32.totalorder %v834, 0
        %vm883 = vcmp.lt.s32.totalorder %v317, 0
        %vm884 = vcmp.lt.s32.totalorder %v328, 0
        %vm885 = vcmp.lt.s32.totalorder %v339, 0
        %vm886 = vcmp.lt.s32.totalorder %v350, 0
        %vm887 = vcmp.lt.s32.totalorder %v361, 0
        %vm888 = vcmp.lt.s32.totalorder %v372, 0
        %vm889 = vcmp.lt.s32.totalorder %v383, 0
        %vm890 = vcmp.lt.s32.totalorder %v394, 0
        %vm891 = vcmp.lt.s32.totalorder %v405, 0
        %vm892 = vcmp.lt.s32.totalorder %v416, 0
        %vm893 = vcmp.lt.s32.totalorder %v427, 0
        %vm894 = vcmp.lt.s32.totalorder %v438, 0
        %vm895 = vcmp.lt.s32.totalorder %v449, 0
        %vm896 = vcmp.lt.s32.totalorder %v460, 0
        %vm897 = vcmp.lt.s32.totalorder %v471, 0
        %vm898 = vcmp.lt.s32.totalorder %v482, 0
        %vm899 = vcmp.lt.s32.totalorder %v493, 0
        %vm900 = vcmp.lt.s32.totalorder %v504, 0
        %vm901 = vcmp.lt.s32.totalorder %v515, 0
        %vm902 = vcmp.lt.s32.totalorder %v526, 0
        %vm903 = vcmp.lt.s32.totalorder %v537, 0
        %vm904 = vcmp.lt.s32.totalorder %v548, 0
        %vm905 = vcmp.lt.s32.totalorder %v559, 0
        %vm906 = vcmp.lt.s32.totalorder %v570, 0
        %vm907 = vcmp.lt.s32.totalorder %v581, 0
        %vm908 = vcmp.lt.s32.totalorder %v592, 0
        %vm909 = vcmp.lt.s32.totalorder %v603, 0
        %vm910 = vcmp.lt.s32.totalorder %v614, 0
        %vm911 = vcmp.lt.s32.totalorder %v625, 0
        %vm912 = vcmp.lt.s32.totalorder %v636, 0
        %vm913 = vcmp.lt.s32.totalorder %v647, 0
        %vm914 = vcmp.lt.s32.totalorder %v658, 0
        %vm915 = vcmp.lt.s32.totalorder %v669, 0
        %vm916 = vcmp.lt.s32.totalorder %v680, 0
        %vm917 = vcmp.lt.s32.totalorder %v691, 0
        %vm918 = vcmp.lt.s32.totalorder %v702, 0
        %vm919 = vcmp.lt.s32.totalorder %v713, 0
        %vm920 = vcmp.lt.s32.totalorder %v724, 0
        %vm921 = vcmp.lt.s32.totalorder %v735, 0
        %vm922 = vcmp.lt.s32.totalorder %v746, 0
        %vm923 = vcmp.lt.s32.totalorder %v757, 0
        %vm924 = vcmp.lt.s32.totalorder %v768, 0
        %vm925 = vcmp.lt.s32.totalorder %v779, 0
        %vm926 = vcmp.lt.s32.totalorder %v790, 0
        %vm927 = vcmp.lt.s32.totalorder %v801, 0
        %vm928 = vcmp.lt.s32.totalorder %v812, 0
        %vm929 = vcmp.lt.s32.totalorder %v823, 0
        %vm930 = vcmp.lt.s32.totalorder %v834, 0
        %vm931 = vmand %vm883, %vm835
        %vm932 = vmand %vm884, %vm836
        %vm933 = vmand %vm885, %vm837
        %vm934 = vmand %vm886, %vm838
        %vm935 = vmand %vm887, %vm839
        %vm936 = vmand %vm888, %vm840
        %vm937 = vmand %vm889, %vm841
        %vm938 = vmand %vm890, %vm842
        %vm939 = vmand %vm891, %vm843
        %vm940 = vmand %vm892, %vm844
        %vm941 = vmand %vm893, %vm845
        %vm942 = vmand %vm894, %vm846
        %vm943 = vmand %vm895, %vm847
        %vm944 = vmand %vm896, %vm848
        %vm945 = vmand %vm897, %vm849
        %vm946 = vmand %vm898, %vm850
        %vm947 = vmand %vm899, %vm851
        %vm948 = vmand %vm900, %vm852
        %vm949 = vmand %vm901, %vm853
        %vm950 = vmand %vm902, %vm854
        %vm951 = vmand %vm903, %vm855
        %vm952 = vmand %vm904, %vm856
        %vm953 = vmand %vm905, %vm857
        %vm954 = vmand %vm906, %vm858
        %vm955 = vmand %vm907, %vm859
        %vm956 = vmand %vm908, %vm860
        %vm957 = vmand %vm909, %vm861
        %vm958 = vmand %vm910, %vm862
        %vm959 = vmand %vm911, %vm863
        %vm960 = vmand %vm912, %vm864
        %vm961 = vmand %vm913, %vm865
        %vm962 = vmand %vm914, %vm866
        %vm963 = vmand %vm915, %vm867
        %vm964 = vmand %vm916, %vm868
        %vm965 = vmand %vm917, %vm869
        %vm966 = vmand %vm918, %vm870
        %vm967 = vmand %vm919, %vm871
        %vm968 = vmand %vm920, %vm872
        %vm969 = vmand %vm921, %vm873
        %vm970 = vmand %vm922, %vm874
        %vm971 = vmand %vm923, %vm875
        %vm972 = vmand %vm924, %vm876
        %vm973 = vmand %vm925, %vm877
        %vm974 = vmand %vm926, %vm878
        %vm975 = vmand %vm927, %vm879
        %vm976 = vmand %vm928, %vm880
        %vm977 = vmand %vm929, %vm881
        %vm978 = vmand %vm930, %vm882
        %v979 = vadd.s32 %v317, 24
        %v980 = vadd.s32 %v328, 24
        %v981 = vadd.s32 %v339, 24
        %v982 = vadd.s32 %v350, 24
        %v983 = vadd.s32 %v361, 24
        %v984 = vadd.s32 %v372, 24
        %v985 = vadd.s32 %v383, 24
        %v986 = vadd.s32 %v394, 24
        %v987 = vadd.s32 %v405, 24
        %v988 = vadd.s32 %v416, 24
        %v989 = vadd.s32 %v427, 24
        %v990 = vadd.s32 %v438, 24
        %v991 = vadd.s32 %v449, 24
        %v992 = vadd.s32 %v460, 24
        %v993 = vadd.s32 %v471, 24
        %v994 = vadd.s32 %v482, 24
        %v995 = vadd.s32 %v493, 24
        %v996 = vadd.s32 %v504, 24
        %v997 = vadd.s32 %v515, 24
        %v998 = vadd.s32 %v526, 24
        %v999 = vadd.s32 %v537, 24
        %v1000 = vadd.s32 %v548, 24
        %v1001 = vadd.s32 %v559, 24
        %v1002 = vadd.s32 %v570, 24
        %v1003 = vadd.s32 %v581, 24
        %v1004 = vadd.s32 %v592, 24
        %v1005 = vadd.s32 %v603, 24
        %v1006 = vadd.s32 %v614, 24
        %v1007 = vadd.s32 %v625, 24
        %v1008 = vadd.s32 %v636, 24
        %v1009 = vadd.s32 %v647, 24
        %v1010 = vadd.s32 %v658, 24
        %v1011 = vadd.s32 %v669, 24
        %v1012 = vadd.s32 %v680, 24
        %v1013 = vadd.s32 %v691, 24
        %v1014 = vadd.s32 %v702, 24
        %v1015 = vadd.s32 %v713, 24
        %v1016 = vadd.s32 %v724, 24
        %v1017 = vadd.s32 %v735, 24
        %v1018 = vadd.s32 %v746, 24
        %v1019 = vadd.s32 %v757, 24
        %v1020 = vadd.s32 %v768, 24
        %v1021 = vadd.s32 %v779, 24
        %v1022 = vadd.s32 %v790, 24
        %v1023 = vadd.s32 %v801, 24
        %v1024 = vadd.s32 %v812, 24
        %v1025 = vadd.s32 %v823, 24
        %v1026 = vadd.s32 %v834, 24
        %v1027 = vsel %vm931, %v979, %v317
        %v1028 = vsel %vm932, %v980, %v328
        %v1029 = vsel %vm933, %v981, %v339
        %v1030 = vsel %vm934, %v982, %v350
        %v1031 = vsel %vm935, %v983, %v361
        %v1032 = vsel %vm936, %v984, %v372
        %v1033 = vsel %vm937, %v985, %v383
        %v1034 = vsel %vm938, %v986, %v394
        %v1035 = vsel %vm939, %v987, %v405
        %v1036 = vsel %vm940, %v988, %v416
        %v1037 = vsel %vm941, %v989, %v427
        %v1038 = vsel %vm942, %v990, %v438
        %v1039 = vsel %vm943, %v991, %v449
        %v1040 = vsel %vm944, %v992, %v460
        %v1041 = vsel %vm945, %v993, %v471
        %v1042 = vsel %vm946, %v994, %v482
        %v1043 = vsel %vm947, %v995, %v493
        %v1044 = vsel %vm948, %v996, %v504
        %v1045 = vsel %vm949, %v997, %v515
        %v1046 = vsel %vm950, %v998, %v526
        %v1047 = vsel %vm951, %v999, %v537
        %v1048 = vsel %vm952, %v1000, %v548
        %v1049 = vsel %vm953, %v1001, %v559
        %v1050 = vsel %vm954, %v1002, %v570
        %v1051 = vsel %vm955, %v1003, %v581
        %v1052 = vsel %vm956, %v1004, %v592
        %v1053 = vsel %vm957, %v1005, %v603
        %v1054 = vsel %vm958, %v1006, %v614
        %v1055 = vsel %vm959, %v1007, %v625
        %v1056 = vsel %vm960, %v1008, %v636
        %v1057 = vsel %vm961, %v1009, %v647
        %v1058 = vsel %vm962, %v1010, %v658
        %v1059 = vsel %vm963, %v1011, %v669
        %v1060 = vsel %vm964, %v1012, %v680
        %v1061 = vsel %vm965, %v1013, %v691
        %v1062 = vsel %vm966, %v1014, %v702
        %v1063 = vsel %vm967, %v1015, %v713
        %v1064 = vsel %vm968, %v1016, %v724
        %v1065 = vsel %vm969, %v1017, %v735
        %v1066 = vsel %vm970, %v1018, %v746
        %v1067 = vsel %vm971, %v1019, %v757
        %v1068 = vsel %vm972, %v1020, %v768
        %v1069 = vsel %vm973, %v1021, %v779
        %v1070 = vsel %vm974, %v1022, %v790
        %v1071 = vsel %vm975, %v1023, %v801
        %v1072 = vsel %vm976, %v1024, %v812
        %v1073 = vsel %vm977, %v1025, %v823
        %v1074 = vsel %vm978, %v1026, %v834
        %vm1075 = vcmp.ge.s32.totalorder %v1027, 1
        %vm1076 = vcmp.ge.s32.totalorder %v1028, 1
        %vm1077 = vcmp.ge.s32.totalorder %v1029, 1
        %vm1078 = vcmp.ge.s32.totalorder %v1030, 1
        %vm1079 = vcmp.ge.s32.totalorder %v1031, 1
        %vm1080 = vcmp.ge.s32.totalorder %v1032, 1
        %vm1081 = vcmp.ge.s32.totalorder %v1033, 1
        %vm1082 = vcmp.ge.s32.totalorder %v1034, 1
        %vm1083 = vcmp.ge.s32.totalorder %v1035, 1
        %vm1084 = vcmp.ge.s32.totalorder %v1036, 1
        %vm1085 = vcmp.ge.s32.totalorder %v1037, 1
        %vm1086 = vcmp.ge.s32.totalorder %v1038, 1
        %vm1087 = vcmp.ge.s32.totalorder %v1039, 1
        %vm1088 = vcmp.ge.s32.totalorder %v1040, 1
        %vm1089 = vcmp.ge.s32.totalorder %v1041, 1
        %vm1090 = vcmp.ge.s32.totalorder %v1042, 1
        %vm1091 = vcmp.ge.s32.totalorder %v1043, 1
        %vm1092 = vcmp.ge.s32.totalorder %v1044, 1
        %vm1093 = vcmp.ge.s32.totalorder %v1045, 1
        %vm1094 = vcmp.ge.s32.totalorder %v1046, 1
        %vm1095 = vcmp.ge.s32.totalorder %v1047, 1
        %vm1096 = vcmp.ge.s32.totalorder %v1048, 1
        %vm1097 = vcmp.ge.s32.totalorder %v1049, 1
        %vm1098 = vcmp.ge.s32.totalorder %v1050, 1
        %vm1099 = vcmp.ge.s32.totalorder %v1051, 1
        %vm1100 = vcmp.ge.s32.totalorder %v1052, 1
        %vm1101 = vcmp.ge.s32.totalorder %v1053, 1
        %vm1102 = vcmp.ge.s32.totalorder %v1054, 1
        %vm1103 = vcmp.ge.s32.totalorder %v1055, 1
        %vm1104 = vcmp.ge.s32.totalorder %v1056, 1
        %vm1105 = vcmp.ge.s32.totalorder %v1057, 1
        %vm1106 = vcmp.ge.s32.totalorder %v1058, 1
        %vm1107 = vcmp.ge.s32.totalorder %v1059, 1
        %vm1108 = vcmp.ge.s32.totalorder %v1060, 1
        %vm1109 = vcmp.ge.s32.totalorder %v1061, 1
        %vm1110 = vcmp.ge.s32.totalorder %v1062, 1
        %vm1111 = vcmp.ge.s32.totalorder %v1063, 1
        %vm1112 = vcmp.ge.s32.totalorder %v1064, 1
        %vm1113 = vcmp.ge.s32.totalorder %v1065, 1
        %vm1114 = vcmp.ge.s32.totalorder %v1066, 1
        %vm1115 = vcmp.ge.s32.totalorder %v1067, 1
        %vm1116 = vcmp.ge.s32.totalorder %v1068, 1
        %vm1117 = vcmp.ge.s32.totalorder %v1069, 1
        %vm1118 = vcmp.ge.s32.totalorder %v1070, 1
        %vm1119 = vcmp.ge.s32.totalorder %v1071, 1
        %vm1120 = vcmp.ge.s32.totalorder %v1072, 1
        %vm1121 = vcmp.ge.s32.totalorder %v1073, 1
        %vm1122 = vcmp.ge.s32.totalorder %v1074, 1
        %vm1123 = vcmp.le.s32.totalorder %v1027, 16
        %vm1124 = vcmp.le.s32.totalorder %v1028, 16
        %vm1125 = vcmp.le.s32.totalorder %v1029, 16
        %vm1126 = vcmp.le.s32.totalorder %v1030, 16
        %vm1127 = vcmp.le.s32.totalorder %v1031, 16
        %vm1128 = vcmp.le.s32.totalorder %v1032, 16
        %vm1129 = vcmp.le.s32.totalorder %v1033, 16
        %vm1130 = vcmp.le.s32.totalorder %v1034, 16
        %vm1131 = vcmp.le.s32.totalorder %v1035, 16
        %vm1132 = vcmp.le.s32.totalorder %v1036, 16
        %vm1133 = vcmp.le.s32.totalorder %v1037, 16
        %vm1134 = vcmp.le.s32.totalorder %v1038, 16
        %vm1135 = vcmp.le.s32.totalorder %v1039, 16
        %vm1136 = vcmp.le.s32.totalorder %v1040, 16
        %vm1137 = vcmp.le.s32.totalorder %v1041, 16
        %vm1138 = vcmp.le.s32.totalorder %v1042, 16
        %vm1139 = vcmp.le.s32.totalorder %v1043, 16
        %vm1140 = vcmp.le.s32.totalorder %v1044, 16
        %vm1141 = vcmp.le.s32.totalorder %v1045, 16
        %vm1142 = vcmp.le.s32.totalorder %v1046, 16
        %vm1143 = vcmp.le.s32.totalorder %v1047, 16
        %vm1144 = vcmp.le.s32.totalorder %v1048, 16
        %vm1145 = vcmp.le.s32.totalorder %v1049, 16
        %vm1146 = vcmp.le.s32.totalorder %v1050, 16
        %vm1147 = vcmp.le.s32.totalorder %v1051, 16
        %vm1148 = vcmp.le.s32.totalorder %v1052, 16
        %vm1149 = vcmp.le.s32.totalorder %v1053, 16
        %vm1150 = vcmp.le.s32.totalorder %v1054, 16
        %vm1151 = vcmp.le.s32.totalorder %v1055, 16
        %vm1152 = vcmp.le.s32.totalorder %v1056, 16
        %vm1153 = vcmp.le.s32.totalorder %v1057, 16
        %vm1154 = vcmp.le.s32.totalorder %v1058, 16
        %vm1155 = vcmp.le.s32.totalorder %v1059, 16
        %vm1156 = vcmp.le.s32.totalorder %v1060, 16
        %vm1157 = vcmp.le.s32.totalorder %v1061, 16
        %vm1158 = vcmp.le.s32.totalorder %v1062, 16
        %vm1159 = vcmp.le.s32.totalorder %v1063, 16
        %vm1160 = vcmp.le.s32.totalorder %v1064, 16
        %vm1161 = vcmp.le.s32.totalorder %v1065, 16
        %vm1162 = vcmp.le.s32.totalorder %v1066, 16
        %vm1163 = vcmp.le.s32.totalorder %v1067, 16
        %vm1164 = vcmp.le.s32.totalorder %v1068, 16
        %vm1165 = vcmp.le.s32.totalorder %v1069, 16
        %vm1166 = vcmp.le.s32.totalorder %v1070, 16
        %vm1167 = vcmp.le.s32.totalorder %v1071, 16
        %vm1168 = vcmp.le.s32.totalorder %v1072, 16
        %vm1169 = vcmp.le.s32.totalorder %v1073, 16
        %vm1170 = vcmp.le.s32.totalorder %v1074, 16
        %vm1171 = vmand %vm1075, %vm1123
        %vm1172 = vmand %vm1076, %vm1124
        %vm1173 = vmand %vm1077, %vm1125
        %vm1174 = vmand %vm1078, %vm1126
        %vm1175 = vmand %vm1079, %vm1127
        %vm1176 = vmand %vm1080, %vm1128
        %vm1177 = vmand %vm1081, %vm1129
        %vm1178 = vmand %vm1082, %vm1130
        %vm1179 = vmand %vm1083, %vm1131
        %vm1180 = vmand %vm1084, %vm1132
        %vm1181 = vmand %vm1085, %vm1133
        %vm1182 = vmand %vm1086, %vm1134
        %vm1183 = vmand %vm1087, %vm1135
        %vm1184 = vmand %vm1088, %vm1136
        %vm1185 = vmand %vm1089, %vm1137
        %vm1186 = vmand %vm1090, %vm1138
        %vm1187 = vmand %vm1091, %vm1139
        %vm1188 = vmand %vm1092, %vm1140
        %vm1189 = vmand %vm1093, %vm1141
        %vm1190 = vmand %vm1094, %vm1142
        %vm1191 = vmand %vm1095, %vm1143
        %vm1192 = vmand %vm1096, %vm1144
        %vm1193 = vmand %vm1097, %vm1145
        %vm1194 = vmand %vm1098, %vm1146
        %vm1195 = vmand %vm1099, %vm1147
        %vm1196 = vmand %vm1100, %vm1148
        %vm1197 = vmand %vm1101, %vm1149
        %vm1198 = vmand %vm1102, %vm1150
        %vm1199 = vmand %vm1103, %vm1151
        %vm1200 = vmand %vm1104, %vm1152
        %vm1201 = vmand %vm1105, %vm1153
        %vm1202 = vmand %vm1106, %vm1154
        %vm1203 = vmand %vm1107, %vm1155
        %vm1204 = vmand %vm1108, %vm1156
        %vm1205 = vmand %vm1109, %vm1157
        %vm1206 = vmand %vm1110, %vm1158
        %vm1207 = vmand %vm1111, %vm1159
        %vm1208 = vmand %vm1112, %vm1160
        %vm1209 = vmand %vm1113, %vm1161
        %vm1210 = vmand %vm1114, %vm1162
        %vm1211 = vmand %vm1115, %vm1163
        %vm1212 = vmand %vm1116, %vm1164
        %vm1213 = vmand %vm1117, %vm1165
        %vm1214 = vmand %vm1118, %vm1166
        %vm1215 = vmand %vm1119, %vm1167
        %vm1216 = vmand %vm1120, %vm1168
        %vm1217 = vmand %vm1121, %vm1169
        %vm1218 = vmand %vm1122, %vm1170
        %v1219 = vld [vmem:[#allocation9] sm:$0xff]
        %v1220 = vld [vmem:[%s221 + $0x7] sm:$0xff]
        %v1221 = vld [vmem:[%s221 + $0xf] sm:$0xff]
        %v1222 = vld [vmem:[%s221 + $0x17] sm:$0xff]
        %v1223 = vld [vmem:[%s221 + $0x1f] sm:$0xff]
        %v1224 = vld [vmem:[%s221 + $0x27] sm:$0xff]
        %v1225 = vld [vmem:[%s221 + $0x2f] sm:$0xff]
        %v1226 = vld [vmem:[%s221 + $0x37] sm:$0xff]
        %v1227 = vld [vmem:[%s221 + $0x3f] sm:$0xff]
        %v1228 = vld [vmem:[%s221 + $0x47] sm:$0xff]
        %v1229 = vld [vmem:[%s221 + $0x4f] sm:$0xff]
        %v1230 = vld [vmem:[%s221 + $0x57] sm:$0xff]
        %v1231 = vld [vmem:[%s221 + $0x5f] sm:$0xff]
        %v1232 = vld [vmem:[%s221 + $0x67] sm:$0xff]
        %v1233 = vld [vmem:[%s221 + $0x6f] sm:$0xff]
        %v1234 = vld [vmem:[%s221 + $0x77] sm:$0xff]
        %v1235 = vld [vmem:[%s221 + $0x7f] sm:$0xff]
        %v1236 = vld [vmem:[%s221 + $0x87] sm:$0xff]
        %v1237 = vld [vmem:[%s221 + $0x8f] sm:$0xff]
        %v1238 = vld [vmem:[%s221 + $0x97] sm:$0xff]
        %v1239 = vld [vmem:[%s221 + $0x9f] sm:$0xff]
        %v1240 = vld [vmem:[%s221 + $0xa7] sm:$0xff]
        %v1241 = vld [vmem:[%s221 + $0xaf] sm:$0xff]
        %v1242 = vld [vmem:[%s221 + $0xb7] sm:$0xff]
        %v1243 = vld [vmem:[%s221 + $0xbf] sm:$0xff]
        %v1244 = vld [vmem:[%s221 + $0xc7] sm:$0xff]
        %v1245 = vld [vmem:[%s221 + $0xcf] sm:$0xff]
        %v1246 = vld [vmem:[%s221 + $0xd7] sm:$0xff]
        %v1247 = vld [vmem:[%s221 + $0xdf] sm:$0xff]
        %v1248 = vld [vmem:[%s221 + $0xe7] sm:$0xff]
        %v1249 = vld [vmem:[%s221 + $0xef] sm:$0xff]
        %v1250 = vld [vmem:[%s221 + $0xf7] sm:$0xff]
        %v1251 = vld [vmem:[%s221 + $0xff] sm:$0xff]
        %v1252 = vld [vmem:[%s221 + $0x107] sm:$0xff]
        %v1253 = vld [vmem:[%s221 + $0x10f] sm:$0xff]
        %v1254 = vld [vmem:[%s221 + $0x117] sm:$0xff]
        %v1255 = vld [vmem:[%s221 + $0x11f] sm:$0xff]
        %v1256 = vld [vmem:[%s221 + $0x127] sm:$0xff]
        %v1257 = vld [vmem:[%s221 + $0x12f] sm:$0xff]
        %v1258 = vld [vmem:[%s221 + $0x137] sm:$0xff]
        %v1259 = vld [vmem:[%s221 + $0x13f] sm:$0xff]
        %v1260 = vld [vmem:[%s221 + $0x147] sm:$0xff]
        %v1261 = vld [vmem:[%s221 + $0x14f] sm:$0xff]
        %v1262 = vld [vmem:[%s221 + $0x157] sm:$0xff]
        %v1263 = vld [vmem:[%s221 + $0x15f] sm:$0xff]
        %v1264 = vld [vmem:[%s221 + $0x167] sm:$0xff]
        %v1265 = vld [vmem:[%s221 + $0x16f] sm:$0xff]
        %v1266 = vld [vmem:[%s221 + $0x177] sm:$0xff]
        %v1267 = vld [vmem:[%s221 + $0x17f] sm:$0xff]
        %v1268 = vld [vmem:[%s221 + $0x8] sm:$0xff]
        %v1269 = vld [vmem:[%s221 + $0x10] sm:$0xff]
        %v1270 = vld [vmem:[%s221 + $0x18] sm:$0xff]
        %v1271 = vld [vmem:[%s221 + $0x20] sm:$0xff]
        %v1272 = vld [vmem:[%s221 + $0x28] sm:$0xff]
        %v1273 = vld [vmem:[%s221 + $0x30] sm:$0xff]
        %v1274 = vld [vmem:[%s221 + $0x38] sm:$0xff]
        %v1275 = vld [vmem:[%s221 + $0x40] sm:$0xff]
        %v1276 = vld [vmem:[%s221 + $0x48] sm:$0xff]
        %v1277 = vld [vmem:[%s221 + $0x50] sm:$0xff]
        %v1278 = vld [vmem:[%s221 + $0x58] sm:$0xff]
        %v1279 = vld [vmem:[%s221 + $0x60] sm:$0xff]
        %v1280 = vld [vmem:[%s221 + $0x68] sm:$0xff]
        %v1281 = vld [vmem:[%s221 + $0x70] sm:$0xff]
        %v1282 = vld [vmem:[%s221 + $0x78] sm:$0xff]
        %v1283 = vld [vmem:[%s221 + $0x80] sm:$0xff]
        %v1284 = vld [vmem:[%s221 + $0x88] sm:$0xff]
        %v1285 = vld [vmem:[%s221 + $0x90] sm:$0xff]
        %v1286 = vld [vmem:[%s221 + $0x98] sm:$0xff]
        %v1287 = vld [vmem:[%s221 + $0xa0] sm:$0xff]
        %v1288 = vld [vmem:[%s221 + $0xa8] sm:$0xff]
        %v1289 = vld [vmem:[%s221 + $0xb0] sm:$0xff]
        %v1290 = vld [vmem:[%s221 + $0xb8] sm:$0xff]
        %v1291 = vld [vmem:[%s221 + $0xc0] sm:$0xff]
        %v1292 = vld [vmem:[%s221 + $0xc8] sm:$0xff]
        %v1293 = vld [vmem:[%s221 + $0xd0] sm:$0xff]
        %v1294 = vld [vmem:[%s221 + $0xd8] sm:$0xff]
        %v1295 = vld [vmem:[%s221 + $0xe0] sm:$0xff]
        %v1296 = vld [vmem:[%s221 + $0xe8] sm:$0xff]
        %v1297 = vld [vmem:[%s221 + $0xf0] sm:$0xff]
        %v1298 = vld [vmem:[%s221 + $0xf8] sm:$0xff]
        %v1299 = vld [vmem:[%s221 + $0x100] sm:$0xff]
        %v1300 = vld [vmem:[%s221 + $0x108] sm:$0xff]
        %v1301 = vld [vmem:[%s221 + $0x110] sm:$0xff]
        %v1302 = vld [vmem:[%s221 + $0x118] sm:$0xff]
        %v1303 = vld [vmem:[%s221 + $0x120] sm:$0xff]
        %v1304 = vld [vmem:[%s221 + $0x128] sm:$0xff]
        %v1305 = vld [vmem:[%s221 + $0x130] sm:$0xff]
        %v1306 = vld [vmem:[%s221 + $0x138] sm:$0xff]
        %v1307 = vld [vmem:[%s221 + $0x140] sm:$0xff]
        %v1308 = vld [vmem:[%s221 + $0x148] sm:$0xff]
        %v1309 = vld [vmem:[%s221 + $0x150] sm:$0xff]
        %v1310 = vld [vmem:[%s221 + $0x158] sm:$0xff]
        %v1311 = vld [vmem:[%s221 + $0x160] sm:$0xff]
        %v1312 = vld [vmem:[%s221 + $0x168] sm:$0xff]
        %v1313 = vld [vmem:[%s221 + $0x170] sm:$0xff]
        %v1314 = vld [vmem:[%s221 + $0x178] sm:$0xff]
        %v1315 = vld [vmem:[%s221 + $0x180] sm:$0xff]
        %v1316 = vld [vmem:[%s221 + $0x9] sm:$0xff]
        %v1317 = vld [vmem:[%s221 + $0x11] sm:$0xff]
        %v1318 = vld [vmem:[%s221 + $0x19] sm:$0xff]
        %v1319 = vld [vmem:[%s221 + $0x21] sm:$0xff]
        %v1320 = vld [vmem:[%s221 + $0x29] sm:$0xff]
        %v1321 = vld [vmem:[%s221 + $0x31] sm:$0xff]
        %v1322 = vld [vmem:[%s221 + $0x39] sm:$0xff]
        %v1323 = vld [vmem:[%s221 + $0x41] sm:$0xff]
        %v1324 = vld [vmem:[%s221 + $0x49] sm:$0xff]
        %v1325 = vld [vmem:[%s221 + $0x51] sm:$0xff]
        %v1326 = vld [vmem:[%s221 + $0x59] sm:$0xff]
        %v1327 = vld [vmem:[%s221 + $0x61] sm:$0xff]
        %v1328 = vld [vmem:[%s221 + $0x69] sm:$0xff]
        %v1329 = vld [vmem:[%s221 + $0x71] sm:$0xff]
        %v1330 = vld [vmem:[%s221 + $0x79] sm:$0xff]
        %v1331 = vld [vmem:[%s221 + $0x81] sm:$0xff]
        %v1332 = vld [vmem:[%s221 + $0x89] sm:$0xff]
        %v1333 = vld [vmem:[%s221 + $0x91] sm:$0xff]
        %v1334 = vld [vmem:[%s221 + $0x99] sm:$0xff]
        %v1335 = vld [vmem:[%s221 + $0xa1] sm:$0xff]
        %v1336 = vld [vmem:[%s221 + $0xa9] sm:$0xff]
        %v1337 = vld [vmem:[%s221 + $0xb1] sm:$0xff]
        %v1338 = vld [vmem:[%s221 + $0xb9] sm:$0xff]
        %v1339 = vld [vmem:[%s221 + $0xc1] sm:$0xff]
        %v1340 = vld [vmem:[%s221 + $0xc9] sm:$0xff]
        %v1341 = vld [vmem:[%s221 + $0xd1] sm:$0xff]
        %v1342 = vld [vmem:[%s221 + $0xd9] sm:$0xff]
        %v1343 = vld [vmem:[%s221 + $0xe1] sm:$0xff]
        %v1344 = vld [vmem:[%s221 + $0xe9] sm:$0xff]
        %v1345 = vld [vmem:[%s221 + $0xf1] sm:$0xff]
        %v1346 = vld [vmem:[%s221 + $0xf9] sm:$0xff]
        %v1347 = vld [vmem:[%s221 + $0x101] sm:$0xff]
        %v1348 = vld [vmem:[%s221 + $0x109] sm:$0xff]
        %v1349 = vld [vmem:[%s221 + $0x111] sm:$0xff]
        %v1350 = vld [vmem:[%s221 + $0x119] sm:$0xff]
        %v1351 = vld [vmem:[%s221 + $0x121] sm:$0xff]
        %v1352 = vld [vmem:[%s221 + $0x129] sm:$0xff]
        %v1353 = vld [vmem:[%s221 + $0x131] sm:$0xff]
        %v1354 = vld [vmem:[%s221 + $0x139] sm:$0xff]
        %v1355 = vld [vmem:[%s221 + $0x141] sm:$0xff]
        %v1356 = vld [vmem:[%s221 + $0x149] sm:$0xff]
        %v1357 = vld [vmem:[%s221 + $0x151] sm:$0xff]
        %v1358 = vld [vmem:[%s221 + $0x159] sm:$0xff]
        %v1359 = vld [vmem:[%s221 + $0x161] sm:$0xff]
        %v1360 = vld [vmem:[%s221 + $0x169] sm:$0xff]
        %v1361 = vld [vmem:[%s221 + $0x171] sm:$0xff]
        %v1362 = vld [vmem:[%s221 + $0x179] sm:$0xff]
        %v1363 = vld [vmem:[%s221 + $0x181] sm:$0xff]
        %v1364 = vld [vmem:[#allocation6] sm:$0xff]
        %v1365 = vld [vmem:[#allocation6 + $0x8] sm:$0xff]
        %v1366 = vld [vmem:[#allocation6 + $0x10] sm:$0xff]
        %v1367 = vld [vmem:[#allocation6 + $0x18] sm:$0xff]
        %v1368 = vld [vmem:[#allocation6 + $0x20] sm:$0xff]
        %v1369 = vld [vmem:[#allocation6 + $0x28] sm:$0xff]
        %v1370 = vld [vmem:[#allocation6 + $0x30] sm:$0xff]
        %v1371 = vld [vmem:[#allocation6 + $0x38] sm:$0xff]
        %v1372 = vld [vmem:[#allocation6 + $0x40] sm:$0xff]
        %v1373 = vld [vmem:[#allocation6 + $0x48] sm:$0xff]
        %v1374 = vld [vmem:[#allocation6 + $0x50] sm:$0xff]
        %v1375 = vld [vmem:[#allocation6 + $0x58] sm:$0xff]
        %v1376 = vld [vmem:[#allocation6 + $0x60] sm:$0xff]
        %v1377 = vld [vmem:[#allocation6 + $0x68] sm:$0xff]
        %v1378 = vld [vmem:[#allocation6 + $0x70] sm:$0xff]
        %v1379 = vld [vmem:[#allocation6 + $0x78] sm:$0xff]
        %v1380 = vld [vmem:[#allocation6 + $0x80] sm:$0xff]
        %v1381 = vld [vmem:[#allocation6 + $0x88] sm:$0xff]
        %v1382 = vld [vmem:[#allocation6 + $0x90] sm:$0xff]
        %v1383 = vld [vmem:[#allocation6 + $0x98] sm:$0xff]
        %v1384 = vld [vmem:[#allocation6 + $0xa0] sm:$0xff]
        %v1385 = vld [vmem:[#allocation6 + $0xa8] sm:$0xff]
        %v1386 = vld [vmem:[#allocation6 + $0xb0] sm:$0xff]
        %v1387 = vld [vmem:[#allocation6 + $0xb8] sm:$0xff]
        %v1388 = vld [vmem:[#allocation6 + $0xc0] sm:$0xff]
        %v1389 = vld [vmem:[#allocation6 + $0xc8] sm:$0xff]
        %v1390 = vld [vmem:[#allocation6 + $0xd0] sm:$0xff]
        %v1391 = vld [vmem:[#allocation6 + $0xd8] sm:$0xff]
        %v1392 = vld [vmem:[#allocation6 + $0xe0] sm:$0xff]
        %v1393 = vld [vmem:[#allocation6 + $0xe8] sm:$0xff]
        %v1394 = vld [vmem:[#allocation6 + $0xf0] sm:$0xff]
        %v1395 = vld [vmem:[#allocation6 + $0xf8] sm:$0xff]
        %v1396 = vld [vmem:[#allocation6 + $0x100] sm:$0xff]
        %v1397 = vld [vmem:[#allocation6 + $0x108] sm:$0xff]
        %v1398 = vld [vmem:[#allocation6 + $0x110] sm:$0xff]
        %v1399 = vld [vmem:[#allocation6 + $0x118] sm:$0xff]
        %v1400 = vld [vmem:[#allocation6 + $0x120] sm:$0xff]
        %v1401 = vld [vmem:[#allocation6 + $0x128] sm:$0xff]
        %v1402 = vld [vmem:[#allocation6 + $0x130] sm:$0xff]
        %v1403 = vld [vmem:[#allocation6 + $0x138] sm:$0xff]
        %v1404 = vld [vmem:[#allocation6 + $0x140] sm:$0xff]
        %v1405 = vld [vmem:[#allocation6 + $0x148] sm:$0xff]
        %v1406 = vld [vmem:[#allocation6 + $0x150] sm:$0xff]
        %v1407 = vld [vmem:[#allocation6 + $0x158] sm:$0xff]
        %v1408 = vld [vmem:[#allocation6 + $0x160] sm:$0xff]
        %v1409 = vld [vmem:[#allocation6 + $0x168] sm:$0xff]
        %v1410 = vld [vmem:[#allocation6 + $0x170] sm:$0xff]
        %v1411 = vld [vmem:[#allocation6 + $0x178] sm:$0xff]
        %v1412 = vld [vmem:[%s221 + $0x187] sm:$0xff]
        %v1413 = vld [vmem:[%s221 + $0x18f] sm:$0xff]
        %v1414 = vld [vmem:[%s221 + $0x197] sm:$0xff]
        %v1415 = vld [vmem:[%s221 + $0x188] sm:$0xff]
        %v1416 = vld [vmem:[%s221 + $0x190] sm:$0xff]
        %v1417 = vld [vmem:[%s221 + $0x198] sm:$0xff]
        %v1418 = vld [vmem:[%s221 + $0x189] sm:$0xff]
        %v1419 = vld [vmem:[%s221 + $0x191] sm:$0xff]
        %v1420 = vld [vmem:[%s221 + $0x199] sm:$0xff]
        %s1421 = scalar_lea.vmem [#allocation6], 384
        %v1422 = vld [vmem:[%s1421] sm:$0xff]
        %v1423 = vld [vmem:[%s1421 + $0x8] sm:$0xff]
        %v1424 = vld [vmem:[%s1421 + $0x10] sm:$0xff]
        %v1425 = vld [vmem:[%s1421 + $0x18] sm:$0xff]
        %v1426 = vld [vmem:[%s1421 + $0x20] sm:$0xff]
        %v1427 = vld [vmem:[%s1421 + $0x28] sm:$0xff]
        %v1428 = vld [vmem:[%s1421 + $0x30] sm:$0xff]
        %v1429 = vld [vmem:[%s1421 + $0x38] sm:$0xff]
        %v1430 = vld [vmem:[%s1421 + $0x40] sm:$0xff]
        %v1431 = vld [vmem:[%s1421 + $0x48] sm:$0xff]
        %v1432 = vld [vmem:[%s1421 + $0x50] sm:$0xff]
        %v1433 = vld [vmem:[%s1421 + $0x58] sm:$0xff]
        %v1434 = vld [vmem:[%s1421 + $0x60] sm:$0xff]
        %v1435 = vld [vmem:[%s1421 + $0x68] sm:$0xff]
        %v1436 = vld [vmem:[%s1421 + $0x70] sm:$0xff]
        %v1437 = vld [vmem:[%s1421 + $0x78] sm:$0xff]
        %v1438 = vld [vmem:[%s1421 + $0x80] sm:$0xff]
        %v1439 = vld [vmem:[%s1421 + $0x88] sm:$0xff]
        %v1440 = vld [vmem:[%s1421 + $0x90] sm:$0xff]
        %v1441 = vld [vmem:[%s1421 + $0x98] sm:$0xff]
        %v1442 = vld [vmem:[%s1421 + $0xa0] sm:$0xff]
        %v1443 = vld [vmem:[%s1421 + $0xa8] sm:$0xff]
        %v1444 = vld [vmem:[%s1421 + $0xb0] sm:$0xff]
        %v1445 = vld [vmem:[%s1421 + $0xb8] sm:$0xff]
        %v1446 = vld [vmem:[%s1421 + $0xc0] sm:$0xff]
        %v1447 = vld [vmem:[%s1421 + $0xc8] sm:$0xff]
        %v1448 = vld [vmem:[%s1421 + $0xd0] sm:$0xff]
        %v1449 = vld [vmem:[%s1421 + $0xd8] sm:$0xff]
        %v1450 = vld [vmem:[%s1421 + $0xe0] sm:$0xff]
        %v1451 = vld [vmem:[%s1421 + $0xe8] sm:$0xff]
        %v1452 = vld [vmem:[%s1421 + $0xf0] sm:$0xff]
        %v1453 = vld [vmem:[%s1421 + $0xf8] sm:$0xff]
        %v1454 = vld [vmem:[%s1421 + $0x100] sm:$0xff]
        %v1455 = vld [vmem:[%s1421 + $0x108] sm:$0xff]
        %v1456 = vld [vmem:[%s1421 + $0x110] sm:$0xff]
        %v1457 = vld [vmem:[%s1421 + $0x118] sm:$0xff]
        %v1458 = vld [vmem:[%s1421 + $0x120] sm:$0xff]
        %v1459 = vld [vmem:[%s1421 + $0x128] sm:$0xff]
        %v1460 = vld [vmem:[%s1421 + $0x130] sm:$0xff]
        %v1461 = vld [vmem:[%s1421 + $0x138] sm:$0xff]
        %v1462 = vld [vmem:[%s1421 + $0x140] sm:$0xff]
        %v1463 = vld [vmem:[%s1421 + $0x148] sm:$0xff]
        %v1464 = vld [vmem:[%s1421 + $0x150] sm:$0xff]
        %v1465 = vld [vmem:[%s1421 + $0x158] sm:$0xff]
        %v1466 = vld [vmem:[%s1421 + $0x160] sm:$0xff]
        %v1467 = vld [vmem:[%s1421 + $0x168] sm:$0xff]
        %v1468 = vld [vmem:[%s1421 + $0x170] sm:$0xff]
        %v1469 = vld [vmem:[%s1421 + $0x178] sm:$0xff]
        %1470 = vmatprep.subr.mxu0 0.0
        %1471 = vmatpush1.msra.mxu0 %v1437
        %1472 = vmatprep.subr.mxu0 0.0
        %1473 = vmatpush1.msra.mxu0 %v1436
        %1474 = vmatprep.subr.mxu0 0.0
        %1475 = vmatpush1.msra.mxu0 %v1435
        %1476 = vmatprep.subr.mxu0 0.0
        %1477 = vmatpush1.msra.mxu0 %v1434
        %1478 = vmatprep.subr.mxu0 0.0
        %1479 = vmatpush1.msra.mxu0 %v1433
        %1480 = vmatprep.subr.mxu0 0.0
        %1481 = vmatpush1.msra.mxu0 %v1432
        %1482 = vmatprep.subr.mxu0 0.0
        %1483 = vmatpush1.msra.mxu0 %v1431
        %1484 = vmatprep.subr.mxu0 0.0
        %1485 = vmatpush1.msra.mxu0 %v1430
        %1486 = vmatprep.subr.mxu0 0.0
        %1487 = vmatpush1.msra.mxu0 %v1429
        %1488 = vmatprep.subr.mxu0 0.0
        %1489 = vmatpush1.msra.mxu0 %v1428
        %1490 = vmatprep.subr.mxu0 0.0
        %1491 = vmatpush1.msra.mxu0 %v1427
        %1492 = vmatprep.subr.mxu0 0.0
        %1493 = vmatpush1.msra.mxu0 %v1426
        %1494 = vmatprep.subr.mxu0 0.0
        %1495 = vmatpush1.msra.mxu0 %v1425
        %1496 = vmatprep.subr.mxu0 0.0
        %1497 = vmatpush1.msra.mxu0 %v1424
        %1498 = vmatprep.subr.mxu0 0.0
        %1499 = vmatpush1.msra.mxu0 %v1423
        %1500 = vmatprep.subr.mxu0 0.0
        %1501 = vmatpush1.msra.mxu0 %v1422
        %1502 = vmatprep.subr.mxu0 0.0
        %1503 = vmatpush2.msra.mxu0 %v1453
        %1504 = vmatprep.subr.mxu0 0.0
        %1505 = vmatpush2.msra.mxu0 %v1452
        %1506 = vmatprep.subr.mxu0 0.0
        %1507 = vmatpush2.msra.mxu0 %v1451
        %1508 = vmatprep.subr.mxu0 0.0
        %1509 = vmatpush2.msra.mxu0 %v1450
        %1510 = vmatprep.subr.mxu0 0.0
        %1511 = vmatpush2.msra.mxu0 %v1449
        %1512 = vmatprep.subr.mxu0 0.0
        %1513 = vmatpush2.msra.mxu0 %v1448
        %1514 = vmatprep.subr.mxu0 0.0
        %1515 = vmatpush2.msra.mxu0 %v1447
        %1516 = vmatprep.subr.mxu0 0.0
        %1517 = vmatpush2.msra.mxu0 %v1446
        %1518 = vmatprep.subr.mxu0 0.0
        %1519 = vmatpush2.msra.mxu0 %v1445
        %1520 = vmatprep.subr.mxu0 0.0
        %1521 = vmatpush2.msra.mxu0 %v1444
        %1522 = vmatprep.subr.mxu0 0.0
        %1523 = vmatpush2.msra.mxu0 %v1443
        %1524 = vmatprep.subr.mxu0 0.0
        %1525 = vmatpush2.msra.mxu0 %v1442
        %1526 = vmatprep.subr.mxu0 0.0
        %1527 = vmatpush2.msra.mxu0 %v1441
        %1528 = vmatprep.subr.mxu0 0.0
        %1529 = vmatpush2.msra.mxu0 %v1440
        %1530 = vmatprep.subr.mxu0 0.0
        %1531 = vmatpush2.msra.mxu0 %v1439
        %1532 = vmatprep.subr.mxu0 0.0
        %1533 = vmatpush2.msra.mxu0 %v1438
        %1534 = vmatprep.mubr.f32.mxu0 %v1271
        %1535 = vmatmul.mubr.f32.gmra.mxu0 %v1223
        %v1536 = vpop.f32.mrf.mxu0
        %v1537 = vadd.f32 0.0, %v1536
        %v1538 = vpop.f32.mrf.mxu0
        %1539 = vmatprep.mubr.f32.mxu0 %v1272
        %1540 = vmatmul.mubr.f32.gmra.mxu0 %v1224
        %v1541 = vpop.f32.mrf.mxu0
        %v1542 = vadd.f32 0.0, %v1541
        %v1543 = vpop.f32.mrf.mxu0
        %1544 = vmatprep.mubr.f32.mxu0 %v1273
        %1545 = vmatmul.mubr.f32.gmra.mxu0 %v1225
        %v1546 = vpop.f32.mrf.mxu0
        %v1547 = vadd.f32 0.0, %v1546
        %v1548 = vpop.f32.mrf.mxu0
        %1549 = vmatprep.mubr.f32.mxu0 %v1274
        %1550 = vmatmul.mubr.f32.gmra.mxu0 %v1226
        %v1551 = vpop.f32.mrf.mxu0
        %v1552 = vadd.f32 0.0, %v1551
        %v1553 = vpop.f32.mrf.mxu0
        %1554 = vmatprep.mubr.f32.mxu0 %v1275
        %1555 = vmatmul.mubr.f32.gmra.mxu0 %v1227
        %v1556 = vpop.f32.mrf.mxu0
        %v1557 = vadd.f32 0.0, %v1556
        %v1558 = vpop.f32.mrf.mxu0
        %1559 = vmatprep.mubr.f32.mxu0 %v1276
        %1560 = vmatmul.mubr.f32.gmra.mxu0 %v1228
        %v1561 = vpop.f32.mrf.mxu0
        %v1562 = vadd.f32 0.0, %v1561
        %v1563 = vpop.f32.mrf.mxu0
        %1564 = vmatprep.mubr.f32.mxu0 %v1277
        %1565 = vmatmul.mubr.f32.gmra.mxu0 %v1229
        %v1566 = vpop.f32.mrf.mxu0
        %v1567 = vadd.f32 0.0, %v1566
        %v1568 = vpop.f32.mrf.mxu0
        %1569 = vmatprep.mubr.f32.mxu0 %v1278
        %1570 = vmatmul.mubr.f32.gmra.mxu0 %v1230
        %v1571 = vpop.f32.mrf.mxu0
        %v1572 = vadd.f32 0.0, %v1571
        %v1573 = vpop.f32.mrf.mxu0
        %1574 = vmatprep.mubr.f32.mxu0 %v1279
        %1575 = vmatmul.mubr.f32.gmra.mxu0 %v1231
        %v1576 = vpop.f32.mrf.mxu0
        %v1577 = vadd.f32 0.0, %v1576
        %v1578 = vpop.f32.mrf.mxu0
        %1579 = vmatprep.mubr.f32.mxu0 %v1280
        %1580 = vmatmul.mubr.f32.gmra.mxu0 %v1232
        %v1581 = vpop.f32.mrf.mxu0
        %v1582 = vadd.f32 0.0, %v1581
        %v1583 = vpop.f32.mrf.mxu0
        %1584 = vmatprep.mubr.f32.mxu0 %v1281
        %1585 = vmatmul.mubr.f32.gmra.mxu0 %v1233
        %v1586 = vpop.f32.mrf.mxu0
        %v1587 = vadd.f32 0.0, %v1586
        %v1588 = vpop.f32.mrf.mxu0
        %1589 = vmatprep.mubr.f32.mxu0 %v1282
        %1590 = vmatmul.mubr.f32.gmra.mxu0 %v1234
        %v1591 = vpop.f32.mrf.mxu0
        %v1592 = vadd.f32 0.0, %v1591
        %v1593 = vpop.f32.mrf.mxu0
        %1594 = vmatprep.mubr.f32.mxu0 %v1283
        %1595 = vmatmul.mubr.f32.gmra.mxu0 %v1235
        %v1596 = vpop.f32.mrf.mxu0
        %v1597 = vadd.f32 0.0, %v1596
        %v1598 = vpop.f32.mrf.mxu0
        %1599 = vmatprep.mubr.f32.mxu0 %v1284
        %1600 = vmatmul.mubr.f32.gmra.mxu0 %v1236
        %v1601 = vpop.f32.mrf.mxu0
        %v1602 = vadd.f32 0.0, %v1601
        %v1603 = vpop.f32.mrf.mxu0
        %1604 = vmatprep.mubr.f32.mxu0 %v1285
        %1605 = vmatmul.mubr.f32.gmra.mxu0 %v1237
        %v1606 = vpop.f32.mrf.mxu0
        %v1607 = vadd.f32 0.0, %v1606
        %v1608 = vpop.f32.mrf.mxu0
        %1609 = vmatprep.mubr.f32.mxu0 %v1286
        %1610 = vmatmul.mubr.f32.gmra.mxu0 %v1238
        %v1611 = vpop.f32.mrf.mxu0
        %v1612 = vadd.f32 0.0, %v1611
        %v1613 = vpop.f32.mrf.mxu0
        %1614 = vmatprep.mubr.f32.mxu0 %v1287
        %1615 = vmatmul.mubr.f32.gmra.mxu0 %v1239
        %v1616 = vpop.f32.mrf.mxu0
        %v1617 = vadd.f32 0.0, %v1616
        %v1618 = vpop.f32.mrf.mxu0
        %1619 = vmatprep.mubr.f32.mxu0 %v1288
        %1620 = vmatmul.mubr.f32.gmra.mxu0 %v1240
        %v1621 = vpop.f32.mrf.mxu0
        %v1622 = vadd.f32 0.0, %v1621
        %v1623 = vpop.f32.mrf.mxu0
        %1624 = vmatprep.mubr.f32.mxu0 %v1289
        %1625 = vmatmul.mubr.f32.gmra.mxu0 %v1241
        %v1626 = vpop.f32.mrf.mxu0
        %v1627 = vadd.f32 0.0, %v1626
        %v1628 = vpop.f32.mrf.mxu0
        %1629 = vmatprep.mubr.f32.mxu0 %v1290
        %1630 = vmatmul.mubr.f32.gmra.mxu0 %v1242
        %v1631 = vpop.f32.mrf.mxu0
        %v1632 = vadd.f32 0.0, %v1631
        %v1633 = vpop.f32.mrf.mxu0
        %1634 = vmatprep.mubr.f32.mxu0 %v1291
        %1635 = vmatmul.mubr.f32.gmra.mxu0 %v1243
        %v1636 = vpop.f32.mrf.mxu0
        %v1637 = vadd.f32 0.0, %v1636
        %v1638 = vpop.f32.mrf.mxu0
        %1639 = vmatprep.mubr.f32.mxu0 %v1292
        %1640 = vmatmul.mubr.f32.gmra.mxu0 %v1244
        %v1641 = vpop.f32.mrf.mxu0
        %v1642 = vadd.f32 0.0, %v1641
        %v1643 = vpop.f32.mrf.mxu0
        %1644 = vmatprep.mubr.f32.mxu0 %v1293
        %1645 = vmatmul.mubr.f32.gmra.mxu0 %v1245
        %v1646 = vpop.f32.mrf.mxu0
        %v1647 = vadd.f32 0.0, %v1646
        %v1648 = vpop.f32.mrf.mxu0
        %1649 = vmatprep.mubr.f32.mxu0 %v1294
        %1650 = vmatmul.mubr.f32.gmra.mxu0 %v1246
        %v1651 = vpop.f32.mrf.mxu0
        %v1652 = vadd.f32 0.0, %v1651
        %v1653 = vpop.f32.mrf.mxu0
        %1654 = vmatprep.mubr.f32.mxu0 %v1295
        %1655 = vmatmul.mubr.f32.gmra.mxu0 %v1247
        %v1656 = vpop.f32.mrf.mxu0
        %v1657 = vadd.f32 0.0, %v1656
        %v1658 = vpop.f32.mrf.mxu0
        %1659 = vmatprep.mubr.f32.mxu0 %v1296
        %1660 = vmatmul.mubr.f32.gmra.mxu0 %v1248
        %v1661 = vpop.f32.mrf.mxu0
        %v1662 = vadd.f32 0.0, %v1661
        %v1663 = vpop.f32.mrf.mxu0
        %1664 = vmatprep.mubr.f32.mxu0 %v1297
        %1665 = vmatmul.mubr.f32.gmra.mxu0 %v1249
        %v1666 = vpop.f32.mrf.mxu0
        %v1667 = vadd.f32 0.0, %v1666
        %v1668 = vpop.f32.mrf.mxu0
        %1669 = vmatprep.mubr.f32.mxu0 %v1298
        %1670 = vmatmul.mubr.f32.gmra.mxu0 %v1250
        %v1671 = vpop.f32.mrf.mxu0
        %v1672 = vadd.f32 0.0, %v1671
        %v1673 = vpop.f32.mrf.mxu0
        %1674 = vmatprep.mubr.f32.mxu0 %v1299
        %1675 = vmatmul.mubr.f32.gmra.mxu0 %v1251
        %v1676 = vpop.f32.mrf.mxu0
        %v1677 = vadd.f32 0.0, %v1676
        %v1678 = vpop.f32.mrf.mxu0
        %1679 = vmatprep.mubr.f32.mxu0 %v1300
        %1680 = vmatmul.mubr.f32.gmra.mxu0 %v1252
        %v1681 = vpop.f32.mrf.mxu0
        %v1682 = vadd.f32 0.0, %v1681
        %v1683 = vpop.f32.mrf.mxu0
        %1684 = vmatprep.mubr.f32.mxu0 %v1301
        %1685 = vmatmul.mubr.f32.gmra.mxu0 %v1253
        %v1686 = vpop.f32.mrf.mxu0
        %v1687 = vadd.f32 0.0, %v1686
        %v1688 = vpop.f32.mrf.mxu0
        %1689 = vmatprep.mubr.f32.mxu0 %v1302
        %1690 = vmatmul.mubr.f32.gmra.mxu0 %v1254
        %v1691 = vpop.f32.mrf.mxu0
        %v1692 = vadd.f32 0.0, %v1691
        %v1693 = vpop.f32.mrf.mxu0
        %1694 = vmatprep.mubr.f32.mxu0 %v1303
        %1695 = vmatmul.mubr.f32.gmra.mxu0 %v1255
        %v1696 = vpop.f32.mrf.mxu0
        %v1697 = vadd.f32 0.0, %v1696
        %v1698 = vpop.f32.mrf.mxu0
        %1699 = vmatprep.mubr.f32.mxu0 %v1304
        %1700 = vmatmul.mubr.f32.gmra.mxu0 %v1256
        %v1701 = vpop.f32.mrf.mxu0
        %v1702 = vadd.f32 0.0, %v1701
        %v1703 = vpop.f32.mrf.mxu0
        %1704 = vmatprep.mubr.f32.mxu0 %v1305
        %1705 = vmatmul.mubr.f32.gmra.mxu0 %v1257
        %v1706 = vpop.f32.mrf.mxu0
        %v1707 = vadd.f32 0.0, %v1706
        %v1708 = vpop.f32.mrf.mxu0
        %1709 = vmatprep.mubr.f32.mxu0 %v1306
        %1710 = vmatmul.mubr.f32.gmra.mxu0 %v1258
        %v1711 = vpop.f32.mrf.mxu0
        %v1712 = vadd.f32 0.0, %v1711
        %v1713 = vpop.f32.mrf.mxu0
        %1714 = vmatprep.mubr.f32.mxu0 %v1307
        %1715 = vmatmul.mubr.f32.gmra.mxu0 %v1259
        %v1716 = vpop.f32.mrf.mxu0
        %v1717 = vadd.f32 0.0, %v1716
        %v1718 = vpop.f32.mrf.mxu0
        %1719 = vmatprep.mubr.f32.mxu0 %v1308
        %1720 = vmatmul.mubr.f32.gmra.mxu0 %v1260
        %v1721 = vpop.f32.mrf.mxu0
        %v1722 = vadd.f32 0.0, %v1721
        %v1723 = vpop.f32.mrf.mxu0
        %1724 = vmatprep.mubr.f32.mxu0 %v1309
        %1725 = vmatmul.mubr.f32.gmra.mxu0 %v1261
        %v1726 = vpop.f32.mrf.mxu0
        %v1727 = vadd.f32 0.0, %v1726
        %v1728 = vpop.f32.mrf.mxu0
        %1729 = vmatprep.mubr.f32.mxu0 %v1310
        %1730 = vmatmul.mubr.f32.gmra.mxu0 %v1262
        %v1731 = vpop.f32.mrf.mxu0
        %v1732 = vadd.f32 0.0, %v1731
        %v1733 = vpop.f32.mrf.mxu0
        %1734 = vmatprep.mubr.f32.mxu0 %v1311
        %1735 = vmatmul.mubr.f32.gmra.mxu0 %v1263
        %v1736 = vpop.f32.mrf.mxu0
        %v1737 = vadd.f32 0.0, %v1736
        %v1738 = vpop.f32.mrf.mxu0
        %1739 = vmatprep.mubr.f32.mxu0 %v1312
        %1740 = vmatmul.mubr.f32.gmra.mxu0 %v1264
        %v1741 = vpop.f32.mrf.mxu0
        %v1742 = vadd.f32 0.0, %v1741
        %v1743 = vpop.f32.mrf.mxu0
        %1744 = vmatprep.mubr.f32.mxu0 %v1313
        %1745 = vmatmul.mubr.f32.gmra.mxu0 %v1265
        %v1746 = vpop.f32.mrf.mxu0
        %v1747 = vadd.f32 0.0, %v1746
        %v1748 = vpop.f32.mrf.mxu0
        %1749 = vmatprep.mubr.f32.mxu0 %v1314
        %1750 = vmatmul.mubr.f32.gmra.mxu0 %v1266
        %v1751 = vpop.f32.mrf.mxu0
        %v1752 = vadd.f32 0.0, %v1751
        %v1753 = vpop.f32.mrf.mxu0
        %1754 = vmatprep.mubr.f32.mxu0 %v1315
        %1755 = vmatmul.mubr.f32.gmra.mxu0 %v1267
        %v1756 = vpop.f32.mrf.mxu0
        %v1757 = vadd.f32 0.0, %v1756
        %v1758 = vpop.f32.mrf.mxu0
        %1759 = vmatprep.mubr.f32.mxu0 %v1415
        %1760 = vmatmul.mubr.f32.gmra.mxu0 %v1412
        %v1761 = vpop.f32.mrf.mxu0
        %v1762 = vadd.f32 0.0, %v1761
        %v1763 = vpop.f32.mrf.mxu0
        %1764 = vmatprep.mubr.f32.mxu0 %v1416
        %1765 = vmatmul.mubr.f32.gmra.mxu0 %v1413
        %v1766 = vpop.f32.mrf.mxu0
        %v1767 = vadd.f32 0.0, %v1766
        %v1768 = vpop.f32.mrf.mxu0
        %1769 = vmatprep.mubr.f32.mxu0 %v1417
        %1770 = vmatmul.mubr.f32.gmra.mxu0 %v1414
        %v1771 = vpop.f32.mrf.mxu0
        %v1772 = vadd.f32 0.0, %v1771
        %v1773 = vpop.f32.mrf.mxu0
        %1774 = vdwg.mxu0
        %1775 = vmatprep.subr.mxu0 0.0
        %1776 = vmatpush1.msra.mxu0 %v1469
        %1777 = vmatprep.subr.mxu0 0.0
        %1778 = vmatpush1.msra.mxu0 %v1468
        %1779 = vmatprep.subr.mxu0 0.0
        %1780 = vmatpush1.msra.mxu0 %v1467
        %1781 = vmatprep.subr.mxu0 0.0
        %1782 = vmatpush1.msra.mxu0 %v1466
        %1783 = vmatprep.subr.mxu0 0.0
        %1784 = vmatpush1.msra.mxu0 %v1465
        %1785 = vmatprep.subr.mxu0 0.0
        %1786 = vmatpush1.msra.mxu0 %v1464
        %1787 = vmatprep.subr.mxu0 0.0
        %1788 = vmatpush1.msra.mxu0 %v1463
        %1789 = vmatprep.subr.mxu0 0.0
        %1790 = vmatpush1.msra.mxu0 %v1462
        %1791 = vmatprep.subr.mxu0 0.0
        %1792 = vmatpush1.msra.mxu0 %v1461
        %1793 = vmatprep.subr.mxu0 0.0
        %1794 = vmatpush1.msra.mxu0 %v1460
        %1795 = vmatprep.subr.mxu0 0.0
        %1796 = vmatpush1.msra.mxu0 %v1459
        %1797 = vmatprep.subr.mxu0 0.0
        %1798 = vmatpush1.msra.mxu0 %v1458
        %1799 = vmatprep.subr.mxu0 0.0
        %1800 = vmatpush1.msra.mxu0 %v1457
        %1801 = vmatprep.subr.mxu0 0.0
        %1802 = vmatpush1.msra.mxu0 %v1456
        %1803 = vmatprep.subr.mxu0 0.0
        %1804 = vmatpush1.msra.mxu0 %v1455
        %1805 = vmatprep.subr.mxu0 0.0
        %1806 = vmatpush1.msra.mxu0 %v1454
        %1807 = vmatprep.subr.mxu0 0.0
        %1808 = vmatpush2.msra.mxu0 0.0
        %1809 = vmatprep.subr.mxu0 0.0
        %1810 = vmatpush2.msra.mxu0 0.0
        %1811 = vmatprep.subr.mxu0 0.0
        %1812 = vmatpush2.msra.mxu0 0.0
        %1813 = vmatprep.subr.mxu0 0.0
        %1814 = vmatpush2.msra.mxu0 0.0
        %1815 = vmatprep.subr.mxu0 0.0
        %1816 = vmatpush2.msra.mxu0 0.0
        %1817 = vmatprep.subr.mxu0 0.0
        %1818 = vmatpush2.msra.mxu0 0.0
        %1819 = vmatprep.subr.mxu0 0.0
        %1820 = vmatpush2.msra.mxu0 0.0
        %1821 = vmatprep.subr.mxu0 0.0
        %1822 = vmatpush2.msra.mxu0 0.0
        %1823 = vmatprep.subr.mxu0 0.0
        %1824 = vmatpush2.msra.mxu0 0.0
        %1825 = vmatprep.subr.mxu0 0.0
        %1826 = vmatpush2.msra.mxu0 0.0
        %1827 = vmatprep.subr.mxu0 0.0
        %1828 = vmatpush2.msra.mxu0 0.0
        %1829 = vmatprep.subr.mxu0 0.0
        %1830 = vmatpush2.msra.mxu0 0.0
        %1831 = vmatprep.subr.mxu0 0.0
        %1832 = vmatpush2.msra.mxu0 0.0
        %1833 = vmatprep.subr.mxu0 0.0
        %1834 = vmatpush2.msra.mxu0 0.0
        %1835 = vmatprep.subr.mxu0 0.0
        %1836 = vmatpush2.msra.mxu0 0.0
        %1837 = vmatprep.subr.mxu0 0.0
        %1838 = vmatpush2.msra.mxu0 0.0
        %1839 = vmatprep.mubr.f32.mxu0 0.0
        %1840 = vmatmul.mubr.f32.gmra.mxu0 %v1319
        %v1841 = vpop.f32.mrf.mxu0
        %v1842 = vadd.f32 %v1537, %v1841
        %v1843 = vpop.f32.mrf.mxu0
        %1844 = vmatprep.mubr.f32.mxu0 0.0
        %1845 = vmatmul.mubr.f32.gmra.mxu0 %v1320
        %v1846 = vpop.f32.mrf.mxu0
        %v1847 = vadd.f32 %v1542, %v1846
        %v1848 = vpop.f32.mrf.mxu0
        %1849 = vmatprep.mubr.f32.mxu0 0.0
        %1850 = vmatmul.mubr.f32.gmra.mxu0 %v1321
        %v1851 = vpop.f32.mrf.mxu0
        %v1852 = vadd.f32 %v1547, %v1851
        %v1853 = vpop.f32.mrf.mxu0
        %1854 = vmatprep.mubr.f32.mxu0 0.0
        %1855 = vmatmul.mubr.f32.gmra.mxu0 %v1322
        %v1856 = vpop.f32.mrf.mxu0
        %v1857 = vadd.f32 %v1552, %v1856
        %v1858 = vpop.f32.mrf.mxu0
        %1859 = vmatprep.mubr.f32.mxu0 0.0
        %1860 = vmatmul.mubr.f32.gmra.mxu0 %v1323
        %v1861 = vpop.f32.mrf.mxu0
        %v1862 = vadd.f32 %v1557, %v1861
        %v1863 = vpop.f32.mrf.mxu0
        %1864 = vmatprep.mubr.f32.mxu0 0.0
        %1865 = vmatmul.mubr.f32.gmra.mxu0 %v1324
        %v1866 = vpop.f32.mrf.mxu0
        %v1867 = vadd.f32 %v1562, %v1866
        %v1868 = vpop.f32.mrf.mxu0
        %1869 = vmatprep.mubr.f32.mxu0 0.0
        %1870 = vmatmul.mubr.f32.gmra.mxu0 %v1325
        %v1871 = vpop.f32.mrf.mxu0
        %v1872 = vadd.f32 %v1567, %v1871
        %v1873 = vpop.f32.mrf.mxu0
        %1874 = vmatprep.mubr.f32.mxu0 0.0
        %1875 = vmatmul.mubr.f32.gmra.mxu0 %v1326
        %v1876 = vpop.f32.mrf.mxu0
        %v1877 = vadd.f32 %v1572, %v1876
        %v1878 = vpop.f32.mrf.mxu0
        %1879 = vmatprep.mubr.f32.mxu0 0.0
        %1880 = vmatmul.mubr.f32.gmra.mxu0 %v1327
        %v1881 = vpop.f32.mrf.mxu0
        %v1882 = vadd.f32 %v1577, %v1881
        %v1883 = vpop.f32.mrf.mxu0
        %1884 = vmatprep.mubr.f32.mxu0 0.0
        %1885 = vmatmul.mubr.f32.gmra.mxu0 %v1328
        %v1886 = vpop.f32.mrf.mxu0
        %v1887 = vadd.f32 %v1582, %v1886
        %v1888 = vpop.f32.mrf.mxu0
        %1889 = vmatprep.mubr.f32.mxu0 0.0
        %1890 = vmatmul.mubr.f32.gmra.mxu0 %v1329
        %v1891 = vpop.f32.mrf.mxu0
        %v1892 = vadd.f32 %v1587, %v1891
        %v1893 = vpop.f32.mrf.mxu0
        %1894 = vmatprep.mubr.f32.mxu0 0.0
        %1895 = vmatmul.mubr.f32.gmra.mxu0 %v1330
        %v1896 = vpop.f32.mrf.mxu0
        %v1897 = vadd.f32 %v1592, %v1896
        %v1898 = vpop.f32.mrf.mxu0
        %1899 = vmatprep.mubr.f32.mxu0 0.0
        %1900 = vmatmul.mubr.f32.gmra.mxu0 %v1331
        %v1901 = vpop.f32.mrf.mxu0
        %v1902 = vadd.f32 %v1597, %v1901
        %v1903 = vpop.f32.mrf.mxu0
        %1904 = vmatprep.mubr.f32.mxu0 0.0
        %1905 = vmatmul.mubr.f32.gmra.mxu0 %v1332
        %v1906 = vpop.f32.mrf.mxu0
        %v1907 = vadd.f32 %v1602, %v1906
        %v1908 = vpop.f32.mrf.mxu0
        %1909 = vmatprep.mubr.f32.mxu0 0.0
        %1910 = vmatmul.mubr.f32.gmra.mxu0 %v1333
        %v1911 = vpop.f32.mrf.mxu0
        %v1912 = vadd.f32 %v1607, %v1911
        %v1913 = vpop.f32.mrf.mxu0
        %1914 = vmatprep.mubr.f32.mxu0 0.0
        %1915 = vmatmul.mubr.f32.gmra.mxu0 %v1334
        %v1916 = vpop.f32.mrf.mxu0
        %v1917 = vadd.f32 %v1612, %v1916
        %v1918 = vpop.f32.mrf.mxu0
        %1919 = vmatprep.mubr.f32.mxu0 0.0
        %1920 = vmatmul.mubr.f32.gmra.mxu0 %v1335
        %v1921 = vpop.f32.mrf.mxu0
        %v1922 = vadd.f32 %v1617, %v1921
        %v1923 = vpop.f32.mrf.mxu0
        %1924 = vmatprep.mubr.f32.mxu0 0.0
        %1925 = vmatmul.mubr.f32.gmra.mxu0 %v1336
        %v1926 = vpop.f32.mrf.mxu0
        %v1927 = vadd.f32 %v1622, %v1926
        %v1928 = vpop.f32.mrf.mxu0
        %1929 = vmatprep.mubr.f32.mxu0 0.0
        %1930 = vmatmul.mubr.f32.gmra.mxu0 %v1337
        %v1931 = vpop.f32.mrf.mxu0
        %v1932 = vadd.f32 %v1627, %v1931
        %v1933 = vpop.f32.mrf.mxu0
        %1934 = vmatprep.mubr.f32.mxu0 0.0
        %1935 = vmatmul.mubr.f32.gmra.mxu0 %v1338
        %v1936 = vpop.f32.mrf.mxu0
        %v1937 = vadd.f32 %v1632, %v1936
        %v1938 = vpop.f32.mrf.mxu0
        %1939 = vmatprep.mubr.f32.mxu0 0.0
        %1940 = vmatmul.mubr.f32.gmra.mxu0 %v1339
        %v1941 = vpop.f32.mrf.mxu0
        %v1942 = vadd.f32 %v1637, %v1941
        %v1943 = vpop.f32.mrf.mxu0
        %1944 = vmatprep.mubr.f32.mxu0 0.0
        %1945 = vmatmul.mubr.f32.gmra.mxu0 %v1340
        %v1946 = vpop.f32.mrf.mxu0
        %v1947 = vadd.f32 %v1642, %v1946
        %v1948 = vpop.f32.mrf.mxu0
        %1949 = vmatprep.mubr.f32.mxu0 0.0
        %1950 = vmatmul.mubr.f32.gmra.mxu0 %v1341
        %v1951 = vpop.f32.mrf.mxu0
        %v1952 = vadd.f32 %v1647, %v1951
        %v1953 = vpop.f32.mrf.mxu0
        %1954 = vmatprep.mubr.f32.mxu0 0.0
        %1955 = vmatmul.mubr.f32.gmra.mxu0 %v1342
        %v1956 = vpop.f32.mrf.mxu0
        %v1957 = vadd.f32 %v1652, %v1956
        %v1958 = vpop.f32.mrf.mxu0
        %1959 = vmatprep.mubr.f32.mxu0 0.0
        %1960 = vmatmul.mubr.f32.gmra.mxu0 %v1343
        %v1961 = vpop.f32.mrf.mxu0
        %v1962 = vadd.f32 %v1657, %v1961
        %v1963 = vpop.f32.mrf.mxu0
        %1964 = vmatprep.mubr.f32.mxu0 0.0
        %1965 = vmatmul.mubr.f32.gmra.mxu0 %v1344
        %v1966 = vpop.f32.mrf.mxu0
        %v1967 = vadd.f32 %v1662, %v1966
        %v1968 = vpop.f32.mrf.mxu0
        %1969 = vmatprep.mubr.f32.mxu0 0.0
        %1970 = vmatmul.mubr.f32.gmra.mxu0 %v1345
        %v1971 = vpop.f32.mrf.mxu0
        %v1972 = vadd.f32 %v1667, %v1971
        %v1973 = vpop.f32.mrf.mxu0
        %1974 = vmatprep.mubr.f32.mxu0 0.0
        %1975 = vmatmul.mubr.f32.gmra.mxu0 %v1346
        %v1976 = vpop.f32.mrf.mxu0
        %v1977 = vadd.f32 %v1672, %v1976
        %v1978 = vpop.f32.mrf.mxu0
        %1979 = vmatprep.mubr.f32.mxu0 0.0
        %1980 = vmatmul.mubr.f32.gmra.mxu0 %v1347
        %v1981 = vpop.f32.mrf.mxu0
        %v1982 = vadd.f32 %v1677, %v1981
        %v1983 = vpop.f32.mrf.mxu0
        %1984 = vmatprep.mubr.f32.mxu0 0.0
        %1985 = vmatmul.mubr.f32.gmra.mxu0 %v1348
        %v1986 = vpop.f32.mrf.mxu0
        %v1987 = vadd.f32 %v1682, %v1986
        %v1988 = vpop.f32.mrf.mxu0
        %1989 = vmatprep.mubr.f32.mxu0 0.0
        %1990 = vmatmul.mubr.f32.gmra.mxu0 %v1349
        %v1991 = vpop.f32.mrf.mxu0
        %v1992 = vadd.f32 %v1687, %v1991
        %v1993 = vpop.f32.mrf.mxu0
        %1994 = vmatprep.mubr.f32.mxu0 0.0
        %1995 = vmatmul.mubr.f32.gmra.mxu0 %v1350
        %v1996 = vpop.f32.mrf.mxu0
        %v1997 = vadd.f32 %v1692, %v1996
        %v1998 = vpop.f32.mrf.mxu0
        %1999 = vmatprep.mubr.f32.mxu0 0.0
        %2000 = vmatmul.mubr.f32.gmra.mxu0 %v1351
        %v2001 = vpop.f32.mrf.mxu0
        %v2002 = vadd.f32 %v1697, %v2001
        %v2003 = vpop.f32.mrf.mxu0
        %2004 = vmatprep.mubr.f32.mxu0 0.0
        %2005 = vmatmul.mubr.f32.gmra.mxu0 %v1352
        %v2006 = vpop.f32.mrf.mxu0
        %v2007 = vadd.f32 %v1702, %v2006
        %v2008 = vpop.f32.mrf.mxu0
        %2009 = vmatprep.mubr.f32.mxu0 0.0
        %2010 = vmatmul.mubr.f32.gmra.mxu0 %v1353
        %v2011 = vpop.f32.mrf.mxu0
        %v2012 = vadd.f32 %v1707, %v2011
        %v2013 = vpop.f32.mrf.mxu0
        %2014 = vmatprep.mubr.f32.mxu0 0.0
        %2015 = vmatmul.mubr.f32.gmra.mxu0 %v1354
        %v2016 = vpop.f32.mrf.mxu0
        %v2017 = vadd.f32 %v1712, %v2016
        %v2018 = vpop.f32.mrf.mxu0
        %2019 = vmatprep.mubr.f32.mxu0 0.0
        %2020 = vmatmul.mubr.f32.gmra.mxu0 %v1355
        %v2021 = vpop.f32.mrf.mxu0
        %v2022 = vadd.f32 %v1717, %v2021
        %v2023 = vpop.f32.mrf.mxu0
        %2024 = vmatprep.mubr.f32.mxu0 0.0
        %2025 = vmatmul.mubr.f32.gmra.mxu0 %v1356
        %v2026 = vpop.f32.mrf.mxu0
        %v2027 = vadd.f32 %v1722, %v2026
        %v2028 = vpop.f32.mrf.mxu0
        %2029 = vmatprep.mubr.f32.mxu0 0.0
        %2030 = vmatmul.mubr.f32.gmra.mxu0 %v1357
        %v2031 = vpop.f32.mrf.mxu0
        %v2032 = vadd.f32 %v1727, %v2031
        %v2033 = vpop.f32.mrf.mxu0
        %2034 = vmatprep.mubr.f32.mxu0 0.0
        %2035 = vmatmul.mubr.f32.gmra.mxu0 %v1358
        %v2036 = vpop.f32.mrf.mxu0
        %v2037 = vadd.f32 %v1732, %v2036
        %v2038 = vpop.f32.mrf.mxu0
        %2039 = vmatprep.mubr.f32.mxu0 0.0
        %2040 = vmatmul.mubr.f32.gmra.mxu0 %v1359
        %v2041 = vpop.f32.mrf.mxu0
        %v2042 = vadd.f32 %v1737, %v2041
        %v2043 = vpop.f32.mrf.mxu0
        %2044 = vmatprep.mubr.f32.mxu0 0.0
        %2045 = vmatmul.mubr.f32.gmra.mxu0 %v1360
        %v2046 = vpop.f32.mrf.mxu0
        %v2047 = vadd.f32 %v1742, %v2046
        %v2048 = vpop.f32.mrf.mxu0
        %2049 = vmatprep.mubr.f32.mxu0 0.0
        %2050 = vmatmul.mubr.f32.gmra.mxu0 %v1361
        %v2051 = vpop.f32.mrf.mxu0
        %v2052 = vadd.f32 %v1747, %v2051
        %v2053 = vpop.f32.mrf.mxu0
        %2054 = vmatprep.mubr.f32.mxu0 0.0
        %2055 = vmatmul.mubr.f32.gmra.mxu0 %v1362
        %v2056 = vpop.f32.mrf.mxu0
        %v2057 = vadd.f32 %v1752, %v2056
        %v2058 = vpop.f32.mrf.mxu0
        %2059 = vmatprep.mubr.f32.mxu0 0.0
        %2060 = vmatmul.mubr.f32.gmra.mxu0 %v1363
        %v2061 = vpop.f32.mrf.mxu0
        %v2062 = vadd.f32 %v1757, %v2061
        %v2063 = vpop.f32.mrf.mxu0
        %2064 = vmatprep.mubr.f32.mxu0 0.0
        %2065 = vmatmul.mubr.f32.gmra.mxu0 %v1418
        %v2066 = vpop.f32.mrf.mxu0
        %v2067 = vadd.f32 %v1762, %v2066
        %v2068 = vpop.f32.mrf.mxu0
        %2069 = vmatprep.mubr.f32.mxu0 0.0
        %2070 = vmatmul.mubr.f32.gmra.mxu0 %v1419
        %v2071 = vpop.f32.mrf.mxu0
        %v2072 = vadd.f32 %v1767, %v2071
        %v2073 = vpop.f32.mrf.mxu0
        %2074 = vmatprep.mubr.f32.mxu0 0.0
        %2075 = vmatmul.mubr.f32.gmra.mxu0 %v1420
        %v2076 = vpop.f32.mrf.mxu0
        %v2077 = vadd.f32 %v1772, %v2076
        %v2078 = vpop.f32.mrf.mxu0
        %2079 = vdwg.mxu0
        %2080 = vmatprep.subr.mxu0 0.0
        %2081 = vmatpush1.msra.mxu0 %v1379
        %2082 = vmatprep.subr.mxu0 0.0
        %2083 = vmatpush1.msra.mxu0 %v1378
        %2084 = vmatprep.subr.mxu0 0.0
        %2085 = vmatpush1.msra.mxu0 %v1377
        %2086 = vmatprep.subr.mxu0 0.0
        %2087 = vmatpush1.msra.mxu0 %v1376
        %2088 = vmatprep.subr.mxu0 0.0
        %2089 = vmatpush1.msra.mxu0 %v1375
        %2090 = vmatprep.subr.mxu0 0.0
        %2091 = vmatpush1.msra.mxu0 %v1374
        %2092 = vmatprep.subr.mxu0 0.0
        %2093 = vmatpush1.msra.mxu0 %v1373
        %2094 = vmatprep.subr.mxu0 0.0
        %2095 = vmatpush1.msra.mxu0 %v1372
        %2096 = vmatprep.subr.mxu0 0.0
        %2097 = vmatpush1.msra.mxu0 %v1371
        %2098 = vmatprep.subr.mxu0 0.0
        %2099 = vmatpush1.msra.mxu0 %v1370
        %2100 = vmatprep.subr.mxu0 0.0
        %2101 = vmatpush1.msra.mxu0 %v1369
        %2102 = vmatprep.subr.mxu0 0.0
        %2103 = vmatpush1.msra.mxu0 %v1368
        %2104 = vmatprep.subr.mxu0 0.0
        %2105 = vmatpush1.msra.mxu0 %v1367
        %2106 = vmatprep.subr.mxu0 0.0
        %2107 = vmatpush1.msra.mxu0 %v1366
        %2108 = vmatprep.subr.mxu0 0.0
        %2109 = vmatpush1.msra.mxu0 %v1365
        %2110 = vmatprep.subr.mxu0 0.0
        %2111 = vmatpush1.msra.mxu0 %v1364
        %2112 = vmatprep.subr.mxu0 0.0
        %2113 = vmatpush2.msra.mxu0 %v1395
        %2114 = vmatprep.subr.mxu0 0.0
        %2115 = vmatpush2.msra.mxu0 %v1394
        %2116 = vmatprep.subr.mxu0 0.0
        %2117 = vmatpush2.msra.mxu0 %v1393
        %2118 = vmatprep.subr.mxu0 0.0
        %2119 = vmatpush2.msra.mxu0 %v1392
        %2120 = vmatprep.subr.mxu0 0.0
        %2121 = vmatpush2.msra.mxu0 %v1391
        %2122 = vmatprep.subr.mxu0 0.0
        %2123 = vmatpush2.msra.mxu0 %v1390
        %2124 = vmatprep.subr.mxu0 0.0
        %2125 = vmatpush2.msra.mxu0 %v1389
        %2126 = vmatprep.subr.mxu0 0.0
        %2127 = vmatpush2.msra.mxu0 %v1388
        %2128 = vmatprep.subr.mxu0 0.0
        %2129 = vmatpush2.msra.mxu0 %v1387
        %2130 = vmatprep.subr.mxu0 0.0
        %2131 = vmatpush2.msra.mxu0 %v1386
        %2132 = vmatprep.subr.mxu0 0.0
        %2133 = vmatpush2.msra.mxu0 %v1385
        %2134 = vmatprep.subr.mxu0 0.0
        %2135 = vmatpush2.msra.mxu0 %v1384
        %2136 = vmatprep.subr.mxu0 0.0
        %2137 = vmatpush2.msra.mxu0 %v1383
        %2138 = vmatprep.subr.mxu0 0.0
        %2139 = vmatpush2.msra.mxu0 %v1382
        %2140 = vmatprep.subr.mxu0 0.0
        %2141 = vmatpush2.msra.mxu0 %v1381
        %2142 = vmatprep.subr.mxu0 0.0
        %2143 = vmatpush2.msra.mxu0 %v1380
        %2144 = vmatprep.mubr.f32.mxu0 %v1268
        %2145 = vmatmul.mubr.f32.gmra.mxu0 %v1220
        %v2146 = vpop.f32.mrf.mxu0
        %v2147 = vadd.f32 %v1842, %v2146
        %v2148 = vpop.f32.mrf.mxu0
        %2149 = vmatprep.mubr.f32.mxu0 %v1269
        %2150 = vmatmul.mubr.f32.gmra.mxu0 %v1221
        %v2151 = vpop.f32.mrf.mxu0
        %v2152 = vadd.f32 %v1847, %v2151
        %v2153 = vpop.f32.mrf.mxu0
        %2154 = vmatprep.mubr.f32.mxu0 %v1270
        %2155 = vmatmul.mubr.f32.gmra.mxu0 %v1222
        %v2156 = vpop.f32.mrf.mxu0
        %v2157 = vadd.f32 %v1852, %v2156
        %v2158 = vpop.f32.mrf.mxu0
        %2159 = vmatprep.mubr.f32.mxu0 %v1271
        %2160 = vmatmul.mubr.f32.gmra.mxu0 %v1223
        %v2161 = vpop.f32.mrf.mxu0
        %v2162 = vadd.f32 %v1857, %v2161
        %v2163 = vpop.f32.mrf.mxu0
        %2164 = vmatprep.mubr.f32.mxu0 %v1272
        %2165 = vmatmul.mubr.f32.gmra.mxu0 %v1224
        %v2166 = vpop.f32.mrf.mxu0
        %v2167 = vadd.f32 %v1862, %v2166
        %v2168 = vpop.f32.mrf.mxu0
        %2169 = vmatprep.mubr.f32.mxu0 %v1273
        %2170 = vmatmul.mubr.f32.gmra.mxu0 %v1225
        %v2171 = vpop.f32.mrf.mxu0
        %v2172 = vadd.f32 %v1867, %v2171
        %v2173 = vpop.f32.mrf.mxu0
        %2174 = vmatprep.mubr.f32.mxu0 %v1274
        %2175 = vmatmul.mubr.f32.gmra.mxu0 %v1226
        %v2176 = vpop.f32.mrf.mxu0
        %v2177 = vadd.f32 %v1872, %v2176
        %v2178 = vpop.f32.mrf.mxu0
        %2179 = vmatprep.mubr.f32.mxu0 %v1275
        %2180 = vmatmul.mubr.f32.gmra.mxu0 %v1227
        %v2181 = vpop.f32.mrf.mxu0
        %v2182 = vadd.f32 %v1877, %v2181
        %v2183 = vpop.f32.mrf.mxu0
        %2184 = vmatprep.mubr.f32.mxu0 %v1276
        %2185 = vmatmul.mubr.f32.gmra.mxu0 %v1228
        %v2186 = vpop.f32.mrf.mxu0
        %v2187 = vadd.f32 %v1882, %v2186
        %v2188 = vpop.f32.mrf.mxu0
        %2189 = vmatprep.mubr.f32.mxu0 %v1277
        %2190 = vmatmul.mubr.f32.gmra.mxu0 %v1229
        %v2191 = vpop.f32.mrf.mxu0
        %v2192 = vadd.f32 %v1887, %v2191
        %v2193 = vpop.f32.mrf.mxu0
        %2194 = vmatprep.mubr.f32.mxu0 %v1278
        %2195 = vmatmul.mubr.f32.gmra.mxu0 %v1230
        %v2196 = vpop.f32.mrf.mxu0
        %v2197 = vadd.f32 %v1892, %v2196
        %v2198 = vpop.f32.mrf.mxu0
        %2199 = vmatprep.mubr.f32.mxu0 %v1279
        %2200 = vmatmul.mubr.f32.gmra.mxu0 %v1231
        %v2201 = vpop.f32.mrf.mxu0
        %v2202 = vadd.f32 %v1897, %v2201
        %v2203 = vpop.f32.mrf.mxu0
        %2204 = vmatprep.mubr.f32.mxu0 %v1280
        %2205 = vmatmul.mubr.f32.gmra.mxu0 %v1232
        %v2206 = vpop.f32.mrf.mxu0
        %v2207 = vadd.f32 %v1902, %v2206
        %v2208 = vpop.f32.mrf.mxu0
        %2209 = vmatprep.mubr.f32.mxu0 %v1281
        %2210 = vmatmul.mubr.f32.gmra.mxu0 %v1233
        %v2211 = vpop.f32.mrf.mxu0
        %v2212 = vadd.f32 %v1907, %v2211
        %v2213 = vpop.f32.mrf.mxu0
        %2214 = vmatprep.mubr.f32.mxu0 %v1282
        %2215 = vmatmul.mubr.f32.gmra.mxu0 %v1234
        %v2216 = vpop.f32.mrf.mxu0
        %v2217 = vadd.f32 %v1912, %v2216
        %v2218 = vpop.f32.mrf.mxu0
        %2219 = vmatprep.mubr.f32.mxu0 %v1283
        %2220 = vmatmul.mubr.f32.gmra.mxu0 %v1235
        %v2221 = vpop.f32.mrf.mxu0
        %v2222 = vadd.f32 %v1917, %v2221
        %v2223 = vpop.f32.mrf.mxu0
        %2224 = vmatprep.mubr.f32.mxu0 %v1284
        %2225 = vmatmul.mubr.f32.gmra.mxu0 %v1236
        %v2226 = vpop.f32.mrf.mxu0
        %v2227 = vadd.f32 %v1922, %v2226
        %v2228 = vpop.f32.mrf.mxu0
        %2229 = vmatprep.mubr.f32.mxu0 %v1285
        %2230 = vmatmul.mubr.f32.gmra.mxu0 %v1237
        %v2231 = vpop.f32.mrf.mxu0
        %v2232 = vadd.f32 %v1927, %v2231
        %v2233 = vpop.f32.mrf.mxu0
        %2234 = vmatprep.mubr.f32.mxu0 %v1286
        %2235 = vmatmul.mubr.f32.gmra.mxu0 %v1238
        %v2236 = vpop.f32.mrf.mxu0
        %v2237 = vadd.f32 %v1932, %v2236
        %v2238 = vpop.f32.mrf.mxu0
        %2239 = vmatprep.mubr.f32.mxu0 %v1287
        %2240 = vmatmul.mubr.f32.gmra.mxu0 %v1239
        %v2241 = vpop.f32.mrf.mxu0
        %v2242 = vadd.f32 %v1937, %v2241
        %v2243 = vpop.f32.mrf.mxu0
        %2244 = vmatprep.mubr.f32.mxu0 %v1288
        %2245 = vmatmul.mubr.f32.gmra.mxu0 %v1240
        %v2246 = vpop.f32.mrf.mxu0
        %v2247 = vadd.f32 %v1942, %v2246
        %v2248 = vpop.f32.mrf.mxu0
        %2249 = vmatprep.mubr.f32.mxu0 %v1289
        %2250 = vmatmul.mubr.f32.gmra.mxu0 %v1241
        %v2251 = vpop.f32.mrf.mxu0
        %v2252 = vadd.f32 %v1947, %v2251
        %v2253 = vpop.f32.mrf.mxu0
        %2254 = vmatprep.mubr.f32.mxu0 %v1290
        %2255 = vmatmul.mubr.f32.gmra.mxu0 %v1242
        %v2256 = vpop.f32.mrf.mxu0
        %v2257 = vadd.f32 %v1952, %v2256
        %v2258 = vpop.f32.mrf.mxu0
        %2259 = vmatprep.mubr.f32.mxu0 %v1291
        %2260 = vmatmul.mubr.f32.gmra.mxu0 %v1243
        %v2261 = vpop.f32.mrf.mxu0
        %v2262 = vadd.f32 %v1957, %v2261
        %v2263 = vpop.f32.mrf.mxu0
        %2264 = vmatprep.mubr.f32.mxu0 %v1292
        %2265 = vmatmul.mubr.f32.gmra.mxu0 %v1244
        %v2266 = vpop.f32.mrf.mxu0
        %v2267 = vadd.f32 %v1962, %v2266
        %v2268 = vpop.f32.mrf.mxu0
        %2269 = vmatprep.mubr.f32.mxu0 %v1293
        %2270 = vmatmul.mubr.f32.gmra.mxu0 %v1245
        %v2271 = vpop.f32.mrf.mxu0
        %v2272 = vadd.f32 %v1967, %v2271
        %v2273 = vpop.f32.mrf.mxu0
        %2274 = vmatprep.mubr.f32.mxu0 %v1294
        %2275 = vmatmul.mubr.f32.gmra.mxu0 %v1246
        %v2276 = vpop.f32.mrf.mxu0
        %v2277 = vadd.f32 %v1972, %v2276
        %v2278 = vpop.f32.mrf.mxu0
        %2279 = vmatprep.mubr.f32.mxu0 %v1295
        %2280 = vmatmul.mubr.f32.gmra.mxu0 %v1247
        %v2281 = vpop.f32.mrf.mxu0
        %v2282 = vadd.f32 %v1977, %v2281
        %v2283 = vpop.f32.mrf.mxu0
        %2284 = vmatprep.mubr.f32.mxu0 %v1296
        %2285 = vmatmul.mubr.f32.gmra.mxu0 %v1248
        %v2286 = vpop.f32.mrf.mxu0
        %v2287 = vadd.f32 %v1982, %v2286
        %v2288 = vpop.f32.mrf.mxu0
        %2289 = vmatprep.mubr.f32.mxu0 %v1297
        %2290 = vmatmul.mubr.f32.gmra.mxu0 %v1249
        %v2291 = vpop.f32.mrf.mxu0
        %v2292 = vadd.f32 %v1987, %v2291
        %v2293 = vpop.f32.mrf.mxu0
        %2294 = vmatprep.mubr.f32.mxu0 %v1298
        %2295 = vmatmul.mubr.f32.gmra.mxu0 %v1250
        %v2296 = vpop.f32.mrf.mxu0
        %v2297 = vadd.f32 %v1992, %v2296
        %v2298 = vpop.f32.mrf.mxu0
        %2299 = vmatprep.mubr.f32.mxu0 %v1299
        %2300 = vmatmul.mubr.f32.gmra.mxu0 %v1251
        %v2301 = vpop.f32.mrf.mxu0
        %v2302 = vadd.f32 %v1997, %v2301
        %v2303 = vpop.f32.mrf.mxu0
        %2304 = vmatprep.mubr.f32.mxu0 %v1300
        %2305 = vmatmul.mubr.f32.gmra.mxu0 %v1252
        %v2306 = vpop.f32.mrf.mxu0
        %v2307 = vadd.f32 %v2002, %v2306
        %v2308 = vpop.f32.mrf.mxu0
        %2309 = vmatprep.mubr.f32.mxu0 %v1301
        %2310 = vmatmul.mubr.f32.gmra.mxu0 %v1253
        %v2311 = vpop.f32.mrf.mxu0
        %v2312 = vadd.f32 %v2007, %v2311
        %v2313 = vpop.f32.mrf.mxu0
        %2314 = vmatprep.mubr.f32.mxu0 %v1302
        %2315 = vmatmul.mubr.f32.gmra.mxu0 %v1254
        %v2316 = vpop.f32.mrf.mxu0
        %v2317 = vadd.f32 %v2012, %v2316
        %v2318 = vpop.f32.mrf.mxu0
        %2319 = vmatprep.mubr.f32.mxu0 %v1303
        %2320 = vmatmul.mubr.f32.gmra.mxu0 %v1255
        %v2321 = vpop.f32.mrf.mxu0
        %v2322 = vadd.f32 %v2017, %v2321
        %v2323 = vpop.f32.mrf.mxu0
        %2324 = vmatprep.mubr.f32.mxu0 %v1304
        %2325 = vmatmul.mubr.f32.gmra.mxu0 %v1256
        %v2326 = vpop.f32.mrf.mxu0
        %v2327 = vadd.f32 %v2022, %v2326
        %v2328 = vpop.f32.mrf.mxu0
        %2329 = vmatprep.mubr.f32.mxu0 %v1305
        %2330 = vmatmul.mubr.f32.gmra.mxu0 %v1257
        %v2331 = vpop.f32.mrf.mxu0
        %v2332 = vadd.f32 %v2027, %v2331
        %v2333 = vpop.f32.mrf.mxu0
        %2334 = vmatprep.mubr.f32.mxu0 %v1306
        %2335 = vmatmul.mubr.f32.gmra.mxu0 %v1258
        %v2336 = vpop.f32.mrf.mxu0
        %v2337 = vadd.f32 %v2032, %v2336
        %v2338 = vpop.f32.mrf.mxu0
        %2339 = vmatprep.mubr.f32.mxu0 %v1307
        %2340 = vmatmul.mubr.f32.gmra.mxu0 %v1259
        %v2341 = vpop.f32.mrf.mxu0
        %v2342 = vadd.f32 %v2037, %v2341
        %v2343 = vpop.f32.mrf.mxu0
        %2344 = vmatprep.mubr.f32.mxu0 %v1308
        %2345 = vmatmul.mubr.f32.gmra.mxu0 %v1260
        %v2346 = vpop.f32.mrf.mxu0
        %v2347 = vadd.f32 %v2042, %v2346
        %v2348 = vpop.f32.mrf.mxu0
        %2349 = vmatprep.mubr.f32.mxu0 %v1309
        %2350 = vmatmul.mubr.f32.gmra.mxu0 %v1261
        %v2351 = vpop.f32.mrf.mxu0
        %v2352 = vadd.f32 %v2047, %v2351
        %v2353 = vpop.f32.mrf.mxu0
        %2354 = vmatprep.mubr.f32.mxu0 %v1310
        %2355 = vmatmul.mubr.f32.gmra.mxu0 %v1262
        %v2356 = vpop.f32.mrf.mxu0
        %v2357 = vadd.f32 %v2052, %v2356
        %v2358 = vpop.f32.mrf.mxu0
        %2359 = vmatprep.mubr.f32.mxu0 %v1311
        %2360 = vmatmul.mubr.f32.gmra.mxu0 %v1263
        %v2361 = vpop.f32.mrf.mxu0
        %v2362 = vadd.f32 %v2057, %v2361
        %v2363 = vpop.f32.mrf.mxu0
        %2364 = vmatprep.mubr.f32.mxu0 %v1312
        %2365 = vmatmul.mubr.f32.gmra.mxu0 %v1264
        %v2366 = vpop.f32.mrf.mxu0
        %v2367 = vadd.f32 %v2062, %v2366
        %v2368 = vpop.f32.mrf.mxu0
        %2369 = vmatprep.mubr.f32.mxu0 %v1313
        %2370 = vmatmul.mubr.f32.gmra.mxu0 %v1265
        %v2371 = vpop.f32.mrf.mxu0
        %v2372 = vadd.f32 %v2067, %v2371
        %v2373 = vpop.f32.mrf.mxu0
        %2374 = vmatprep.mubr.f32.mxu0 %v1314
        %2375 = vmatmul.mubr.f32.gmra.mxu0 %v1266
        %v2376 = vpop.f32.mrf.mxu0
        %v2377 = vadd.f32 %v2072, %v2376
        %v2378 = vpop.f32.mrf.mxu0
        %2379 = vmatprep.mubr.f32.mxu0 %v1315
        %2380 = vmatmul.mubr.f32.gmra.mxu0 %v1267
        %v2381 = vpop.f32.mrf.mxu0
        %v2382 = vadd.f32 %v2077, %v2381
        %v2383 = vpop.f32.mrf.mxu0
        %2384 = vdwg.mxu0
        %2385 = vmatprep.subr.mxu0 0.0
        %2386 = vmatpush1.msra.mxu0 %v1411
        %2387 = vmatprep.subr.mxu0 0.0
        %2388 = vmatpush1.msra.mxu0 %v1410
        %2389 = vmatprep.subr.mxu0 0.0
        %2390 = vmatpush1.msra.mxu0 %v1409
        %2391 = vmatprep.subr.mxu0 0.0
        %2392 = vmatpush1.msra.mxu0 %v1408
        %2393 = vmatprep.subr.mxu0 0.0
        %2394 = vmatpush1.msra.mxu0 %v1407
        %2395 = vmatprep.subr.mxu0 0.0
        %2396 = vmatpush1.msra.mxu0 %v1406
        %2397 = vmatprep.subr.mxu0 0.0
        %2398 = vmatpush1.msra.mxu0 %v1405
        %2399 = vmatprep.subr.mxu0 0.0
        %2400 = vmatpush1.msra.mxu0 %v1404
        %2401 = vmatprep.subr.mxu0 0.0
        %2402 = vmatpush1.msra.mxu0 %v1403
        %2403 = vmatprep.subr.mxu0 0.0
        %2404 = vmatpush1.msra.mxu0 %v1402
        %2405 = vmatprep.subr.mxu0 0.0
        %2406 = vmatpush1.msra.mxu0 %v1401
        %2407 = vmatprep.subr.mxu0 0.0
        %2408 = vmatpush1.msra.mxu0 %v1400
        %2409 = vmatprep.subr.mxu0 0.0
        %2410 = vmatpush1.msra.mxu0 %v1399
        %2411 = vmatprep.subr.mxu0 0.0
        %2412 = vmatpush1.msra.mxu0 %v1398
        %2413 = vmatprep.subr.mxu0 0.0
        %2414 = vmatpush1.msra.mxu0 %v1397
        %2415 = vmatprep.subr.mxu0 0.0
        %2416 = vmatpush1.msra.mxu0 %v1396
        %2417 = vmatprep.subr.mxu0 0.0
        %2418 = vmatpush2.msra.mxu0 0.0
        %2419 = vmatprep.subr.mxu0 0.0
        %2420 = vmatpush2.msra.mxu0 0.0
        %2421 = vmatprep.subr.mxu0 0.0
        %2422 = vmatpush2.msra.mxu0 0.0
        %2423 = vmatprep.subr.mxu0 0.0
        %2424 = vmatpush2.msra.mxu0 0.0
        %2425 = vmatprep.subr.mxu0 0.0
        %2426 = vmatpush2.msra.mxu0 0.0
        %2427 = vmatprep.subr.mxu0 0.0
        %2428 = vmatpush2.msra.mxu0 0.0
        %2429 = vmatprep.subr.mxu0 0.0
        %2430 = vmatpush2.msra.mxu0 0.0
        %2431 = vmatprep.subr.mxu0 0.0
        %2432 = vmatpush2.msra.mxu0 0.0
        %2433 = vmatprep.subr.mxu0 0.0
        %2434 = vmatpush2.msra.mxu0 0.0
        %2435 = vmatprep.subr.mxu0 0.0
        %2436 = vmatpush2.msra.mxu0 0.0
        %2437 = vmatprep.subr.mxu0 0.0
        %2438 = vmatpush2.msra.mxu0 0.0
        %2439 = vmatprep.subr.mxu0 0.0
        %2440 = vmatpush2.msra.mxu0 0.0
        %2441 = vmatprep.subr.mxu0 0.0
        %2442 = vmatpush2.msra.mxu0 0.0
        %2443 = vmatprep.subr.mxu0 0.0
        %2444 = vmatpush2.msra.mxu0 0.0
        %2445 = vmatprep.subr.mxu0 0.0
        %2446 = vmatpush2.msra.mxu0 0.0
        %2447 = vmatprep.subr.mxu0 0.0
        %2448 = vmatpush2.msra.mxu0 0.0
        %2449 = vmatprep.mubr.f32.mxu0 0.0
        %2450 = vmatmul.mubr.f32.gmra.mxu0 %v1316
        %v2451 = vpop.f32.mrf.mxu0
        %v2452 = vadd.f32 %v2147, %v2451
        %v2453 = vpop.f32.mrf.mxu0
        %2454 = vmatprep.mubr.f32.mxu0 0.0
        %2455 = vmatmul.mubr.f32.gmra.mxu0 %v1317
        %v2456 = vpop.f32.mrf.mxu0
        %v2457 = vadd.f32 %v2152, %v2456
        %v2458 = vpop.f32.mrf.mxu0
        %2459 = vmatprep.mubr.f32.mxu0 0.0
        %2460 = vmatmul.mubr.f32.gmra.mxu0 %v1318
        %v2461 = vpop.f32.mrf.mxu0
        %v2462 = vadd.f32 %v2157, %v2461
        %v2463 = vpop.f32.mrf.mxu0
        %2464 = vmatprep.mubr.f32.mxu0 0.0
        %2465 = vmatmul.mubr.f32.gmra.mxu0 %v1319
        %v2466 = vpop.f32.mrf.mxu0
        %v2467 = vadd.f32 %v2162, %v2466
        %v2468 = vpop.f32.mrf.mxu0
        %2469 = vmatprep.mubr.f32.mxu0 0.0
        %2470 = vmatmul.mubr.f32.gmra.mxu0 %v1320
        %v2471 = vpop.f32.mrf.mxu0
        %v2472 = vadd.f32 %v2167, %v2471
        %v2473 = vpop.f32.mrf.mxu0
        %2474 = vmatprep.mubr.f32.mxu0 0.0
        %2475 = vmatmul.mubr.f32.gmra.mxu0 %v1321
        %v2476 = vpop.f32.mrf.mxu0
        %v2477 = vadd.f32 %v2172, %v2476
        %v2478 = vpop.f32.mrf.mxu0
        %2479 = vmatprep.mubr.f32.mxu0 0.0
        %2480 = vmatmul.mubr.f32.gmra.mxu0 %v1322
        %v2481 = vpop.f32.mrf.mxu0
        %v2482 = vadd.f32 %v2177, %v2481
        %v2483 = vpop.f32.mrf.mxu0
        %2484 = vmatprep.mubr.f32.mxu0 0.0
        %2485 = vmatmul.mubr.f32.gmra.mxu0 %v1323
        %v2486 = vpop.f32.mrf.mxu0
        %v2487 = vadd.f32 %v2182, %v2486
        %v2488 = vpop.f32.mrf.mxu0
        %2489 = vmatprep.mubr.f32.mxu0 0.0
        %2490 = vmatmul.mubr.f32.gmra.mxu0 %v1324
        %v2491 = vpop.f32.mrf.mxu0
        %v2492 = vadd.f32 %v2187, %v2491
        %v2493 = vpop.f32.mrf.mxu0
        %2494 = vmatprep.mubr.f32.mxu0 0.0
        %2495 = vmatmul.mubr.f32.gmra.mxu0 %v1325
        %v2496 = vpop.f32.mrf.mxu0
        %v2497 = vadd.f32 %v2192, %v2496
        %v2498 = vpop.f32.mrf.mxu0
        %2499 = vmatprep.mubr.f32.mxu0 0.0
        %2500 = vmatmul.mubr.f32.gmra.mxu0 %v1326
        %v2501 = vpop.f32.mrf.mxu0
        %v2502 = vadd.f32 %v2197, %v2501
        %v2503 = vpop.f32.mrf.mxu0
        %2504 = vmatprep.mubr.f32.mxu0 0.0
        %2505 = vmatmul.mubr.f32.gmra.mxu0 %v1327
        %v2506 = vpop.f32.mrf.mxu0
        %v2507 = vadd.f32 %v2202, %v2506
        %v2508 = vpop.f32.mrf.mxu0
        %2509 = vmatprep.mubr.f32.mxu0 0.0
        %2510 = vmatmul.mubr.f32.gmra.mxu0 %v1328
        %v2511 = vpop.f32.mrf.mxu0
        %v2512 = vadd.f32 %v2207, %v2511
        %v2513 = vpop.f32.mrf.mxu0
        %2514 = vmatprep.mubr.f32.mxu0 0.0
        %2515 = vmatmul.mubr.f32.gmra.mxu0 %v1329
        %v2516 = vpop.f32.mrf.mxu0
        %v2517 = vadd.f32 %v2212, %v2516
        %v2518 = vpop.f32.mrf.mxu0
        %2519 = vmatprep.mubr.f32.mxu0 0.0
        %2520 = vmatmul.mubr.f32.gmra.mxu0 %v1330
        %v2521 = vpop.f32.mrf.mxu0
        %v2522 = vadd.f32 %v2217, %v2521
        %v2523 = vpop.f32.mrf.mxu0
        %2524 = vmatprep.mubr.f32.mxu0 0.0
        %2525 = vmatmul.mubr.f32.gmra.mxu0 %v1331
        %v2526 = vpop.f32.mrf.mxu0
        %v2527 = vadd.f32 %v2222, %v2526
        %v2528 = vpop.f32.mrf.mxu0
        %2529 = vmatprep.mubr.f32.mxu0 0.0
        %2530 = vmatmul.mubr.f32.gmra.mxu0 %v1332
        %v2531 = vpop.f32.mrf.mxu0
        %v2532 = vadd.f32 %v2227, %v2531
        %v2533 = vpop.f32.mrf.mxu0
        %2534 = vmatprep.mubr.f32.mxu0 0.0
        %2535 = vmatmul.mubr.f32.gmra.mxu0 %v1333
        %v2536 = vpop.f32.mrf.mxu0
        %v2537 = vadd.f32 %v2232, %v2536
        %v2538 = vpop.f32.mrf.mxu0
        %2539 = vmatprep.mubr.f32.mxu0 0.0
        %2540 = vmatmul.mubr.f32.gmra.mxu0 %v1334
        %v2541 = vpop.f32.mrf.mxu0
        %v2542 = vadd.f32 %v2237, %v2541
        %v2543 = vpop.f32.mrf.mxu0
        %2544 = vmatprep.mubr.f32.mxu0 0.0
        %2545 = vmatmul.mubr.f32.gmra.mxu0 %v1335
        %v2546 = vpop.f32.mrf.mxu0
        %v2547 = vadd.f32 %v2242, %v2546
        %v2548 = vpop.f32.mrf.mxu0
        %2549 = vmatprep.mubr.f32.mxu0 0.0
        %2550 = vmatmul.mubr.f32.gmra.mxu0 %v1336
        %v2551 = vpop.f32.mrf.mxu0
        %v2552 = vadd.f32 %v2247, %v2551
        %v2553 = vpop.f32.mrf.mxu0
        %2554 = vmatprep.mubr.f32.mxu0 0.0
        %2555 = vmatmul.mubr.f32.gmra.mxu0 %v1337
        %v2556 = vpop.f32.mrf.mxu0
        %v2557 = vadd.f32 %v2252, %v2556
        %v2558 = vpop.f32.mrf.mxu0
        %2559 = vmatprep.mubr.f32.mxu0 0.0
        %2560 = vmatmul.mubr.f32.gmra.mxu0 %v1338
        %v2561 = vpop.f32.mrf.mxu0
        %v2562 = vadd.f32 %v2257, %v2561
        %v2563 = vpop.f32.mrf.mxu0
        %2564 = vmatprep.mubr.f32.mxu0 0.0
        %2565 = vmatmul.mubr.f32.gmra.mxu0 %v1339
        %v2566 = vpop.f32.mrf.mxu0
        %v2567 = vadd.f32 %v2262, %v2566
        %v2568 = vpop.f32.mrf.mxu0
        %2569 = vmatprep.mubr.f32.mxu0 0.0
        %2570 = vmatmul.mubr.f32.gmra.mxu0 %v1340
        %v2571 = vpop.f32.mrf.mxu0
        %v2572 = vadd.f32 %v2267, %v2571
        %v2573 = vpop.f32.mrf.mxu0
        %2574 = vmatprep.mubr.f32.mxu0 0.0
        %2575 = vmatmul.mubr.f32.gmra.mxu0 %v1341
        %v2576 = vpop.f32.mrf.mxu0
        %v2577 = vadd.f32 %v2272, %v2576
        %v2578 = vpop.f32.mrf.mxu0
        %2579 = vmatprep.mubr.f32.mxu0 0.0
        %2580 = vmatmul.mubr.f32.gmra.mxu0 %v1342
        %v2581 = vpop.f32.mrf.mxu0
        %v2582 = vadd.f32 %v2277, %v2581
        %v2583 = vpop.f32.mrf.mxu0
        %2584 = vmatprep.mubr.f32.mxu0 0.0
        %2585 = vmatmul.mubr.f32.gmra.mxu0 %v1343
        %v2586 = vpop.f32.mrf.mxu0
        %v2587 = vadd.f32 %v2282, %v2586
        %v2588 = vpop.f32.mrf.mxu0
        %2589 = vmatprep.mubr.f32.mxu0 0.0
        %2590 = vmatmul.mubr.f32.gmra.mxu0 %v1344
        %v2591 = vpop.f32.mrf.mxu0
        %v2592 = vadd.f32 %v2287, %v2591
        %v2593 = vpop.f32.mrf.mxu0
        %2594 = vmatprep.mubr.f32.mxu0 0.0
        %2595 = vmatmul.mubr.f32.gmra.mxu0 %v1345
        %v2596 = vpop.f32.mrf.mxu0
        %v2597 = vadd.f32 %v2292, %v2596
        %v2598 = vpop.f32.mrf.mxu0
        %2599 = vmatprep.mubr.f32.mxu0 0.0
        %2600 = vmatmul.mubr.f32.gmra.mxu0 %v1346
        %v2601 = vpop.f32.mrf.mxu0
        %v2602 = vadd.f32 %v2297, %v2601
        %v2603 = vpop.f32.mrf.mxu0
        %2604 = vmatprep.mubr.f32.mxu0 0.0
        %2605 = vmatmul.mubr.f32.gmra.mxu0 %v1347
        %v2606 = vpop.f32.mrf.mxu0
        %v2607 = vadd.f32 %v2302, %v2606
        %v2608 = vpop.f32.mrf.mxu0
        %2609 = vmatprep.mubr.f32.mxu0 0.0
        %2610 = vmatmul.mubr.f32.gmra.mxu0 %v1348
        %v2611 = vpop.f32.mrf.mxu0
        %v2612 = vadd.f32 %v2307, %v2611
        %v2613 = vpop.f32.mrf.mxu0
        %2614 = vmatprep.mubr.f32.mxu0 0.0
        %2615 = vmatmul.mubr.f32.gmra.mxu0 %v1349
        %v2616 = vpop.f32.mrf.mxu0
        %v2617 = vadd.f32 %v2312, %v2616
        %v2618 = vpop.f32.mrf.mxu0
        %2619 = vmatprep.mubr.f32.mxu0 0.0
        %2620 = vmatmul.mubr.f32.gmra.mxu0 %v1350
        %v2621 = vpop.f32.mrf.mxu0
        %v2622 = vadd.f32 %v2317, %v2621
        %v2623 = vpop.f32.mrf.mxu0
        %2624 = vmatprep.mubr.f32.mxu0 0.0
        %2625 = vmatmul.mubr.f32.gmra.mxu0 %v1351
        %v2626 = vpop.f32.mrf.mxu0
        %v2627 = vadd.f32 %v2322, %v2626
        %v2628 = vpop.f32.mrf.mxu0
        %2629 = vmatprep.mubr.f32.mxu0 0.0
        %2630 = vmatmul.mubr.f32.gmra.mxu0 %v1352
        %v2631 = vpop.f32.mrf.mxu0
        %v2632 = vadd.f32 %v2327, %v2631
        %v2633 = vpop.f32.mrf.mxu0
        %2634 = vmatprep.mubr.f32.mxu0 0.0
        %2635 = vmatmul.mubr.f32.gmra.mxu0 %v1353
        %v2636 = vpop.f32.mrf.mxu0
        %v2637 = vadd.f32 %v2332, %v2636
        %v2638 = vpop.f32.mrf.mxu0
        %2639 = vmatprep.mubr.f32.mxu0 0.0
        %2640 = vmatmul.mubr.f32.gmra.mxu0 %v1354
        %v2641 = vpop.f32.mrf.mxu0
        %v2642 = vadd.f32 %v2337, %v2641
        %v2643 = vpop.f32.mrf.mxu0
        %2644 = vmatprep.mubr.f32.mxu0 0.0
        %2645 = vmatmul.mubr.f32.gmra.mxu0 %v1355
        %v2646 = vpop.f32.mrf.mxu0
        %v2647 = vadd.f32 %v2342, %v2646
        %v2648 = vpop.f32.mrf.mxu0
        %2649 = vmatprep.mubr.f32.mxu0 0.0
        %2650 = vmatmul.mubr.f32.gmra.mxu0 %v1356
        %v2651 = vpop.f32.mrf.mxu0
        %v2652 = vadd.f32 %v2347, %v2651
        %v2653 = vpop.f32.mrf.mxu0
        %2654 = vmatprep.mubr.f32.mxu0 0.0
        %2655 = vmatmul.mubr.f32.gmra.mxu0 %v1357
        %v2656 = vpop.f32.mrf.mxu0
        %v2657 = vadd.f32 %v2352, %v2656
        %v2658 = vpop.f32.mrf.mxu0
        %2659 = vmatprep.mubr.f32.mxu0 0.0
        %2660 = vmatmul.mubr.f32.gmra.mxu0 %v1358
        %v2661 = vpop.f32.mrf.mxu0
        %v2662 = vadd.f32 %v2357, %v2661
        %v2663 = vpop.f32.mrf.mxu0
        %2664 = vmatprep.mubr.f32.mxu0 0.0
        %2665 = vmatmul.mubr.f32.gmra.mxu0 %v1359
        %v2666 = vpop.f32.mrf.mxu0
        %v2667 = vadd.f32 %v2362, %v2666
        %v2668 = vpop.f32.mrf.mxu0
        %2669 = vmatprep.mubr.f32.mxu0 0.0
        %2670 = vmatmul.mubr.f32.gmra.mxu0 %v1360
        %v2671 = vpop.f32.mrf.mxu0
        %v2672 = vadd.f32 %v2367, %v2671
        %v2673 = vpop.f32.mrf.mxu0
        %2674 = vmatprep.mubr.f32.mxu0 0.0
        %2675 = vmatmul.mubr.f32.gmra.mxu0 %v1361
        %v2676 = vpop.f32.mrf.mxu0
        %v2677 = vadd.f32 %v2372, %v2676
        %v2678 = vpop.f32.mrf.mxu0
        %2679 = vmatprep.mubr.f32.mxu0 0.0
        %2680 = vmatmul.mubr.f32.gmra.mxu0 %v1362
        %v2681 = vpop.f32.mrf.mxu0
        %v2682 = vadd.f32 %v2377, %v2681
        %v2683 = vpop.f32.mrf.mxu0
        %2684 = vmatprep.mubr.f32.mxu0 0.0
        %2685 = vmatmul.mubr.f32.gmra.mxu0 %v1363
        %v2686 = vpop.f32.mrf.mxu0
        %v2687 = vadd.f32 %v2382, %v2686
        %v2688 = vpop.f32.mrf.mxu0
        %2689 = vdwg.mxu0
        %v2690 = vld [vmem:[%s221 + $0x37] sm:$0xff]
        %v2691 = vld [vmem:[%s221 + $0x3f] sm:$0xff]
        %v2692 = vld [vmem:[%s221 + $0x47] sm:$0xff]
        %v2693 = vld [vmem:[%s221 + $0x4f] sm:$0xff]
        %v2694 = vld [vmem:[%s221 + $0x57] sm:$0xff]
        %v2695 = vld [vmem:[%s221 + $0x5f] sm:$0xff]
        %v2696 = vld [vmem:[%s221 + $0x67] sm:$0xff]
        %v2697 = vld [vmem:[%s221 + $0x6f] sm:$0xff]
        %v2698 = vld [vmem:[%s221 + $0x77] sm:$0xff]
        %v2699 = vld [vmem:[%s221 + $0x7f] sm:$0xff]
        %v2700 = vld [vmem:[%s221 + $0x87] sm:$0xff]
        %v2701 = vld [vmem:[%s221 + $0x8f] sm:$0xff]
        %v2702 = vld [vmem:[%s221 + $0x97] sm:$0xff]
        %v2703 = vld [vmem:[%s221 + $0x9f] sm:$0xff]
        %v2704 = vld [vmem:[%s221 + $0xa7] sm:$0xff]
        %v2705 = vld [vmem:[%s221 + $0xaf] sm:$0xff]
        %v2706 = vld [vmem:[%s221 + $0xb7] sm:$0xff]
        %v2707 = vld [vmem:[%s221 + $0xbf] sm:$0xff]
        %v2708 = vld [vmem:[%s221 + $0xc7] sm:$0xff]
        %v2709 = vld [vmem:[%s221 + $0xcf] sm:$0xff]
        %v2710 = vld [vmem:[%s221 + $0xd7] sm:$0xff]
        %v2711 = vld [vmem:[%s221 + $0xdf] sm:$0xff]
        %v2712 = vld [vmem:[%s221 + $0xe7] sm:$0xff]
        %v2713 = vld [vmem:[%s221 + $0xef] sm:$0xff]
        %v2714 = vld [vmem:[%s221 + $0xf7] sm:$0xff]
        %v2715 = vld [vmem:[%s221 + $0xff] sm:$0xff]
        %v2716 = vld [vmem:[%s221 + $0x107] sm:$0xff]
        %v2717 = vld [vmem:[%s221 + $0x10f] sm:$0xff]
        %v2718 = vld [vmem:[%s221 + $0x117] sm:$0xff]
        %v2719 = vld [vmem:[%s221 + $0x11f] sm:$0xff]
        %v2720 = vld [vmem:[%s221 + $0x127] sm:$0xff]
        %v2721 = vld [vmem:[%s221 + $0x12f] sm:$0xff]
        %v2722 = vld [vmem:[%s221 + $0x137] sm:$0xff]
        %v2723 = vld [vmem:[%s221 + $0x13f] sm:$0xff]
        %v2724 = vld [vmem:[%s221 + $0x147] sm:$0xff]
        %v2725 = vld [vmem:[%s221 + $0x14f] sm:$0xff]
        %v2726 = vld [vmem:[%s221 + $0x157] sm:$0xff]
        %v2727 = vld [vmem:[%s221 + $0x15f] sm:$0xff]
        %v2728 = vld [vmem:[%s221 + $0x167] sm:$0xff]
        %v2729 = vld [vmem:[%s221 + $0x16f] sm:$0xff]
        %v2730 = vld [vmem:[%s221 + $0x177] sm:$0xff]
        %v2731 = vld [vmem:[%s221 + $0x17f] sm:$0xff]
        %v2732 = vld [vmem:[%s221 + $0x187] sm:$0xff]
        %v2733 = vld [vmem:[%s221 + $0x18f] sm:$0xff]
        %v2734 = vld [vmem:[%s221 + $0x197] sm:$0xff]
        %v2735 = vld [vmem:[%s221 + $0x19f] sm:$0xff]
        %v2736 = vld [vmem:[%s221 + $0x1a7] sm:$0xff]
        %v2737 = vld [vmem:[%s221 + $0x1af] sm:$0xff]
        %v2738 = vld [vmem:[%s221 + $0x38] sm:$0xff]
        %v2739 = vld [vmem:[%s221 + $0x40] sm:$0xff]
        %v2740 = vld [vmem:[%s221 + $0x48] sm:$0xff]
        %v2741 = vld [vmem:[%s221 + $0x50] sm:$0xff]
        %v2742 = vld [vmem:[%s221 + $0x58] sm:$0xff]
        %v2743 = vld [vmem:[%s221 + $0x60] sm:$0xff]
        %v2744 = vld [vmem:[%s221 + $0x68] sm:$0xff]
        %v2745 = vld [vmem:[%s221 + $0x70] sm:$0xff]
        %v2746 = vld [vmem:[%s221 + $0x78] sm:$0xff]
        %v2747 = vld [vmem:[%s221 + $0x80] sm:$0xff]
        %v2748 = vld [vmem:[%s221 + $0x88] sm:$0xff]
        %v2749 = vld [vmem:[%s221 + $0x90] sm:$0xff]
        %v2750 = vld [vmem:[%s221 + $0x98] sm:$0xff]
        %v2751 = vld [vmem:[%s221 + $0xa0] sm:$0xff]
        %v2752 = vld [vmem:[%s221 + $0xa8] sm:$0xff]
        %v2753 = vld [vmem:[%s221 + $0xb0] sm:$0xff]
        %v2754 = vld [vmem:[%s221 + $0xb8] sm:$0xff]
        %v2755 = vld [vmem:[%s221 + $0xc0] sm:$0xff]
        %v2756 = vld [vmem:[%s221 + $0xc8] sm:$0xff]
        %v2757 = vld [vmem:[%s221 + $0xd0] sm:$0xff]
        %v2758 = vld [vmem:[%s221 + $0xd8] sm:$0xff]
        %v2759 = vld [vmem:[%s221 + $0xe0] sm:$0xff]
        %v2760 = vld [vmem:[%s221 + $0xe8] sm:$0xff]
        %v2761 = vld [vmem:[%s221 + $0xf0] sm:$0xff]
        %v2762 = vld [vmem:[%s221 + $0xf8] sm:$0xff]
        %v2763 = vld [vmem:[%s221 + $0x100] sm:$0xff]
        %v2764 = vld [vmem:[%s221 + $0x108] sm:$0xff]
        %v2765 = vld [vmem:[%s221 + $0x110] sm:$0xff]
        %v2766 = vld [vmem:[%s221 + $0x118] sm:$0xff]
        %v2767 = vld [vmem:[%s221 + $0x120] sm:$0xff]
        %v2768 = vld [vmem:[%s221 + $0x128] sm:$0xff]
        %v2769 = vld [vmem:[%s221 + $0x130] sm:$0xff]
        %v2770 = vld [vmem:[%s221 + $0x138] sm:$0xff]
        %v2771 = vld [vmem:[%s221 + $0x140] sm:$0xff]
        %v2772 = vld [vmem:[%s221 + $0x148] sm:$0xff]
        %v2773 = vld [vmem:[%s221 + $0x150] sm:$0xff]
        %v2774 = vld [vmem:[%s221 + $0x158] sm:$0xff]
        %v2775 = vld [vmem:[%s221 + $0x160] sm:$0xff]
        %v2776 = vld [vmem:[%s221 + $0x168] sm:$0xff]
        %v2777 = vld [vmem:[%s221 + $0x170] sm:$0xff]
        %v2778 = vld [vmem:[%s221 + $0x178] sm:$0xff]
        %v2779 = vld [vmem:[%s221 + $0x180] sm:$0xff]
        %v2780 = vld [vmem:[%s221 + $0x188] sm:$0xff]
        %v2781 = vld [vmem:[%s221 + $0x190] sm:$0xff]
        %v2782 = vld [vmem:[%s221 + $0x198] sm:$0xff]
        %v2783 = vld [vmem:[%s221 + $0x1a0] sm:$0xff]
        %v2784 = vld [vmem:[%s221 + $0x1a8] sm:$0xff]
        %v2785 = vld [vmem:[%s221 + $0x1b0] sm:$0xff]
        %v2786 = vld [vmem:[%s221 + $0x39] sm:$0xff]
        %v2787 = vld [vmem:[%s221 + $0x41] sm:$0xff]
        %v2788 = vld [vmem:[%s221 + $0x49] sm:$0xff]
        %v2789 = vld [vmem:[%s221 + $0x51] sm:$0xff]
        %v2790 = vld [vmem:[%s221 + $0x59] sm:$0xff]
        %v2791 = vld [vmem:[%s221 + $0x61] sm:$0xff]
        %v2792 = vld [vmem:[%s221 + $0x69] sm:$0xff]
        %v2793 = vld [vmem:[%s221 + $0x71] sm:$0xff]
        %v2794 = vld [vmem:[%s221 + $0x79] sm:$0xff]
        %v2795 = vld [vmem:[%s221 + $0x81] sm:$0xff]
        %v2796 = vld [vmem:[%s221 + $0x89] sm:$0xff]
        %v2797 = vld [vmem:[%s221 + $0x91] sm:$0xff]
        %v2798 = vld [vmem:[%s221 + $0x99] sm:$0xff]
        %v2799 = vld [vmem:[%s221 + $0xa1] sm:$0xff]
        %v2800 = vld [vmem:[%s221 + $0xa9] sm:$0xff]
        %v2801 = vld [vmem:[%s221 + $0xb1] sm:$0xff]
        %v2802 = vld [vmem:[%s221 + $0xb9] sm:$0xff]
        %v2803 = vld [vmem:[%s221 + $0xc1] sm:$0xff]
        %v2804 = vld [vmem:[%s221 + $0xc9] sm:$0xff]
        %v2805 = vld [vmem:[%s221 + $0xd1] sm:$0xff]
        %v2806 = vld [vmem:[%s221 + $0xd9] sm:$0xff]
        %v2807 = vld [vmem:[%s221 + $0xe1] sm:$0xff]
        %v2808 = vld [vmem:[%s221 + $0xe9] sm:$0xff]
        %v2809 = vld [vmem:[%s221 + $0xf1] sm:$0xff]
        %v2810 = vld [vmem:[%s221 + $0xf9] sm:$0xff]
        %v2811 = vld [vmem:[%s221 + $0x101] sm:$0xff]
        %v2812 = vld [vmem:[%s221 + $0x109] sm:$0xff]
        %v2813 = vld [vmem:[%s221 + $0x111] sm:$0xff]
        %v2814 = vld [vmem:[%s221 + $0x119] sm:$0xff]
        %v2815 = vld [vmem:[%s221 + $0x121] sm:$0xff]
        %v2816 = vld [vmem:[%s221 + $0x129] sm:$0xff]
        %v2817 = vld [vmem:[%s221 + $0x131] sm:$0xff]
        %v2818 = vld [vmem:[%s221 + $0x139] sm:$0xff]
        %v2819 = vld [vmem:[%s221 + $0x141] sm:$0xff]
        %v2820 = vld [vmem:[%s221 + $0x149] sm:$0xff]
        %v2821 = vld [vmem:[%s221 + $0x151] sm:$0xff]
        %v2822 = vld [vmem:[%s221 + $0x159] sm:$0xff]
        %v2823 = vld [vmem:[%s221 + $0x161] sm:$0xff]
        %v2824 = vld [vmem:[%s221 + $0x169] sm:$0xff]
        %v2825 = vld [vmem:[%s221 + $0x171] sm:$0xff]
        %v2826 = vld [vmem:[%s221 + $0x179] sm:$0xff]
        %v2827 = vld [vmem:[%s221 + $0x181] sm:$0xff]
        %v2828 = vld [vmem:[%s221 + $0x189] sm:$0xff]
        %v2829 = vld [vmem:[%s221 + $0x191] sm:$0xff]
        %v2830 = vld [vmem:[%s221 + $0x199] sm:$0xff]
        %v2831 = vld [vmem:[%s221 + $0x1a1] sm:$0xff]
        %v2832 = vld [vmem:[%s221 + $0x1a9] sm:$0xff]
        %v2833 = vld [vmem:[%s221 + $0x1b1] sm:$0xff]
        %s2834 = scalar_lea.vmem [#allocation6], 768
        %v2835 = vld [vmem:[%s2834] sm:$0xff]
        %v2836 = vld [vmem:[%s2834 + $0x8] sm:$0xff]
        %v2837 = vld [vmem:[%s2834 + $0x10] sm:$0xff]
        %v2838 = vld [vmem:[%s2834 + $0x18] sm:$0xff]
        %v2839 = vld [vmem:[%s2834 + $0x20] sm:$0xff]
        %v2840 = vld [vmem:[%s2834 + $0x28] sm:$0xff]
        %v2841 = vld [vmem:[%s2834 + $0x30] sm:$0xff]
        %v2842 = vld [vmem:[%s2834 + $0x38] sm:$0xff]
        %v2843 = vld [vmem:[%s2834 + $0x40] sm:$0xff]
        %v2844 = vld [vmem:[%s2834 + $0x48] sm:$0xff]
        %v2845 = vld [vmem:[%s2834 + $0x50] sm:$0xff]
        %v2846 = vld [vmem:[%s2834 + $0x58] sm:$0xff]
        %v2847 = vld [vmem:[%s2834 + $0x60] sm:$0xff]
        %v2848 = vld [vmem:[%s2834 + $0x68] sm:$0xff]
        %v2849 = vld [vmem:[%s2834 + $0x70] sm:$0xff]
        %v2850 = vld [vmem:[%s2834 + $0x78] sm:$0xff]
        %v2851 = vld [vmem:[%s2834 + $0x80] sm:$0xff]
        %v2852 = vld [vmem:[%s2834 + $0x88] sm:$0xff]
        %v2853 = vld [vmem:[%s2834 + $0x90] sm:$0xff]
        %v2854 = vld [vmem:[%s2834 + $0x98] sm:$0xff]
        %v2855 = vld [vmem:[%s2834 + $0xa0] sm:$0xff]
        %v2856 = vld [vmem:[%s2834 + $0xa8] sm:$0xff]
        %v2857 = vld [vmem:[%s2834 + $0xb0] sm:$0xff]
        %v2858 = vld [vmem:[%s2834 + $0xb8] sm:$0xff]
        %v2859 = vld [vmem:[%s2834 + $0xc0] sm:$0xff]
        %v2860 = vld [vmem:[%s2834 + $0xc8] sm:$0xff]
        %v2861 = vld [vmem:[%s2834 + $0xd0] sm:$0xff]
        %v2862 = vld [vmem:[%s2834 + $0xd8] sm:$0xff]
        %v2863 = vld [vmem:[%s2834 + $0xe0] sm:$0xff]
        %v2864 = vld [vmem:[%s2834 + $0xe8] sm:$0xff]
        %v2865 = vld [vmem:[%s2834 + $0xf0] sm:$0xff]
        %v2866 = vld [vmem:[%s2834 + $0xf8] sm:$0xff]
        %v2867 = vld [vmem:[%s2834 + $0x100] sm:$0xff]
        %v2868 = vld [vmem:[%s2834 + $0x108] sm:$0xff]
        %v2869 = vld [vmem:[%s2834 + $0x110] sm:$0xff]
        %v2870 = vld [vmem:[%s2834 + $0x118] sm:$0xff]
        %v2871 = vld [vmem:[%s2834 + $0x120] sm:$0xff]
        %v2872 = vld [vmem:[%s2834 + $0x128] sm:$0xff]
        %v2873 = vld [vmem:[%s2834 + $0x130] sm:$0xff]
        %v2874 = vld [vmem:[%s2834 + $0x138] sm:$0xff]
        %v2875 = vld [vmem:[%s2834 + $0x140] sm:$0xff]
        %v2876 = vld [vmem:[%s2834 + $0x148] sm:$0xff]
        %v2877 = vld [vmem:[%s2834 + $0x150] sm:$0xff]
        %v2878 = vld [vmem:[%s2834 + $0x158] sm:$0xff]
        %v2879 = vld [vmem:[%s2834 + $0x160] sm:$0xff]
        %v2880 = vld [vmem:[%s2834 + $0x168] sm:$0xff]
        %v2881 = vld [vmem:[%s2834 + $0x170] sm:$0xff]
        %v2882 = vld [vmem:[%s2834 + $0x178] sm:$0xff]
        %2883 = vmatprep.subr.mxu0 0.0
        %2884 = vmatpush1.msra.mxu0 %v2850
        %2885 = vmatprep.subr.mxu0 0.0
        %2886 = vmatpush1.msra.mxu0 %v2849
        %2887 = vmatprep.subr.mxu0 0.0
        %2888 = vmatpush1.msra.mxu0 %v2848
        %2889 = vmatprep.subr.mxu0 0.0
        %2890 = vmatpush1.msra.mxu0 %v2847
        %2891 = vmatprep.subr.mxu0 0.0
        %2892 = vmatpush1.msra.mxu0 %v2846
        %2893 = vmatprep.subr.mxu0 0.0
        %2894 = vmatpush1.msra.mxu0 %v2845
        %2895 = vmatprep.subr.mxu0 0.0
        %2896 = vmatpush1.msra.mxu0 %v2844
        %2897 = vmatprep.subr.mxu0 0.0
        %2898 = vmatpush1.msra.mxu0 %v2843
        %2899 = vmatprep.subr.mxu0 0.0
        %2900 = vmatpush1.msra.mxu0 %v2842
        %2901 = vmatprep.subr.mxu0 0.0
        %2902 = vmatpush1.msra.mxu0 %v2841
        %2903 = vmatprep.subr.mxu0 0.0
        %2904 = vmatpush1.msra.mxu0 %v2840
        %2905 = vmatprep.subr.mxu0 0.0
        %2906 = vmatpush1.msra.mxu0 %v2839
        %2907 = vmatprep.subr.mxu0 0.0
        %2908 = vmatpush1.msra.mxu0 %v2838
        %2909 = vmatprep.subr.mxu0 0.0
        %2910 = vmatpush1.msra.mxu0 %v2837
        %2911 = vmatprep.subr.mxu0 0.0
        %2912 = vmatpush1.msra.mxu0 %v2836
        %2913 = vmatprep.subr.mxu0 0.0
        %2914 = vmatpush1.msra.mxu0 %v2835
        %2915 = vmatprep.subr.mxu0 0.0
        %2916 = vmatpush2.msra.mxu0 %v2866
        %2917 = vmatprep.subr.mxu0 0.0
        %2918 = vmatpush2.msra.mxu0 %v2865
        %2919 = vmatprep.subr.mxu0 0.0
        %2920 = vmatpush2.msra.mxu0 %v2864
        %2921 = vmatprep.subr.mxu0 0.0
        %2922 = vmatpush2.msra.mxu0 %v2863
        %2923 = vmatprep.subr.mxu0 0.0
        %2924 = vmatpush2.msra.mxu0 %v2862
        %2925 = vmatprep.subr.mxu0 0.0
        %2926 = vmatpush2.msra.mxu0 %v2861
        %2927 = vmatprep.subr.mxu0 0.0
        %2928 = vmatpush2.msra.mxu0 %v2860
        %2929 = vmatprep.subr.mxu0 0.0
        %2930 = vmatpush2.msra.mxu0 %v2859
        %2931 = vmatprep.subr.mxu0 0.0
        %2932 = vmatpush2.msra.mxu0 %v2858
        %2933 = vmatprep.subr.mxu0 0.0
        %2934 = vmatpush2.msra.mxu0 %v2857
        %2935 = vmatprep.subr.mxu0 0.0
        %2936 = vmatpush2.msra.mxu0 %v2856
        %2937 = vmatprep.subr.mxu0 0.0
        %2938 = vmatpush2.msra.mxu0 %v2855
        %2939 = vmatprep.subr.mxu0 0.0
        %2940 = vmatpush2.msra.mxu0 %v2854
        %2941 = vmatprep.subr.mxu0 0.0
        %2942 = vmatpush2.msra.mxu0 %v2853
        %2943 = vmatprep.subr.mxu0 0.0
        %2944 = vmatpush2.msra.mxu0 %v2852
        %2945 = vmatprep.subr.mxu0 0.0
        %2946 = vmatpush2.msra.mxu0 %v2851
        %2947 = vmatprep.mubr.f32.mxu0 %v2738
        %2948 = vmatmul.mubr.f32.gmra.mxu0 %v2690
        %v2949 = vpop.f32.mrf.mxu0
        %v2950 = vadd.f32 0.0, %v2949
        %v2951 = vpop.f32.mrf.mxu0
        %2952 = vmatprep.mubr.f32.mxu0 %v2739
        %2953 = vmatmul.mubr.f32.gmra.mxu0 %v2691
        %v2954 = vpop.f32.mrf.mxu0
        %v2955 = vadd.f32 0.0, %v2954
        %v2956 = vpop.f32.mrf.mxu0
        %2957 = vmatprep.mubr.f32.mxu0 %v2740
        %2958 = vmatmul.mubr.f32.gmra.mxu0 %v2692
        %v2959 = vpop.f32.mrf.mxu0
        %v2960 = vadd.f32 0.0, %v2959
        %v2961 = vpop.f32.mrf.mxu0
        %2962 = vmatprep.mubr.f32.mxu0 %v2741
        %2963 = vmatmul.mubr.f32.gmra.mxu0 %v2693
        %v2964 = vpop.f32.mrf.mxu0
        %v2965 = vadd.f32 0.0, %v2964
        %v2966 = vpop.f32.mrf.mxu0
        %2967 = vmatprep.mubr.f32.mxu0 %v2742
        %2968 = vmatmul.mubr.f32.gmra.mxu0 %v2694
        %v2969 = vpop.f32.mrf.mxu0
        %v2970 = vadd.f32 0.0, %v2969
        %v2971 = vpop.f32.mrf.mxu0
        %2972 = vmatprep.mubr.f32.mxu0 %v2743
        %2973 = vmatmul.mubr.f32.gmra.mxu0 %v2695
        %v2974 = vpop.f32.mrf.mxu0
        %v2975 = vadd.f32 0.0, %v2974
        %v2976 = vpop.f32.mrf.mxu0
        %2977 = vmatprep.mubr.f32.mxu0 %v2744
        %2978 = vmatmul.mubr.f32.gmra.mxu0 %v2696
        %v2979 = vpop.f32.mrf.mxu0
        %v2980 = vadd.f32 0.0, %v2979
        %v2981 = vpop.f32.mrf.mxu0
        %2982 = vmatprep.mubr.f32.mxu0 %v2745
        %2983 = vmatmul.mubr.f32.gmra.mxu0 %v2697
        %v2984 = vpop.f32.mrf.mxu0
        %v2985 = vadd.f32 0.0, %v2984
        %v2986 = vpop.f32.mrf.mxu0
        %2987 = vmatprep.mubr.f32.mxu0 %v2746
        %2988 = vmatmul.mubr.f32.gmra.mxu0 %v2698
        %v2989 = vpop.f32.mrf.mxu0
        %v2990 = vadd.f32 0.0, %v2989
        %v2991 = vpop.f32.mrf.mxu0
        %2992 = vmatprep.mubr.f32.mxu0 %v2747
        %2993 = vmatmul.mubr.f32.gmra.mxu0 %v2699
        %v2994 = vpop.f32.mrf.mxu0
        %v2995 = vadd.f32 0.0, %v2994
        %v2996 = vpop.f32.mrf.mxu0
        %2997 = vmatprep.mubr.f32.mxu0 %v2748
        %2998 = vmatmul.mubr.f32.gmra.mxu0 %v2700
        %v2999 = vpop.f32.mrf.mxu0
        %v3000 = vadd.f32 0.0, %v2999
        %v3001 = vpop.f32.mrf.mxu0
        %3002 = vmatprep.mubr.f32.mxu0 %v2749
        %3003 = vmatmul.mubr.f32.gmra.mxu0 %v2701
        %v3004 = vpop.f32.mrf.mxu0
        %v3005 = vadd.f32 0.0, %v3004
        %v3006 = vpop.f32.mrf.mxu0
        %3007 = vmatprep.mubr.f32.mxu0 %v2750
        %3008 = vmatmul.mubr.f32.gmra.mxu0 %v2702
        %v3009 = vpop.f32.mrf.mxu0
        %v3010 = vadd.f32 0.0, %v3009
        %v3011 = vpop.f32.mrf.mxu0
        %3012 = vmatprep.mubr.f32.mxu0 %v2751
        %3013 = vmatmul.mubr.f32.gmra.mxu0 %v2703
        %v3014 = vpop.f32.mrf.mxu0
        %v3015 = vadd.f32 0.0, %v3014
        %v3016 = vpop.f32.mrf.mxu0
        %3017 = vmatprep.mubr.f32.mxu0 %v2752
        %3018 = vmatmul.mubr.f32.gmra.mxu0 %v2704
        %v3019 = vpop.f32.mrf.mxu0
        %v3020 = vadd.f32 0.0, %v3019
        %v3021 = vpop.f32.mrf.mxu0
        %3022 = vmatprep.mubr.f32.mxu0 %v2753
        %3023 = vmatmul.mubr.f32.gmra.mxu0 %v2705
        %v3024 = vpop.f32.mrf.mxu0
        %v3025 = vadd.f32 0.0, %v3024
        %v3026 = vpop.f32.mrf.mxu0
        %3027 = vmatprep.mubr.f32.mxu0 %v2754
        %3028 = vmatmul.mubr.f32.gmra.mxu0 %v2706
        %v3029 = vpop.f32.mrf.mxu0
        %v3030 = vadd.f32 0.0, %v3029
        %v3031 = vpop.f32.mrf.mxu0
        %3032 = vmatprep.mubr.f32.mxu0 %v2755
        %3033 = vmatmul.mubr.f32.gmra.mxu0 %v2707
        %v3034 = vpop.f32.mrf.mxu0
        %v3035 = vadd.f32 0.0, %v3034
        %v3036 = vpop.f32.mrf.mxu0
        %3037 = vmatprep.mubr.f32.mxu0 %v2756
        %3038 = vmatmul.mubr.f32.gmra.mxu0 %v2708
        %v3039 = vpop.f32.mrf.mxu0
        %v3040 = vadd.f32 0.0, %v3039
        %v3041 = vpop.f32.mrf.mxu0
        %3042 = vmatprep.mubr.f32.mxu0 %v2757
        %3043 = vmatmul.mubr.f32.gmra.mxu0 %v2709
        %v3044 = vpop.f32.mrf.mxu0
        %v3045 = vadd.f32 0.0, %v3044
        %v3046 = vpop.f32.mrf.mxu0
        %3047 = vmatprep.mubr.f32.mxu0 %v2758
        %3048 = vmatmul.mubr.f32.gmra.mxu0 %v2710
        %v3049 = vpop.f32.mrf.mxu0
        %v3050 = vadd.f32 0.0, %v3049
        %v3051 = vpop.f32.mrf.mxu0
        %3052 = vmatprep.mubr.f32.mxu0 %v2759
        %3053 = vmatmul.mubr.f32.gmra.mxu0 %v2711
        %v3054 = vpop.f32.mrf.mxu0
        %v3055 = vadd.f32 0.0, %v3054
        %v3056 = vpop.f32.mrf.mxu0
        %3057 = vmatprep.mubr.f32.mxu0 %v2760
        %3058 = vmatmul.mubr.f32.gmra.mxu0 %v2712
        %v3059 = vpop.f32.mrf.mxu0
        %v3060 = vadd.f32 0.0, %v3059
        %v3061 = vpop.f32.mrf.mxu0
        %3062 = vmatprep.mubr.f32.mxu0 %v2761
        %3063 = vmatmul.mubr.f32.gmra.mxu0 %v2713
        %v3064 = vpop.f32.mrf.mxu0
        %v3065 = vadd.f32 0.0, %v3064
        %v3066 = vpop.f32.mrf.mxu0
        %3067 = vmatprep.mubr.f32.mxu0 %v2762
        %3068 = vmatmul.mubr.f32.gmra.mxu0 %v2714
        %v3069 = vpop.f32.mrf.mxu0
        %v3070 = vadd.f32 0.0, %v3069
        %v3071 = vpop.f32.mrf.mxu0
        %3072 = vmatprep.mubr.f32.mxu0 %v2763
        %3073 = vmatmul.mubr.f32.gmra.mxu0 %v2715
        %v3074 = vpop.f32.mrf.mxu0
        %v3075 = vadd.f32 0.0, %v3074
        %v3076 = vpop.f32.mrf.mxu0
        %3077 = vmatprep.mubr.f32.mxu0 %v2764
        %3078 = vmatmul.mubr.f32.gmra.mxu0 %v2716
        %v3079 = vpop.f32.mrf.mxu0
        %v3080 = vadd.f32 0.0, %v3079
        %v3081 = vpop.f32.mrf.mxu0
        %3082 = vmatprep.mubr.f32.mxu0 %v2765
        %3083 = vmatmul.mubr.f32.gmra.mxu0 %v2717
        %v3084 = vpop.f32.mrf.mxu0
        %v3085 = vadd.f32 0.0, %v3084
        %v3086 = vpop.f32.mrf.mxu0
        %3087 = vmatprep.mubr.f32.mxu0 %v2766
        %3088 = vmatmul.mubr.f32.gmra.mxu0 %v2718
        %v3089 = vpop.f32.mrf.mxu0
        %v3090 = vadd.f32 0.0, %v3089
        %v3091 = vpop.f32.mrf.mxu0
        %3092 = vmatprep.mubr.f32.mxu0 %v2767
        %3093 = vmatmul.mubr.f32.gmra.mxu0 %v2719
        %v3094 = vpop.f32.mrf.mxu0
        %v3095 = vadd.f32 0.0, %v3094
        %v3096 = vpop.f32.mrf.mxu0
        %3097 = vmatprep.mubr.f32.mxu0 %v2768
        %3098 = vmatmul.mubr.f32.gmra.mxu0 %v2720
        %v3099 = vpop.f32.mrf.mxu0
        %v3100 = vadd.f32 0.0, %v3099
        %v3101 = vpop.f32.mrf.mxu0
        %3102 = vmatprep.mubr.f32.mxu0 %v2769
        %3103 = vmatmul.mubr.f32.gmra.mxu0 %v2721
        %v3104 = vpop.f32.mrf.mxu0
        %v3105 = vadd.f32 0.0, %v3104
        %v3106 = vpop.f32.mrf.mxu0
        %3107 = vmatprep.mubr.f32.mxu0 %v2770
        %3108 = vmatmul.mubr.f32.gmra.mxu0 %v2722
        %v3109 = vpop.f32.mrf.mxu0
        %v3110 = vadd.f32 0.0, %v3109
        %v3111 = vpop.f32.mrf.mxu0
        %3112 = vmatprep.mubr.f32.mxu0 %v2771
        %3113 = vmatmul.mubr.f32.gmra.mxu0 %v2723
        %v3114 = vpop.f32.mrf.mxu0
        %v3115 = vadd.f32 0.0, %v3114
        %v3116 = vpop.f32.mrf.mxu0
        %3117 = vmatprep.mubr.f32.mxu0 %v2772
        %3118 = vmatmul.mubr.f32.gmra.mxu0 %v2724
        %v3119 = vpop.f32.mrf.mxu0
        %v3120 = vadd.f32 0.0, %v3119
        %v3121 = vpop.f32.mrf.mxu0
        %3122 = vmatprep.mubr.f32.mxu0 %v2773
        %3123 = vmatmul.mubr.f32.gmra.mxu0 %v2725
        %v3124 = vpop.f32.mrf.mxu0
        %v3125 = vadd.f32 0.0, %v3124
        %v3126 = vpop.f32.mrf.mxu0
        %3127 = vmatprep.mubr.f32.mxu0 %v2774
        %3128 = vmatmul.mubr.f32.gmra.mxu0 %v2726
        %v3129 = vpop.f32.mrf.mxu0
        %v3130 = vadd.f32 0.0, %v3129
        %v3131 = vpop.f32.mrf.mxu0
        %3132 = vmatprep.mubr.f32.mxu0 %v2775
        %3133 = vmatmul.mubr.f32.gmra.mxu0 %v2727
        %v3134 = vpop.f32.mrf.mxu0
        %v3135 = vadd.f32 0.0, %v3134
        %v3136 = vpop.f32.mrf.mxu0
        %3137 = vmatprep.mubr.f32.mxu0 %v2776
        %3138 = vmatmul.mubr.f32.gmra.mxu0 %v2728
        %v3139 = vpop.f32.mrf.mxu0
        %v3140 = vadd.f32 0.0, %v3139
        %v3141 = vpop.f32.mrf.mxu0
        %3142 = vmatprep.mubr.f32.mxu0 %v2777
        %3143 = vmatmul.mubr.f32.gmra.mxu0 %v2729
        %v3144 = vpop.f32.mrf.mxu0
        %v3145 = vadd.f32 0.0, %v3144
        %v3146 = vpop.f32.mrf.mxu0
        %3147 = vmatprep.mubr.f32.mxu0 %v2778
        %3148 = vmatmul.mubr.f32.gmra.mxu0 %v2730
        %v3149 = vpop.f32.mrf.mxu0
        %v3150 = vadd.f32 0.0, %v3149
        %v3151 = vpop.f32.mrf.mxu0
        %3152 = vmatprep.mubr.f32.mxu0 %v2779
        %3153 = vmatmul.mubr.f32.gmra.mxu0 %v2731
        %v3154 = vpop.f32.mrf.mxu0
        %v3155 = vadd.f32 0.0, %v3154
        %v3156 = vpop.f32.mrf.mxu0
        %3157 = vmatprep.mubr.f32.mxu0 %v2780
        %3158 = vmatmul.mubr.f32.gmra.mxu0 %v2732
        %v3159 = vpop.f32.mrf.mxu0
        %v3160 = vadd.f32 0.0, %v3159
        %v3161 = vpop.f32.mrf.mxu0
        %3162 = vmatprep.mubr.f32.mxu0 %v2781
        %3163 = vmatmul.mubr.f32.gmra.mxu0 %v2733
        %v3164 = vpop.f32.mrf.mxu0
        %v3165 = vadd.f32 0.0, %v3164
        %v3166 = vpop.f32.mrf.mxu0
        %3167 = vmatprep.mubr.f32.mxu0 %v2782
        %3168 = vmatmul.mubr.f32.gmra.mxu0 %v2734
        %v3169 = vpop.f32.mrf.mxu0
        %v3170 = vadd.f32 0.0, %v3169
        %v3171 = vpop.f32.mrf.mxu0
        %3172 = vmatprep.mubr.f32.mxu0 %v2783
        %3173 = vmatmul.mubr.f32.gmra.mxu0 %v2735
        %v3174 = vpop.f32.mrf.mxu0
        %v3175 = vadd.f32 0.0, %v3174
        %v3176 = vpop.f32.mrf.mxu0
        %3177 = vmatprep.mubr.f32.mxu0 %v2784
        %3178 = vmatmul.mubr.f32.gmra.mxu0 %v2736
        %v3179 = vpop.f32.mrf.mxu0
        %v3180 = vadd.f32 0.0, %v3179
        %v3181 = vpop.f32.mrf.mxu0
        %3182 = vmatprep.mubr.f32.mxu0 %v2785
        %3183 = vmatmul.mubr.f32.gmra.mxu0 %v2737
        %v3184 = vpop.f32.mrf.mxu0
        %v3185 = vadd.f32 0.0, %v3184
        %v3186 = vpop.f32.mrf.mxu0
        %3187 = vdwg.mxu0
        %3188 = vmatprep.subr.mxu0 0.0
        %3189 = vmatpush1.msra.mxu0 %v2882
        %3190 = vmatprep.subr.mxu0 0.0
        %3191 = vmatpush1.msra.mxu0 %v2881
        %3192 = vmatprep.subr.mxu0 0.0
        %3193 = vmatpush1.msra.mxu0 %v2880
        %3194 = vmatprep.subr.mxu0 0.0
        %3195 = vmatpush1.msra.mxu0 %v2879
        %3196 = vmatprep.subr.mxu0 0.0
        %3197 = vmatpush1.msra.mxu0 %v2878
        %3198 = vmatprep.subr.mxu0 0.0
        %3199 = vmatpush1.msra.mxu0 %v2877
        %3200 = vmatprep.subr.mxu0 0.0
        %3201 = vmatpush1.msra.mxu0 %v2876
        %3202 = vmatprep.subr.mxu0 0.0
        %3203 = vmatpush1.msra.mxu0 %v2875
        %3204 = vmatprep.subr.mxu0 0.0
        %3205 = vmatpush1.msra.mxu0 %v2874
        %3206 = vmatprep.subr.mxu0 0.0
        %3207 = vmatpush1.msra.mxu0 %v2873
        %3208 = vmatprep.subr.mxu0 0.0
        %3209 = vmatpush1.msra.mxu0 %v2872
        %3210 = vmatprep.subr.mxu0 0.0
        %3211 = vmatpush1.msra.mxu0 %v2871
        %3212 = vmatprep.subr.mxu0 0.0
        %3213 = vmatpush1.msra.mxu0 %v2870
        %3214 = vmatprep.subr.mxu0 0.0
        %3215 = vmatpush1.msra.mxu0 %v2869
        %3216 = vmatprep.subr.mxu0 0.0
        %3217 = vmatpush1.msra.mxu0 %v2868
        %3218 = vmatprep.subr.mxu0 0.0
        %3219 = vmatpush1.msra.mxu0 %v2867
        %3220 = vmatprep.subr.mxu0 0.0
        %3221 = vmatpush2.msra.mxu0 0.0
        %3222 = vmatprep.subr.mxu0 0.0
        %3223 = vmatpush2.msra.mxu0 0.0
        %3224 = vmatprep.subr.mxu0 0.0
        %3225 = vmatpush2.msra.mxu0 0.0
        %3226 = vmatprep.subr.mxu0 0.0
        %3227 = vmatpush2.msra.mxu0 0.0
        %3228 = vmatprep.subr.mxu0 0.0
        %3229 = vmatpush2.msra.mxu0 0.0
        %3230 = vmatprep.subr.mxu0 0.0
        %3231 = vmatpush2.msra.mxu0 0.0
        %3232 = vmatprep.subr.mxu0 0.0
        %3233 = vmatpush2.msra.mxu0 0.0
        %3234 = vmatprep.subr.mxu0 0.0
        %3235 = vmatpush2.msra.mxu0 0.0
        %3236 = vmatprep.subr.mxu0 0.0
        %3237 = vmatpush2.msra.mxu0 0.0
        %3238 = vmatprep.subr.mxu0 0.0
        %3239 = vmatpush2.msra.mxu0 0.0
        %3240 = vmatprep.subr.mxu0 0.0
        %3241 = vmatpush2.msra.mxu0 0.0
        %3242 = vmatprep.subr.mxu0 0.0
        %3243 = vmatpush2.msra.mxu0 0.0
        %3244 = vmatprep.subr.mxu0 0.0
        %3245 = vmatpush2.msra.mxu0 0.0
        %3246 = vmatprep.subr.mxu0 0.0
        %3247 = vmatpush2.msra.mxu0 0.0
        %3248 = vmatprep.subr.mxu0 0.0
        %3249 = vmatpush2.msra.mxu0 0.0
        %3250 = vmatprep.subr.mxu0 0.0
        %3251 = vmatpush2.msra.mxu0 0.0
        %3252 = vmatprep.mubr.f32.mxu0 0.0
        %3253 = vmatmul.mubr.f32.gmra.mxu0 %v2786
        %v3254 = vpop.f32.mrf.mxu0
        %v3255 = vadd.f32 %v2950, %v3254
        %v3256 = vpop.f32.mrf.mxu0
        %3257 = vmatprep.mubr.f32.mxu0 0.0
        %3258 = vmatmul.mubr.f32.gmra.mxu0 %v2787
        %v3259 = vpop.f32.mrf.mxu0
        %v3260 = vadd.f32 %v2955, %v3259
        %v3261 = vpop.f32.mrf.mxu0
        %3262 = vmatprep.mubr.f32.mxu0 0.0
        %3263 = vmatmul.mubr.f32.gmra.mxu0 %v2788
        %v3264 = vpop.f32.mrf.mxu0
        %v3265 = vadd.f32 %v2960, %v3264
        %v3266 = vpop.f32.mrf.mxu0
        %3267 = vmatprep.mubr.f32.mxu0 0.0
        %3268 = vmatmul.mubr.f32.gmra.mxu0 %v2789
        %v3269 = vpop.f32.mrf.mxu0
        %v3270 = vadd.f32 %v2965, %v3269
        %v3271 = vpop.f32.mrf.mxu0
        %3272 = vmatprep.mubr.f32.mxu0 0.0
        %3273 = vmatmul.mubr.f32.gmra.mxu0 %v2790
        %v3274 = vpop.f32.mrf.mxu0
        %v3275 = vadd.f32 %v2970, %v3274
        %v3276 = vpop.f32.mrf.mxu0
        %3277 = vmatprep.mubr.f32.mxu0 0.0
        %3278 = vmatmul.mubr.f32.gmra.mxu0 %v2791
        %v3279 = vpop.f32.mrf.mxu0
        %v3280 = vadd.f32 %v2975, %v3279
        %v3281 = vpop.f32.mrf.mxu0
        %3282 = vmatprep.mubr.f32.mxu0 0.0
        %3283 = vmatmul.mubr.f32.gmra.mxu0 %v2792
        %v3284 = vpop.f32.mrf.mxu0
        %v3285 = vadd.f32 %v2980, %v3284
        %v3286 = vpop.f32.mrf.mxu0
        %3287 = vmatprep.mubr.f32.mxu0 0.0
        %3288 = vmatmul.mubr.f32.gmra.mxu0 %v2793
        %v3289 = vpop.f32.mrf.mxu0
        %v3290 = vadd.f32 %v2985, %v3289
        %v3291 = vpop.f32.mrf.mxu0
        %3292 = vmatprep.mubr.f32.mxu0 0.0
        %3293 = vmatmul.mubr.f32.gmra.mxu0 %v2794
        %v3294 = vpop.f32.mrf.mxu0
        %v3295 = vadd.f32 %v2990, %v3294
        %v3296 = vpop.f32.mrf.mxu0
        %3297 = vmatprep.mubr.f32.mxu0 0.0
        %3298 = vmatmul.mubr.f32.gmra.mxu0 %v2795
        %v3299 = vpop.f32.mrf.mxu0
        %v3300 = vadd.f32 %v2995, %v3299
        %v3301 = vpop.f32.mrf.mxu0
        %3302 = vmatprep.mubr.f32.mxu0 0.0
        %3303 = vmatmul.mubr.f32.gmra.mxu0 %v2796
        %v3304 = vpop.f32.mrf.mxu0
        %v3305 = vadd.f32 %v3000, %v3304
        %v3306 = vpop.f32.mrf.mxu0
        %3307 = vmatprep.mubr.f32.mxu0 0.0
        %3308 = vmatmul.mubr.f32.gmra.mxu0 %v2797
        %v3309 = vpop.f32.mrf.mxu0
        %v3310 = vadd.f32 %v3005, %v3309
        %v3311 = vpop.f32.mrf.mxu0
        %3312 = vmatprep.mubr.f32.mxu0 0.0
        %3313 = vmatmul.mubr.f32.gmra.mxu0 %v2798
        %v3314 = vpop.f32.mrf.mxu0
        %v3315 = vadd.f32 %v3010, %v3314
        %v3316 = vpop.f32.mrf.mxu0
        %3317 = vmatprep.mubr.f32.mxu0 0.0
        %3318 = vmatmul.mubr.f32.gmra.mxu0 %v2799
        %v3319 = vpop.f32.mrf.mxu0
        %v3320 = vadd.f32 %v3015, %v3319
        %v3321 = vpop.f32.mrf.mxu0
        %3322 = vmatprep.mubr.f32.mxu0 0.0
        %3323 = vmatmul.mubr.f32.gmra.mxu0 %v2800
        %v3324 = vpop.f32.mrf.mxu0
        %v3325 = vadd.f32 %v3020, %v3324
        %v3326 = vpop.f32.mrf.mxu0
        %3327 = vmatprep.mubr.f32.mxu0 0.0
        %3328 = vmatmul.mubr.f32.gmra.mxu0 %v2801
        %v3329 = vpop.f32.mrf.mxu0
        %v3330 = vadd.f32 %v3025, %v3329
        %v3331 = vpop.f32.mrf.mxu0
        %3332 = vmatprep.mubr.f32.mxu0 0.0
        %3333 = vmatmul.mubr.f32.gmra.mxu0 %v2802
        %v3334 = vpop.f32.mrf.mxu0
        %v3335 = vadd.f32 %v3030, %v3334
        %v3336 = vpop.f32.mrf.mxu0
        %3337 = vmatprep.mubr.f32.mxu0 0.0
        %3338 = vmatmul.mubr.f32.gmra.mxu0 %v2803
        %v3339 = vpop.f32.mrf.mxu0
        %v3340 = vadd.f32 %v3035, %v3339
        %v3341 = vpop.f32.mrf.mxu0
        %3342 = vmatprep.mubr.f32.mxu0 0.0
        %3343 = vmatmul.mubr.f32.gmra.mxu0 %v2804
        %v3344 = vpop.f32.mrf.mxu0
        %v3345 = vadd.f32 %v3040, %v3344
        %v3346 = vpop.f32.mrf.mxu0
        %3347 = vmatprep.mubr.f32.mxu0 0.0
        %3348 = vmatmul.mubr.f32.gmra.mxu0 %v2805
        %v3349 = vpop.f32.mrf.mxu0
        %v3350 = vadd.f32 %v3045, %v3349
        %v3351 = vpop.f32.mrf.mxu0
        %3352 = vmatprep.mubr.f32.mxu0 0.0
        %3353 = vmatmul.mubr.f32.gmra.mxu0 %v2806
        %v3354 = vpop.f32.mrf.mxu0
        %v3355 = vadd.f32 %v3050, %v3354
        %v3356 = vpop.f32.mrf.mxu0
        %3357 = vmatprep.mubr.f32.mxu0 0.0
        %3358 = vmatmul.mubr.f32.gmra.mxu0 %v2807
        %v3359 = vpop.f32.mrf.mxu0
        %v3360 = vadd.f32 %v3055, %v3359
        %v3361 = vpop.f32.mrf.mxu0
        %3362 = vmatprep.mubr.f32.mxu0 0.0
        %3363 = vmatmul.mubr.f32.gmra.mxu0 %v2808
        %v3364 = vpop.f32.mrf.mxu0
        %v3365 = vadd.f32 %v3060, %v3364
        %v3366 = vpop.f32.mrf.mxu0
        %3367 = vmatprep.mubr.f32.mxu0 0.0
        %3368 = vmatmul.mubr.f32.gmra.mxu0 %v2809
        %v3369 = vpop.f32.mrf.mxu0
        %v3370 = vadd.f32 %v3065, %v3369
        %v3371 = vpop.f32.mrf.mxu0
        %3372 = vmatprep.mubr.f32.mxu0 0.0
        %3373 = vmatmul.mubr.f32.gmra.mxu0 %v2810
        %v3374 = vpop.f32.mrf.mxu0
        %v3375 = vadd.f32 %v3070, %v3374
        %v3376 = vpop.f32.mrf.mxu0
        %3377 = vmatprep.mubr.f32.mxu0 0.0
        %3378 = vmatmul.mubr.f32.gmra.mxu0 %v2811
        %v3379 = vpop.f32.mrf.mxu0
        %v3380 = vadd.f32 %v3075, %v3379
        %v3381 = vpop.f32.mrf.mxu0
        %3382 = vmatprep.mubr.f32.mxu0 0.0
        %3383 = vmatmul.mubr.f32.gmra.mxu0 %v2812
        %v3384 = vpop.f32.mrf.mxu0
        %v3385 = vadd.f32 %v3080, %v3384
        %v3386 = vpop.f32.mrf.mxu0
        %3387 = vmatprep.mubr.f32.mxu0 0.0
        %3388 = vmatmul.mubr.f32.gmra.mxu0 %v2813
        %v3389 = vpop.f32.mrf.mxu0
        %v3390 = vadd.f32 %v3085, %v3389
        %v3391 = vpop.f32.mrf.mxu0
        %3392 = vmatprep.mubr.f32.mxu0 0.0
        %3393 = vmatmul.mubr.f32.gmra.mxu0 %v2814
        %v3394 = vpop.f32.mrf.mxu0
        %v3395 = vadd.f32 %v3090, %v3394
        %v3396 = vpop.f32.mrf.mxu0
        %3397 = vmatprep.mubr.f32.mxu0 0.0
        %3398 = vmatmul.mubr.f32.gmra.mxu0 %v2815
        %v3399 = vpop.f32.mrf.mxu0
        %v3400 = vadd.f32 %v3095, %v3399
        %v3401 = vpop.f32.mrf.mxu0
        %3402 = vmatprep.mubr.f32.mxu0 0.0
        %3403 = vmatmul.mubr.f32.gmra.mxu0 %v2816
        %v3404 = vpop.f32.mrf.mxu0
        %v3405 = vadd.f32 %v3100, %v3404
        %v3406 = vpop.f32.mrf.mxu0
        %3407 = vmatprep.mubr.f32.mxu0 0.0
        %3408 = vmatmul.mubr.f32.gmra.mxu0 %v2817
        %v3409 = vpop.f32.mrf.mxu0
        %v3410 = vadd.f32 %v3105, %v3409
        %v3411 = vpop.f32.mrf.mxu0
        %3412 = vmatprep.mubr.f32.mxu0 0.0
        %3413 = vmatmul.mubr.f32.gmra.mxu0 %v2818
        %v3414 = vpop.f32.mrf.mxu0
        %v3415 = vadd.f32 %v3110, %v3414
        %v3416 = vpop.f32.mrf.mxu0
        %3417 = vmatprep.mubr.f32.mxu0 0.0
        %3418 = vmatmul.mubr.f32.gmra.mxu0 %v2819
        %v3419 = vpop.f32.mrf.mxu0
        %v3420 = vadd.f32 %v3115, %v3419
        %v3421 = vpop.f32.mrf.mxu0
        %3422 = vmatprep.mubr.f32.mxu0 0.0
        %3423 = vmatmul.mubr.f32.gmra.mxu0 %v2820
        %v3424 = vpop.f32.mrf.mxu0
        %v3425 = vadd.f32 %v3120, %v3424
        %v3426 = vpop.f32.mrf.mxu0
        %3427 = vmatprep.mubr.f32.mxu0 0.0
        %3428 = vmatmul.mubr.f32.gmra.mxu0 %v2821
        %v3429 = vpop.f32.mrf.mxu0
        %v3430 = vadd.f32 %v3125, %v3429
        %v3431 = vpop.f32.mrf.mxu0
        %3432 = vmatprep.mubr.f32.mxu0 0.0
        %3433 = vmatmul.mubr.f32.gmra.mxu0 %v2822
        %v3434 = vpop.f32.mrf.mxu0
        %v3435 = vadd.f32 %v3130, %v3434
        %v3436 = vpop.f32.mrf.mxu0
        %3437 = vmatprep.mubr.f32.mxu0 0.0
        %3438 = vmatmul.mubr.f32.gmra.mxu0 %v2823
        %v3439 = vpop.f32.mrf.mxu0
        %v3440 = vadd.f32 %v3135, %v3439
        %v3441 = vpop.f32.mrf.mxu0
        %3442 = vmatprep.mubr.f32.mxu0 0.0
        %3443 = vmatmul.mubr.f32.gmra.mxu0 %v2824
        %v3444 = vpop.f32.mrf.mxu0
        %v3445 = vadd.f32 %v3140, %v3444
        %v3446 = vpop.f32.mrf.mxu0
        %3447 = vmatprep.mubr.f32.mxu0 0.0
        %3448 = vmatmul.mubr.f32.gmra.mxu0 %v2825
        %v3449 = vpop.f32.mrf.mxu0
        %v3450 = vadd.f32 %v3145, %v3449
        %v3451 = vpop.f32.mrf.mxu0
        %3452 = vmatprep.mubr.f32.mxu0 0.0
        %3453 = vmatmul.mubr.f32.gmra.mxu0 %v2826
        %v3454 = vpop.f32.mrf.mxu0
        %v3455 = vadd.f32 %v3150, %v3454
        %v3456 = vpop.f32.mrf.mxu0
        %3457 = vmatprep.mubr.f32.mxu0 0.0
        %3458 = vmatmul.mubr.f32.gmra.mxu0 %v2827
        %v3459 = vpop.f32.mrf.mxu0
        %v3460 = vadd.f32 %v3155, %v3459
        %v3461 = vpop.f32.mrf.mxu0
        %3462 = vmatprep.mubr.f32.mxu0 0.0
        %3463 = vmatmul.mubr.f32.gmra.mxu0 %v2828
        %v3464 = vpop.f32.mrf.mxu0
        %v3465 = vadd.f32 %v3160, %v3464
        %v3466 = vpop.f32.mrf.mxu0
        %3467 = vmatprep.mubr.f32.mxu0 0.0
        %3468 = vmatmul.mubr.f32.gmra.mxu0 %v2829
        %v3469 = vpop.f32.mrf.mxu0
        %v3470 = vadd.f32 %v3165, %v3469
        %v3471 = vpop.f32.mrf.mxu0
        %3472 = vmatprep.mubr.f32.mxu0 0.0
        %3473 = vmatmul.mubr.f32.gmra.mxu0 %v2830
        %v3474 = vpop.f32.mrf.mxu0
        %v3475 = vadd.f32 %v3170, %v3474
        %v3476 = vpop.f32.mrf.mxu0
        %3477 = vmatprep.mubr.f32.mxu0 0.0
        %3478 = vmatmul.mubr.f32.gmra.mxu0 %v2831
        %v3479 = vpop.f32.mrf.mxu0
        %v3480 = vadd.f32 %v3175, %v3479
        %v3481 = vpop.f32.mrf.mxu0
        %3482 = vmatprep.mubr.f32.mxu0 0.0
        %3483 = vmatmul.mubr.f32.gmra.mxu0 %v2832
        %v3484 = vpop.f32.mrf.mxu0
        %v3485 = vadd.f32 %v3180, %v3484
        %v3486 = vpop.f32.mrf.mxu0
        %3487 = vmatprep.mubr.f32.mxu0 0.0
        %3488 = vmatmul.mubr.f32.gmra.mxu0 %v2833
        %v3489 = vpop.f32.mrf.mxu0
        %v3490 = vadd.f32 %v3185, %v3489
        %v3491 = vpop.f32.mrf.mxu0
        %3492 = vdwg.mxu0
        %v3493 = vadd.f32 %v2452, %v3255
        %v3494 = vadd.f32 %v2457, %v3260
        %v3495 = vadd.f32 %v2462, %v3265
        %v3496 = vadd.f32 %v2467, %v3270
        %v3497 = vadd.f32 %v2472, %v3275
        %v3498 = vadd.f32 %v2477, %v3280
        %v3499 = vadd.f32 %v2482, %v3285
        %v3500 = vadd.f32 %v2487, %v3290
        %v3501 = vadd.f32 %v2492, %v3295
        %v3502 = vadd.f32 %v2497, %v3300
        %v3503 = vadd.f32 %v2502, %v3305
        %v3504 = vadd.f32 %v2507, %v3310
        %v3505 = vadd.f32 %v2512, %v3315
        %v3506 = vadd.f32 %v2517, %v3320
        %v3507 = vadd.f32 %v2522, %v3325
        %v3508 = vadd.f32 %v2527, %v3330
        %v3509 = vadd.f32 %v2532, %v3335
        %v3510 = vadd.f32 %v2537, %v3340
        %v3511 = vadd.f32 %v2542, %v3345
        %v3512 = vadd.f32 %v2547, %v3350
        %v3513 = vadd.f32 %v2552, %v3355
        %v3514 = vadd.f32 %v2557, %v3360
        %v3515 = vadd.f32 %v2562, %v3365
        %v3516 = vadd.f32 %v2567, %v3370
        %v3517 = vadd.f32 %v2572, %v3375
        %v3518 = vadd.f32 %v2577, %v3380
        %v3519 = vadd.f32 %v2582, %v3385
        %v3520 = vadd.f32 %v2587, %v3390
        %v3521 = vadd.f32 %v2592, %v3395
        %v3522 = vadd.f32 %v2597, %v3400
        %v3523 = vadd.f32 %v2602, %v3405
        %v3524 = vadd.f32 %v2607, %v3410
        %v3525 = vadd.f32 %v2612, %v3415
        %v3526 = vadd.f32 %v2617, %v3420
        %v3527 = vadd.f32 %v2622, %v3425
        %v3528 = vadd.f32 %v2627, %v3430
        %v3529 = vadd.f32 %v2632, %v3435
        %v3530 = vadd.f32 %v2637, %v3440
        %v3531 = vadd.f32 %v2642, %v3445
        %v3532 = vadd.f32 %v2647, %v3450
        %v3533 = vadd.f32 %v2652, %v3455
        %v3534 = vadd.f32 %v2657, %v3460
        %v3535 = vadd.f32 %v2662, %v3465
        %v3536 = vadd.f32 %v2667, %v3470
        %v3537 = vadd.f32 %v2672, %v3475
        %v3538 = vadd.f32 %v2677, %v3480
        %v3539 = vadd.f32 %v2682, %v3485
        %v3540 = vadd.f32 %v2687, %v3490
        %v3541 = vlaneseq
        %v3542 = vshrl.u32 %v3541, 7
        %v3543 = vsub.s32 0, %v3542
        %v3544 = vrot.slane %v1219, %v3543
        %v3545 = vadd.f32 %v3493, %v3544
        %v3546 = vadd.f32 %v3494, %v3544
        %v3547 = vadd.f32 %v3495, %v3544
        %v3548 = vadd.f32 %v3496, %v3544
        %v3549 = vadd.f32 %v3497, %v3544
        %v3550 = vadd.f32 %v3498, %v3544
        %v3551 = vadd.f32 %v3499, %v3544
        %v3552 = vadd.f32 %v3500, %v3544
        %v3553 = vadd.f32 %v3501, %v3544
        %v3554 = vadd.f32 %v3502, %v3544
        %v3555 = vadd.f32 %v3503, %v3544
        %v3556 = vadd.f32 %v3504, %v3544
        %v3557 = vadd.f32 %v3505, %v3544
        %v3558 = vadd.f32 %v3506, %v3544
        %v3559 = vadd.f32 %v3507, %v3544
        %v3560 = vadd.f32 %v3508, %v3544
        %v3561 = vadd.f32 %v3509, %v3544
        %v3562 = vadd.f32 %v3510, %v3544
        %v3563 = vadd.f32 %v3511, %v3544
        %v3564 = vadd.f32 %v3512, %v3544
        %v3565 = vadd.f32 %v3513, %v3544
        %v3566 = vadd.f32 %v3514, %v3544
        %v3567 = vadd.f32 %v3515, %v3544
        %v3568 = vadd.f32 %v3516, %v3544
        %v3569 = vadd.f32 %v3517, %v3544
        %v3570 = vadd.f32 %v3518, %v3544
        %v3571 = vadd.f32 %v3519, %v3544
        %v3572 = vadd.f32 %v3520, %v3544
        %v3573 = vadd.f32 %v3521, %v3544
        %v3574 = vadd.f32 %v3522, %v3544
        %v3575 = vadd.f32 %v3523, %v3544
        %v3576 = vadd.f32 %v3524, %v3544
        %v3577 = vadd.f32 %v3525, %v3544
        %v3578 = vadd.f32 %v3526, %v3544
        %v3579 = vadd.f32 %v3527, %v3544
        %v3580 = vadd.f32 %v3528, %v3544
        %v3581 = vadd.f32 %v3529, %v3544
        %v3582 = vadd.f32 %v3530, %v3544
        %v3583 = vadd.f32 %v3531, %v3544
        %v3584 = vadd.f32 %v3532, %v3544
        %v3585 = vadd.f32 %v3533, %v3544
        %v3586 = vadd.f32 %v3534, %v3544
        %v3587 = vadd.f32 %v3535, %v3544
        %v3588 = vadd.f32 %v3536, %v3544
        %v3589 = vadd.f32 %v3537, %v3544
        %v3590 = vadd.f32 %v3538, %v3544
        %v3591 = vadd.f32 %v3539, %v3544
        %v3592 = vadd.f32 %v3540, %v3544
        %v3593 = vsel %vm1171, 1, 0
        %v3594 = vsel %vm1172, 1, 0
        %v3595 = vsel %vm1173, 1, 0
        %v3596 = vsel %vm1174, 1, 0
        %v3597 = vsel %vm1175, 1, 0
        %v3598 = vsel %vm1176, 1, 0
        %v3599 = vsel %vm1177, 1, 0
        %v3600 = vsel %vm1178, 1, 0
        %v3601 = vsel %vm1179, 1, 0
        %v3602 = vsel %vm1180, 1, 0
        %v3603 = vsel %vm1181, 1, 0
        %v3604 = vsel %vm1182, 1, 0
        %v3605 = vsel %vm1183, 1, 0
        %v3606 = vsel %vm1184, 1, 0
        %v3607 = vsel %vm1185, 1, 0
        %v3608 = vsel %vm1186, 1, 0
        %v3609 = vsel %vm1187, 1, 0
        %v3610 = vsel %vm1188, 1, 0
        %v3611 = vsel %vm1189, 1, 0
        %v3612 = vsel %vm1190, 1, 0
        %v3613 = vsel %vm1191, 1, 0
        %v3614 = vsel %vm1192, 1, 0
        %v3615 = vsel %vm1193, 1, 0
        %v3616 = vsel %vm1194, 1, 0
        %v3617 = vsel %vm1195, 1, 0
        %v3618 = vsel %vm1196, 1, 0
        %v3619 = vsel %vm1197, 1, 0
        %v3620 = vsel %vm1198, 1, 0
        %v3621 = vsel %vm1199, 1, 0
        %v3622 = vsel %vm1200, 1, 0
        %v3623 = vsel %vm1201, 1, 0
        %v3624 = vsel %vm1202, 1, 0
        %v3625 = vsel %vm1203, 1, 0
        %v3626 = vsel %vm1204, 1, 0
        %v3627 = vsel %vm1205, 1, 0
        %v3628 = vsel %vm1206, 1, 0
        %v3629 = vsel %vm1207, 1, 0
        %v3630 = vsel %vm1208, 1, 0
        %v3631 = vsel %vm1209, 1, 0
        %v3632 = vsel %vm1210, 1, 0
        %v3633 = vsel %vm1211, 1, 0
        %v3634 = vsel %vm1212, 1, 0
        %v3635 = vsel %vm1213, 1, 0
        %v3636 = vsel %vm1214, 1, 0
        %v3637 = vsel %vm1215, 1, 0
        %v3638 = vsel %vm1216, 1, 0
        %v3639 = vsel %vm1217, 1, 0
        %v3640 = vsel %vm1218, 1, 0
        %vm3641 = vcmp.eq.s32.totalorder %v3593, 1
        %vm3642 = vcmp.eq.s32.totalorder %v3594, 1
        %vm3643 = vcmp.eq.s32.totalorder %v3595, 1
        %vm3644 = vcmp.eq.s32.totalorder %v3596, 1
        %vm3645 = vcmp.eq.s32.totalorder %v3597, 1
        %vm3646 = vcmp.eq.s32.totalorder %v3598, 1
        %vm3647 = vcmp.eq.s32.totalorder %v3599, 1
        %vm3648 = vcmp.eq.s32.totalorder %v3600, 1
        %vm3649 = vcmp.eq.s32.totalorder %v3601, 1
        %vm3650 = vcmp.eq.s32.totalorder %v3602, 1
        %vm3651 = vcmp.eq.s32.totalorder %v3603, 1
        %vm3652 = vcmp.eq.s32.totalorder %v3604, 1
        %vm3653 = vcmp.eq.s32.totalorder %v3605, 1
        %vm3654 = vcmp.eq.s32.totalorder %v3606, 1
        %vm3655 = vcmp.eq.s32.totalorder %v3607, 1
        %vm3656 = vcmp.eq.s32.totalorder %v3608, 1
        %vm3657 = vcmp.eq.s32.totalorder %v3609, 1
        %vm3658 = vcmp.eq.s32.totalorder %v3610, 1
        %vm3659 = vcmp.eq.s32.totalorder %v3611, 1
        %vm3660 = vcmp.eq.s32.totalorder %v3612, 1
        %vm3661 = vcmp.eq.s32.totalorder %v3613, 1
        %vm3662 = vcmp.eq.s32.totalorder %v3614, 1
        %vm3663 = vcmp.eq.s32.totalorder %v3615, 1
        %vm3664 = vcmp.eq.s32.totalorder %v3616, 1
        %vm3665 = vcmp.eq.s32.totalorder %v3617, 1
        %vm3666 = vcmp.eq.s32.totalorder %v3618, 1
        %vm3667 = vcmp.eq.s32.totalorder %v3619, 1
        %vm3668 = vcmp.eq.s32.totalorder %v3620, 1
        %vm3669 = vcmp.eq.s32.totalorder %v3621, 1
        %vm3670 = vcmp.eq.s32.totalorder %v3622, 1
        %vm3671 = vcmp.eq.s32.totalorder %v3623, 1
        %vm3672 = vcmp.eq.s32.totalorder %v3624, 1
        %vm3673 = vcmp.eq.s32.totalorder %v3625, 1
        %vm3674 = vcmp.eq.s32.totalorder %v3626, 1
        %vm3675 = vcmp.eq.s32.totalorder %v3627, 1
        %vm3676 = vcmp.eq.s32.totalorder %v3628, 1
        %vm3677 = vcmp.eq.s32.totalorder %v3629, 1
        %vm3678 = vcmp.eq.s32.totalorder %v3630, 1
        %vm3679 = vcmp.eq.s32.totalorder %v3631, 1
        %vm3680 = vcmp.eq.s32.totalorder %v3632, 1
        %vm3681 = vcmp.eq.s32.totalorder %v3633, 1
        %vm3682 = vcmp.eq.s32.totalorder %v3634, 1
        %vm3683 = vcmp.eq.s32.totalorder %v3635, 1
        %vm3684 = vcmp.eq.s32.totalorder %v3636, 1
        %vm3685 = vcmp.eq.s32.totalorder %v3637, 1
        %vm3686 = vcmp.eq.s32.totalorder %v3638, 1
        %vm3687 = vcmp.eq.s32.totalorder %v3639, 1
        %vm3688 = vcmp.eq.s32.totalorder %v3640, 1
        %v3689 = vsel %vm3641, %v3545, 0.0
        %v3690 = vsel %vm3642, %v3546, 0.0
        %v3691 = vsel %vm3643, %v3547, 0.0
        %v3692 = vsel %vm3644, %v3548, 0.0
        %v3693 = vsel %vm3645, %v3549, 0.0
        %v3694 = vsel %vm3646, %v3550, 0.0
        %v3695 = vsel %vm3647, %v3551, 0.0
        %v3696 = vsel %vm3648, %v3552, 0.0
        %v3697 = vsel %vm3649, %v3553, 0.0
        %v3698 = vsel %vm3650, %v3554, 0.0
        %v3699 = vsel %vm3651, %v3555, 0.0
        %v3700 = vsel %vm3652, %v3556, 0.0
        %v3701 = vsel %vm3653, %v3557, 0.0
        %v3702 = vsel %vm3654, %v3558, 0.0
        %v3703 = vsel %vm3655, %v3559, 0.0
        %v3704 = vsel %vm3656, %v3560, 0.0
        %v3705 = vsel %vm3657, %v3561, 0.0
        %v3706 = vsel %vm3658, %v3562, 0.0
        %v3707 = vsel %vm3659, %v3563, 0.0
        %v3708 = vsel %vm3660, %v3564, 0.0
        %v3709 = vsel %vm3661, %v3565, 0.0
        %v3710 = vsel %vm3662, %v3566, 0.0
        %v3711 = vsel %vm3663, %v3567, 0.0
        %v3712 = vsel %vm3664, %v3568, 0.0
        %v3713 = vsel %vm3665, %v3569, 0.0
        %v3714 = vsel %vm3666, %v3570, 0.0
        %v3715 = vsel %vm3667, %v3571, 0.0
        %v3716 = vsel %vm3668, %v3572, 0.0
        %v3717 = vsel %vm3669, %v3573, 0.0
        %v3718 = vsel %vm3670, %v3574, 0.0
        %v3719 = vsel %vm3671, %v3575, 0.0
        %v3720 = vsel %vm3672, %v3576, 0.0
        %v3721 = vsel %vm3673, %v3577, 0.0
        %v3722 = vsel %vm3674, %v3578, 0.0
        %v3723 = vsel %vm3675, %v3579, 0.0
        %v3724 = vsel %vm3676, %v3580, 0.0
        %v3725 = vsel %vm3677, %v3581, 0.0
        %v3726 = vsel %vm3678, %v3582, 0.0
        %v3727 = vsel %vm3679, %v3583, 0.0
        %v3728 = vsel %vm3680, %v3584, 0.0
        %v3729 = vsel %vm3681, %v3585, 0.0
        %v3730 = vsel %vm3682, %v3586, 0.0
        %v3731 = vsel %vm3683, %v3587, 0.0
        %v3732 = vsel %vm3684, %v3588, 0.0
        %v3733 = vsel %vm3685, %v3589, 0.0
        %v3734 = vsel %vm3686, %v3590, 0.0
        %v3735 = vsel %vm3687, %v3591, 0.0
        %v3736 = vsel %vm3688, %v3592, 0.0
        %v3737 = vadd.f32 %v3689, %v3690
        %v3738 = vadd.f32 %v3737, %v3691
        %v3739 = vadd.f32 %v3738, %v3692
        %v3740 = vadd.f32 %v3739, %v3693
        %v3741 = vadd.f32 %v3740, %v3694
        %v3742 = vadd.f32 %v3741, %v3695
        %v3743 = vadd.f32 %v3742, %v3696
        %v3744 = vadd.f32 %v3743, %v3697
        %v3745 = vadd.f32 %v3744, %v3698
        %v3746 = vadd.f32 %v3745, %v3699
        %v3747 = vadd.f32 %v3746, %v3700
        %v3748 = vadd.f32 %v3747, %v3701
        %v3749 = vadd.f32 %v3748, %v3702
        %v3750 = vadd.f32 %v3749, %v3703
        %v3751 = vadd.f32 %v3750, %v3704
        %v3752 = vadd.f32 %v3751, %v3705
        %v3753 = vadd.f32 %v3752, %v3706
        %v3754 = vadd.f32 %v3753, %v3707
        %v3755 = vadd.f32 %v3754, %v3708
        %v3756 = vadd.f32 %v3755, %v3709
        %v3757 = vadd.f32 %v3756, %v3710
        %v3758 = vadd.f32 %v3757, %v3711
        %v3759 = vadd.f32 %v3758, %v3712
        %v3760 = vadd.f32 %v3759, %v3713
        %v3761 = vadd.f32 %v3760, %v3714
        %v3762 = vadd.f32 %v3761, %v3715
        %v3763 = vadd.f32 %v3762, %v3716
        %v3764 = vadd.f32 %v3763, %v3717
        %v3765 = vadd.f32 %v3764, %v3718
        %v3766 = vadd.f32 %v3765, %v3719
        %v3767 = vadd.f32 %v3766, %v3720
        %v3768 = vadd.f32 %v3767, %v3721
        %v3769 = vadd.f32 %v3768, %v3722
        %v3770 = vadd.f32 %v3769, %v3723
        %v3771 = vadd.f32 %v3770, %v3724
        %v3772 = vadd.f32 %v3771, %v3725
        %v3773 = vadd.f32 %v3772, %v3726
        %v3774 = vadd.f32 %v3773, %v3727
        %v3775 = vadd.f32 %v3774, %v3728
        %v3776 = vadd.f32 %v3775, %v3729
        %v3777 = vadd.f32 %v3776, %v3730
        %v3778 = vadd.f32 %v3777, %v3731
        %v3779 = vadd.f32 %v3778, %v3732
        %v3780 = vadd.f32 %v3779, %v3733
        %v3781 = vadd.f32 %v3780, %v3734
        %v3782 = vadd.f32 %v3781, %v3735
        %v3783 = vadd.f32 %v3782, %v3736
        %v3784 = vrot.slane %v3783, 4
        %v3785 = vadd.f32 %v3783, %v3784
        %v3786 = vrot.slane %v3785, 2
        %v3787 = vadd.f32 %v3785, %v3786
        %v3788 = vrot.slane %v3787, 1
        %v3789 = vadd.f32 %v3787, %v3788
        %v3790 = vmul.f32 %v3789, 0.00390625
        %v3791 = vmul.f32 %v3689, %v3689
        %v3792 = vmul.f32 %v3690, %v3690
        %v3793 = vmul.f32 %v3691, %v3691
        %v3794 = vmul.f32 %v3692, %v3692
        %v3795 = vmul.f32 %v3693, %v3693
        %v3796 = vmul.f32 %v3694, %v3694
        %v3797 = vmul.f32 %v3695, %v3695
        %v3798 = vmul.f32 %v3696, %v3696
        %v3799 = vmul.f32 %v3697, %v3697
        %v3800 = vmul.f32 %v3698, %v3698
        %v3801 = vmul.f32 %v3699, %v3699
        %v3802 = vmul.f32 %v3700, %v3700
        %v3803 = vmul.f32 %v3701, %v3701
        %v3804 = vmul.f32 %v3702, %v3702
        %v3805 = vmul.f32 %v3703, %v3703
        %v3806 = vmul.f32 %v3704, %v3704
        %v3807 = vmul.f32 %v3705, %v3705
        %v3808 = vmul.f32 %v3706, %v3706
        %v3809 = vmul.f32 %v3707, %v3707
        %v3810 = vmul.f32 %v3708, %v3708
        %v3811 = vmul.f32 %v3709, %v3709
        %v3812 = vmul.f32 %v3710, %v3710
        %v3813 = vmul.f32 %v3711, %v3711
        %v3814 = vmul.f32 %v3712, %v3712
        %v3815 = vmul.f32 %v3713, %v3713
        %v3816 = vmul.f32 %v3714, %v3714
        %v3817 = vmul.f32 %v3715, %v3715
        %v3818 = vmul.f32 %v3716, %v3716
        %v3819 = vmul.f32 %v3717, %v3717
        %v3820 = vmul.f32 %v3718, %v3718
        %v3821 = vmul.f32 %v3719, %v3719
        %v3822 = vmul.f32 %v3720, %v3720
        %v3823 = vmul.f32 %v3721, %v3721
        %v3824 = vmul.f32 %v3722, %v3722
        %v3825 = vmul.f32 %v3723, %v3723
        %v3826 = vmul.f32 %v3724, %v3724
        %v3827 = vmul.f32 %v3725, %v3725
        %v3828 = vmul.f32 %v3726, %v3726
        %v3829 = vmul.f32 %v3727, %v3727
        %v3830 = vmul.f32 %v3728, %v3728
        %v3831 = vmul.f32 %v3729, %v3729
        %v3832 = vmul.f32 %v3730, %v3730
        %v3833 = vmul.f32 %v3731, %v3731
        %v3834 = vmul.f32 %v3732, %v3732
        %v3835 = vmul.f32 %v3733, %v3733
        %v3836 = vmul.f32 %v3734, %v3734
        %v3837 = vmul.f32 %v3735, %v3735
        %v3838 = vmul.f32 %v3736, %v3736
        %v3839 = vadd.f32 %v3791, %v3792
        %v3840 = vadd.f32 %v3839, %v3793
        %v3841 = vadd.f32 %v3840, %v3794
        %v3842 = vadd.f32 %v3841, %v3795
        %v3843 = vadd.f32 %v3842, %v3796
        %v3844 = vadd.f32 %v3843, %v3797
        %v3845 = vadd.f32 %v3844, %v3798
        %v3846 = vadd.f32 %v3845, %v3799
        %v3847 = vadd.f32 %v3846, %v3800
        %v3848 = vadd.f32 %v3847, %v3801
        %v3849 = vadd.f32 %v3848, %v3802
        %v3850 = vadd.f32 %v3849, %v3803
        %v3851 = vadd.f32 %v3850, %v3804
        %v3852 = vadd.f32 %v3851, %v3805
        %v3853 = vadd.f32 %v3852, %v3806
        %v3854 = vadd.f32 %v3853, %v3807
        %v3855 = vadd.f32 %v3854, %v3808
        %v3856 = vadd.f32 %v3855, %v3809
        %v3857 = vadd.f32 %v3856, %v3810
        %v3858 = vadd.f32 %v3857, %v3811
        %v3859 = vadd.f32 %v3858, %v3812
        %v3860 = vadd.f32 %v3859, %v3813
        %v3861 = vadd.f32 %v3860, %v3814
        %v3862 = vadd.f32 %v3861, %v3815
        %v3863 = vadd.f32 %v3862, %v3816
        %v3864 = vadd.f32 %v3863, %v3817
        %v3865 = vadd.f32 %v3864, %v3818
        %v3866 = vadd.f32 %v3865, %v3819
        %v3867 = vadd.f32 %v3866, %v3820
        %v3868 = vadd.f32 %v3867, %v3821
        %v3869 = vadd.f32 %v3868, %v3822
        %v3870 = vadd.f32 %v3869, %v3823
        %v3871 = vadd.f32 %v3870, %v3824
        %v3872 = vadd.f32 %v3871, %v3825
        %v3873 = vadd.f32 %v3872, %v3826
        %v3874 = vadd.f32 %v3873, %v3827
        %v3875 = vadd.f32 %v3874, %v3828
        %v3876 = vadd.f32 %v3875, %v3829
        %v3877 = vadd.f32 %v3876, %v3830
        %v3878 = vadd.f32 %v3877, %v3831
        %v3879 = vadd.f32 %v3878, %v3832
        %v3880 = vadd.f32 %v3879, %v3833
        %v3881 = vadd.f32 %v3880, %v3834
        %v3882 = vadd.f32 %v3881, %v3835
        %v3883 = vadd.f32 %v3882, %v3836
        %v3884 = vadd.f32 %v3883, %v3837
        %v3885 = vadd.f32 %v3884, %v3838
        %v3886 = vrot.slane %v3885, 4
        %v3887 = vadd.f32 %v3885, %v3886
        %v3888 = vrot.slane %v3887, 2
        %v3889 = vadd.f32 %v3887, %v3888
        %v3890 = vrot.slane %v3889, 1
        %v3891 = vadd.f32 %v3889, %v3890
        %v3892 = vmul.f32 %v3891, 0.00390625
        %v3893 = vmul.f32 %v3790, %v3790
        %v3894 = vsub.f32 %v3892, %v3893
        %v3895 = vsub.f32 %v3545, %v3790
        %v3896 = vsub.f32 %v3546, %v3790
        %v3897 = vsub.f32 %v3547, %v3790
        %v3898 = vsub.f32 %v3548, %v3790
        %v3899 = vsub.f32 %v3549, %v3790
        %v3900 = vsub.f32 %v3550, %v3790
        %v3901 = vsub.f32 %v3551, %v3790
        %v3902 = vsub.f32 %v3552, %v3790
        %v3903 = vsub.f32 %v3553, %v3790
        %v3904 = vsub.f32 %v3554, %v3790
        %v3905 = vsub.f32 %v3555, %v3790
        %v3906 = vsub.f32 %v3556, %v3790
        %v3907 = vsub.f32 %v3557, %v3790
        %v3908 = vsub.f32 %v3558, %v3790
        %v3909 = vsub.f32 %v3559, %v3790
        %v3910 = vsub.f32 %v3560, %v3790
        %v3911 = vsub.f32 %v3561, %v3790
        %v3912 = vsub.f32 %v3562, %v3790
        %v3913 = vsub.f32 %v3563, %v3790
        %v3914 = vsub.f32 %v3564, %v3790
        %v3915 = vsub.f32 %v3565, %v3790
        %v3916 = vsub.f32 %v3566, %v3790
        %v3917 = vsub.f32 %v3567, %v3790
        %v3918 = vsub.f32 %v3568, %v3790
        %v3919 = vsub.f32 %v3569, %v3790
        %v3920 = vsub.f32 %v3570, %v3790
        %v3921 = vsub.f32 %v3571, %v3790
        %v3922 = vsub.f32 %v3572, %v3790
        %v3923 = vsub.f32 %v3573, %v3790
        %v3924 = vsub.f32 %v3574, %v3790
        %v3925 = vsub.f32 %v3575, %v3790
        %v3926 = vsub.f32 %v3576, %v3790
        %v3927 = vsub.f32 %v3577, %v3790
        %v3928 = vsub.f32 %v3578, %v3790
        %v3929 = vsub.f32 %v3579, %v3790
        %v3930 = vsub.f32 %v3580, %v3790
        %v3931 = vsub.f32 %v3581, %v3790
        %v3932 = vsub.f32 %v3582, %v3790
        %v3933 = vsub.f32 %v3583, %v3790
        %v3934 = vsub.f32 %v3584, %v3790
        %v3935 = vsub.f32 %v3585, %v3790
        %v3936 = vsub.f32 %v3586, %v3790
        %v3937 = vsub.f32 %v3587, %v3790
        %v3938 = vsub.f32 %v3588, %v3790
        %v3939 = vsub.f32 %v3589, %v3790
        %v3940 = vsub.f32 %v3590, %v3790
        %v3941 = vsub.f32 %v3591, %v3790
        %v3942 = vsub.f32 %v3592, %v3790
        %v3943 = vadd.f32 %v3894, 1e-05
        %v3944 = vrsqrt.pop %v3943
        %v3945 = vmul.f32 %v3895, %v3944
        %v3946 = vmul.f32 %v3896, %v3944
        %v3947 = vmul.f32 %v3897, %v3944
        %v3948 = vmul.f32 %v3898, %v3944
        %v3949 = vmul.f32 %v3899, %v3944
        %v3950 = vmul.f32 %v3900, %v3944
        %v3951 = vmul.f32 %v3901, %v3944
        %v3952 = vmul.f32 %v3902, %v3944
        %v3953 = vmul.f32 %v3903, %v3944
        %v3954 = vmul.f32 %v3904, %v3944
        %v3955 = vmul.f32 %v3905, %v3944
        %v3956 = vmul.f32 %v3906, %v3944
        %v3957 = vmul.f32 %v3907, %v3944
        %v3958 = vmul.f32 %v3908, %v3944
        %v3959 = vmul.f32 %v3909, %v3944
        %v3960 = vmul.f32 %v3910, %v3944
        %v3961 = vmul.f32 %v3911, %v3944
        %v3962 = vmul.f32 %v3912, %v3944
        %v3963 = vmul.f32 %v3913, %v3944
        %v3964 = vmul.f32 %v3914, %v3944
        %v3965 = vmul.f32 %v3915, %v3944
        %v3966 = vmul.f32 %v3916, %v3944
        %v3967 = vmul.f32 %v3917, %v3944
        %v3968 = vmul.f32 %v3918, %v3944
        %v3969 = vmul.f32 %v3919, %v3944
        %v3970 = vmul.f32 %v3920, %v3944
        %v3971 = vmul.f32 %v3921, %v3944
        %v3972 = vmul.f32 %v3922, %v3944
        %v3973 = vmul.f32 %v3923, %v3944
        %v3974 = vmul.f32 %v3924, %v3944
        %v3975 = vmul.f32 %v3925, %v3944
        %v3976 = vmul.f32 %v3926, %v3944
        %v3977 = vmul.f32 %v3927, %v3944
        %v3978 = vmul.f32 %v3928, %v3944
        %v3979 = vmul.f32 %v3929, %v3944
        %v3980 = vmul.f32 %v3930, %v3944
        %v3981 = vmul.f32 %v3931, %v3944
        %v3982 = vmul.f32 %v3932, %v3944
        %v3983 = vmul.f32 %v3933, %v3944
        %v3984 = vmul.f32 %v3934, %v3944
        %v3985 = vmul.f32 %v3935, %v3944
        %v3986 = vmul.f32 %v3936, %v3944
        %v3987 = vmul.f32 %v3937, %v3944
        %v3988 = vmul.f32 %v3938, %v3944
        %v3989 = vmul.f32 %v3939, %v3944
        %v3990 = vmul.f32 %v3940, %v3944
        %v3991 = vmul.f32 %v3941, %v3944
        %v3992 = vmul.f32 %v3942, %v3944
        %v3993 = vlaneseq
        %v3994 = vshrl.u32 %v3993, 7
        %v3995 = vsub.s32 1, %v3994
        %v3996 = vrot.slane %v1219, %v3995
        %v3997 = vmul.f32 %v3945, %v3996
        %v3998 = vmul.f32 %v3946, %v3996
        %v3999 = vmul.f32 %v3947, %v3996
        %v4000 = vmul.f32 %v3948, %v3996
        %v4001 = vmul.f32 %v3949, %v3996
        %v4002 = vmul.f32 %v3950, %v3996
        %v4003 = vmul.f32 %v3951, %v3996
        %v4004 = vmul.f32 %v3952, %v3996
        %v4005 = vmul.f32 %v3953, %v3996
        %v4006 = vmul.f32 %v3954, %v3996
        %v4007 = vmul.f32 %v3955, %v3996
        %v4008 = vmul.f32 %v3956, %v3996
        %v4009 = vmul.f32 %v3957, %v3996
        %v4010 = vmul.f32 %v3958, %v3996
        %v4011 = vmul.f32 %v3959, %v3996
        %v4012 = vmul.f32 %v3960, %v3996
        %v4013 = vmul.f32 %v3961, %v3996
        %v4014 = vmul.f32 %v3962, %v3996
        %v4015 = vmul.f32 %v3963, %v3996
        %v4016 = vmul.f32 %v3964, %v3996
        %v4017 = vmul.f32 %v3965, %v3996
        %v4018 = vmul.f32 %v3966, %v3996
        %v4019 = vmul.f32 %v3967, %v3996
        %v4020 = vmul.f32 %v3968, %v3996
        %v4021 = vmul.f32 %v3969, %v3996
        %v4022 = vmul.f32 %v3970, %v3996
        %v4023 = vmul.f32 %v3971, %v3996
        %v4024 = vmul.f32 %v3972, %v3996
        %v4025 = vmul.f32 %v3973, %v3996
        %v4026 = vmul.f32 %v3974, %v3996
        %v4027 = vmul.f32 %v3975, %v3996
        %v4028 = vmul.f32 %v3976, %v3996
        %v4029 = vmul.f32 %v3977, %v3996
        %v4030 = vmul.f32 %v3978, %v3996
        %v4031 = vmul.f32 %v3979, %v3996
        %v4032 = vmul.f32 %v3980, %v3996
        %v4033 = vmul.f32 %v3981, %v3996
        %v4034 = vmul.f32 %v3982, %v3996
        %v4035 = vmul.f32 %v3983, %v3996
        %v4036 = vmul.f32 %v3984, %v3996
        %v4037 = vmul.f32 %v3985, %v3996
        %v4038 = vmul.f32 %v3986, %v3996
        %v4039 = vmul.f32 %v3987, %v3996
        %v4040 = vmul.f32 %v3988, %v3996
        %v4041 = vmul.f32 %v3989, %v3996
        %v4042 = vmul.f32 %v3990, %v3996
        %v4043 = vmul.f32 %v3991, %v3996
        %v4044 = vmul.f32 %v3992, %v3996
        %v4045 = vlaneseq
        %v4046 = vshrl.u32 %v4045, 7
        %v4047 = vsub.s32 2, %v4046
        %v4048 = vrot.slane %v1219, %v4047
        %v4049 = vadd.f32 %v3997, %v4048
        %v4050 = vadd.f32 %v3998, %v4048
        %v4051 = vadd.f32 %v3999, %v4048
        %v4052 = vadd.f32 %v4000, %v4048
        %v4053 = vadd.f32 %v4001, %v4048
        %v4054 = vadd.f32 %v4002, %v4048
        %v4055 = vadd.f32 %v4003, %v4048
        %v4056 = vadd.f32 %v4004, %v4048
        %v4057 = vadd.f32 %v4005, %v4048
        %v4058 = vadd.f32 %v4006, %v4048
        %v4059 = vadd.f32 %v4007, %v4048
        %v4060 = vadd.f32 %v4008, %v4048
        %v4061 = vadd.f32 %v4009, %v4048
        %v4062 = vadd.f32 %v4010, %v4048
        %v4063 = vadd.f32 %v4011, %v4048
        %v4064 = vadd.f32 %v4012, %v4048
        %v4065 = vadd.f32 %v4013, %v4048
        %v4066 = vadd.f32 %v4014, %v4048
        %v4067 = vadd.f32 %v4015, %v4048
        %v4068 = vadd.f32 %v4016, %v4048
        %v4069 = vadd.f32 %v4017, %v4048
        %v4070 = vadd.f32 %v4018, %v4048
        %v4071 = vadd.f32 %v4019, %v4048
        %v4072 = vadd.f32 %v4020, %v4048
        %v4073 = vadd.f32 %v4021, %v4048
        %v4074 = vadd.f32 %v4022, %v4048
        %v4075 = vadd.f32 %v4023, %v4048
        %v4076 = vadd.f32 %v4024, %v4048
        %v4077 = vadd.f32 %v4025, %v4048
        %v4078 = vadd.f32 %v4026, %v4048
        %v4079 = vadd.f32 %v4027, %v4048
        %v4080 = vadd.f32 %v4028, %v4048
        %v4081 = vadd.f32 %v4029, %v4048
        %v4082 = vadd.f32 %v4030, %v4048
        %v4083 = vadd.f32 %v4031, %v4048
        %v4084 = vadd.f32 %v4032, %v4048
        %v4085 = vadd.f32 %v4033, %v4048
        %v4086 = vadd.f32 %v4034, %v4048
        %v4087 = vadd.f32 %v4035, %v4048
        %v4088 = vadd.f32 %v4036, %v4048
        %v4089 = vadd.f32 %v4037, %v4048
        %v4090 = vadd.f32 %v4038, %v4048
        %v4091 = vadd.f32 %v4039, %v4048
        %v4092 = vadd.f32 %v4040, %v4048
        %v4093 = vadd.f32 %v4041, %v4048
        %v4094 = vadd.f32 %v4042, %v4048
        %v4095 = vadd.f32 %v4043, %v4048
        %v4096 = vadd.f32 %v4044, %v4048
        %v4097 = vmax.f32 %v4049, 0.0
        %v4098 = vmax.f32 %v4050, 0.0
        %v4099 = vmax.f32 %v4051, 0.0
        %v4100 = vmax.f32 %v4052, 0.0
        %v4101 = vmax.f32 %v4053, 0.0
        %v4102 = vmax.f32 %v4054, 0.0
        %v4103 = vmax.f32 %v4055, 0.0
        %v4104 = vmax.f32 %v4056, 0.0
        %v4105 = vmax.f32 %v4057, 0.0
        %v4106 = vmax.f32 %v4058, 0.0
        %v4107 = vmax.f32 %v4059, 0.0
        %v4108 = vmax.f32 %v4060, 0.0
        %v4109 = vmax.f32 %v4061, 0.0
        %v4110 = vmax.f32 %v4062, 0.0
        %v4111 = vmax.f32 %v4063, 0.0
        %v4112 = vmax.f32 %v4064, 0.0
        %v4113 = vmax.f32 %v4065, 0.0
        %v4114 = vmax.f32 %v4066, 0.0
        %v4115 = vmax.f32 %v4067, 0.0
        %v4116 = vmax.f32 %v4068, 0.0
        %v4117 = vmax.f32 %v4069, 0.0
        %v4118 = vmax.f32 %v4070, 0.0
        %v4119 = vmax.f32 %v4071, 0.0
        %v4120 = vmax.f32 %v4072, 0.0
        %v4121 = vmax.f32 %v4073, 0.0
        %v4122 = vmax.f32 %v4074, 0.0
        %v4123 = vmax.f32 %v4075, 0.0
        %v4124 = vmax.f32 %v4076, 0.0
        %v4125 = vmax.f32 %v4077, 0.0
        %v4126 = vmax.f32 %v4078, 0.0
        %v4127 = vmax.f32 %v4079, 0.0
        %v4128 = vmax.f32 %v4080, 0.0
        %v4129 = vmax.f32 %v4081, 0.0
        %v4130 = vmax.f32 %v4082, 0.0
        %v4131 = vmax.f32 %v4083, 0.0
        %v4132 = vmax.f32 %v4084, 0.0
        %v4133 = vmax.f32 %v4085, 0.0
        %v4134 = vmax.f32 %v4086, 0.0
        %v4135 = vmax.f32 %v4087, 0.0
        %v4136 = vmax.f32 %v4088, 0.0
        %v4137 = vmax.f32 %v4089, 0.0
        %v4138 = vmax.f32 %v4090, 0.0
        %v4139 = vmax.f32 %v4091, 0.0
        %v4140 = vmax.f32 %v4092, 0.0
        %v4141 = vmax.f32 %v4093, 0.0
        %v4142 = vmax.f32 %v4094, 0.0
        %v4143 = vmax.f32 %v4095, 0.0
        %v4144 = vmax.f32 %v4096, 0.0
        %4145 = vst [vmem:[#allocation2] sm:$0xff] 0.0
        %4146 = vst [vmem:[#allocation2 + $0x1b8] sm:$0xff] 0.0
        %4147 = vst [vmem:[#allocation2 + $0x20] sm:$0xff] %v4097
        %4148 = vst [vmem:[#allocation2 + $0x28] sm:$0xff] %v4098
        %4149 = vst [vmem:[#allocation2 + $0x30] sm:$0xff] %v4099
        %4150 = vst [vmem:[#allocation2 + $0x38] sm:$0xff] %v4100
        %4151 = vst [vmem:[#allocation2 + $0x40] sm:$0xff] %v4101
        %4152 = vst [vmem:[#allocation2 + $0x48] sm:$0xff] %v4102
        %4153 = vst [vmem:[#allocation2 + $0x50] sm:$0xff] %v4103
        %4154 = vst [vmem:[#allocation2 + $0x58] sm:$0xff] %v4104
        %4155 = vst [vmem:[#allocation2 + $0x60] sm:$0xff] %v4105
        %4156 = vst [vmem:[#allocation2 + $0x68] sm:$0xff] %v4106
        %4157 = vst [vmem:[#allocation2 + $0x70] sm:$0xff] %v4107
        %4158 = vst [vmem:[#allocation2 + $0x78] sm:$0xff] %v4108
        %4159 = vst [vmem:[#allocation2 + $0x80] sm:$0xff] %v4109
        %4160 = vst [vmem:[#allocation2 + $0x88] sm:$0xff] %v4110
        %4161 = vst [vmem:[#allocation2 + $0x90] sm:$0xff] %v4111
        %4162 = vst [vmem:[#allocation2 + $0x98] sm:$0xff] %v4112
        %4163 = vst [vmem:[#allocation2 + $0xa0] sm:$0xff] %v4113
        %4164 = vst [vmem:[#allocation2 + $0xa8] sm:$0xff] %v4114
        %4165 = vst [vmem:[#allocation2 + $0xb0] sm:$0xff] %v4115
        %4166 = vst [vmem:[#allocation2 + $0xb8] sm:$0xff] %v4116
        %4167 = vst [vmem:[#allocation2 + $0xc0] sm:$0xff] %v4117
        %4168 = vst [vmem:[#allocation2 + $0xc8] sm:$0xff] %v4118
        %4169 = vst [vmem:[#allocation2 + $0xd0] sm:$0xff] %v4119
        %4170 = vst [vmem:[#allocation2 + $0xd8] sm:$0xff] %v4120
        %4171 = vst [vmem:[#allocation2 + $0xe0] sm:$0xff] %v4121
        %4172 = vst [vmem:[#allocation2 + $0xe8] sm:$0xff] %v4122
        %4173 = vst [vmem:[#allocation2 + $0xf0] sm:$0xff] %v4123
        %4174 = vst [vmem:[#allocation2 + $0xf8] sm:$0xff] %v4124
        %4175 = vst [vmem:[#allocation2 + $0x100] sm:$0xff] %v4125
        %4176 = vst [vmem:[#allocation2 + $0x108] sm:$0xff] %v4126
        %4177 = vst [vmem:[#allocation2 + $0x110] sm:$0xff] %v4127
        %4178 = vst [vmem:[#allocation2 + $0x118] sm:$0xff] %v4128
        %4179 = vst [vmem:[#allocation2 + $0x120] sm:$0xff] %v4129
        %4180 = vst [vmem:[#allocation2 + $0x128] sm:$0xff] %v4130
        %4181 = vst [vmem:[#allocation2 + $0x130] sm:$0xff] %v4131
        %4182 = vst [vmem:[#allocation2 + $0x138] sm:$0xff] %v4132
        %4183 = vst [vmem:[#allocation2 + $0x140] sm:$0xff] %v4133
        %4184 = vst [vmem:[#allocation2 + $0x148] sm:$0xff] %v4134
        %4185 = vst [vmem:[#allocation2 + $0x150] sm:$0xff] %v4135
        %4186 = vst [vmem:[#allocation2 + $0x158] sm:$0xff] %v4136
        %4187 = vst [vmem:[#allocation2 + $0x160] sm:$0xff] %v4137
        %4188 = vst [vmem:[#allocation2 + $0x168] sm:$0xff] %v4138
        %4189 = vst [vmem:[#allocation2 + $0x170] sm:$0xff] %v4139
        %4190 = vst [vmem:[#allocation2 + $0x178] sm:$0xff] %v4140
        %4191 = vst [vmem:[#allocation2 + $0x180] sm:$0xff] %v4141
        %4192 = vst [vmem:[#allocation2 + $0x188] sm:$0xff] %v4142
        %4193 = vst [vmem:[#allocation2 + $0x190] sm:$0xff] %v4143
        %4194 = vst [vmem:[#allocation2 + $0x198] sm:$0xff] %v4144
        %v4195 = vld [vmem:[#allocation2 + $0x38] sm:$0xff]
        %v4196 = vld [vmem:[#allocation2 + $0x40] sm:$0xff]
        %v4197 = vld [vmem:[#allocation2 + $0x48] sm:$0xff]
        %4198 = vst [vmem:[#allocation2 + $0x8] sm:$0xff] %v4195
        %4199 = vst [vmem:[#allocation2 + $0x10] sm:$0xff] %v4196
        %4200 = vst [vmem:[#allocation2 + $0x18] sm:$0xff] %v4197
        %v4201 = vld [vmem:[#allocation2 + $0x170] sm:$0xff]
        %v4202 = vld [vmem:[#allocation2 + $0x178] sm:$0xff]
        %v4203 = vld [vmem:[#allocation2 + $0x180] sm:$0xff]
        %4204 = vst [vmem:[#allocation2 + $0x1a0] sm:$0xff] %v4201
        %4205 = vst [vmem:[#allocation2 + $0x1a8] sm:$0xff] %v4202
        %4206 = vst [vmem:[#allocation2 + $0x1b0] sm:$0xff] %v4203
        %v4207 = vld [vmem:[#allocation2 + $0xa] sm:$0x1]
        %4208 = vst [vmem:[#allocation2 + $0x8] sm:$0x1] %v4207
        %v4209 = vld [vmem:[#allocation2 + $0x17] sm:$0x1]
        %4210 = vst [vmem:[#allocation2 + $0x19] sm:$0x1] %v4209
        %v4211 = vld [vmem:[#allocation2 + $0x22] sm:$0x1]
        %4212 = vst [vmem:[#allocation2 + $0x20] sm:$0x1] %v4211
        %v4213 = vld [vmem:[#allocation2 + $0x2f] sm:$0x1]
        %4214 = vst [vmem:[#allocation2 + $0x31] sm:$0x1] %v4213
        %v4215 = vld [vmem:[#allocation2 + $0x3a] sm:$0x1]
        %4216 = vst [vmem:[#allocation2 + $0x38] sm:$0x1] %v4215
        %v4217 = vld [vmem:[#allocation2 + $0x47] sm:$0x1]
        %4218 = vst [vmem:[#allocation2 + $0x49] sm:$0x1] %v4217
        %v4219 = vld [vmem:[#allocation2 + $0x52] sm:$0x1]
        %4220 = vst [vmem:[#allocation2 + $0x50] sm:$0x1] %v4219
        %v4221 = vld [vmem:[#allocation2 + $0x5f] sm:$0x1]
        %4222 = vst [vmem:[#allocation2 + $0x61] sm:$0x1] %v4221
        %v4223 = vld [vmem:[#allocation2 + $0x6a] sm:$0x1]
        %4224 = vst [vmem:[#allocation2 + $0x68] sm:$0x1] %v4223
        %v4225 = vld [vmem:[#allocation2 + $0x77] sm:$0x1]
        %4226 = vst [vmem:[#allocation2 + $0x79] sm:$0x1] %v4225
        %v4227 = vld [vmem:[#allocation2 + $0x82] sm:$0x1]
        %4228 = vst [vmem:[#allocation2 + $0x80] sm:$0x1] %v4227
        %v4229 = vld [vmem:[#allocation2 + $0x8f] sm:$0x1]
        %4230 = vst [vmem:[#allocation2 + $0x91] sm:$0x1] %v4229
        %v4231 = vld [vmem:[#allocation2 + $0x9a] sm:$0x1]
        %4232 = vst [vmem:[#allocation2 + $0x98] sm:$0x1] %v4231
        %v4233 = vld [vmem:[#allocation2 + $0xa7] sm:$0x1]
        %4234 = vst [vmem:[#allocation2 + $0xa9] sm:$0x1] %v4233
        %v4235 = vld [vmem:[#allocation2 + $0xb2] sm:$0x1]
        %4236 = vst [vmem:[#allocation2 + $0xb0] sm:$0x1] %v4235
        %v4237 = vld [vmem:[#allocation2 + $0xbf] sm:$0x1]
        %4238 = vst [vmem:[#allocation2 + $0xc1] sm:$0x1] %v4237
        %v4239 = vld [vmem:[#allocation2 + $0xca] sm:$0x1]
        %4240 = vst [vmem:[#allocation2 + $0xc8] sm:$0x1] %v4239
        %v4241 = vld [vmem:[#allocation2 + $0xd7] sm:$0x1]
        %4242 = vst [vmem:[#allocation2 + $0xd9] sm:$0x1] %v4241
        %v4243 = vld [vmem:[#allocation2 + $0xe2] sm:$0x1]
        %4244 = vst [vmem:[#allocation2 + $0xe0] sm:$0x1] %v4243
        %v4245 = vld [vmem:[#allocation2 + $0xef] sm:$0x1]
        %4246 = vst [vmem:[#allocation2 + $0xf1] sm:$0x1] %v4245
        %v4247 = vld [vmem:[#allocation2 + $0xfa] sm:$0x1]
        %4248 = vst [vmem:[#allocation2 + $0xf8] sm:$0x1] %v4247
        %v4249 = vld [vmem:[#allocation2 + $0x107] sm:$0x1]
        %4250 = vst [vmem:[#allocation2 + $0x109] sm:$0x1] %v4249
        %v4251 = vld [vmem:[#allocation2 + $0x112] sm:$0x1]
        %4252 = vst [vmem:[#allocation2 + $0x110] sm:$0x1] %v4251
        %v4253 = vld [vmem:[#allocation2 + $0x11f] sm:$0x1]
        %4254 = vst [vmem:[#allocation2 + $0x121] sm:$0x1] %v4253
        %v4255 = vld [vmem:[#allocation2 + $0x12a] sm:$0x1]
        %4256 = vst [vmem:[#allocation2 + $0x128] sm:$0x1] %v4255
        %v4257 = vld [vmem:[#allocation2 + $0x137] sm:$0x1]
        %4258 = vst [vmem:[#allocation2 + $0x139] sm:$0x1] %v4257
        %v4259 = vld [vmem:[#allocation2 + $0x142] sm:$0x1]
        %4260 = vst [vmem:[#allocation2 + $0x140] sm:$0x1] %v4259
        %v4261 = vld [vmem:[#allocation2 + $0x14f] sm:$0x1]
        %4262 = vst [vmem:[#allocation2 + $0x151] sm:$0x1] %v4261
        %v4263 = vld [vmem:[#allocation2 + $0x15a] sm:$0x1]
        %4264 = vst [vmem:[#allocation2 + $0x158] sm:$0x1] %v4263
        %v4265 = vld [vmem:[#allocation2 + $0x167] sm:$0x1]
        %4266 = vst [vmem:[#allocation2 + $0x169] sm:$0x1] %v4265
        %v4267 = vld [vmem:[#allocation2 + $0x172] sm:$0x1]
        %4268 = vst [vmem:[#allocation2 + $0x170] sm:$0x1] %v4267
        %v4269 = vld [vmem:[#allocation2 + $0x17f] sm:$0x1]
        %4270 = vst [vmem:[#allocation2 + $0x181] sm:$0x1] %v4269
        %v4271 = vld [vmem:[#allocation2 + $0x18a] sm:$0x1]
        %4272 = vst [vmem:[#allocation2 + $0x188] sm:$0x1] %v4271
        %v4273 = vld [vmem:[#allocation2 + $0x197] sm:$0x1]
        %4274 = vst [vmem:[#allocation2 + $0x199] sm:$0x1] %v4273
        %v4275 = vld [vmem:[#allocation2 + $0x1a2] sm:$0x1]
        %4276 = vst [vmem:[#allocation2 + $0x1a0] sm:$0x1] %v4275
        %v4277 = vld [vmem:[#allocation2 + $0x1af] sm:$0x1]
        %4278 = vst [vmem:[#allocation2 + $0x1b1] sm:$0x1] %v4277
        %v4279 = vld [vmem:[#allocation2 + $0x7] sm:$0xff]
        %v4280 = vld [vmem:[#allocation2 + $0xf] sm:$0xff]
        %v4281 = vld [vmem:[#allocation2 + $0x17] sm:$0xff]
        %v4282 = vld [vmem:[#allocation2 + $0x1f] sm:$0xff]
        %v4283 = vld [vmem:[#allocation2 + $0x27] sm:$0xff]
        %v4284 = vld [vmem:[#allocation2 + $0x2f] sm:$0xff]
        %v4285 = vld [vmem:[#allocation2 + $0x37] sm:$0xff]
        %v4286 = vld [vmem:[#allocation2 + $0x3f] sm:$0xff]
        %v4287 = vld [vmem:[#allocation2 + $0x47] sm:$0xff]
        %v4288 = vld [vmem:[#allocation2 + $0x4f] sm:$0xff]
        %v4289 = vld [vmem:[#allocation2 + $0x57] sm:$0xff]
        %v4290 = vld [vmem:[#allocation2 + $0x5f] sm:$0xff]
        %v4291 = vld [vmem:[#allocation2 + $0x67] sm:$0xff]
        %v4292 = vld [vmem:[#allocation2 + $0x6f] sm:$0xff]
        %v4293 = vld [vmem:[#allocation2 + $0x77] sm:$0xff]
        %v4294 = vld [vmem:[#allocation2 + $0x7f] sm:$0xff]
        %v4295 = vld [vmem:[#allocation2 + $0x87] sm:$0xff]
        %v4296 = vld [vmem:[#allocation2 + $0x8f] sm:$0xff]
        %v4297 = vld [vmem:[#allocation2 + $0x97] sm:$0xff]
        %v4298 = vld [vmem:[#allocation2 + $0x9f] sm:$0xff]
        %v4299 = vld [vmem:[#allocation2 + $0xa7] sm:$0xff]
        %v4300 = vld [vmem:[#allocation2 + $0xaf] sm:$0xff]
        %v4301 = vld [vmem:[#allocation2 + $0xb7] sm:$0xff]
        %v4302 = vld [vmem:[#allocation2 + $0xbf] sm:$0xff]
        %v4303 = vld [vmem:[#allocation2 + $0xc7] sm:$0xff]
        %v4304 = vld [vmem:[#allocation2 + $0xcf] sm:$0xff]
        %v4305 = vld [vmem:[#allocation2 + $0xd7] sm:$0xff]
        %v4306 = vld [vmem:[#allocation2 + $0xdf] sm:$0xff]
        %v4307 = vld [vmem:[#allocation2 + $0xe7] sm:$0xff]
        %v4308 = vld [vmem:[#allocation2 + $0xef] sm:$0xff]
        %v4309 = vld [vmem:[#allocation2 + $0xf7] sm:$0xff]
        %v4310 = vld [vmem:[#allocation2 + $0xff] sm:$0xff]
        %v4311 = vld [vmem:[#allocation2 + $0x107] sm:$0xff]
        %v4312 = vld [vmem:[#allocation2 + $0x10f] sm:$0xff]
        %v4313 = vld [vmem:[#allocation2 + $0x117] sm:$0xff]
        %v4314 = vld [vmem:[#allocation2 + $0x11f] sm:$0xff]
        %v4315 = vld [vmem:[#allocation2 + $0x127] sm:$0xff]
        %v4316 = vld [vmem:[#allocation2 + $0x12f] sm:$0xff]
        %v4317 = vld [vmem:[#allocation2 + $0x137] sm:$0xff]
        %v4318 = vld [vmem:[#allocation2 + $0x13f] sm:$0xff]
        %v4319 = vld [vmem:[#allocation2 + $0x147] sm:$0xff]
        %v4320 = vld [vmem:[#allocation2 + $0x14f] sm:$0xff]
        %v4321 = vld [vmem:[#allocation2 + $0x157] sm:$0xff]
        %v4322 = vld [vmem:[#allocation2 + $0x15f] sm:$0xff]
        %v4323 = vld [vmem:[#allocation2 + $0x167] sm:$0xff]
        %v4324 = vld [vmem:[#allocation2 + $0x16f] sm:$0xff]
        %v4325 = vld [vmem:[#allocation2 + $0x177] sm:$0xff]
        %v4326 = vld [vmem:[#allocation2 + $0x17f] sm:$0xff]
        %v4327 = vld [vmem:[#allocation2 + $0x8] sm:$0xff]
        %v4328 = vld [vmem:[#allocation2 + $0x10] sm:$0xff]
        %v4329 = vld [vmem:[#allocation2 + $0x18] sm:$0xff]
        %v4330 = vld [vmem:[#allocation2 + $0x20] sm:$0xff]
        %v4331 = vld [vmem:[#allocation2 + $0x28] sm:$0xff]
        %v4332 = vld [vmem:[#allocation2 + $0x30] sm:$0xff]
        %v4333 = vld [vmem:[#allocation2 + $0x38] sm:$0xff]
        %v4334 = vld [vmem:[#allocation2 + $0x40] sm:$0xff]
        %v4335 = vld [vmem:[#allocation2 + $0x48] sm:$0xff]
        %v4336 = vld [vmem:[#allocation2 + $0x50] sm:$0xff]
        %v4337 = vld [vmem:[#allocation2 + $0x58] sm:$0xff]
        %v4338 = vld [vmem:[#allocation2 + $0x60] sm:$0xff]
        %v4339 = vld [vmem:[#allocation2 + $0x68] sm:$0xff]
        %v4340 = vld [vmem:[#allocation2 + $0x70] sm:$0xff]
        %v4341 = vld [vmem:[#allocation2 + $0x78] sm:$0xff]
        %v4342 = vld [vmem:[#allocation2 + $0x80] sm:$0xff]
        %v4343 = vld [vmem:[#allocation2 + $0x88] sm:$0xff]
        %v4344 = vld [vmem:[#allocation2 + $0x90] sm:$0xff]
        %v4345 = vld [vmem:[#allocation2 + $0x98] sm:$0xff]
        %v4346 = vld [vmem:[#allocation2 + $0xa0] sm:$0xff]
        %v4347 = vld [vmem:[#allocation2 + $0xa8] sm:$0xff]
        %v4348 = vld [vmem:[#allocation2 + $0xb0] sm:$0xff]
        %v4349 = vld [vmem:[#allocation2 + $0xb8] sm:$0xff]
        %v4350 = vld [vmem:[#allocation2 + $0xc0] sm:$0xff]
        %v4351 = vld [vmem:[#allocation2 + $0xc8] sm:$0xff]
        %v4352 = vld [vmem:[#allocation2 + $0xd0] sm:$0xff]
        %v4353 = vld [vmem:[#allocation2 + $0xd8] sm:$0xff]
        %v4354 = vld [vmem:[#allocation2 + $0xe0] sm:$0xff]
        %v4355 = vld [vmem:[#allocation2 + $0xe8] sm:$0xff]
        %v4356 = vld [vmem:[#allocation2 + $0xf0] sm:$0xff]
        %v4357 = vld [vmem:[#allocation2 + $0xf8] sm:$0xff]
        %v4358 = vld [vmem:[#allocation2 + $0x100] sm:$0xff]
        %v4359 = vld [vmem:[#allocation2 + $0x108] sm:$0xff]
        %v4360 = vld [vmem:[#allocation2 + $0x110] sm:$0xff]
        %v4361 = vld [vmem:[#allocation2 + $0x118] sm:$0xff]
        %v4362 = vld [vmem:[#allocation2 + $0x120] sm:$0xff]
        %v4363 = vld [vmem:[#allocation2 + $0x128] sm:$0xff]
        %v4364 = vld [vmem:[#allocation2 + $0x130] sm:$0xff]
        %v4365 = vld [vmem:[#allocation2 + $0x138] sm:$0xff]
        %v4366 = vld [vmem:[#allocation2 + $0x140] sm:$0xff]
        %v4367 = vld [vmem:[#allocation2 + $0x148] sm:$0xff]
        %v4368 = vld [vmem:[#allocation2 + $0x150] sm:$0xff]
        %v4369 = vld [vmem:[#allocation2 + $0x158] sm:$0xff]
        %v4370 = vld [vmem:[#allocation2 + $0x160] sm:$0xff]
        %v4371 = vld [vmem:[#allocation2 + $0x168] sm:$0xff]
        %v4372 = vld [vmem:[#allocation2 + $0x170] sm:$0xff]
        %v4373 = vld [vmem:[#allocation2 + $0x178] sm:$0xff]
        %v4374 = vld [vmem:[#allocation2 + $0x180] sm:$0xff]
        %v4375 = vld [vmem:[#allocation2 + $0x9] sm:$0xff]
        %v4376 = vld [vmem:[#allocation2 + $0x11] sm:$0xff]
        %v4377 = vld [vmem:[#allocation2 + $0x19] sm:$0xff]
        %v4378 = vld [vmem:[#allocation2 + $0x21] sm:$0xff]
        %v4379 = vld [vmem:[#allocation2 + $0x29] sm:$0xff]
        %v4380 = vld [vmem:[#allocation2 + $0x31] sm:$0xff]
        %v4381 = vld [vmem:[#allocation2 + $0x39] sm:$0xff]
        %v4382 = vld [vmem:[#allocation2 + $0x41] sm:$0xff]
        %v4383 = vld [vmem:[#allocation2 + $0x49] sm:$0xff]
        %v4384 = vld [vmem:[#allocation2 + $0x51] sm:$0xff]
        %v4385 = vld [vmem:[#allocation2 + $0x59] sm:$0xff]
        %v4386 = vld [vmem:[#allocation2 + $0x61] sm:$0xff]
        %v4387 = vld [vmem:[#allocation2 + $0x69] sm:$0xff]
        %v4388 = vld [vmem:[#allocation2 + $0x71] sm:$0xff]
        %v4389 = vld [vmem:[#allocation2 + $0x79] sm:$0xff]
        %v4390 = vld [vmem:[#allocation2 + $0x81] sm:$0xff]
        %v4391 = vld [vmem:[#allocation2 + $0x89] sm:$0xff]
        %v4392 = vld [vmem:[#allocation2 + $0x91] sm:$0xff]
        %v4393 = vld [vmem:[#allocation2 + $0x99] sm:$0xff]
        %v4394 = vld [vmem:[#allocation2 + $0xa1] sm:$0xff]
        %v4395 = vld [vmem:[#allocation2 + $0xa9] sm:$0xff]
        %v4396 = vld [vmem:[#allocation2 + $0xb1] sm:$0xff]
        %v4397 = vld [vmem:[#allocation2 + $0xb9] sm:$0xff]
        %v4398 = vld [vmem:[#allocation2 + $0xc1] sm:$0xff]
        %v4399 = vld [vmem:[#allocation2 + $0xc9] sm:$0xff]
        %v4400 = vld [vmem:[#allocation2 + $0xd1] sm:$0xff]
        %v4401 = vld [vmem:[#allocation2 + $0xd9] sm:$0xff]
        %v4402 = vld [vmem:[#allocation2 + $0xe1] sm:$0xff]
        %v4403 = vld [vmem:[#allocation2 + $0xe9] sm:$0xff]
        %v4404 = vld [vmem:[#allocation2 + $0xf1] sm:$0xff]
        %v4405 = vld [vmem:[#allocation2 + $0xf9] sm:$0xff]
        %v4406 = vld [vmem:[#allocation2 + $0x101] sm:$0xff]
        %v4407 = vld [vmem:[#allocation2 + $0x109] sm:$0xff]
        %v4408 = vld [vmem:[#allocation2 + $0x111] sm:$0xff]
        %v4409 = vld [vmem:[#allocation2 + $0x119] sm:$0xff]
        %v4410 = vld [vmem:[#allocation2 + $0x121] sm:$0xff]
        %v4411 = vld [vmem:[#allocation2 + $0x129] sm:$0xff]
        %v4412 = vld [vmem:[#allocation2 + $0x131] sm:$0xff]
        %v4413 = vld [vmem:[#allocation2 + $0x139] sm:$0xff]
        %v4414 = vld [vmem:[#allocation2 + $0x141] sm:$0xff]
        %v4415 = vld [vmem:[#allocation2 + $0x149] sm:$0xff]
        %v4416 = vld [vmem:[#allocation2 + $0x151] sm:$0xff]
        %v4417 = vld [vmem:[#allocation2 + $0x159] sm:$0xff]
        %v4418 = vld [vmem:[#allocation2 + $0x161] sm:$0xff]
        %v4419 = vld [vmem:[#allocation2 + $0x169] sm:$0xff]
        %v4420 = vld [vmem:[#allocation2 + $0x171] sm:$0xff]
        %v4421 = vld [vmem:[#allocation2 + $0x179] sm:$0xff]
        %v4422 = vld [vmem:[#allocation2 + $0x181] sm:$0xff]
        %v4423 = vld [vmem:[#allocation8] sm:$0xff]
        %v4424 = vld [vmem:[#allocation8 + $0x8] sm:$0xff]
        %v4425 = vld [vmem:[#allocation8 + $0x10] sm:$0xff]
        %v4426 = vld [vmem:[#allocation8 + $0x18] sm:$0xff]
        %v4427 = vld [vmem:[#allocation8 + $0x20] sm:$0xff]
        %v4428 = vld [vmem:[#allocation8 + $0x28] sm:$0xff]
        %v4429 = vld [vmem:[#allocation8 + $0x30] sm:$0xff]
        %v4430 = vld [vmem:[#allocation8 + $0x38] sm:$0xff]
        %v4431 = vld [vmem:[#allocation8 + $0x40] sm:$0xff]
        %v4432 = vld [vmem:[#allocation8 + $0x48] sm:$0xff]
        %v4433 = vld [vmem:[#allocation8 + $0x50] sm:$0xff]
        %v4434 = vld [vmem:[#allocation8 + $0x58] sm:$0xff]
        %v4435 = vld [vmem:[#allocation8 + $0x60] sm:$0xff]
        %v4436 = vld [vmem:[#allocation8 + $0x68] sm:$0xff]
        %v4437 = vld [vmem:[#allocation8 + $0x70] sm:$0xff]
        %v4438 = vld [vmem:[#allocation8 + $0x78] sm:$0xff]
        %v4439 = vld [vmem:[#allocation8 + $0x80] sm:$0xff]
        %v4440 = vld [vmem:[#allocation8 + $0x88] sm:$0xff]
        %v4441 = vld [vmem:[#allocation8 + $0x90] sm:$0xff]
        %v4442 = vld [vmem:[#allocation8 + $0x98] sm:$0xff]
        %v4443 = vld [vmem:[#allocation8 + $0xa0] sm:$0xff]
        %v4444 = vld [vmem:[#allocation8 + $0xa8] sm:$0xff]
        %v4445 = vld [vmem:[#allocation8 + $0xb0] sm:$0xff]
        %v4446 = vld [vmem:[#allocation8 + $0xb8] sm:$0xff]
        %v4447 = vld [vmem:[#allocation8 + $0xc0] sm:$0xff]
        %v4448 = vld [vmem:[#allocation8 + $0xc8] sm:$0xff]
        %v4449 = vld [vmem:[#allocation8 + $0xd0] sm:$0xff]
        %v4450 = vld [vmem:[#allocation8 + $0xd8] sm:$0xff]
        %v4451 = vld [vmem:[#allocation8 + $0xe0] sm:$0xff]
        %v4452 = vld [vmem:[#allocation8 + $0xe8] sm:$0xff]
        %v4453 = vld [vmem:[#allocation8 + $0xf0] sm:$0xff]
        %v4454 = vld [vmem:[#allocation8 + $0xf8] sm:$0xff]
        %v4455 = vld [vmem:[#allocation8 + $0x100] sm:$0xff]
        %v4456 = vld [vmem:[#allocation8 + $0x108] sm:$0xff]
        %v4457 = vld [vmem:[#allocation8 + $0x110] sm:$0xff]
        %v4458 = vld [vmem:[#allocation8 + $0x118] sm:$0xff]
        %v4459 = vld [vmem:[#allocation8 + $0x120] sm:$0xff]
        %v4460 = vld [vmem:[#allocation8 + $0x128] sm:$0xff]
        %v4461 = vld [vmem:[#allocation8 + $0x130] sm:$0xff]
        %v4462 = vld [vmem:[#allocation8 + $0x138] sm:$0xff]
        %v4463 = vld [vmem:[#allocation8 + $0x140] sm:$0xff]
        %v4464 = vld [vmem:[#allocation8 + $0x148] sm:$0xff]
        %v4465 = vld [vmem:[#allocation8 + $0x150] sm:$0xff]
        %v4466 = vld [vmem:[#allocation8 + $0x158] sm:$0xff]
        %v4467 = vld [vmem:[#allocation8 + $0x160] sm:$0xff]
        %v4468 = vld [vmem:[#allocation8 + $0x168] sm:$0xff]
        %v4469 = vld [vmem:[#allocation8 + $0x170] sm:$0xff]
        %v4470 = vld [vmem:[#allocation8 + $0x178] sm:$0xff]
        %v4471 = vld [vmem:[#allocation2 + $0x187] sm:$0xff]
        %v4472 = vld [vmem:[#allocation2 + $0x18f] sm:$0xff]
        %v4473 = vld [vmem:[#allocation2 + $0x197] sm:$0xff]
        %v4474 = vld [vmem:[#allocation2 + $0x188] sm:$0xff]
        %v4475 = vld [vmem:[#allocation2 + $0x190] sm:$0xff]
        %v4476 = vld [vmem:[#allocation2 + $0x198] sm:$0xff]
        %v4477 = vld [vmem:[#allocation2 + $0x189] sm:$0xff]
        %v4478 = vld [vmem:[#allocation2 + $0x191] sm:$0xff]
        %v4479 = vld [vmem:[#allocation2 + $0x199] sm:$0xff]
        %s4480 = scalar_lea.vmem [#allocation8], 384
        %v4481 = vld [vmem:[%s4480] sm:$0xff]
        %v4482 = vld [vmem:[%s4480 + $0x8] sm:$0xff]
        %v4483 = vld [vmem:[%s4480 + $0x10] sm:$0xff]
        %v4484 = vld [vmem:[%s4480 + $0x18] sm:$0xff]
        %v4485 = vld [vmem:[%s4480 + $0x20] sm:$0xff]
        %v4486 = vld [vmem:[%s4480 + $0x28] sm:$0xff]
        %v4487 = vld [vmem:[%s4480 + $0x30] sm:$0xff]
        %v4488 = vld [vmem:[%s4480 + $0x38] sm:$0xff]
        %v4489 = vld [vmem:[%s4480 + $0x40] sm:$0xff]
        %v4490 = vld [vmem:[%s4480 + $0x48] sm:$0xff]
        %v4491 = vld [vmem:[%s4480 + $0x50] sm:$0xff]
        %v4492 = vld [vmem:[%s4480 + $0x58] sm:$0xff]
        %v4493 = vld [vmem:[%s4480 + $0x60] sm:$0xff]
        %v4494 = vld [vmem:[%s4480 + $0x68] sm:$0xff]
        %v4495 = vld [vmem:[%s4480 + $0x70] sm:$0xff]
        %v4496 = vld [vmem:[%s4480 + $0x78] sm:$0xff]
        %v4497 = vld [vmem:[%s4480 + $0x80] sm:$0xff]
        %v4498 = vld [vmem:[%s4480 + $0x88] sm:$0xff]
        %v4499 = vld [vmem:[%s4480 + $0x90] sm:$0xff]
        %v4500 = vld [vmem:[%s4480 + $0x98] sm:$0xff]
        %v4501 = vld [vmem:[%s4480 + $0xa0] sm:$0xff]
        %v4502 = vld [vmem:[%s4480 + $0xa8] sm:$0xff]
        %v4503 = vld [vmem:[%s4480 + $0xb0] sm:$0xff]
        %v4504 = vld [vmem:[%s4480 + $0xb8] sm:$0xff]
        %v4505 = vld [vmem:[%s4480 + $0xc0] sm:$0xff]
        %v4506 = vld [vmem:[%s4480 + $0xc8] sm:$0xff]
        %v4507 = vld [vmem:[%s4480 + $0xd0] sm:$0xff]
        %v4508 = vld [vmem:[%s4480 + $0xd8] sm:$0xff]
        %v4509 = vld [vmem:[%s4480 + $0xe0] sm:$0xff]
        %v4510 = vld [vmem:[%s4480 + $0xe8] sm:$0xff]
        %v4511 = vld [vmem:[%s4480 + $0xf0] sm:$0xff]
        %v4512 = vld [vmem:[%s4480 + $0xf8] sm:$0xff]
        %v4513 = vld [vmem:[%s4480 + $0x100] sm:$0xff]
        %v4514 = vld [vmem:[%s4480 + $0x108] sm:$0xff]
        %v4515 = vld [vmem:[%s4480 + $0x110] sm:$0xff]
        %v4516 = vld [vmem:[%s4480 + $0x118] sm:$0xff]
        %v4517 = vld [vmem:[%s4480 + $0x120] sm:$0xff]
        %v4518 = vld [vmem:[%s4480 + $0x128] sm:$0xff]
        %v4519 = vld [vmem:[%s4480 + $0x130] sm:$0xff]
        %v4520 = vld [vmem:[%s4480 + $0x138] sm:$0xff]
        %v4521 = vld [vmem:[%s4480 + $0x140] sm:$0xff]
        %v4522 = vld [vmem:[%s4480 + $0x148] sm:$0xff]
        %v4523 = vld [vmem:[%s4480 + $0x150] sm:$0xff]
        %v4524 = vld [vmem:[%s4480 + $0x158] sm:$0xff]
        %v4525 = vld [vmem:[%s4480 + $0x160] sm:$0xff]
        %v4526 = vld [vmem:[%s4480 + $0x168] sm:$0xff]
        %v4527 = vld [vmem:[%s4480 + $0x170] sm:$0xff]
        %v4528 = vld [vmem:[%s4480 + $0x178] sm:$0xff]
        %4529 = vmatprep.subr.mxu0 0.0
        %4530 = vmatpush1.msra.mxu0 %v4496
        %4531 = vmatprep.subr.mxu0 0.0
        %4532 = vmatpush1.msra.mxu0 %v4495
        %4533 = vmatprep.subr.mxu0 0.0
        %4534 = vmatpush1.msra.mxu0 %v4494
        %4535 = vmatprep.subr.mxu0 0.0
        %4536 = vmatpush1.msra.mxu0 %v4493
        %4537 = vmatprep.subr.mxu0 0.0
        %4538 = vmatpush1.msra.mxu0 %v4492
        %4539 = vmatprep.subr.mxu0 0.0
        %4540 = vmatpush1.msra.mxu0 %v4491
        %4541 = vmatprep.subr.mxu0 0.0
        %4542 = vmatpush1.msra.mxu0 %v4490
        %4543 = vmatprep.subr.mxu0 0.0
        %4544 = vmatpush1.msra.mxu0 %v4489
        %4545 = vmatprep.subr.mxu0 0.0
        %4546 = vmatpush1.msra.mxu0 %v4488
        %4547 = vmatprep.subr.mxu0 0.0
        %4548 = vmatpush1.msra.mxu0 %v4487
        %4549 = vmatprep.subr.mxu0 0.0
        %4550 = vmatpush1.msra.mxu0 %v4486
        %4551 = vmatprep.subr.mxu0 0.0
        %4552 = vmatpush1.msra.mxu0 %v4485
        %4553 = vmatprep.subr.mxu0 0.0
        %4554 = vmatpush1.msra.mxu0 %v4484
        %4555 = vmatprep.subr.mxu0 0.0
        %4556 = vmatpush1.msra.mxu0 %v4483
        %4557 = vmatprep.subr.mxu0 0.0
        %4558 = vmatpush1.msra.mxu0 %v4482
        %4559 = vmatprep.subr.mxu0 0.0
        %4560 = vmatpush1.msra.mxu0 %v4481
        %4561 = vmatprep.subr.mxu0 0.0
        %4562 = vmatpush2.msra.mxu0 %v4512
        %4563 = vmatprep.subr.mxu0 0.0
        %4564 = vmatpush2.msra.mxu0 %v4511
        %4565 = vmatprep.subr.mxu0 0.0
        %4566 = vmatpush2.msra.mxu0 %v4510
        %4567 = vmatprep.subr.mxu0 0.0
        %4568 = vmatpush2.msra.mxu0 %v4509
        %4569 = vmatprep.subr.mxu0 0.0
        %4570 = vmatpush2.msra.mxu0 %v4508
        %4571 = vmatprep.subr.mxu0 0.0
        %4572 = vmatpush2.msra.mxu0 %v4507
        %4573 = vmatprep.subr.mxu0 0.0
        %4574 = vmatpush2.msra.mxu0 %v4506
        %4575 = vmatprep.subr.mxu0 0.0
        %4576 = vmatpush2.msra.mxu0 %v4505
        %4577 = vmatprep.subr.mxu0 0.0
        %4578 = vmatpush2.msra.mxu0 %v4504
        %4579 = vmatprep.subr.mxu0 0.0
        %4580 = vmatpush2.msra.mxu0 %v4503
        %4581 = vmatprep.subr.mxu0 0.0
        %4582 = vmatpush2.msra.mxu0 %v4502
        %4583 = vmatprep.subr.mxu0 0.0
        %4584 = vmatpush2.msra.mxu0 %v4501
        %4585 = vmatprep.subr.mxu0 0.0
        %4586 = vmatpush2.msra.mxu0 %v4500
        %4587 = vmatprep.subr.mxu0 0.0
        %4588 = vmatpush2.msra.mxu0 %v4499
        %4589 = vmatprep.subr.mxu0 0.0
        %4590 = vmatpush2.msra.mxu0 %v4498
        %4591 = vmatprep.subr.mxu0 0.0
        %4592 = vmatpush2.msra.mxu0 %v4497
        %4593 = vmatprep.mubr.f32.mxu0 %v4330
        %4594 = vmatmul.mubr.f32.gmra.mxu0 %v4282
        %v4595 = vpop.f32.mrf.mxu0
        %v4596 = vadd.f32 0.0, %v4595
        %v4597 = vpop.f32.mrf.mxu0
        %4598 = vmatprep.mubr.f32.mxu0 %v4331
        %4599 = vmatmul.mubr.f32.gmra.mxu0 %v4283
        %v4600 = vpop.f32.mrf.mxu0
        %v4601 = vadd.f32 0.0, %v4600
        %v4602 = vpop.f32.mrf.mxu0
        %4603 = vmatprep.mubr.f32.mxu0 %v4332
        %4604 = vmatmul.mubr.f32.gmra.mxu0 %v4284
        %v4605 = vpop.f32.mrf.mxu0
        %v4606 = vadd.f32 0.0, %v4605
        %v4607 = vpop.f32.mrf.mxu0
        %4608 = vmatprep.mubr.f32.mxu0 %v4333
        %4609 = vmatmul.mubr.f32.gmra.mxu0 %v4285
        %v4610 = vpop.f32.mrf.mxu0
        %v4611 = vadd.f32 0.0, %v4610
        %v4612 = vpop.f32.mrf.mxu0
        %4613 = vmatprep.mubr.f32.mxu0 %v4334
        %4614 = vmatmul.mubr.f32.gmra.mxu0 %v4286
        %v4615 = vpop.f32.mrf.mxu0
        %v4616 = vadd.f32 0.0, %v4615
        %v4617 = vpop.f32.mrf.mxu0
        %4618 = vmatprep.mubr.f32.mxu0 %v4335
        %4619 = vmatmul.mubr.f32.gmra.mxu0 %v4287
        %v4620 = vpop.f32.mrf.mxu0
        %v4621 = vadd.f32 0.0, %v4620
        %v4622 = vpop.f32.mrf.mxu0
        %4623 = vmatprep.mubr.f32.mxu0 %v4336
        %4624 = vmatmul.mubr.f32.gmra.mxu0 %v4288
        %v4625 = vpop.f32.mrf.mxu0
        %v4626 = vadd.f32 0.0, %v4625
        %v4627 = vpop.f32.mrf.mxu0
        %4628 = vmatprep.mubr.f32.mxu0 %v4337
        %4629 = vmatmul.mubr.f32.gmra.mxu0 %v4289
        %v4630 = vpop.f32.mrf.mxu0
        %v4631 = vadd.f32 0.0, %v4630
        %v4632 = vpop.f32.mrf.mxu0
        %4633 = vmatprep.mubr.f32.mxu0 %v4338
        %4634 = vmatmul.mubr.f32.gmra.mxu0 %v4290
        %v4635 = vpop.f32.mrf.mxu0
        %v4636 = vadd.f32 0.0, %v4635
        %v4637 = vpop.f32.mrf.mxu0
        %4638 = vmatprep.mubr.f32.mxu0 %v4339
        %4639 = vmatmul.mubr.f32.gmra.mxu0 %v4291
        %v4640 = vpop.f32.mrf.mxu0
        %v4641 = vadd.f32 0.0, %v4640
        %v4642 = vpop.f32.mrf.mxu0
        %4643 = vmatprep.mubr.f32.mxu0 %v4340
        %4644 = vmatmul.mubr.f32.gmra.mxu0 %v4292
        %v4645 = vpop.f32.mrf.mxu0
        %v4646 = vadd.f32 0.0, %v4645
        %v4647 = vpop.f32.mrf.mxu0
        %4648 = vmatprep.mubr.f32.mxu0 %v4341
        %4649 = vmatmul.mubr.f32.gmra.mxu0 %v4293
        %v4650 = vpop.f32.mrf.mxu0
        %v4651 = vadd.f32 0.0, %v4650
        %v4652 = vpop.f32.mrf.mxu0
        %4653 = vmatprep.mubr.f32.mxu0 %v4342
        %4654 = vmatmul.mubr.f32.gmra.mxu0 %v4294
        %v4655 = vpop.f32.mrf.mxu0
        %v4656 = vadd.f32 0.0, %v4655
        %v4657 = vpop.f32.mrf.mxu0
        %4658 = vmatprep.mubr.f32.mxu0 %v4343
        %4659 = vmatmul.mubr.f32.gmra.mxu0 %v4295
        %v4660 = vpop.f32.mrf.mxu0
        %v4661 = vadd.f32 0.0, %v4660
        %v4662 = vpop.f32.mrf.mxu0
        %4663 = vmatprep.mubr.f32.mxu0 %v4344
        %4664 = vmatmul.mubr.f32.gmra.mxu0 %v4296
        %v4665 = vpop.f32.mrf.mxu0
        %v4666 = vadd.f32 0.0, %v4665
        %v4667 = vpop.f32.mrf.mxu0
        %4668 = vmatprep.mubr.f32.mxu0 %v4345
        %4669 = vmatmul.mubr.f32.gmra.mxu0 %v4297
        %v4670 = vpop.f32.mrf.mxu0
        %v4671 = vadd.f32 0.0, %v4670
        %v4672 = vpop.f32.mrf.mxu0
        %4673 = vmatprep.mubr.f32.mxu0 %v4346
        %4674 = vmatmul.mubr.f32.gmra.mxu0 %v4298
        %v4675 = vpop.f32.mrf.mxu0
        %v4676 = vadd.f32 0.0, %v4675
        %v4677 = vpop.f32.mrf.mxu0
        %4678 = vmatprep.mubr.f32.mxu0 %v4347
        %4679 = vmatmul.mubr.f32.gmra.mxu0 %v4299
        %v4680 = vpop.f32.mrf.mxu0
        %v4681 = vadd.f32 0.0, %v4680
        %v4682 = vpop.f32.mrf.mxu0
        %4683 = vmatprep.mubr.f32.mxu0 %v4348
        %4684 = vmatmul.mubr.f32.gmra.mxu0 %v4300
        %v4685 = vpop.f32.mrf.mxu0
        %v4686 = vadd.f32 0.0, %v4685
        %v4687 = vpop.f32.mrf.mxu0
        %4688 = vmatprep.mubr.f32.mxu0 %v4349
        %4689 = vmatmul.mubr.f32.gmra.mxu0 %v4301
        %v4690 = vpop.f32.mrf.mxu0
        %v4691 = vadd.f32 0.0, %v4690
        %v4692 = vpop.f32.mrf.mxu0
        %4693 = vmatprep.mubr.f32.mxu0 %v4350
        %4694 = vmatmul.mubr.f32.gmra.mxu0 %v4302
        %v4695 = vpop.f32.mrf.mxu0
        %v4696 = vadd.f32 0.0, %v4695
        %v4697 = vpop.f32.mrf.mxu0
        %4698 = vmatprep.mubr.f32.mxu0 %v4351
        %4699 = vmatmul.mubr.f32.gmra.mxu0 %v4303
        %v4700 = vpop.f32.mrf.mxu0
        %v4701 = vadd.f32 0.0, %v4700
        %v4702 = vpop.f32.mrf.mxu0
        %4703 = vmatprep.mubr.f32.mxu0 %v4352
        %4704 = vmatmul.mubr.f32.gmra.mxu0 %v4304
        %v4705 = vpop.f32.mrf.mxu0
        %v4706 = vadd.f32 0.0, %v4705
        %v4707 = vpop.f32.mrf.mxu0
        %4708 = vmatprep.mubr.f32.mxu0 %v4353
        %4709 = vmatmul.mubr.f32.gmra.mxu0 %v4305
        %v4710 = vpop.f32.mrf.mxu0
        %v4711 = vadd.f32 0.0, %v4710
        %v4712 = vpop.f32.mrf.mxu0
        %4713 = vmatprep.mubr.f32.mxu0 %v4354
        %4714 = vmatmul.mubr.f32.gmra.mxu0 %v4306
        %v4715 = vpop.f32.mrf.mxu0
        %v4716 = vadd.f32 0.0, %v4715
        %v4717 = vpop.f32.mrf.mxu0
        %4718 = vmatprep.mubr.f32.mxu0 %v4355
        %4719 = vmatmul.mubr.f32.gmra.mxu0 %v4307
        %v4720 = vpop.f32.mrf.mxu0
        %v4721 = vadd.f32 0.0, %v4720
        %v4722 = vpop.f32.mrf.mxu0
        %4723 = vmatprep.mubr.f32.mxu0 %v4356
        %4724 = vmatmul.mubr.f32.gmra.mxu0 %v4308
        %v4725 = vpop.f32.mrf.mxu0
        %v4726 = vadd.f32 0.0, %v4725
        %v4727 = vpop.f32.mrf.mxu0
        %4728 = vmatprep.mubr.f32.mxu0 %v4357
        %4729 = vmatmul.mubr.f32.gmra.mxu0 %v4309
        %v4730 = vpop.f32.mrf.mxu0
        %v4731 = vadd.f32 0.0, %v4730
        %v4732 = vpop.f32.mrf.mxu0
        %4733 = vmatprep.mubr.f32.mxu0 %v4358
        %4734 = vmatmul.mubr.f32.gmra.mxu0 %v4310
        %v4735 = vpop.f32.mrf.mxu0
        %v4736 = vadd.f32 0.0, %v4735
        %v4737 = vpop.f32.mrf.mxu0
        %4738 = vmatprep.mubr.f32.mxu0 %v4359
        %4739 = vmatmul.mubr.f32.gmra.mxu0 %v4311
        %v4740 = vpop.f32.mrf.mxu0
        %v4741 = vadd.f32 0.0, %v4740
        %v4742 = vpop.f32.mrf.mxu0
        %4743 = vmatprep.mubr.f32.mxu0 %v4360
        %4744 = vmatmul.mubr.f32.gmra.mxu0 %v4312
        %v4745 = vpop.f32.mrf.mxu0
        %v4746 = vadd.f32 0.0, %v4745
        %v4747 = vpop.f32.mrf.mxu0
        %4748 = vmatprep.mubr.f32.mxu0 %v4361
        %4749 = vmatmul.mubr.f32.gmra.mxu0 %v4313
        %v4750 = vpop.f32.mrf.mxu0
        %v4751 = vadd.f32 0.0, %v4750
        %v4752 = vpop.f32.mrf.mxu0
        %4753 = vmatprep.mubr.f32.mxu0 %v4362
        %4754 = vmatmul.mubr.f32.gmra.mxu0 %v4314
        %v4755 = vpop.f32.mrf.mxu0
        %v4756 = vadd.f32 0.0, %v4755
        %v4757 = vpop.f32.mrf.mxu0
        %4758 = vmatprep.mubr.f32.mxu0 %v4363
        %4759 = vmatmul.mubr.f32.gmra.mxu0 %v4315
        %v4760 = vpop.f32.mrf.mxu0
        %v4761 = vadd.f32 0.0, %v4760
        %v4762 = vpop.f32.mrf.mxu0
        %4763 = vmatprep.mubr.f32.mxu0 %v4364
        %4764 = vmatmul.mubr.f32.gmra.mxu0 %v4316
        %v4765 = vpop.f32.mrf.mxu0
        %v4766 = vadd.f32 0.0, %v4765
        %v4767 = vpop.f32.mrf.mxu0
        %4768 = vmatprep.mubr.f32.mxu0 %v4365
        %4769 = vmatmul.mubr.f32.gmra.mxu0 %v4317
        %v4770 = vpop.f32.mrf.mxu0
        %v4771 = vadd.f32 0.0, %v4770
        %v4772 = vpop.f32.mrf.mxu0
        %4773 = vmatprep.mubr.f32.mxu0 %v4366
        %4774 = vmatmul.mubr.f32.gmra.mxu0 %v4318
        %v4775 = vpop.f32.mrf.mxu0
        %v4776 = vadd.f32 0.0, %v4775
        %v4777 = vpop.f32.mrf.mxu0
        %4778 = vmatprep.mubr.f32.mxu0 %v4367
        %4779 = vmatmul.mubr.f32.gmra.mxu0 %v4319
        %v4780 = vpop.f32.mrf.mxu0
        %v4781 = vadd.f32 0.0, %v4780
        %v4782 = vpop.f32.mrf.mxu0
        %4783 = vmatprep.mubr.f32.mxu0 %v4368
        %4784 = vmatmul.mubr.f32.gmra.mxu0 %v4320
        %v4785 = vpop.f32.mrf.mxu0
        %v4786 = vadd.f32 0.0, %v4785
        %v4787 = vpop.f32.mrf.mxu0
        %4788 = vmatprep.mubr.f32.mxu0 %v4369
        %4789 = vmatmul.mubr.f32.gmra.mxu0 %v4321
        %v4790 = vpop.f32.mrf.mxu0
        %v4791 = vadd.f32 0.0, %v4790
        %v4792 = vpop.f32.mrf.mxu0
        %4793 = vmatprep.mubr.f32.mxu0 %v4370
        %4794 = vmatmul.mubr.f32.gmra.mxu0 %v4322
        %v4795 = vpop.f32.mrf.mxu0
        %v4796 = vadd.f32 0.0, %v4795
        %v4797 = vpop.f32.mrf.mxu0
        %4798 = vmatprep.mubr.f32.mxu0 %v4371
        %4799 = vmatmul.mubr.f32.gmra.mxu0 %v4323
        %v4800 = vpop.f32.mrf.mxu0
        %v4801 = vadd.f32 0.0, %v4800
        %v4802 = vpop.f32.mrf.mxu0
        %4803 = vmatprep.mubr.f32.mxu0 %v4372
        %4804 = vmatmul.mubr.f32.gmra.mxu0 %v4324
        %v4805 = vpop.f32.mrf.mxu0
        %v4806 = vadd.f32 0.0, %v4805
        %v4807 = vpop.f32.mrf.mxu0
        %4808 = vmatprep.mubr.f32.mxu0 %v4373
        %4809 = vmatmul.mubr.f32.gmra.mxu0 %v4325
        %v4810 = vpop.f32.mrf.mxu0
        %v4811 = vadd.f32 0.0, %v4810
        %v4812 = vpop.f32.mrf.mxu0
        %4813 = vmatprep.mubr.f32.mxu0 %v4374
        %4814 = vmatmul.mubr.f32.gmra.mxu0 %v4326
        %v4815 = vpop.f32.mrf.mxu0
        %v4816 = vadd.f32 0.0, %v4815
        %v4817 = vpop.f32.mrf.mxu0
        %4818 = vmatprep.mubr.f32.mxu0 %v4474
        %4819 = vmatmul.mubr.f32.gmra.mxu0 %v4471
        %v4820 = vpop.f32.mrf.mxu0
        %v4821 = vadd.f32 0.0, %v4820
        %v4822 = vpop.f32.mrf.mxu0
        %4823 = vmatprep.mubr.f32.mxu0 %v4475
        %4824 = vmatmul.mubr.f32.gmra.mxu0 %v4472
        %v4825 = vpop.f32.mrf.mxu0
        %v4826 = vadd.f32 0.0, %v4825
        %v4827 = vpop.f32.mrf.mxu0
        %4828 = vmatprep.mubr.f32.mxu0 %v4476
        %4829 = vmatmul.mubr.f32.gmra.mxu0 %v4473
        %v4830 = vpop.f32.mrf.mxu0
        %v4831 = vadd.f32 0.0, %v4830
        %v4832 = vpop.f32.mrf.mxu0
        %4833 = vdwg.mxu0
        %4834 = vmatprep.subr.mxu0 0.0
        %4835 = vmatpush1.msra.mxu0 %v4528
        %4836 = vmatprep.subr.mxu0 0.0
        %4837 = vmatpush1.msra.mxu0 %v4527
        %4838 = vmatprep.subr.mxu0 0.0
        %4839 = vmatpush1.msra.mxu0 %v4526
        %4840 = vmatprep.subr.mxu0 0.0
        %4841 = vmatpush1.msra.mxu0 %v4525
        %4842 = vmatprep.subr.mxu0 0.0
        %4843 = vmatpush1.msra.mxu0 %v4524
        %4844 = vmatprep.subr.mxu0 0.0
        %4845 = vmatpush1.msra.mxu0 %v4523
        %4846 = vmatprep.subr.mxu0 0.0
        %4847 = vmatpush1.msra.mxu0 %v4522
        %4848 = vmatprep.subr.mxu0 0.0
        %4849 = vmatpush1.msra.mxu0 %v4521
        %4850 = vmatprep.subr.mxu0 0.0
        %4851 = vmatpush1.msra.mxu0 %v4520
        %4852 = vmatprep.subr.mxu0 0.0
        %4853 = vmatpush1.msra.mxu0 %v4519
        %4854 = vmatprep.subr.mxu0 0.0
        %4855 = vmatpush1.msra.mxu0 %v4518
        %4856 = vmatprep.subr.mxu0 0.0
        %4857 = vmatpush1.msra.mxu0 %v4517
        %4858 = vmatprep.subr.mxu0 0.0
        %4859 = vmatpush1.msra.mxu0 %v4516
        %4860 = vmatprep.subr.mxu0 0.0
        %4861 = vmatpush1.msra.mxu0 %v4515
        %4862 = vmatprep.subr.mxu0 0.0
        %4863 = vmatpush1.msra.mxu0 %v4514
        %4864 = vmatprep.subr.mxu0 0.0
        %4865 = vmatpush1.msra.mxu0 %v4513
        %4866 = vmatprep.subr.mxu0 0.0
        %4867 = vmatpush2.msra.mxu0 0.0
        %4868 = vmatprep.subr.mxu0 0.0
        %4869 = vmatpush2.msra.mxu0 0.0
        %4870 = vmatprep.subr.mxu0 0.0
        %4871 = vmatpush2.msra.mxu0 0.0
        %4872 = vmatprep.subr.mxu0 0.0
        %4873 = vmatpush2.msra.mxu0 0.0
        %4874 = vmatprep.subr.mxu0 0.0
        %4875 = vmatpush2.msra.mxu0 0.0
        %4876 = vmatprep.subr.mxu0 0.0
        %4877 = vmatpush2.msra.mxu0 0.0
        %4878 = vmatprep.subr.mxu0 0.0
        %4879 = vmatpush2.msra.mxu0 0.0
        %4880 = vmatprep.subr.mxu0 0.0
        %4881 = vmatpush2.msra.mxu0 0.0
        %4882 = vmatprep.subr.mxu0 0.0
        %4883 = vmatpush2.msra.mxu0 0.0
        %4884 = vmatprep.subr.mxu0 0.0
        %4885 = vmatpush2.msra.mxu0 0.0
        %4886 = vmatprep.subr.mxu0 0.0
        %4887 = vmatpush2.msra.mxu0 0.0
        %4888 = vmatprep.subr.mxu0 0.0
        %4889 = vmatpush2.msra.mxu0 0.0
        %4890 = vmatprep.subr.mxu0 0.0
        %4891 = vmatpush2.msra.mxu0 0.0
        %4892 = vmatprep.subr.mxu0 0.0
        %4893 = vmatpush2.msra.mxu0 0.0
        %4894 = vmatprep.subr.mxu0 0.0
        %4895 = vmatpush2.msra.mxu0 0.0
        %4896 = vmatprep.subr.mxu0 0.0
        %4897 = vmatpush2.msra.mxu0 0.0
        %4898 = vmatprep.mubr.f32.mxu0 0.0
        %4899 = vmatmul.mubr.f32.gmra.mxu0 %v4378
        %v4900 = vpop.f32.mrf.mxu0
        %v4901 = vadd.f32 %v4596, %v4900
        %v4902 = vpop.f32.mrf.mxu0
        %4903 = vmatprep.mubr.f32.mxu0 0.0
        %4904 = vmatmul.mubr.f32.gmra.mxu0 %v4379
        %v4905 = vpop.f32.mrf.mxu0
        %v4906 = vadd.f32 %v4601, %v4905
        %v4907 = vpop.f32.mrf.mxu0
        %4908 = vmatprep.mubr.f32.mxu0 0.0
        %4909 = vmatmul.mubr.f32.gmra.mxu0 %v4380
        %v4910 = vpop.f32.mrf.mxu0
        %v4911 = vadd.f32 %v4606, %v4910
        %v4912 = vpop.f32.mrf.mxu0
        %4913 = vmatprep.mubr.f32.mxu0 0.0
        %4914 = vmatmul.mubr.f32.gmra.mxu0 %v4381
        %v4915 = vpop.f32.mrf.mxu0
        %v4916 = vadd.f32 %v4611, %v4915
        %v4917 = vpop.f32.mrf.mxu0
        %4918 = vmatprep.mubr.f32.mxu0 0.0
        %4919 = vmatmul.mubr.f32.gmra.mxu0 %v4382
        %v4920 = vpop.f32.mrf.mxu0
        %v4921 = vadd.f32 %v4616, %v4920
        %v4922 = vpop.f32.mrf.mxu0
        %4923 = vmatprep.mubr.f32.mxu0 0.0
        %4924 = vmatmul.mubr.f32.gmra.mxu0 %v4383
        %v4925 = vpop.f32.mrf.mxu0
        %v4926 = vadd.f32 %v4621, %v4925
        %v4927 = vpop.f32.mrf.mxu0
        %4928 = vmatprep.mubr.f32.mxu0 0.0
        %4929 = vmatmul.mubr.f32.gmra.mxu0 %v4384
        %v4930 = vpop.f32.mrf.mxu0
        %v4931 = vadd.f32 %v4626, %v4930
        %v4932 = vpop.f32.mrf.mxu0
        %4933 = vmatprep.mubr.f32.mxu0 0.0
        %4934 = vmatmul.mubr.f32.gmra.mxu0 %v4385
        %v4935 = vpop.f32.mrf.mxu0
        %v4936 = vadd.f32 %v4631, %v4935
        %v4937 = vpop.f32.mrf.mxu0
        %4938 = vmatprep.mubr.f32.mxu0 0.0
        %4939 = vmatmul.mubr.f32.gmra.mxu0 %v4386
        %v4940 = vpop.f32.mrf.mxu0
        %v4941 = vadd.f32 %v4636, %v4940
        %v4942 = vpop.f32.mrf.mxu0
        %4943 = vmatprep.mubr.f32.mxu0 0.0
        %4944 = vmatmul.mubr.f32.gmra.mxu0 %v4387
        %v4945 = vpop.f32.mrf.mxu0
        %v4946 = vadd.f32 %v4641, %v4945
        %v4947 = vpop.f32.mrf.mxu0
        %4948 = vmatprep.mubr.f32.mxu0 0.0
        %4949 = vmatmul.mubr.f32.gmra.mxu0 %v4388
        %v4950 = vpop.f32.mrf.mxu0
        %v4951 = vadd.f32 %v4646, %v4950
        %v4952 = vpop.f32.mrf.mxu0
        %4953 = vmatprep.mubr.f32.mxu0 0.0
        %4954 = vmatmul.mubr.f32.gmra.mxu0 %v4389
        %v4955 = vpop.f32.mrf.mxu0
        %v4956 = vadd.f32 %v4651, %v4955
        %v4957 = vpop.f32.mrf.mxu0
        %4958 = vmatprep.mubr.f32.mxu0 0.0
        %4959 = vmatmul.mubr.f32.gmra.mxu0 %v4390
        %v4960 = vpop.f32.mrf.mxu0
        %v4961 = vadd.f32 %v4656, %v4960
        %v4962 = vpop.f32.mrf.mxu0
        %4963 = vmatprep.mubr.f32.mxu0 0.0
        %4964 = vmatmul.mubr.f32.gmra.mxu0 %v4391
        %v4965 = vpop.f32.mrf.mxu0
        %v4966 = vadd.f32 %v4661, %v4965
        %v4967 = vpop.f32.mrf.mxu0
        %4968 = vmatprep.mubr.f32.mxu0 0.0
        %4969 = vmatmul.mubr.f32.gmra.mxu0 %v4392
        %v4970 = vpop.f32.mrf.mxu0
        %v4971 = vadd.f32 %v4666, %v4970
        %v4972 = vpop.f32.mrf.mxu0
        %4973 = vmatprep.mubr.f32.mxu0 0.0
        %4974 = vmatmul.mubr.f32.gmra.mxu0 %v4393
        %v4975 = vpop.f32.mrf.mxu0
        %v4976 = vadd.f32 %v4671, %v4975
        %v4977 = vpop.f32.mrf.mxu0
        %4978 = vmatprep.mubr.f32.mxu0 0.0
        %4979 = vmatmul.mubr.f32.gmra.mxu0 %v4394
        %v4980 = vpop.f32.mrf.mxu0
        %v4981 = vadd.f32 %v4676, %v4980
        %v4982 = vpop.f32.mrf.mxu0
        %4983 = vmatprep.mubr.f32.mxu0 0.0
        %4984 = vmatmul.mubr.f32.gmra.mxu0 %v4395
        %v4985 = vpop.f32.mrf.mxu0
        %v4986 = vadd.f32 %v4681, %v4985
        %v4987 = vpop.f32.mrf.mxu0
        %4988 = vmatprep.mubr.f32.mxu0 0.0
        %4989 = vmatmul.mubr.f32.gmra.mxu0 %v4396
        %v4990 = vpop.f32.mrf.mxu0
        %v4991 = vadd.f32 %v4686, %v4990
        %v4992 = vpop.f32.mrf.mxu0
        %4993 = vmatprep.mubr.f32.mxu0 0.0
        %4994 = vmatmul.mubr.f32.gmra.mxu0 %v4397
        %v4995 = vpop.f32.mrf.mxu0
        %v4996 = vadd.f32 %v4691, %v4995
        %v4997 = vpop.f32.mrf.mxu0
        %4998 = vmatprep.mubr.f32.mxu0 0.0
        %4999 = vmatmul.mubr.f32.gmra.mxu0 %v4398
        %v5000 = vpop.f32.mrf.mxu0
        %v5001 = vadd.f32 %v4696, %v5000
        %v5002 = vpop.f32.mrf.mxu0
        %5003 = vmatprep.mubr.f32.mxu0 0.0
        %5004 = vmatmul.mubr.f32.gmra.mxu0 %v4399
        %v5005 = vpop.f32.mrf.mxu0
        %v5006 = vadd.f32 %v4701, %v5005
        %v5007 = vpop.f32.mrf.mxu0
        %5008 = vmatprep.mubr.f32.mxu0 0.0
        %5009 = vmatmul.mubr.f32.gmra.mxu0 %v4400
        %v5010 = vpop.f32.mrf.mxu0
        %v5011 = vadd.f32 %v4706, %v5010
        %v5012 = vpop.f32.mrf.mxu0
        %5013 = vmatprep.mubr.f32.mxu0 0.0
        %5014 = vmatmul.mubr.f32.gmra.mxu0 %v4401
        %v5015 = vpop.f32.mrf.mxu0
        %v5016 = vadd.f32 %v4711, %v5015
        %v5017 = vpop.f32.mrf.mxu0
        %5018 = vmatprep.mubr.f32.mxu0 0.0
        %5019 = vmatmul.mubr.f32.gmra.mxu0 %v4402
        %v5020 = vpop.f32.mrf.mxu0
        %v5021 = vadd.f32 %v4716, %v5020
        %v5022 = vpop.f32.mrf.mxu0
        %5023 = vmatprep.mubr.f32.mxu0 0.0
        %5024 = vmatmul.mubr.f32.gmra.mxu0 %v4403
        %v5025 = vpop.f32.mrf.mxu0
        %v5026 = vadd.f32 %v4721, %v5025
        %v5027 = vpop.f32.mrf.mxu0
        %5028 = vmatprep.mubr.f32.mxu0 0.0
        %5029 = vmatmul.mubr.f32.gmra.mxu0 %v4404
        %v5030 = vpop.f32.mrf.mxu0
        %v5031 = vadd.f32 %v4726, %v5030
        %v5032 = vpop.f32.mrf.mxu0
        %5033 = vmatprep.mubr.f32.mxu0 0.0
        %5034 = vmatmul.mubr.f32.gmra.mxu0 %v4405
        %v5035 = vpop.f32.mrf.mxu0
        %v5036 = vadd.f32 %v4731, %v5035
        %v5037 = vpop.f32.mrf.mxu0
        %5038 = vmatprep.mubr.f32.mxu0 0.0
        %5039 = vmatmul.mubr.f32.gmra.mxu0 %v4406
        %v5040 = vpop.f32.mrf.mxu0
        %v5041 = vadd.f32 %v4736, %v5040
        %v5042 = vpop.f32.mrf.mxu0
        %5043 = vmatprep.mubr.f32.mxu0 0.0
        %5044 = vmatmul.mubr.f32.gmra.mxu0 %v4407
        %v5045 = vpop.f32.mrf.mxu0
        %v5046 = vadd.f32 %v4741, %v5045
        %v5047 = vpop.f32.mrf.mxu0
        %5048 = vmatprep.mubr.f32.mxu0 0.0
        %5049 = vmatmul.mubr.f32.gmra.mxu0 %v4408
        %v5050 = vpop.f32.mrf.mxu0
        %v5051 = vadd.f32 %v4746, %v5050
        %v5052 = vpop.f32.mrf.mxu0
        %5053 = vmatprep.mubr.f32.mxu0 0.0
        %5054 = vmatmul.mubr.f32.gmra.mxu0 %v4409
        %v5055 = vpop.f32.mrf.mxu0
        %v5056 = vadd.f32 %v4751, %v5055
        %v5057 = vpop.f32.mrf.mxu0
        %5058 = vmatprep.mubr.f32.mxu0 0.0
        %5059 = vmatmul.mubr.f32.gmra.mxu0 %v4410
        %v5060 = vpop.f32.mrf.mxu0
        %v5061 = vadd.f32 %v4756, %v5060
        %v5062 = vpop.f32.mrf.mxu0
        %5063 = vmatprep.mubr.f32.mxu0 0.0
        %5064 = vmatmul.mubr.f32.gmra.mxu0 %v4411
        %v5065 = vpop.f32.mrf.mxu0
        %v5066 = vadd.f32 %v4761, %v5065
        %v5067 = vpop.f32.mrf.mxu0
        %5068 = vmatprep.mubr.f32.mxu0 0.0
        %5069 = vmatmul.mubr.f32.gmra.mxu0 %v4412
        %v5070 = vpop.f32.mrf.mxu0
        %v5071 = vadd.f32 %v4766, %v5070
        %v5072 = vpop.f32.mrf.mxu0
        %5073 = vmatprep.mubr.f32.mxu0 0.0
        %5074 = vmatmul.mubr.f32.gmra.mxu0 %v4413
        %v5075 = vpop.f32.mrf.mxu0
        %v5076 = vadd.f32 %v4771, %v5075
        %v5077 = vpop.f32.mrf.mxu0
        %5078 = vmatprep.mubr.f32.mxu0 0.0
        %5079 = vmatmul.mubr.f32.gmra.mxu0 %v4414
        %v5080 = vpop.f32.mrf.mxu0
        %v5081 = vadd.f32 %v4776, %v5080
        %v5082 = vpop.f32.mrf.mxu0
        %5083 = vmatprep.mubr.f32.mxu0 0.0
        %5084 = vmatmul.mubr.f32.gmra.mxu0 %v4415
        %v5085 = vpop.f32.mrf.mxu0
        %v5086 = vadd.f32 %v4781, %v5085
        %v5087 = vpop.f32.mrf.mxu0
        %5088 = vmatprep.mubr.f32.mxu0 0.0
        %5089 = vmatmul.mubr.f32.gmra.mxu0 %v4416
        %v5090 = vpop.f32.mrf.mxu0
        %v5091 = vadd.f32 %v4786, %v5090
        %v5092 = vpop.f32.mrf.mxu0
        %5093 = vmatprep.mubr.f32.mxu0 0.0
        %5094 = vmatmul.mubr.f32.gmra.mxu0 %v4417
        %v5095 = vpop.f32.mrf.mxu0
        %v5096 = vadd.f32 %v4791, %v5095
        %v5097 = vpop.f32.mrf.mxu0
        %5098 = vmatprep.mubr.f32.mxu0 0.0
        %5099 = vmatmul.mubr.f32.gmra.mxu0 %v4418
        %v5100 = vpop.f32.mrf.mxu0
        %v5101 = vadd.f32 %v4796, %v5100
        %v5102 = vpop.f32.mrf.mxu0
        %5103 = vmatprep.mubr.f32.mxu0 0.0
        %5104 = vmatmul.mubr.f32.gmra.mxu0 %v4419
        %v5105 = vpop.f32.mrf.mxu0
        %v5106 = vadd.f32 %v4801, %v5105
        %v5107 = vpop.f32.mrf.mxu0
        %5108 = vmatprep.mubr.f32.mxu0 0.0
        %5109 = vmatmul.mubr.f32.gmra.mxu0 %v4420
        %v5110 = vpop.f32.mrf.mxu0
        %v5111 = vadd.f32 %v4806, %v5110
        %v5112 = vpop.f32.mrf.mxu0
        %5113 = vmatprep.mubr.f32.mxu0 0.0
        %5114 = vmatmul.mubr.f32.gmra.mxu0 %v4421
        %v5115 = vpop.f32.mrf.mxu0
        %v5116 = vadd.f32 %v4811, %v5115
        %v5117 = vpop.f32.mrf.mxu0
        %5118 = vmatprep.mubr.f32.mxu0 0.0
        %5119 = vmatmul.mubr.f32.gmra.mxu0 %v4422
        %v5120 = vpop.f32.mrf.mxu0
        %v5121 = vadd.f32 %v4816, %v5120
        %v5122 = vpop.f32.mrf.mxu0
        %5123 = vmatprep.mubr.f32.mxu0 0.0
        %5124 = vmatmul.mubr.f32.gmra.mxu0 %v4477
        %v5125 = vpop.f32.mrf.mxu0
        %v5126 = vadd.f32 %v4821, %v5125
        %v5127 = vpop.f32.mrf.mxu0
        %5128 = vmatprep.mubr.f32.mxu0 0.0
        %5129 = vmatmul.mubr.f32.gmra.mxu0 %v4478
        %v5130 = vpop.f32.mrf.mxu0
        %v5131 = vadd.f32 %v4826, %v5130
        %v5132 = vpop.f32.mrf.mxu0
        %5133 = vmatprep.mubr.f32.mxu0 0.0
        %5134 = vmatmul.mubr.f32.gmra.mxu0 %v4479
        %v5135 = vpop.f32.mrf.mxu0
        %v5136 = vadd.f32 %v4831, %v5135
        %v5137 = vpop.f32.mrf.mxu0
        %5138 = vdwg.mxu0
        %5139 = vmatprep.subr.mxu0 0.0
        %5140 = vmatpush1.msra.mxu0 %v4438
        %5141 = vmatprep.subr.mxu0 0.0
        %5142 = vmatpush1.msra.mxu0 %v4437
        %5143 = vmatprep.subr.mxu0 0.0
        %5144 = vmatpush1.msra.mxu0 %v4436
        %5145 = vmatprep.subr.mxu0 0.0
        %5146 = vmatpush1.msra.mxu0 %v4435
        %5147 = vmatprep.subr.mxu0 0.0
        %5148 = vmatpush1.msra.mxu0 %v4434
        %5149 = vmatprep.subr.mxu0 0.0
        %5150 = vmatpush1.msra.mxu0 %v4433
        %5151 = vmatprep.subr.mxu0 0.0
        %5152 = vmatpush1.msra.mxu0 %v4432
        %5153 = vmatprep.subr.mxu0 0.0
        %5154 = vmatpush1.msra.mxu0 %v4431
        %5155 = vmatprep.subr.mxu0 0.0
        %5156 = vmatpush1.msra.mxu0 %v4430
        %5157 = vmatprep.subr.mxu0 0.0
        %5158 = vmatpush1.msra.mxu0 %v4429
        %5159 = vmatprep.subr.mxu0 0.0
        %5160 = vmatpush1.msra.mxu0 %v4428
        %5161 = vmatprep.subr.mxu0 0.0
        %5162 = vmatpush1.msra.mxu0 %v4427
        %5163 = vmatprep.subr.mxu0 0.0
        %5164 = vmatpush1.msra.mxu0 %v4426
        %5165 = vmatprep.subr.mxu0 0.0
        %5166 = vmatpush1.msra.mxu0 %v4425
        %5167 = vmatprep.subr.mxu0 0.0
        %5168 = vmatpush1.msra.mxu0 %v4424
        %5169 = vmatprep.subr.mxu0 0.0
        %5170 = vmatpush1.msra.mxu0 %v4423
        %5171 = vmatprep.subr.mxu0 0.0
        %5172 = vmatpush2.msra.mxu0 %v4454
        %5173 = vmatprep.subr.mxu0 0.0
        %5174 = vmatpush2.msra.mxu0 %v4453
        %5175 = vmatprep.subr.mxu0 0.0
        %5176 = vmatpush2.msra.mxu0 %v4452
        %5177 = vmatprep.subr.mxu0 0.0
        %5178 = vmatpush2.msra.mxu0 %v4451
        %5179 = vmatprep.subr.mxu0 0.0
        %5180 = vmatpush2.msra.mxu0 %v4450
        %5181 = vmatprep.subr.mxu0 0.0
        %5182 = vmatpush2.msra.mxu0 %v4449
        %5183 = vmatprep.subr.mxu0 0.0
        %5184 = vmatpush2.msra.mxu0 %v4448
        %5185 = vmatprep.subr.mxu0 0.0
        %5186 = vmatpush2.msra.mxu0 %v4447
        %5187 = vmatprep.subr.mxu0 0.0
        %5188 = vmatpush2.msra.mxu0 %v4446
        %5189 = vmatprep.subr.mxu0 0.0
        %5190 = vmatpush2.msra.mxu0 %v4445
        %5191 = vmatprep.subr.mxu0 0.0
        %5192 = vmatpush2.msra.mxu0 %v4444
        %5193 = vmatprep.subr.mxu0 0.0
        %5194 = vmatpush2.msra.mxu0 %v4443
        %5195 = vmatprep.subr.mxu0 0.0
        %5196 = vmatpush2.msra.mxu0 %v4442
        %5197 = vmatprep.subr.mxu0 0.0
        %5198 = vmatpush2.msra.mxu0 %v4441
        %5199 = vmatprep.subr.mxu0 0.0
        %5200 = vmatpush2.msra.mxu0 %v4440
        %5201 = vmatprep.subr.mxu0 0.0
        %5202 = vmatpush2.msra.mxu0 %v4439
        %5203 = vmatprep.mubr.f32.mxu0 %v4327
        %5204 = vmatmul.mubr.f32.gmra.mxu0 %v4279
        %v5205 = vpop.f32.mrf.mxu0
        %v5206 = vadd.f32 %v4901, %v5205
        %v5207 = vpop.f32.mrf.mxu0
        %5208 = vmatprep.mubr.f32.mxu0 %v4328
        %5209 = vmatmul.mubr.f32.gmra.mxu0 %v4280
        %v5210 = vpop.f32.mrf.mxu0
        %v5211 = vadd.f32 %v4906, %v5210
        %v5212 = vpop.f32.mrf.mxu0
        %5213 = vmatprep.mubr.f32.mxu0 %v4329
        %5214 = vmatmul.mubr.f32.gmra.mxu0 %v4281
        %v5215 = vpop.f32.mrf.mxu0
        %v5216 = vadd.f32 %v4911, %v5215
        %v5217 = vpop.f32.mrf.mxu0
        %5218 = vmatprep.mubr.f32.mxu0 %v4330
        %5219 = vmatmul.mubr.f32.gmra.mxu0 %v4282
        %v5220 = vpop.f32.mrf.mxu0
        %v5221 = vadd.f32 %v4916, %v5220
        %v5222 = vpop.f32.mrf.mxu0
        %5223 = vmatprep.mubr.f32.mxu0 %v4331
        %5224 = vmatmul.mubr.f32.gmra.mxu0 %v4283
        %v5225 = vpop.f32.mrf.mxu0
        %v5226 = vadd.f32 %v4921, %v5225
        %v5227 = vpop.f32.mrf.mxu0
        %5228 = vmatprep.mubr.f32.mxu0 %v4332
        %5229 = vmatmul.mubr.f32.gmra.mxu0 %v4284
        %v5230 = vpop.f32.mrf.mxu0
        %v5231 = vadd.f32 %v4926, %v5230
        %v5232 = vpop.f32.mrf.mxu0
        %5233 = vmatprep.mubr.f32.mxu0 %v4333
        %5234 = vmatmul.mubr.f32.gmra.mxu0 %v4285
        %v5235 = vpop.f32.mrf.mxu0
        %v5236 = vadd.f32 %v4931, %v5235
        %v5237 = vpop.f32.mrf.mxu0
        %5238 = vmatprep.mubr.f32.mxu0 %v4334
        %5239 = vmatmul.mubr.f32.gmra.mxu0 %v4286
        %v5240 = vpop.f32.mrf.mxu0
        %v5241 = vadd.f32 %v4936, %v5240
        %v5242 = vpop.f32.mrf.mxu0
        %5243 = vmatprep.mubr.f32.mxu0 %v4335
        %5244 = vmatmul.mubr.f32.gmra.mxu0 %v4287
        %v5245 = vpop.f32.mrf.mxu0
        %v5246 = vadd.f32 %v4941, %v5245
        %v5247 = vpop.f32.mrf.mxu0
        %5248 = vmatprep.mubr.f32.mxu0 %v4336
        %5249 = vmatmul.mubr.f32.gmra.mxu0 %v4288
        %v5250 = vpop.f32.mrf.mxu0
        %v5251 = vadd.f32 %v4946, %v5250
        %v5252 = vpop.f32.mrf.mxu0
        %5253 = vmatprep.mubr.f32.mxu0 %v4337
        %5254 = vmatmul.mubr.f32.gmra.mxu0 %v4289
        %v5255 = vpop.f32.mrf.mxu0
        %v5256 = vadd.f32 %v4951, %v5255
        %v5257 = vpop.f32.mrf.mxu0
        %5258 = vmatprep.mubr.f32.mxu0 %v4338
        %5259 = vmatmul.mubr.f32.gmra.mxu0 %v4290
        %v5260 = vpop.f32.mrf.mxu0
        %v5261 = vadd.f32 %v4956, %v5260
        %v5262 = vpop.f32.mrf.mxu0
        %5263 = vmatprep.mubr.f32.mxu0 %v4339
        %5264 = vmatmul.mubr.f32.gmra.mxu0 %v4291
        %v5265 = vpop.f32.mrf.mxu0
        %v5266 = vadd.f32 %v4961, %v5265
        %v5267 = vpop.f32.mrf.mxu0
        %5268 = vmatprep.mubr.f32.mxu0 %v4340
        %5269 = vmatmul.mubr.f32.gmra.mxu0 %v4292
        %v5270 = vpop.f32.mrf.mxu0
        %v5271 = vadd.f32 %v4966, %v5270
        %v5272 = vpop.f32.mrf.mxu0
        %5273 = vmatprep.mubr.f32.mxu0 %v4341
        %5274 = vmatmul.mubr.f32.gmra.mxu0 %v4293
        %v5275 = vpop.f32.mrf.mxu0
        %v5276 = vadd.f32 %v4971, %v5275
        %v5277 = vpop.f32.mrf.mxu0
        %5278 = vmatprep.mubr.f32.mxu0 %v4342
        %5279 = vmatmul.mubr.f32.gmra.mxu0 %v4294
        %v5280 = vpop.f32.mrf.mxu0
        %v5281 = vadd.f32 %v4976, %v5280
        %v5282 = vpop.f32.mrf.mxu0
        %5283 = vmatprep.mubr.f32.mxu0 %v4343
        %5284 = vmatmul.mubr.f32.gmra.mxu0 %v4295
        %v5285 = vpop.f32.mrf.mxu0
        %v5286 = vadd.f32 %v4981, %v5285
        %v5287 = vpop.f32.mrf.mxu0
        %5288 = vmatprep.mubr.f32.mxu0 %v4344
        %5289 = vmatmul.mubr.f32.gmra.mxu0 %v4296
        %v5290 = vpop.f32.mrf.mxu0
        %v5291 = vadd.f32 %v4986, %v5290
        %v5292 = vpop.f32.mrf.mxu0
        %5293 = vmatprep.mubr.f32.mxu0 %v4345
        %5294 = vmatmul.mubr.f32.gmra.mxu0 %v4297
        %v5295 = vpop.f32.mrf.mxu0
        %v5296 = vadd.f32 %v4991, %v5295
        %v5297 = vpop.f32.mrf.mxu0
        %5298 = vmatprep.mubr.f32.mxu0 %v4346
        %5299 = vmatmul.mubr.f32.gmra.mxu0 %v4298
        %v5300 = vpop.f32.mrf.mxu0
        %v5301 = vadd.f32 %v4996, %v5300
        %v5302 = vpop.f32.mrf.mxu0
        %5303 = vmatprep.mubr.f32.mxu0 %v4347
        %5304 = vmatmul.mubr.f32.gmra.mxu0 %v4299
        %v5305 = vpop.f32.mrf.mxu0
        %v5306 = vadd.f32 %v5001, %v5305
        %v5307 = vpop.f32.mrf.mxu0
        %5308 = vmatprep.mubr.f32.mxu0 %v4348
        %5309 = vmatmul.mubr.f32.gmra.mxu0 %v4300
        %v5310 = vpop.f32.mrf.mxu0
        %v5311 = vadd.f32 %v5006, %v5310
        %v5312 = vpop.f32.mrf.mxu0
        %5313 = vmatprep.mubr.f32.mxu0 %v4349
        %5314 = vmatmul.mubr.f32.gmra.mxu0 %v4301
        %v5315 = vpop.f32.mrf.mxu0
        %v5316 = vadd.f32 %v5011, %v5315
        %v5317 = vpop.f32.mrf.mxu0
        %5318 = vmatprep.mubr.f32.mxu0 %v4350
        %5319 = vmatmul.mubr.f32.gmra.mxu0 %v4302
        %v5320 = vpop.f32.mrf.mxu0
        %v5321 = vadd.f32 %v5016, %v5320
        %v5322 = vpop.f32.mrf.mxu0
        %5323 = vmatprep.mubr.f32.mxu0 %v4351
        %5324 = vmatmul.mubr.f32.gmra.mxu0 %v4303
        %v5325 = vpop.f32.mrf.mxu0
        %v5326 = vadd.f32 %v5021, %v5325
        %v5327 = vpop.f32.mrf.mxu0
        %5328 = vmatprep.mubr.f32.mxu0 %v4352
        %5329 = vmatmul.mubr.f32.gmra.mxu0 %v4304
        %v5330 = vpop.f32.mrf.mxu0
        %v5331 = vadd.f32 %v5026, %v5330
        %v5332 = vpop.f32.mrf.mxu0
        %5333 = vmatprep.mubr.f32.mxu0 %v4353
        %5334 = vmatmul.mubr.f32.gmra.mxu0 %v4305
        %v5335 = vpop.f32.mrf.mxu0
        %v5336 = vadd.f32 %v5031, %v5335
        %v5337 = vpop.f32.mrf.mxu0
        %5338 = vmatprep.mubr.f32.mxu0 %v4354
        %5339 = vmatmul.mubr.f32.gmra.mxu0 %v4306
        %v5340 = vpop.f32.mrf.mxu0
        %v5341 = vadd.f32 %v5036, %v5340
        %v5342 = vpop.f32.mrf.mxu0
        %5343 = vmatprep.mubr.f32.mxu0 %v4355
        %5344 = vmatmul.mubr.f32.gmra.mxu0 %v4307
        %v5345 = vpop.f32.mrf.mxu0
        %v5346 = vadd.f32 %v5041, %v5345
        %v5347 = vpop.f32.mrf.mxu0
        %5348 = vmatprep.mubr.f32.mxu0 %v4356
        %5349 = vmatmul.mubr.f32.gmra.mxu0 %v4308
        %v5350 = vpop.f32.mrf.mxu0
        %v5351 = vadd.f32 %v5046, %v5350
        %v5352 = vpop.f32.mrf.mxu0
        %5353 = vmatprep.mubr.f32.mxu0 %v4357
        %5354 = vmatmul.mubr.f32.gmra.mxu0 %v4309
        %v5355 = vpop.f32.mrf.mxu0
        %v5356 = vadd.f32 %v5051, %v5355
        %v5357 = vpop.f32.mrf.mxu0
        %5358 = vmatprep.mubr.f32.mxu0 %v4358
        %5359 = vmatmul.mubr.f32.gmra.mxu0 %v4310
        %v5360 = vpop.f32.mrf.mxu0
        %v5361 = vadd.f32 %v5056, %v5360
        %v5362 = vpop.f32.mrf.mxu0
        %5363 = vmatprep.mubr.f32.mxu0 %v4359
        %5364 = vmatmul.mubr.f32.gmra.mxu0 %v4311
        %v5365 = vpop.f32.mrf.mxu0
        %v5366 = vadd.f32 %v5061, %v5365
        %v5367 = vpop.f32.mrf.mxu0
        %5368 = vmatprep.mubr.f32.mxu0 %v4360
        %5369 = vmatmul.mubr.f32.gmra.mxu0 %v4312
        %v5370 = vpop.f32.mrf.mxu0
        %v5371 = vadd.f32 %v5066, %v5370
        %v5372 = vpop.f32.mrf.mxu0
        %5373 = vmatprep.mubr.f32.mxu0 %v4361
        %5374 = vmatmul.mubr.f32.gmra.mxu0 %v4313
        %v5375 = vpop.f32.mrf.mxu0
        %v5376 = vadd.f32 %v5071, %v5375
        %v5377 = vpop.f32.mrf.mxu0
        %5378 = vmatprep.mubr.f32.mxu0 %v4362
        %5379 = vmatmul.mubr.f32.gmra.mxu0 %v4314
        %v5380 = vpop.f32.mrf.mxu0
        %v5381 = vadd.f32 %v5076, %v5380
        %v5382 = vpop.f32.mrf.mxu0
        %5383 = vmatprep.mubr.f32.mxu0 %v4363
        %5384 = vmatmul.mubr.f32.gmra.mxu0 %v4315
        %v5385 = vpop.f32.mrf.mxu0
        %v5386 = vadd.f32 %v5081, %v5385
        %v5387 = vpop.f32.mrf.mxu0
        %5388 = vmatprep.mubr.f32.mxu0 %v4364
        %5389 = vmatmul.mubr.f32.gmra.mxu0 %v4316
        %v5390 = vpop.f32.mrf.mxu0
        %v5391 = vadd.f32 %v5086, %v5390
        %v5392 = vpop.f32.mrf.mxu0
        %5393 = vmatprep.mubr.f32.mxu0 %v4365
        %5394 = vmatmul.mubr.f32.gmra.mxu0 %v4317
        %v5395 = vpop.f32.mrf.mxu0
        %v5396 = vadd.f32 %v5091, %v5395
        %v5397 = vpop.f32.mrf.mxu0
        %5398 = vmatprep.mubr.f32.mxu0 %v4366
        %5399 = vmatmul.mubr.f32.gmra.mxu0 %v4318
        %v5400 = vpop.f32.mrf.mxu0
        %v5401 = vadd.f32 %v5096, %v5400
        %v5402 = vpop.f32.mrf.mxu0
        %5403 = vmatprep.mubr.f32.mxu0 %v4367
        %5404 = vmatmul.mubr.f32.gmra.mxu0 %v4319
        %v5405 = vpop.f32.mrf.mxu0
        %v5406 = vadd.f32 %v5101, %v5405
        %v5407 = vpop.f32.mrf.mxu0
        %5408 = vmatprep.mubr.f32.mxu0 %v4368
        %5409 = vmatmul.mubr.f32.gmra.mxu0 %v4320
        %v5410 = vpop.f32.mrf.mxu0
        %v5411 = vadd.f32 %v5106, %v5410
        %v5412 = vpop.f32.mrf.mxu0
        %5413 = vmatprep.mubr.f32.mxu0 %v4369
        %5414 = vmatmul.mubr.f32.gmra.mxu0 %v4321
        %v5415 = vpop.f32.mrf.mxu0
        %v5416 = vadd.f32 %v5111, %v5415
        %v5417 = vpop.f32.mrf.mxu0
        %5418 = vmatprep.mubr.f32.mxu0 %v4370
        %5419 = vmatmul.mubr.f32.gmra.mxu0 %v4322
        %v5420 = vpop.f32.mrf.mxu0
        %v5421 = vadd.f32 %v5116, %v5420
        %v5422 = vpop.f32.mrf.mxu0
        %5423 = vmatprep.mubr.f32.mxu0 %v4371
        %5424 = vmatmul.mubr.f32.gmra.mxu0 %v4323
        %v5425 = vpop.f32.mrf.mxu0
        %v5426 = vadd.f32 %v5121, %v5425
        %v5427 = vpop.f32.mrf.mxu0
        %5428 = vmatprep.mubr.f32.mxu0 %v4372
        %5429 = vmatmul.mubr.f32.gmra.mxu0 %v4324
        %v5430 = vpop.f32.mrf.mxu0
        %v5431 = vadd.f32 %v5126, %v5430
        %v5432 = vpop.f32.mrf.mxu0
        %5433 = vmatprep.mubr.f32.mxu0 %v4373
        %5434 = vmatmul.mubr.f32.gmra.mxu0 %v4325
        %v5435 = vpop.f32.mrf.mxu0
        %v5436 = vadd.f32 %v5131, %v5435
        %v5437 = vpop.f32.mrf.mxu0
        %5438 = vmatprep.mubr.f32.mxu0 %v4374
        %5439 = vmatmul.mubr.f32.gmra.mxu0 %v4326
        %v5440 = vpop.f32.mrf.mxu0
        %v5441 = vadd.f32 %v5136, %v5440
        %v5442 = vpop.f32.mrf.mxu0
        %5443 = vdwg.mxu0
        %5444 = vmatprep.subr.mxu0 0.0
        %5445 = vmatpush1.msra.mxu0 %v4470
        %5446 = vmatprep.subr.mxu0 0.0
        %5447 = vmatpush1.msra.mxu0 %v4469
        %5448 = vmatprep.subr.mxu0 0.0
        %5449 = vmatpush1.msra.mxu0 %v4468
        %5450 = vmatprep.subr.mxu0 0.0
        %5451 = vmatpush1.msra.mxu0 %v4467
        %5452 = vmatprep.subr.mxu0 0.0
        %5453 = vmatpush1.msra.mxu0 %v4466
        %5454 = vmatprep.subr.mxu0 0.0
        %5455 = vmatpush1.msra.mxu0 %v4465
        %5456 = vmatprep.subr.mxu0 0.0
        %5457 = vmatpush1.msra.mxu0 %v4464
        %5458 = vmatprep.subr.mxu0 0.0
        %5459 = vmatpush1.msra.mxu0 %v4463
        %5460 = vmatprep.subr.mxu0 0.0
        %5461 = vmatpush1.msra.mxu0 %v4462
        %5462 = vmatprep.subr.mxu0 0.0
        %5463 = vmatpush1.msra.mxu0 %v4461
        %5464 = vmatprep.subr.mxu0 0.0
        %5465 = vmatpush1.msra.mxu0 %v4460
        %5466 = vmatprep.subr.mxu0 0.0
        %5467 = vmatpush1.msra.mxu0 %v4459
        %5468 = vmatprep.subr.mxu0 0.0
        %5469 = vmatpush1.msra.mxu0 %v4458
        %5470 = vmatprep.subr.mxu0 0.0
        %5471 = vmatpush1.msra.mxu0 %v4457
        %5472 = vmatprep.subr.mxu0 0.0
        %5473 = vmatpush1.msra.mxu0 %v4456
        %5474 = vmatprep.subr.mxu0 0.0
        %5475 = vmatpush1.msra.mxu0 %v4455
        %5476 = vmatprep.subr.mxu0 0.0
        %5477 = vmatpush2.msra.mxu0 0.0
        %5478 = vmatprep.subr.mxu0 0.0
        %5479 = vmatpush2.msra.mxu0 0.0
        %5480 = vmatprep.subr.mxu0 0.0
        %5481 = vmatpush2.msra.mxu0 0.0
        %5482 = vmatprep.subr.mxu0 0.0
        %5483 = vmatpush2.msra.mxu0 0.0
        %5484 = vmatprep.subr.mxu0 0.0
        %5485 = vmatpush2.msra.mxu0 0.0
        %5486 = vmatprep.subr.mxu0 0.0
        %5487 = vmatpush2.msra.mxu0 0.0
        %5488 = vmatprep.subr.mxu0 0.0
        %5489 = vmatpush2.msra.mxu0 0.0
        %5490 = vmatprep.subr.mxu0 0.0
        %5491 = vmatpush2.msra.mxu0 0.0
        %5492 = vmatprep.subr.mxu0 0.0
        %5493 = vmatpush2.msra.mxu0 0.0
        %5494 = vmatprep.subr.mxu0 0.0
        %5495 = vmatpush2.msra.mxu0 0.0
        %5496 = vmatprep.subr.mxu0 0.0
        %5497 = vmatpush2.msra.mxu0 0.0
        %5498 = vmatprep.subr.mxu0 0.0
        %5499 = vmatpush2.msra.mxu0 0.0
        %5500 = vmatprep.subr.mxu0 0.0
        %5501 = vmatpush2.msra.mxu0 0.0
        %5502 = vmatprep.subr.mxu0 0.0
        %5503 = vmatpush2.msra.mxu0 0.0
        %5504 = vmatprep.subr.mxu0 0.0
        %5505 = vmatpush2.msra.mxu0 0.0
        %5506 = vmatprep.subr.mxu0 0.0
        %5507 = vmatpush2.msra.mxu0 0.0
        %5508 = vmatprep.mubr.f32.mxu0 0.0
        %5509 = vmatmul.mubr.f32.gmra.mxu0 %v4375
        %v5510 = vpop.f32.mrf.mxu0
        %v5511 = vadd.f32 %v5206, %v5510
        %v5512 = vpop.f32.mrf.mxu0
        %5513 = vmatprep.mubr.f32.mxu0 0.0
        %5514 = vmatmul.mubr.f32.gmra.mxu0 %v4376
        %v5515 = vpop.f32.mrf.mxu0
        %v5516 = vadd.f32 %v5211, %v5515
        %v5517 = vpop.f32.mrf.mxu0
        %5518 = vmatprep.mubr.f32.mxu0 0.0
        %5519 = vmatmul.mubr.f32.gmra.mxu0 %v4377
        %v5520 = vpop.f32.mrf.mxu0
        %v5521 = vadd.f32 %v5216, %v5520
        %v5522 = vpop.f32.mrf.mxu0
        %5523 = vmatprep.mubr.f32.mxu0 0.0
        %5524 = vmatmul.mubr.f32.gmra.mxu0 %v4378
        %v5525 = vpop.f32.mrf.mxu0
        %v5526 = vadd.f32 %v5221, %v5525
        %v5527 = vpop.f32.mrf.mxu0
        %5528 = vmatprep.mubr.f32.mxu0 0.0
        %5529 = vmatmul.mubr.f32.gmra.mxu0 %v4379
        %v5530 = vpop.f32.mrf.mxu0
        %v5531 = vadd.f32 %v5226, %v5530
        %v5532 = vpop.f32.mrf.mxu0
        %5533 = vmatprep.mubr.f32.mxu0 0.0
        %5534 = vmatmul.mubr.f32.gmra.mxu0 %v4380
        %v5535 = vpop.f32.mrf.mxu0
        %v5536 = vadd.f32 %v5231, %v5535
        %v5537 = vpop.f32.mrf.mxu0
        %5538 = vmatprep.mubr.f32.mxu0 0.0
        %5539 = vmatmul.mubr.f32.gmra.mxu0 %v4381
        %v5540 = vpop.f32.mrf.mxu0
        %v5541 = vadd.f32 %v5236, %v5540
        %v5542 = vpop.f32.mrf.mxu0
        %5543 = vmatprep.mubr.f32.mxu0 0.0
        %5544 = vmatmul.mubr.f32.gmra.mxu0 %v4382
        %v5545 = vpop.f32.mrf.mxu0
        %v5546 = vadd.f32 %v5241, %v5545
        %v5547 = vpop.f32.mrf.mxu0
        %5548 = vmatprep.mubr.f32.mxu0 0.0
        %5549 = vmatmul.mubr.f32.gmra.mxu0 %v4383
        %v5550 = vpop.f32.mrf.mxu0
        %v5551 = vadd.f32 %v5246, %v5550
        %v5552 = vpop.f32.mrf.mxu0
        %5553 = vmatprep.mubr.f32.mxu0 0.0
        %5554 = vmatmul.mubr.f32.gmra.mxu0 %v4384
        %v5555 = vpop.f32.mrf.mxu0
        %v5556 = vadd.f32 %v5251, %v5555
        %v5557 = vpop.f32.mrf.mxu0
        %5558 = vmatprep.mubr.f32.mxu0 0.0
        %5559 = vmatmul.mubr.f32.gmra.mxu0 %v4385
        %v5560 = vpop.f32.mrf.mxu0
        %v5561 = vadd.f32 %v5256, %v5560
        %v5562 = vpop.f32.mrf.mxu0
        %5563 = vmatprep.mubr.f32.mxu0 0.0
        %5564 = vmatmul.mubr.f32.gmra.mxu0 %v4386
        %v5565 = vpop.f32.mrf.mxu0
        %v5566 = vadd.f32 %v5261, %v5565
        %v5567 = vpop.f32.mrf.mxu0
        %5568 = vmatprep.mubr.f32.mxu0 0.0
        %5569 = vmatmul.mubr.f32.gmra.mxu0 %v4387
        %v5570 = vpop.f32.mrf.mxu0
        %v5571 = vadd.f32 %v5266, %v5570
        %v5572 = vpop.f32.mrf.mxu0
        %5573 = vmatprep.mubr.f32.mxu0 0.0
        %5574 = vmatmul.mubr.f32.gmra.mxu0 %v4388
        %v5575 = vpop.f32.mrf.mxu0
        %v5576 = vadd.f32 %v5271, %v5575
        %v5577 = vpop.f32.mrf.mxu0
        %5578 = vmatprep.mubr.f32.mxu0 0.0
        %5579 = vmatmul.mubr.f32.gmra.mxu0 %v4389
        %v5580 = vpop.f32.mrf.mxu0
        %v5581 = vadd.f32 %v5276, %v5580
        %v5582 = vpop.f32.mrf.mxu0
        %5583 = vmatprep.mubr.f32.mxu0 0.0
        %5584 = vmatmul.mubr.f32.gmra.mxu0 %v4390
        %v5585 = vpop.f32.mrf.mxu0
        %v5586 = vadd.f32 %v5281, %v5585
        %v5587 = vpop.f32.mrf.mxu0
        %5588 = vmatprep.mubr.f32.mxu0 0.0
        %5589 = vmatmul.mubr.f32.gmra.mxu0 %v4391
        %v5590 = vpop.f32.mrf.mxu0
        %v5591 = vadd.f32 %v5286, %v5590
        %v5592 = vpop.f32.mrf.mxu0
        %5593 = vmatprep.mubr.f32.mxu0 0.0
        %5594 = vmatmul.mubr.f32.gmra.mxu0 %v4392
        %v5595 = vpop.f32.mrf.mxu0
        %v5596 = vadd.f32 %v5291, %v5595
        %v5597 = vpop.f32.mrf.mxu0
        %5598 = vmatprep.mubr.f32.mxu0 0.0
        %5599 = vmatmul.mubr.f32.gmra.mxu0 %v4393
        %v5600 = vpop.f32.mrf.mxu0
        %v5601 = vadd.f32 %v5296, %v5600
        %v5602 = vpop.f32.mrf.mxu0
        %5603 = vmatprep.mubr.f32.mxu0 0.0
        %5604 = vmatmul.mubr.f32.gmra.mxu0 %v4394
        %v5605 = vpop.f32.mrf.mxu0
        %v5606 = vadd.f32 %v5301, %v5605
        %v5607 = vpop.f32.mrf.mxu0
        %5608 = vmatprep.mubr.f32.mxu0 0.0
        %5609 = vmatmul.mubr.f32.gmra.mxu0 %v4395
        %v5610 = vpop.f32.mrf.mxu0
        %v5611 = vadd.f32 %v5306, %v5610
        %v5612 = vpop.f32.mrf.mxu0
        %5613 = vmatprep.mubr.f32.mxu0 0.0
        %5614 = vmatmul.mubr.f32.gmra.mxu0 %v4396
        %v5615 = vpop.f32.mrf.mxu0
        %v5616 = vadd.f32 %v5311, %v5615
        %v5617 = vpop.f32.mrf.mxu0
        %5618 = vmatprep.mubr.f32.mxu0 0.0
        %5619 = vmatmul.mubr.f32.gmra.mxu0 %v4397
        %v5620 = vpop.f32.mrf.mxu0
        %v5621 = vadd.f32 %v5316, %v5620
        %v5622 = vpop.f32.mrf.mxu0
        %5623 = vmatprep.mubr.f32.mxu0 0.0
        %5624 = vmatmul.mubr.f32.gmra.mxu0 %v4398
        %v5625 = vpop.f32.mrf.mxu0
        %v5626 = vadd.f32 %v5321, %v5625
        %v5627 = vpop.f32.mrf.mxu0
        %5628 = vmatprep.mubr.f32.mxu0 0.0
        %5629 = vmatmul.mubr.f32.gmra.mxu0 %v4399
        %v5630 = vpop.f32.mrf.mxu0
        %v5631 = vadd.f32 %v5326, %v5630
        %v5632 = vpop.f32.mrf.mxu0
        %5633 = vmatprep.mubr.f32.mxu0 0.0
        %5634 = vmatmul.mubr.f32.gmra.mxu0 %v4400
        %v5635 = vpop.f32.mrf.mxu0
        %v5636 = vadd.f32 %v5331, %v5635
        %v5637 = vpop.f32.mrf.mxu0
        %5638 = vmatprep.mubr.f32.mxu0 0.0
        %5639 = vmatmul.mubr.f32.gmra.mxu0 %v4401
        %v5640 = vpop.f32.mrf.mxu0
        %v5641 = vadd.f32 %v5336, %v5640
        %v5642 = vpop.f32.mrf.mxu0
        %5643 = vmatprep.mubr.f32.mxu0 0.0
        %5644 = vmatmul.mubr.f32.gmra.mxu0 %v4402
        %v5645 = vpop.f32.mrf.mxu0
        %v5646 = vadd.f32 %v5341, %v5645
        %v5647 = vpop.f32.mrf.mxu0
        %5648 = vmatprep.mubr.f32.mxu0 0.0
        %5649 = vmatmul.mubr.f32.gmra.mxu0 %v4403
        %v5650 = vpop.f32.mrf.mxu0
        %v5651 = vadd.f32 %v5346, %v5650
        %v5652 = vpop.f32.mrf.mxu0
        %5653 = vmatprep.mubr.f32.mxu0 0.0
        %5654 = vmatmul.mubr.f32.gmra.mxu0 %v4404
        %v5655 = vpop.f32.mrf.mxu0
        %v5656 = vadd.f32 %v5351, %v5655
        %v5657 = vpop.f32.mrf.mxu0
        %5658 = vmatprep.mubr.f32.mxu0 0.0
        %5659 = vmatmul.mubr.f32.gmra.mxu0 %v4405
        %v5660 = vpop.f32.mrf.mxu0
        %v5661 = vadd.f32 %v5356, %v5660
        %v5662 = vpop.f32.mrf.mxu0
        %5663 = vmatprep.mubr.f32.mxu0 0.0
        %5664 = vmatmul.mubr.f32.gmra.mxu0 %v4406
        %v5665 = vpop.f32.mrf.mxu0
        %v5666 = vadd.f32 %v5361, %v5665
        %v5667 = vpop.f32.mrf.mxu0
        %5668 = vmatprep.mubr.f32.mxu0 0.0
        %5669 = vmatmul.mubr.f32.gmra.mxu0 %v4407
        %v5670 = vpop.f32.mrf.mxu0
        %v5671 = vadd.f32 %v5366, %v5670
        %v5672 = vpop.f32.mrf.mxu0
        %5673 = vmatprep.mubr.f32.mxu0 0.0
        %5674 = vmatmul.mubr.f32.gmra.mxu0 %v4408
        %v5675 = vpop.f32.mrf.mxu0
        %v5676 = vadd.f32 %v5371, %v5675
        %v5677 = vpop.f32.mrf.mxu0
        %5678 = vmatprep.mubr.f32.mxu0 0.0
        %5679 = vmatmul.mubr.f32.gmra.mxu0 %v4409
        %v5680 = vpop.f32.mrf.mxu0
        %v5681 = vadd.f32 %v5376, %v5680
        %v5682 = vpop.f32.mrf.mxu0
        %5683 = vmatprep.mubr.f32.mxu0 0.0
        %5684 = vmatmul.mubr.f32.gmra.mxu0 %v4410
        %v5685 = vpop.f32.mrf.mxu0
        %v5686 = vadd.f32 %v5381, %v5685
        %v5687 = vpop.f32.mrf.mxu0
        %5688 = vmatprep.mubr.f32.mxu0 0.0
        %5689 = vmatmul.mubr.f32.gmra.mxu0 %v4411
        %v5690 = vpop.f32.mrf.mxu0
        %v5691 = vadd.f32 %v5386, %v5690
        %v5692 = vpop.f32.mrf.mxu0
        %5693 = vmatprep.mubr.f32.mxu0 0.0
        %5694 = vmatmul.mubr.f32.gmra.mxu0 %v4412
        %v5695 = vpop.f32.mrf.mxu0
        %v5696 = vadd.f32 %v5391, %v5695
        %v5697 = vpop.f32.mrf.mxu0
        %5698 = vmatprep.mubr.f32.mxu0 0.0
        %5699 = vmatmul.mubr.f32.gmra.mxu0 %v4413
        %v5700 = vpop.f32.mrf.mxu0
        %v5701 = vadd.f32 %v5396, %v5700
        %v5702 = vpop.f32.mrf.mxu0
        %5703 = vmatprep.mubr.f32.mxu0 0.0
        %5704 = vmatmul.mubr.f32.gmra.mxu0 %v4414
        %v5705 = vpop.f32.mrf.mxu0
        %v5706 = vadd.f32 %v5401, %v5705
        %v5707 = vpop.f32.mrf.mxu0
        %5708 = vmatprep.mubr.f32.mxu0 0.0
        %5709 = vmatmul.mubr.f32.gmra.mxu0 %v4415
        %v5710 = vpop.f32.mrf.mxu0
        %v5711 = vadd.f32 %v5406, %v5710
        %v5712 = vpop.f32.mrf.mxu0
        %5713 = vmatprep.mubr.f32.mxu0 0.0
        %5714 = vmatmul.mubr.f32.gmra.mxu0 %v4416
        %v5715 = vpop.f32.mrf.mxu0
        %v5716 = vadd.f32 %v5411, %v5715
        %v5717 = vpop.f32.mrf.mxu0
        %5718 = vmatprep.mubr.f32.mxu0 0.0
        %5719 = vmatmul.mubr.f32.gmra.mxu0 %v4417
        %v5720 = vpop.f32.mrf.mxu0
        %v5721 = vadd.f32 %v5416, %v5720
        %v5722 = vpop.f32.mrf.mxu0
        %5723 = vmatprep.mubr.f32.mxu0 0.0
        %5724 = vmatmul.mubr.f32.gmra.mxu0 %v4418
        %v5725 = vpop.f32.mrf.mxu0
        %v5726 = vadd.f32 %v5421, %v5725
        %v5727 = vpop.f32.mrf.mxu0
        %5728 = vmatprep.mubr.f32.mxu0 0.0
        %5729 = vmatmul.mubr.f32.gmra.mxu0 %v4419
        %v5730 = vpop.f32.mrf.mxu0
        %v5731 = vadd.f32 %v5426, %v5730
        %v5732 = vpop.f32.mrf.mxu0
        %5733 = vmatprep.mubr.f32.mxu0 0.0
        %5734 = vmatmul.mubr.f32.gmra.mxu0 %v4420
        %v5735 = vpop.f32.mrf.mxu0
        %v5736 = vadd.f32 %v5431, %v5735
        %v5737 = vpop.f32.mrf.mxu0
        %5738 = vmatprep.mubr.f32.mxu0 0.0
        %5739 = vmatmul.mubr.f32.gmra.mxu0 %v4421
        %v5740 = vpop.f32.mrf.mxu0
        %v5741 = vadd.f32 %v5436, %v5740
        %v5742 = vpop.f32.mrf.mxu0
        %5743 = vmatprep.mubr.f32.mxu0 0.0
        %5744 = vmatmul.mubr.f32.gmra.mxu0 %v4422
        %v5745 = vpop.f32.mrf.mxu0
        %v5746 = vadd.f32 %v5441, %v5745
        %v5747 = vpop.f32.mrf.mxu0
        %5748 = vdwg.mxu0
        %v5749 = vld [vmem:[#allocation2 + $0x37] sm:$0xff]
        %v5750 = vld [vmem:[#allocation2 + $0x3f] sm:$0xff]
        %v5751 = vld [vmem:[#allocation2 + $0x47] sm:$0xff]
        %v5752 = vld [vmem:[#allocation2 + $0x4f] sm:$0xff]
        %v5753 = vld [vmem:[#allocation2 + $0x57] sm:$0xff]
        %v5754 = vld [vmem:[#allocation2 + $0x5f] sm:$0xff]
        %v5755 = vld [vmem:[#allocation2 + $0x67] sm:$0xff]
        %v5756 = vld [vmem:[#allocation2 + $0x6f] sm:$0xff]
        %v5757 = vld [vmem:[#allocation2 + $0x77] sm:$0xff]
        %v5758 = vld [vmem:[#allocation2 + $0x7f] sm:$0xff]
        %v5759 = vld [vmem:[#allocation2 + $0x87] sm:$0xff]
        %v5760 = vld [vmem:[#allocation2 + $0x8f] sm:$0xff]
        %v5761 = vld [vmem:[#allocation2 + $0x97] sm:$0xff]
        %v5762 = vld [vmem:[#allocation2 + $0x9f] sm:$0xff]
        %v5763 = vld [vmem:[#allocation2 + $0xa7] sm:$0xff]
        %v5764 = vld [vmem:[#allocation2 + $0xaf] sm:$0xff]
        %v5765 = vld [vmem:[#allocation2 + $0xb7] sm:$0xff]
        %v5766 = vld [vmem:[#allocation2 + $0xbf] sm:$0xff]
        %v5767 = vld [vmem:[#allocation2 + $0xc7] sm:$0xff]
        %v5768 = vld [vmem:[#allocation2 + $0xcf] sm:$0xff]
        %v5769 = vld [vmem:[#allocation2 + $0xd7] sm:$0xff]
        %v5770 = vld [vmem:[#allocation2 + $0xdf] sm:$0xff]
        %v5771 = vld [vmem:[#allocation2 + $0xe7] sm:$0xff]
        %v5772 = vld [vmem:[#allocation2 + $0xef] sm:$0xff]
        %v5773 = vld [vmem:[#allocation2 + $0xf7] sm:$0xff]
        %v5774 = vld [vmem:[#allocation2 + $0xff] sm:$0xff]
        %v5775 = vld [vmem:[#allocation2 + $0x107] sm:$0xff]
        %v5776 = vld [vmem:[#allocation2 + $0x10f] sm:$0xff]
        %v5777 = vld [vmem:[#allocation2 + $0x117] sm:$0xff]
        %v5778 = vld [vmem:[#allocation2 + $0x11f] sm:$0xff]
        %v5779 = vld [vmem:[#allocation2 + $0x127] sm:$0xff]
        %v5780 = vld [vmem:[#allocation2 + $0x12f] sm:$0xff]
        %v5781 = vld [vmem:[#allocation2 + $0x137] sm:$0xff]
        %v5782 = vld [vmem:[#allocation2 + $0x13f] sm:$0xff]
        %v5783 = vld [vmem:[#allocation2 + $0x147] sm:$0xff]
        %v5784 = vld [vmem:[#allocation2 + $0x14f] sm:$0xff]
        %v5785 = vld [vmem:[#allocation2 + $0x157] sm:$0xff]
        %v5786 = vld [vmem:[#allocation2 + $0x15f] sm:$0xff]
        %v5787 = vld [vmem:[#allocation2 + $0x167] sm:$0xff]
        %v5788 = vld [vmem:[#allocation2 + $0x16f] sm:$0xff]
        %v5789 = vld [vmem:[#allocation2 + $0x177] sm:$0xff]
        %v5790 = vld [vmem:[#allocation2 + $0x17f] sm:$0xff]
        %v5791 = vld [vmem:[#allocation2 + $0x187] sm:$0xff]
        %v5792 = vld [vmem:[#allocation2 + $0x18f] sm:$0xff]
        %v5793 = vld [vmem:[#allocation2 + $0x197] sm:$0xff]
        %v5794 = vld [vmem:[#allocation2 + $0x19f] sm:$0xff]
        %v5795 = vld [vmem:[#allocation2 + $0x1a7] sm:$0xff]
        %v5796 = vld [vmem:[#allocation2 + $0x1af] sm:$0xff]
        %v5797 = vld [vmem:[#allocation2 + $0x38] sm:$0xff]
        %v5798 = vld [vmem:[#allocation2 + $0x40] sm:$0xff]
        %v5799 = vld [vmem:[#allocation2 + $0x48] sm:$0xff]
        %v5800 = vld [vmem:[#allocation2 + $0x50] sm:$0xff]
        %v5801 = vld [vmem:[#allocation2 + $0x58] sm:$0xff]
        %v5802 = vld [vmem:[#allocation2 + $0x60] sm:$0xff]
        %v5803 = vld [vmem:[#allocation2 + $0x68] sm:$0xff]
        %v5804 = vld [vmem:[#allocation2 + $0x70] sm:$0xff]
        %v5805 = vld [vmem:[#allocation2 + $0x78] sm:$0xff]
        %v5806 = vld [vmem:[#allocation2 + $0x80] sm:$0xff]
        %v5807 = vld [vmem:[#allocation2 + $0x88] sm:$0xff]
        %v5808 = vld [vmem:[#allocation2 + $0x90] sm:$0xff]
        %v5809 = vld [vmem:[#allocation2 + $0x98] sm:$0xff]
        %v5810 = vld [vmem:[#allocation2 + $0xa0] sm:$0xff]
        %v5811 = vld [vmem:[#allocation2 + $0xa8] sm:$0xff]
        %v5812 = vld [vmem:[#allocation2 + $0xb0] sm:$0xff]
        %v5813 = vld [vmem:[#allocation2 + $0xb8] sm:$0xff]
        %v5814 = vld [vmem:[#allocation2 + $0xc0] sm:$0xff]
        %v5815 = vld [vmem:[#allocation2 + $0xc8] sm:$0xff]
        %v5816 = vld [vmem:[#allocation2 + $0xd0] sm:$0xff]
        %v5817 = vld [vmem:[#allocation2 + $0xd8] sm:$0xff]
        %v5818 = vld [vmem:[#allocation2 + $0xe0] sm:$0xff]
        %v5819 = vld [vmem:[#allocation2 + $0xe8] sm:$0xff]
        %v5820 = vld [vmem:[#allocation2 + $0xf0] sm:$0xff]
        %v5821 = vld [vmem:[#allocation2 + $0xf8] sm:$0xff]
        %v5822 = vld [vmem:[#allocation2 + $0x100] sm:$0xff]
        %v5823 = vld [vmem:[#allocation2 + $0x108] sm:$0xff]
        %v5824 = vld [vmem:[#allocation2 + $0x110] sm:$0xff]
        %v5825 = vld [vmem:[#allocation2 + $0x118] sm:$0xff]
        %v5826 = vld [vmem:[#allocation2 + $0x120] sm:$0xff]
        %v5827 = vld [vmem:[#allocation2 + $0x128] sm:$0xff]
        %v5828 = vld [vmem:[#allocation2 + $0x130] sm:$0xff]
        %v5829 = vld [vmem:[#allocation2 + $0x138] sm:$0xff]
        %v5830 = vld [vmem:[#allocation2 + $0x140] sm:$0xff]
        %v5831 = vld [vmem:[#allocation2 + $0x148] sm:$0xff]
        %v5832 = vld [vmem:[#allocation2 + $0x150] sm:$0xff]
        %v5833 = vld [vmem:[#allocation2 + $0x158] sm:$0xff]
        %v5834 = vld [vmem:[#allocation2 + $0x160] sm:$0xff]
        %v5835 = vld [vmem:[#allocation2 + $0x168] sm:$0xff]
        %v5836 = vld [vmem:[#allocation2 + $0x170] sm:$0xff]
        %v5837 = vld [vmem:[#allocation2 + $0x178] sm:$0xff]
        %v5838 = vld [vmem:[#allocation2 + $0x180] sm:$0xff]
        %v5839 = vld [vmem:[#allocation2 + $0x188] sm:$0xff]
        %v5840 = vld [vmem:[#allocation2 + $0x190] sm:$0xff]
        %v5841 = vld [vmem:[#allocation2 + $0x198] sm:$0xff]
        %v5842 = vld [vmem:[#allocation2 + $0x1a0] sm:$0xff]
        %v5843 = vld [vmem:[#allocation2 + $0x1a8] sm:$0xff]
        %v5844 = vld [vmem:[#allocation2 + $0x1b0] sm:$0xff]
        %v5845 = vld [vmem:[#allocation2 + $0x39] sm:$0xff]
        %v5846 = vld [vmem:[#allocation2 + $0x41] sm:$0xff]
        %v5847 = vld [vmem:[#allocation2 + $0x49] sm:$0xff]
        %v5848 = vld [vmem:[#allocation2 + $0x51] sm:$0xff]
        %v5849 = vld [vmem:[#allocation2 + $0x59] sm:$0xff]
        %v5850 = vld [vmem:[#allocation2 + $0x61] sm:$0xff]
        %v5851 = vld [vmem:[#allocation2 + $0x69] sm:$0xff]
        %v5852 = vld [vmem:[#allocation2 + $0x71] sm:$0xff]
        %v5853 = vld [vmem:[#allocation2 + $0x79] sm:$0xff]
        %v5854 = vld [vmem:[#allocation2 + $0x81] sm:$0xff]
        %v5855 = vld [vmem:[#allocation2 + $0x89] sm:$0xff]
        %v5856 = vld [vmem:[#allocation2 + $0x91] sm:$0xff]
        %v5857 = vld [vmem:[#allocation2 + $0x99] sm:$0xff]
        %v5858 = vld [vmem:[#allocation2 + $0xa1] sm:$0xff]
        %v5859 = vld [vmem:[#allocation2 + $0xa9] sm:$0xff]
        %v5860 = vld [vmem:[#allocation2 + $0xb1] sm:$0xff]
        %v5861 = vld [vmem:[#allocation2 + $0xb9] sm:$0xff]
        %v5862 = vld [vmem:[#allocation2 + $0xc1] sm:$0xff]
        %v5863 = vld [vmem:[#allocation2 + $0xc9] sm:$0xff]
        %v5864 = vld [vmem:[#allocation2 + $0xd1] sm:$0xff]
        %v5865 = vld [vmem:[#allocation2 + $0xd9] sm:$0xff]
        %v5866 = vld [vmem:[#allocation2 + $0xe1] sm:$0xff]
        %v5867 = vld [vmem:[#allocation2 + $0xe9] sm:$0xff]
        %v5868 = vld [vmem:[#allocation2 + $0xf1] sm:$0xff]
        %v5869 = vld [vmem:[#allocation2 + $0xf9] sm:$0xff]
        %v5870 = vld [vmem:[#allocation2 + $0x101] sm:$0xff]
        %v5871 = vld [vmem:[#allocation2 + $0x109] sm:$0xff]
        %v5872 = vld [vmem:[#allocation2 + $0x111] sm:$0xff]
        %v5873 = vld [vmem:[#allocation2 + $0x119] sm:$0xff]
        %v5874 = vld [vmem:[#allocation2 + $0x121] sm:$0xff]
        %v5875 = vld [vmem:[#allocation2 + $0x129] sm:$0xff]
        %v5876 = vld [vmem:[#allocation2 + $0x131] sm:$0xff]
        %v5877 = vld [vmem:[#allocation2 + $0x139] sm:$0xff]
        %v5878 = vld [vmem:[#allocation2 + $0x141] sm:$0xff]
        %v5879 = vld [vmem:[#allocation2 + $0x149] sm:$0xff]
        %v5880 = vld [vmem:[#allocation2 + $0x151] sm:$0xff]
        %v5881 = vld [vmem:[#allocation2 + $0x159] sm:$0xff]
        %v5882 = vld [vmem:[#allocation2 + $0x161] sm:$0xff]
        %v5883 = vld [vmem:[#allocation2 + $0x169] sm:$0xff]
        %v5884 = vld [vmem:[#allocation2 + $0x171] sm:$0xff]
        %v5885 = vld [vmem:[#allocation2 + $0x179] sm:$0xff]
        %v5886 = vld [vmem:[#allocation2 + $0x181] sm:$0xff]
        %v5887 = vld [vmem:[#allocation2 + $0x189] sm:$0xff]
        %v5888 = vld [vmem:[#allocation2 + $0x191] sm:$0xff]
        %v5889 = vld [vmem:[#allocation2 + $0x199] sm:$0xff]
        %v5890 = vld [vmem:[#allocation2 + $0x1a1] sm:$0xff]
        %v5891 = vld [vmem:[#allocation2 + $0x1a9] sm:$0xff]
        %v5892 = vld [vmem:[#allocation2 + $0x1b1] sm:$0xff]
        %s5893 = scalar_lea.vmem [#allocation8], 768
        %v5894 = vld [vmem:[%s5893] sm:$0xff]
        %v5895 = vld [vmem:[%s5893 + $0x8] sm:$0xff]
        %v5896 = vld [vmem:[%s5893 + $0x10] sm:$0xff]
        %v5897 = vld [vmem:[%s5893 + $0x18] sm:$0xff]
        %v5898 = vld [vmem:[%s5893 + $0x20] sm:$0xff]
        %v5899 = vld [vmem:[%s5893 + $0x28] sm:$0xff]
        %v5900 = vld [vmem:[%s5893 + $0x30] sm:$0xff]
        %v5901 = vld [vmem:[%s5893 + $0x38] sm:$0xff]
        %v5902 = vld [vmem:[%s5893 + $0x40] sm:$0xff]
        %v5903 = vld [vmem:[%s5893 + $0x48] sm:$0xff]
        %v5904 = vld [vmem:[%s5893 + $0x50] sm:$0xff]
        %v5905 = vld [vmem:[%s5893 + $0x58] sm:$0xff]
        %v5906 = vld [vmem:[%s5893 + $0x60] sm:$0xff]
        %v5907 = vld [vmem:[%s5893 + $0x68] sm:$0xff]
        %v5908 = vld [vmem:[%s5893 + $0x70] sm:$0xff]
        %v5909 = vld [vmem:[%s5893 + $0x78] sm:$0xff]
        %v5910 = vld [vmem:[%s5893 + $0x80] sm:$0xff]
        %v5911 = vld [vmem:[%s5893 + $0x88] sm:$0xff]
        %v5912 = vld [vmem:[%s5893 + $0x90] sm:$0xff]
        %v5913 = vld [vmem:[%s5893 + $0x98] sm:$0xff]
        %v5914 = vld [vmem:[%s5893 + $0xa0] sm:$0xff]
        %v5915 = vld [vmem:[%s5893 + $0xa8] sm:$0xff]
        %v5916 = vld [vmem:[%s5893 + $0xb0] sm:$0xff]
        %v5917 = vld [vmem:[%s5893 + $0xb8] sm:$0xff]
        %v5918 = vld [vmem:[%s5893 + $0xc0] sm:$0xff]
        %v5919 = vld [vmem:[%s5893 + $0xc8] sm:$0xff]
        %v5920 = vld [vmem:[%s5893 + $0xd0] sm:$0xff]
        %v5921 = vld [vmem:[%s5893 + $0xd8] sm:$0xff]
        %v5922 = vld [vmem:[%s5893 + $0xe0] sm:$0xff]
        %v5923 = vld [vmem:[%s5893 + $0xe8] sm:$0xff]
        %v5924 = vld [vmem:[%s5893 + $0xf0] sm:$0xff]
        %v5925 = vld [vmem:[%s5893 + $0xf8] sm:$0xff]
        %v5926 = vld [vmem:[%s5893 + $0x100] sm:$0xff]
        %v5927 = vld [vmem:[%s5893 + $0x108] sm:$0xff]
        %v5928 = vld [vmem:[%s5893 + $0x110] sm:$0xff]
        %v5929 = vld [vmem:[%s5893 + $0x118] sm:$0xff]
        %v5930 = vld [vmem:[%s5893 + $0x120] sm:$0xff]
        %v5931 = vld [vmem:[%s5893 + $0x128] sm:$0xff]
        %v5932 = vld [vmem:[%s5893 + $0x130] sm:$0xff]
        %v5933 = vld [vmem:[%s5893 + $0x138] sm:$0xff]
        %v5934 = vld [vmem:[%s5893 + $0x140] sm:$0xff]
        %v5935 = vld [vmem:[%s5893 + $0x148] sm:$0xff]
        %v5936 = vld [vmem:[%s5893 + $0x150] sm:$0xff]
        %v5937 = vld [vmem:[%s5893 + $0x158] sm:$0xff]
        %v5938 = vld [vmem:[%s5893 + $0x160] sm:$0xff]
        %v5939 = vld [vmem:[%s5893 + $0x168] sm:$0xff]
        %v5940 = vld [vmem:[%s5893 + $0x170] sm:$0xff]
        %v5941 = vld [vmem:[%s5893 + $0x178] sm:$0xff]
        %5942 = vmatprep.subr.mxu0 0.0
        %5943 = vmatpush1.msra.mxu0 %v5909
        %5944 = vmatprep.subr.mxu0 0.0
        %5945 = vmatpush1.msra.mxu0 %v5908
        %5946 = vmatprep.subr.mxu0 0.0
        %5947 = vmatpush1.msra.mxu0 %v5907
        %5948 = vmatprep.subr.mxu0 0.0
        %5949 = vmatpush1.msra.mxu0 %v5906
        %5950 = vmatprep.subr.mxu0 0.0
        %5951 = vmatpush1.msra.mxu0 %v5905
        %5952 = vmatprep.subr.mxu0 0.0
        %5953 = vmatpush1.msra.mxu0 %v5904
        %5954 = vmatprep.subr.mxu0 0.0
        %5955 = vmatpush1.msra.mxu0 %v5903
        %5956 = vmatprep.subr.mxu0 0.0
        %5957 = vmatpush1.msra.mxu0 %v5902
        %5958 = vmatprep.subr.mxu0 0.0
        %5959 = vmatpush1.msra.mxu0 %v5901
        %5960 = vmatprep.subr.mxu0 0.0
        %5961 = vmatpush1.msra.mxu0 %v5900
        %5962 = vmatprep.subr.mxu0 0.0
        %5963 = vmatpush1.msra.mxu0 %v5899
        %5964 = vmatprep.subr.mxu0 0.0
        %5965 = vmatpush1.msra.mxu0 %v5898
        %5966 = vmatprep.subr.mxu0 0.0
        %5967 = vmatpush1.msra.mxu0 %v5897
        %5968 = vmatprep.subr.mxu0 0.0
        %5969 = vmatpush1.msra.mxu0 %v5896
        %5970 = vmatprep.subr.mxu0 0.0
        %5971 = vmatpush1.msra.mxu0 %v5895
        %5972 = vmatprep.subr.mxu0 0.0
        %5973 = vmatpush1.msra.mxu0 %v5894
        %5974 = vmatprep.subr.mxu0 0.0
        %5975 = vmatpush2.msra.mxu0 %v5925
        %5976 = vmatprep.subr.mxu0 0.0
        %5977 = vmatpush2.msra.mxu0 %v5924
        %5978 = vmatprep.subr.mxu0 0.0
        %5979 = vmatpush2.msra.mxu0 %v5923
        %5980 = vmatprep.subr.mxu0 0.0
        %5981 = vmatpush2.msra.mxu0 %v5922
        %5982 = vmatprep.subr.mxu0 0.0
        %5983 = vmatpush2.msra.mxu0 %v5921
        %5984 = vmatprep.subr.mxu0 0.0
        %5985 = vmatpush2.msra.mxu0 %v5920
        %5986 = vmatprep.subr.mxu0 0.0
        %5987 = vmatpush2.msra.mxu0 %v5919
        %5988 = vmatprep.subr.mxu0 0.0
        %5989 = vmatpush2.msra.mxu0 %v5918
        %5990 = vmatprep.subr.mxu0 0.0
        %5991 = vmatpush2.msra.mxu0 %v5917
        %5992 = vmatprep.subr.mxu0 0.0
        %5993 = vmatpush2.msra.mxu0 %v5916
        %5994 = vmatprep.subr.mxu0 0.0
        %5995 = vmatpush2.msra.mxu0 %v5915
        %5996 = vmatprep.subr.mxu0 0.0
        %5997 = vmatpush2.msra.mxu0 %v5914
        %5998 = vmatprep.subr.mxu0 0.0
        %5999 = vmatpush2.msra.mxu0 %v5913
        %6000 = vmatprep.subr.mxu0 0.0
        %6001 = vmatpush2.msra.mxu0 %v5912
        %6002 = vmatprep.subr.mxu0 0.0
        %6003 = vmatpush2.msra.mxu0 %v5911
        %6004 = vmatprep.subr.mxu0 0.0
        %6005 = vmatpush2.msra.mxu0 %v5910
        %6006 = vmatprep.mubr.f32.mxu0 %v5797
        %6007 = vmatmul.mubr.f32.gmra.mxu0 %v5749
        %v6008 = vpop.f32.mrf.mxu0
        %v6009 = vadd.f32 0.0, %v6008
        %v6010 = vpop.f32.mrf.mxu0
        %6011 = vmatprep.mubr.f32.mxu0 %v5798
        %6012 = vmatmul.mubr.f32.gmra.mxu0 %v5750
        %v6013 = vpop.f32.mrf.mxu0
        %v6014 = vadd.f32 0.0, %v6013
        %v6015 = vpop.f32.mrf.mxu0
        %6016 = vmatprep.mubr.f32.mxu0 %v5799
        %6017 = vmatmul.mubr.f32.gmra.mxu0 %v5751
        %v6018 = vpop.f32.mrf.mxu0
        %v6019 = vadd.f32 0.0, %v6018
        %v6020 = vpop.f32.mrf.mxu0
        %6021 = vmatprep.mubr.f32.mxu0 %v5800
        %6022 = vmatmul.mubr.f32.gmra.mxu0 %v5752
        %v6023 = vpop.f32.mrf.mxu0
        %v6024 = vadd.f32 0.0, %v6023
        %v6025 = vpop.f32.mrf.mxu0
        %6026 = vmatprep.mubr.f32.mxu0 %v5801
        %6027 = vmatmul.mubr.f32.gmra.mxu0 %v5753
        %v6028 = vpop.f32.mrf.mxu0
        %v6029 = vadd.f32 0.0, %v6028
        %v6030 = vpop.f32.mrf.mxu0
        %6031 = vmatprep.mubr.f32.mxu0 %v5802
        %6032 = vmatmul.mubr.f32.gmra.mxu0 %v5754
        %v6033 = vpop.f32.mrf.mxu0
        %v6034 = vadd.f32 0.0, %v6033
        %v6035 = vpop.f32.mrf.mxu0
        %6036 = vmatprep.mubr.f32.mxu0 %v5803
        %6037 = vmatmul.mubr.f32.gmra.mxu0 %v5755
        %v6038 = vpop.f32.mrf.mxu0
        %v6039 = vadd.f32 0.0, %v6038
        %v6040 = vpop.f32.mrf.mxu0
        %6041 = vmatprep.mubr.f32.mxu0 %v5804
        %6042 = vmatmul.mubr.f32.gmra.mxu0 %v5756
        %v6043 = vpop.f32.mrf.mxu0
        %v6044 = vadd.f32 0.0, %v6043
        %v6045 = vpop.f32.mrf.mxu0
        %6046 = vmatprep.mubr.f32.mxu0 %v5805
        %6047 = vmatmul.mubr.f32.gmra.mxu0 %v5757
        %v6048 = vpop.f32.mrf.mxu0
        %v6049 = vadd.f32 0.0, %v6048
        %v6050 = vpop.f32.mrf.mxu0
        %6051 = vmatprep.mubr.f32.mxu0 %v5806
        %6052 = vmatmul.mubr.f32.gmra.mxu0 %v5758
        %v6053 = vpop.f32.mrf.mxu0
        %v6054 = vadd.f32 0.0, %v6053
        %v6055 = vpop.f32.mrf.mxu0
        %6056 = vmatprep.mubr.f32.mxu0 %v5807
        %6057 = vmatmul.mubr.f32.gmra.mxu0 %v5759
        %v6058 = vpop.f32.mrf.mxu0
        %v6059 = vadd.f32 0.0, %v6058
        %v6060 = vpop.f32.mrf.mxu0
        %6061 = vmatprep.mubr.f32.mxu0 %v5808
        %6062 = vmatmul.mubr.f32.gmra.mxu0 %v5760
        %v6063 = vpop.f32.mrf.mxu0
        %v6064 = vadd.f32 0.0, %v6063
        %v6065 = vpop.f32.mrf.mxu0
        %6066 = vmatprep.mubr.f32.mxu0 %v5809
        %6067 = vmatmul.mubr.f32.gmra.mxu0 %v5761
        %v6068 = vpop.f32.mrf.mxu0
        %v6069 = vadd.f32 0.0, %v6068
        %v6070 = vpop.f32.mrf.mxu0
        %6071 = vmatprep.mubr.f32.mxu0 %v5810
        %6072 = vmatmul.mubr.f32.gmra.mxu0 %v5762
        %v6073 = vpop.f32.mrf.mxu0
        %v6074 = vadd.f32 0.0, %v6073
        %v6075 = vpop.f32.mrf.mxu0
        %6076 = vmatprep.mubr.f32.mxu0 %v5811
        %6077 = vmatmul.mubr.f32.gmra.mxu0 %v5763
        %v6078 = vpop.f32.mrf.mxu0
        %v6079 = vadd.f32 0.0, %v6078
        %v6080 = vpop.f32.mrf.mxu0
        %6081 = vmatprep.mubr.f32.mxu0 %v5812
        %6082 = vmatmul.mubr.f32.gmra.mxu0 %v5764
        %v6083 = vpop.f32.mrf.mxu0
        %v6084 = vadd.f32 0.0, %v6083
        %v6085 = vpop.f32.mrf.mxu0
        %6086 = vmatprep.mubr.f32.mxu0 %v5813
        %6087 = vmatmul.mubr.f32.gmra.mxu0 %v5765
        %v6088 = vpop.f32.mrf.mxu0
        %v6089 = vadd.f32 0.0, %v6088
        %v6090 = vpop.f32.mrf.mxu0
        %6091 = vmatprep.mubr.f32.mxu0 %v5814
        %6092 = vmatmul.mubr.f32.gmra.mxu0 %v5766
        %v6093 = vpop.f32.mrf.mxu0
        %v6094 = vadd.f32 0.0, %v6093
        %v6095 = vpop.f32.mrf.mxu0
        %6096 = vmatprep.mubr.f32.mxu0 %v5815
        %6097 = vmatmul.mubr.f32.gmra.mxu0 %v5767
        %v6098 = vpop.f32.mrf.mxu0
        %v6099 = vadd.f32 0.0, %v6098
        %v6100 = vpop.f32.mrf.mxu0
        %6101 = vmatprep.mubr.f32.mxu0 %v5816
        %6102 = vmatmul.mubr.f32.gmra.mxu0 %v5768
        %v6103 = vpop.f32.mrf.mxu0
        %v6104 = vadd.f32 0.0, %v6103
        %v6105 = vpop.f32.mrf.mxu0
        %6106 = vmatprep.mubr.f32.mxu0 %v5817
        %6107 = vmatmul.mubr.f32.gmra.mxu0 %v5769
        %v6108 = vpop.f32.mrf.mxu0
        %v6109 = vadd.f32 0.0, %v6108
        %v6110 = vpop.f32.mrf.mxu0
        %6111 = vmatprep.mubr.f32.mxu0 %v5818
        %6112 = vmatmul.mubr.f32.gmra.mxu0 %v5770
        %v6113 = vpop.f32.mrf.mxu0
        %v6114 = vadd.f32 0.0, %v6113
        %v6115 = vpop.f32.mrf.mxu0
        %6116 = vmatprep.mubr.f32.mxu0 %v5819
        %6117 = vmatmul.mubr.f32.gmra.mxu0 %v5771
        %v6118 = vpop.f32.mrf.mxu0
        %v6119 = vadd.f32 0.0, %v6118
        %v6120 = vpop.f32.mrf.mxu0
        %6121 = vmatprep.mubr.f32.mxu0 %v5820
        %6122 = vmatmul.mubr.f32.gmra.mxu0 %v5772
        %v6123 = vpop.f32.mrf.mxu0
        %v6124 = vadd.f32 0.0, %v6123
        %v6125 = vpop.f32.mrf.mxu0
        %6126 = vmatprep.mubr.f32.mxu0 %v5821
        %6127 = vmatmul.mubr.f32.gmra.mxu0 %v5773
        %v6128 = vpop.f32.mrf.mxu0
        %v6129 = vadd.f32 0.0, %v6128
        %v6130 = vpop.f32.mrf.mxu0
        %6131 = vmatprep.mubr.f32.mxu0 %v5822
        %6132 = vmatmul.mubr.f32.gmra.mxu0 %v5774
        %v6133 = vpop.f32.mrf.mxu0
        %v6134 = vadd.f32 0.0, %v6133
        %v6135 = vpop.f32.mrf.mxu0
        %6136 = vmatprep.mubr.f32.mxu0 %v5823
        %6137 = vmatmul.mubr.f32.gmra.mxu0 %v5775
        %v6138 = vpop.f32.mrf.mxu0
        %v6139 = vadd.f32 0.0, %v6138
        %v6140 = vpop.f32.mrf.mxu0
        %6141 = vmatprep.mubr.f32.mxu0 %v5824
        %6142 = vmatmul.mubr.f32.gmra.mxu0 %v5776
        %v6143 = vpop.f32.mrf.mxu0
        %v6144 = vadd.f32 0.0, %v6143
        %v6145 = vpop.f32.mrf.mxu0
        %6146 = vmatprep.mubr.f32.mxu0 %v5825
        %6147 = vmatmul.mubr.f32.gmra.mxu0 %v5777
        %v6148 = vpop.f32.mrf.mxu0
        %v6149 = vadd.f32 0.0, %v6148
        %v6150 = vpop.f32.mrf.mxu0
        %6151 = vmatprep.mubr.f32.mxu0 %v5826
        %6152 = vmatmul.mubr.f32.gmra.mxu0 %v5778
        %v6153 = vpop.f32.mrf.mxu0
        %v6154 = vadd.f32 0.0, %v6153
        %v6155 = vpop.f32.mrf.mxu0
        %6156 = vmatprep.mubr.f32.mxu0 %v5827
        %6157 = vmatmul.mubr.f32.gmra.mxu0 %v5779
        %v6158 = vpop.f32.mrf.mxu0
        %v6159 = vadd.f32 0.0, %v6158
        %v6160 = vpop.f32.mrf.mxu0
        %6161 = vmatprep.mubr.f32.mxu0 %v5828
        %6162 = vmatmul.mubr.f32.gmra.mxu0 %v5780
        %v6163 = vpop.f32.mrf.mxu0
        %v6164 = vadd.f32 0.0, %v6163
        %v6165 = vpop.f32.mrf.mxu0
        %6166 = vmatprep.mubr.f32.mxu0 %v5829
        %6167 = vmatmul.mubr.f32.gmra.mxu0 %v5781
        %v6168 = vpop.f32.mrf.mxu0
        %v6169 = vadd.f32 0.0, %v6168
        %v6170 = vpop.f32.mrf.mxu0
        %6171 = vmatprep.mubr.f32.mxu0 %v5830
        %6172 = vmatmul.mubr.f32.gmra.mxu0 %v5782
        %v6173 = vpop.f32.mrf.mxu0
        %v6174 = vadd.f32 0.0, %v6173
        %v6175 = vpop.f32.mrf.mxu0
        %6176 = vmatprep.mubr.f32.mxu0 %v5831
        %6177 = vmatmul.mubr.f32.gmra.mxu0 %v5783
        %v6178 = vpop.f32.mrf.mxu0
        %v6179 = vadd.f32 0.0, %v6178
        %v6180 = vpop.f32.mrf.mxu0
        %6181 = vmatprep.mubr.f32.mxu0 %v5832
        %6182 = vmatmul.mubr.f32.gmra.mxu0 %v5784
        %v6183 = vpop.f32.mrf.mxu0
        %v6184 = vadd.f32 0.0, %v6183
        %v6185 = vpop.f32.mrf.mxu0
        %6186 = vmatprep.mubr.f32.mxu0 %v5833
        %6187 = vmatmul.mubr.f32.gmra.mxu0 %v5785
        %v6188 = vpop.f32.mrf.mxu0
        %v6189 = vadd.f32 0.0, %v6188
        %v6190 = vpop.f32.mrf.mxu0
        %6191 = vmatprep.mubr.f32.mxu0 %v5834
        %6192 = vmatmul.mubr.f32.gmra.mxu0 %v5786
        %v6193 = vpop.f32.mrf.mxu0
        %v6194 = vadd.f32 0.0, %v6193
        %v6195 = vpop.f32.mrf.mxu0
        %6196 = vmatprep.mubr.f32.mxu0 %v5835
        %6197 = vmatmul.mubr.f32.gmra.mxu0 %v5787
        %v6198 = vpop.f32.mrf.mxu0
        %v6199 = vadd.f32 0.0, %v6198
        %v6200 = vpop.f32.mrf.mxu0
        %6201 = vmatprep.mubr.f32.mxu0 %v5836
        %6202 = vmatmul.mubr.f32.gmra.mxu0 %v5788
        %v6203 = vpop.f32.mrf.mxu0
        %v6204 = vadd.f32 0.0, %v6203
        %v6205 = vpop.f32.mrf.mxu0
        %6206 = vmatprep.mubr.f32.mxu0 %v5837
        %6207 = vmatmul.mubr.f32.gmra.mxu0 %v5789
        %v6208 = vpop.f32.mrf.mxu0
        %v6209 = vadd.f32 0.0, %v6208
        %v6210 = vpop.f32.mrf.mxu0
        %6211 = vmatprep.mubr.f32.mxu0 %v5838
        %6212 = vmatmul.mubr.f32.gmra.mxu0 %v5790
        %v6213 = vpop.f32.mrf.mxu0
        %v6214 = vadd.f32 0.0, %v6213
        %v6215 = vpop.f32.mrf.mxu0
        %6216 = vmatprep.mubr.f32.mxu0 %v5839
        %6217 = vmatmul.mubr.f32.gmra.mxu0 %v5791
        %v6218 = vpop.f32.mrf.mxu0
        %v6219 = vadd.f32 0.0, %v6218
        %v6220 = vpop.f32.mrf.mxu0
        %6221 = vmatprep.mubr.f32.mxu0 %v5840
        %6222 = vmatmul.mubr.f32.gmra.mxu0 %v5792
        %v6223 = vpop.f32.mrf.mxu0
        %v6224 = vadd.f32 0.0, %v6223
        %v6225 = vpop.f32.mrf.mxu0
        %6226 = vmatprep.mubr.f32.mxu0 %v5841
        %6227 = vmatmul.mubr.f32.gmra.mxu0 %v5793
        %v6228 = vpop.f32.mrf.mxu0
        %v6229 = vadd.f32 0.0, %v6228
        %v6230 = vpop.f32.mrf.mxu0
        %6231 = vmatprep.mubr.f32.mxu0 %v5842
        %6232 = vmatmul.mubr.f32.gmra.mxu0 %v5794
        %v6233 = vpop.f32.mrf.mxu0
        %v6234 = vadd.f32 0.0, %v6233
        %v6235 = vpop.f32.mrf.mxu0
        %6236 = vmatprep.mubr.f32.mxu0 %v5843
        %6237 = vmatmul.mubr.f32.gmra.mxu0 %v5795
        %v6238 = vpop.f32.mrf.mxu0
        %v6239 = vadd.f32 0.0, %v6238
        %v6240 = vpop.f32.mrf.mxu0
        %6241 = vmatprep.mubr.f32.mxu0 %v5844
        %6242 = vmatmul.mubr.f32.gmra.mxu0 %v5796
        %v6243 = vpop.f32.mrf.mxu0
        %v6244 = vadd.f32 0.0, %v6243
        %v6245 = vpop.f32.mrf.mxu0
        %6246 = vdwg.mxu0
        %6247 = vmatprep.subr.mxu0 0.0
        %6248 = vmatpush1.msra.mxu0 %v5941
        %6249 = vmatprep.subr.mxu0 0.0
        %6250 = vmatpush1.msra.mxu0 %v5940
        %6251 = vmatprep.subr.mxu0 0.0
        %6252 = vmatpush1.msra.mxu0 %v5939
        %6253 = vmatprep.subr.mxu0 0.0
        %6254 = vmatpush1.msra.mxu0 %v5938
        %6255 = vmatprep.subr.mxu0 0.0
        %6256 = vmatpush1.msra.mxu0 %v5937
        %6257 = vmatprep.subr.mxu0 0.0
        %6258 = vmatpush1.msra.mxu0 %v5936
        %6259 = vmatprep.subr.mxu0 0.0
        %6260 = vmatpush1.msra.mxu0 %v5935
        %6261 = vmatprep.subr.mxu0 0.0
        %6262 = vmatpush1.msra.mxu0 %v5934
        %6263 = vmatprep.subr.mxu0 0.0
        %6264 = vmatpush1.msra.mxu0 %v5933
        %6265 = vmatprep.subr.mxu0 0.0
        %6266 = vmatpush1.msra.mxu0 %v5932
        %6267 = vmatprep.subr.mxu0 0.0
        %6268 = vmatpush1.msra.mxu0 %v5931
        %6269 = vmatprep.subr.mxu0 0.0
        %6270 = vmatpush1.msra.mxu0 %v5930
        %6271 = vmatprep.subr.mxu0 0.0
        %6272 = vmatpush1.msra.mxu0 %v5929
        %6273 = vmatprep.subr.mxu0 0.0
        %6274 = vmatpush1.msra.mxu0 %v5928
        %6275 = vmatprep.subr.mxu0 0.0
        %6276 = vmatpush1.msra.mxu0 %v5927
        %6277 = vmatprep.subr.mxu0 0.0
        %6278 = vmatpush1.msra.mxu0 %v5926
        %6279 = vmatprep.subr.mxu0 0.0
        %6280 = vmatpush2.msra.mxu0 0.0
        %6281 = vmatprep.subr.mxu0 0.0
        %6282 = vmatpush2.msra.mxu0 0.0
        %6283 = vmatprep.subr.mxu0 0.0
        %6284 = vmatpush2.msra.mxu0 0.0
        %6285 = vmatprep.subr.mxu0 0.0
        %6286 = vmatpush2.msra.mxu0 0.0
        %6287 = vmatprep.subr.mxu0 0.0
        %6288 = vmatpush2.msra.mxu0 0.0
        %6289 = vmatprep.subr.mxu0 0.0
        %6290 = vmatpush2.msra.mxu0 0.0
        %6291 = vmatprep.subr.mxu0 0.0
        %6292 = vmatpush2.msra.mxu0 0.0
        %6293 = vmatprep.subr.mxu0 0.0
        %6294 = vmatpush2.msra.mxu0 0.0
        %6295 = vmatprep.subr.mxu0 0.0
        %6296 = vmatpush2.msra.mxu0 0.0
        %6297 = vmatprep.subr.mxu0 0.0
        %6298 = vmatpush2.msra.mxu0 0.0
        %6299 = vmatprep.subr.mxu0 0.0
        %6300 = vmatpush2.msra.mxu0 0.0
        %6301 = vmatprep.subr.mxu0 0.0
        %6302 = vmatpush2.msra.mxu0 0.0
        %6303 = vmatprep.subr.mxu0 0.0
        %6304 = vmatpush2.msra.mxu0 0.0
        %6305 = vmatprep.subr.mxu0 0.0
        %6306 = vmatpush2.msra.mxu0 0.0
        %6307 = vmatprep.subr.mxu0 0.0
        %6308 = vmatpush2.msra.mxu0 0.0
        %6309 = vmatprep.subr.mxu0 0.0
        %6310 = vmatpush2.msra.mxu0 0.0
        %6311 = vmatprep.mubr.f32.mxu0 0.0
        %6312 = vmatmul.mubr.f32.gmra.mxu0 %v5845
        %v6313 = vpop.f32.mrf.mxu0
        %v6314 = vadd.f32 %v6009, %v6313
        %v6315 = vpop.f32.mrf.mxu0
        %6316 = vmatprep.mubr.f32.mxu0 0.0
        %6317 = vmatmul.mubr.f32.gmra.mxu0 %v5846
        %v6318 = vpop.f32.mrf.mxu0
        %v6319 = vadd.f32 %v6014, %v6318
        %v6320 = vpop.f32.mrf.mxu0
        %6321 = vmatprep.mubr.f32.mxu0 0.0
        %6322 = vmatmul.mubr.f32.gmra.mxu0 %v5847
        %v6323 = vpop.f32.mrf.mxu0
        %v6324 = vadd.f32 %v6019, %v6323
        %v6325 = vpop.f32.mrf.mxu0
        %6326 = vmatprep.mubr.f32.mxu0 0.0
        %6327 = vmatmul.mubr.f32.gmra.mxu0 %v5848
        %v6328 = vpop.f32.mrf.mxu0
        %v6329 = vadd.f32 %v6024, %v6328
        %v6330 = vpop.f32.mrf.mxu0
        %6331 = vmatprep.mubr.f32.mxu0 0.0
        %6332 = vmatmul.mubr.f32.gmra.mxu0 %v5849
        %v6333 = vpop.f32.mrf.mxu0
        %v6334 = vadd.f32 %v6029, %v6333
        %v6335 = vpop.f32.mrf.mxu0
        %6336 = vmatprep.mubr.f32.mxu0 0.0
        %6337 = vmatmul.mubr.f32.gmra.mxu0 %v5850
        %v6338 = vpop.f32.mrf.mxu0
        %v6339 = vadd.f32 %v6034, %v6338
        %v6340 = vpop.f32.mrf.mxu0
        %6341 = vmatprep.mubr.f32.mxu0 0.0
        %6342 = vmatmul.mubr.f32.gmra.mxu0 %v5851
        %v6343 = vpop.f32.mrf.mxu0
        %v6344 = vadd.f32 %v6039, %v6343
        %v6345 = vpop.f32.mrf.mxu0
        %6346 = vmatprep.mubr.f32.mxu0 0.0
        %6347 = vmatmul.mubr.f32.gmra.mxu0 %v5852
        %v6348 = vpop.f32.mrf.mxu0
        %v6349 = vadd.f32 %v6044, %v6348
        %v6350 = vpop.f32.mrf.mxu0
        %6351 = vmatprep.mubr.f32.mxu0 0.0
        %6352 = vmatmul.mubr.f32.gmra.mxu0 %v5853
        %v6353 = vpop.f32.mrf.mxu0
        %v6354 = vadd.f32 %v6049, %v6353
        %v6355 = vpop.f32.mrf.mxu0
        %6356 = vmatprep.mubr.f32.mxu0 0.0
        %6357 = vmatmul.mubr.f32.gmra.mxu0 %v5854
        %v6358 = vpop.f32.mrf.mxu0
        %v6359 = vadd.f32 %v6054, %v6358
        %v6360 = vpop.f32.mrf.mxu0
        %6361 = vmatprep.mubr.f32.mxu0 0.0
        %6362 = vmatmul.mubr.f32.gmra.mxu0 %v5855
        %v6363 = vpop.f32.mrf.mxu0
        %v6364 = vadd.f32 %v6059, %v6363
        %v6365 = vpop.f32.mrf.mxu0
        %6366 = vmatprep.mubr.f32.mxu0 0.0
        %6367 = vmatmul.mubr.f32.gmra.mxu0 %v5856
        %v6368 = vpop.f32.mrf.mxu0
        %v6369 = vadd.f32 %v6064, %v6368
        %v6370 = vpop.f32.mrf.mxu0
        %6371 = vmatprep.mubr.f32.mxu0 0.0
        %6372 = vmatmul.mubr.f32.gmra.mxu0 %v5857
        %v6373 = vpop.f32.mrf.mxu0
        %v6374 = vadd.f32 %v6069, %v6373
        %v6375 = vpop.f32.mrf.mxu0
        %6376 = vmatprep.mubr.f32.mxu0 0.0
        %6377 = vmatmul.mubr.f32.gmra.mxu0 %v5858
        %v6378 = vpop.f32.mrf.mxu0
        %v6379 = vadd.f32 %v6074, %v6378
        %v6380 = vpop.f32.mrf.mxu0
        %6381 = vmatprep.mubr.f32.mxu0 0.0
        %6382 = vmatmul.mubr.f32.gmra.mxu0 %v5859
        %v6383 = vpop.f32.mrf.mxu0
        %v6384 = vadd.f32 %v6079, %v6383
        %v6385 = vpop.f32.mrf.mxu0
        %6386 = vmatprep.mubr.f32.mxu0 0.0
        %6387 = vmatmul.mubr.f32.gmra.mxu0 %v5860
        %v6388 = vpop.f32.mrf.mxu0
        %v6389 = vadd.f32 %v6084, %v6388
        %v6390 = vpop.f32.mrf.mxu0
        %6391 = vmatprep.mubr.f32.mxu0 0.0
        %6392 = vmatmul.mubr.f32.gmra.mxu0 %v5861
        %v6393 = vpop.f32.mrf.mxu0
        %v6394 = vadd.f32 %v6089, %v6393
        %v6395 = vpop.f32.mrf.mxu0
        %6396 = vmatprep.mubr.f32.mxu0 0.0
        %6397 = vmatmul.mubr.f32.gmra.mxu0 %v5862
        %v6398 = vpop.f32.mrf.mxu0
        %v6399 = vadd.f32 %v6094, %v6398
        %v6400 = vpop.f32.mrf.mxu0
        %6401 = vmatprep.mubr.f32.mxu0 0.0
        %6402 = vmatmul.mubr.f32.gmra.mxu0 %v5863
        %v6403 = vpop.f32.mrf.mxu0
        %v6404 = vadd.f32 %v6099, %v6403
        %v6405 = vpop.f32.mrf.mxu0
        %6406 = vmatprep.mubr.f32.mxu0 0.0
        %6407 = vmatmul.mubr.f32.gmra.mxu0 %v5864
        %v6408 = vpop.f32.mrf.mxu0
        %v6409 = vadd.f32 %v6104, %v6408
        %v6410 = vpop.f32.mrf.mxu0
        %6411 = vmatprep.mubr.f32.mxu0 0.0
        %6412 = vmatmul.mubr.f32.gmra.mxu0 %v5865
        %v6413 = vpop.f32.mrf.mxu0
        %v6414 = vadd.f32 %v6109, %v6413
        %v6415 = vpop.f32.mrf.mxu0
        %6416 = vmatprep.mubr.f32.mxu0 0.0
        %6417 = vmatmul.mubr.f32.gmra.mxu0 %v5866
        %v6418 = vpop.f32.mrf.mxu0
        %v6419 = vadd.f32 %v6114, %v6418
        %v6420 = vpop.f32.mrf.mxu0
        %6421 = vmatprep.mubr.f32.mxu0 0.0
        %6422 = vmatmul.mubr.f32.gmra.mxu0 %v5867
        %v6423 = vpop.f32.mrf.mxu0
        %v6424 = vadd.f32 %v6119, %v6423
        %v6425 = vpop.f32.mrf.mxu0
        %6426 = vmatprep.mubr.f32.mxu0 0.0
        %6427 = vmatmul.mubr.f32.gmra.mxu0 %v5868
        %v6428 = vpop.f32.mrf.mxu0
        %v6429 = vadd.f32 %v6124, %v6428
        %v6430 = vpop.f32.mrf.mxu0
        %6431 = vmatprep.mubr.f32.mxu0 0.0
        %6432 = vmatmul.mubr.f32.gmra.mxu0 %v5869
        %v6433 = vpop.f32.mrf.mxu0
        %v6434 = vadd.f32 %v6129, %v6433
        %v6435 = vpop.f32.mrf.mxu0
        %6436 = vmatprep.mubr.f32.mxu0 0.0
        %6437 = vmatmul.mubr.f32.gmra.mxu0 %v5870
        %v6438 = vpop.f32.mrf.mxu0
        %v6439 = vadd.f32 %v6134, %v6438
        %v6440 = vpop.f32.mrf.mxu0
        %6441 = vmatprep.mubr.f32.mxu0 0.0
        %6442 = vmatmul.mubr.f32.gmra.mxu0 %v5871
        %v6443 = vpop.f32.mrf.mxu0
        %v6444 = vadd.f32 %v6139, %v6443
        %v6445 = vpop.f32.mrf.mxu0
        %6446 = vmatprep.mubr.f32.mxu0 0.0
        %6447 = vmatmul.mubr.f32.gmra.mxu0 %v5872
        %v6448 = vpop.f32.mrf.mxu0
        %v6449 = vadd.f32 %v6144, %v6448
        %v6450 = vpop.f32.mrf.mxu0
        %6451 = vmatprep.mubr.f32.mxu0 0.0
        %6452 = vmatmul.mubr.f32.gmra.mxu0 %v5873
        %v6453 = vpop.f32.mrf.mxu0
        %v6454 = vadd.f32 %v6149, %v6453
        %v6455 = vpop.f32.mrf.mxu0
        %6456 = vmatprep.mubr.f32.mxu0 0.0
        %6457 = vmatmul.mubr.f32.gmra.mxu0 %v5874
        %v6458 = vpop.f32.mrf.mxu0
        %v6459 = vadd.f32 %v6154, %v6458
        %v6460 = vpop.f32.mrf.mxu0
        %6461 = vmatprep.mubr.f32.mxu0 0.0
        %6462 = vmatmul.mubr.f32.gmra.mxu0 %v5875
        %v6463 = vpop.f32.mrf.mxu0
        %v6464 = vadd.f32 %v6159, %v6463
        %v6465 = vpop.f32.mrf.mxu0
        %6466 = vmatprep.mubr.f32.mxu0 0.0
        %6467 = vmatmul.mubr.f32.gmra.mxu0 %v5876
        %v6468 = vpop.f32.mrf.mxu0
        %v6469 = vadd.f32 %v6164, %v6468
        %v6470 = vpop.f32.mrf.mxu0
        %6471 = vmatprep.mubr.f32.mxu0 0.0
        %6472 = vmatmul.mubr.f32.gmra.mxu0 %v5877
        %v6473 = vpop.f32.mrf.mxu0
        %v6474 = vadd.f32 %v6169, %v6473
        %v6475 = vpop.f32.mrf.mxu0
        %6476 = vmatprep.mubr.f32.mxu0 0.0
        %6477 = vmatmul.mubr.f32.gmra.mxu0 %v5878
        %v6478 = vpop.f32.mrf.mxu0
        %v6479 = vadd.f32 %v6174, %v6478
        %v6480 = vpop.f32.mrf.mxu0
        %6481 = vmatprep.mubr.f32.mxu0 0.0
        %6482 = vmatmul.mubr.f32.gmra.mxu0 %v5879
        %v6483 = vpop.f32.mrf.mxu0
        %v6484 = vadd.f32 %v6179, %v6483
        %v6485 = vpop.f32.mrf.mxu0
        %6486 = vmatprep.mubr.f32.mxu0 0.0
        %6487 = vmatmul.mubr.f32.gmra.mxu0 %v5880
        %v6488 = vpop.f32.mrf.mxu0
        %v6489 = vadd.f32 %v6184, %v6488
        %v6490 = vpop.f32.mrf.mxu0
        %6491 = vmatprep.mubr.f32.mxu0 0.0
        %6492 = vmatmul.mubr.f32.gmra.mxu0 %v5881
        %v6493 = vpop.f32.mrf.mxu0
        %v6494 = vadd.f32 %v6189, %v6493
        %v6495 = vpop.f32.mrf.mxu0
        %6496 = vmatprep.mubr.f32.mxu0 0.0
        %6497 = vmatmul.mubr.f32.gmra.mxu0 %v5882
        %v6498 = vpop.f32.mrf.mxu0
        %v6499 = vadd.f32 %v6194, %v6498
        %v6500 = vpop.f32.mrf.mxu0
        %6501 = vmatprep.mubr.f32.mxu0 0.0
        %6502 = vmatmul.mubr.f32.gmra.mxu0 %v5883
        %v6503 = vpop.f32.mrf.mxu0
        %v6504 = vadd.f32 %v6199, %v6503
        %v6505 = vpop.f32.mrf.mxu0
        %6506 = vmatprep.mubr.f32.mxu0 0.0
        %6507 = vmatmul.mubr.f32.gmra.mxu0 %v5884
        %v6508 = vpop.f32.mrf.mxu0
        %v6509 = vadd.f32 %v6204, %v6508
        %v6510 = vpop.f32.mrf.mxu0
        %6511 = vmatprep.mubr.f32.mxu0 0.0
        %6512 = vmatmul.mubr.f32.gmra.mxu0 %v5885
        %v6513 = vpop.f32.mrf.mxu0
        %v6514 = vadd.f32 %v6209, %v6513
        %v6515 = vpop.f32.mrf.mxu0
        %6516 = vmatprep.mubr.f32.mxu0 0.0
        %6517 = vmatmul.mubr.f32.gmra.mxu0 %v5886
        %v6518 = vpop.f32.mrf.mxu0
        %v6519 = vadd.f32 %v6214, %v6518
        %v6520 = vpop.f32.mrf.mxu0
        %6521 = vmatprep.mubr.f32.mxu0 0.0
        %6522 = vmatmul.mubr.f32.gmra.mxu0 %v5887
        %v6523 = vpop.f32.mrf.mxu0
        %v6524 = vadd.f32 %v6219, %v6523
        %v6525 = vpop.f32.mrf.mxu0
        %6526 = vmatprep.mubr.f32.mxu0 0.0
        %6527 = vmatmul.mubr.f32.gmra.mxu0 %v5888
        %v6528 = vpop.f32.mrf.mxu0
        %v6529 = vadd.f32 %v6224, %v6528
        %v6530 = vpop.f32.mrf.mxu0
        %6531 = vmatprep.mubr.f32.mxu0 0.0
        %6532 = vmatmul.mubr.f32.gmra.mxu0 %v5889
        %v6533 = vpop.f32.mrf.mxu0
        %v6534 = vadd.f32 %v6229, %v6533
        %v6535 = vpop.f32.mrf.mxu0
        %6536 = vmatprep.mubr.f32.mxu0 0.0
        %6537 = vmatmul.mubr.f32.gmra.mxu0 %v5890
        %v6538 = vpop.f32.mrf.mxu0
        %v6539 = vadd.f32 %v6234, %v6538
        %v6540 = vpop.f32.mrf.mxu0
        %6541 = vmatprep.mubr.f32.mxu0 0.0
        %6542 = vmatmul.mubr.f32.gmra.mxu0 %v5891
        %v6543 = vpop.f32.mrf.mxu0
        %v6544 = vadd.f32 %v6239, %v6543
        %v6545 = vpop.f32.mrf.mxu0
        %6546 = vmatprep.mubr.f32.mxu0 0.0
        %6547 = vmatmul.mubr.f32.gmra.mxu0 %v5892
        %v6548 = vpop.f32.mrf.mxu0
        %v6549 = vadd.f32 %v6244, %v6548
        %v6550 = vpop.f32.mrf.mxu0
        %6551 = vdwg.mxu0
        %v6552 = vadd.f32 %v5511, %v6314
        %v6553 = vadd.f32 %v5516, %v6319
        %v6554 = vadd.f32 %v5521, %v6324
        %v6555 = vadd.f32 %v5526, %v6329
        %v6556 = vadd.f32 %v5531, %v6334
        %v6557 = vadd.f32 %v5536, %v6339
        %v6558 = vadd.f32 %v5541, %v6344
        %v6559 = vadd.f32 %v5546, %v6349
        %v6560 = vadd.f32 %v5551, %v6354
        %v6561 = vadd.f32 %v5556, %v6359
        %v6562 = vadd.f32 %v5561, %v6364
        %v6563 = vadd.f32 %v5566, %v6369
        %v6564 = vadd.f32 %v5571, %v6374
        %v6565 = vadd.f32 %v5576, %v6379
        %v6566 = vadd.f32 %v5581, %v6384
        %v6567 = vadd.f32 %v5586, %v6389
        %v6568 = vadd.f32 %v5591, %v6394
        %v6569 = vadd.f32 %v5596, %v6399
        %v6570 = vadd.f32 %v5601, %v6404
        %v6571 = vadd.f32 %v5606, %v6409
        %v6572 = vadd.f32 %v5611, %v6414
        %v6573 = vadd.f32 %v5616, %v6419
        %v6574 = vadd.f32 %v5621, %v6424
        %v6575 = vadd.f32 %v5626, %v6429
        %v6576 = vadd.f32 %v5631, %v6434
        %v6577 = vadd.f32 %v5636, %v6439
        %v6578 = vadd.f32 %v5641, %v6444
        %v6579 = vadd.f32 %v5646, %v6449
        %v6580 = vadd.f32 %v5651, %v6454
        %v6581 = vadd.f32 %v5656, %v6459
        %v6582 = vadd.f32 %v5661, %v6464
        %v6583 = vadd.f32 %v5666, %v6469
        %v6584 = vadd.f32 %v5671, %v6474
        %v6585 = vadd.f32 %v5676, %v6479
        %v6586 = vadd.f32 %v5681, %v6484
        %v6587 = vadd.f32 %v5686, %v6489
        %v6588 = vadd.f32 %v5691, %v6494
        %v6589 = vadd.f32 %v5696, %v6499
        %v6590 = vadd.f32 %v5701, %v6504
        %v6591 = vadd.f32 %v5706, %v6509
        %v6592 = vadd.f32 %v5711, %v6514
        %v6593 = vadd.f32 %v5716, %v6519
        %v6594 = vadd.f32 %v5721, %v6524
        %v6595 = vadd.f32 %v5726, %v6529
        %v6596 = vadd.f32 %v5731, %v6534
        %v6597 = vadd.f32 %v5736, %v6539
        %v6598 = vadd.f32 %v5741, %v6544
        %v6599 = vadd.f32 %v5746, %v6549
        %v6600 = vlaneseq
        %v6601 = vshrl.u32 %v6600, 7
        %v6602 = vsub.s32 3, %v6601
        %v6603 = vrot.slane %v1219, %v6602
        %v6604 = vadd.f32 %v6552, %v6603
        %v6605 = vadd.f32 %v6553, %v6603
        %v6606 = vadd.f32 %v6554, %v6603
        %v6607 = vadd.f32 %v6555, %v6603
        %v6608 = vadd.f32 %v6556, %v6603
        %v6609 = vadd.f32 %v6557, %v6603
        %v6610 = vadd.f32 %v6558, %v6603
        %v6611 = vadd.f32 %v6559, %v6603
        %v6612 = vadd.f32 %v6560, %v6603
        %v6613 = vadd.f32 %v6561, %v6603
        %v6614 = vadd.f32 %v6562, %v6603
        %v6615 = vadd.f32 %v6563, %v6603
        %v6616 = vadd.f32 %v6564, %v6603
        %v6617 = vadd.f32 %v6565, %v6603
        %v6618 = vadd.f32 %v6566, %v6603
        %v6619 = vadd.f32 %v6567, %v6603
        %v6620 = vadd.f32 %v6568, %v6603
        %v6621 = vadd.f32 %v6569, %v6603
        %v6622 = vadd.f32 %v6570, %v6603
        %v6623 = vadd.f32 %v6571, %v6603
        %v6624 = vadd.f32 %v6572, %v6603
        %v6625 = vadd.f32 %v6573, %v6603
        %v6626 = vadd.f32 %v6574, %v6603
        %v6627 = vadd.f32 %v6575, %v6603
        %v6628 = vadd.f32 %v6576, %v6603
        %v6629 = vadd.f32 %v6577, %v6603
        %v6630 = vadd.f32 %v6578, %v6603
        %v6631 = vadd.f32 %v6579, %v6603
        %v6632 = vadd.f32 %v6580, %v6603
        %v6633 = vadd.f32 %v6581, %v6603
        %v6634 = vadd.f32 %v6582, %v6603
        %v6635 = vadd.f32 %v6583, %v6603
        %v6636 = vadd.f32 %v6584, %v6603
        %v6637 = vadd.f32 %v6585, %v6603
        %v6638 = vadd.f32 %v6586, %v6603
        %v6639 = vadd.f32 %v6587, %v6603
        %v6640 = vadd.f32 %v6588, %v6603
        %v6641 = vadd.f32 %v6589, %v6603
        %v6642 = vadd.f32 %v6590, %v6603
        %v6643 = vadd.f32 %v6591, %v6603
        %v6644 = vadd.f32 %v6592, %v6603
        %v6645 = vadd.f32 %v6593, %v6603
        %v6646 = vadd.f32 %v6594, %v6603
        %v6647 = vadd.f32 %v6595, %v6603
        %v6648 = vadd.f32 %v6596, %v6603
        %v6649 = vadd.f32 %v6597, %v6603
        %v6650 = vadd.f32 %v6598, %v6603
        %v6651 = vadd.f32 %v6599, %v6603
        %v6652 = vsel %vm3641, %v6604, 0.0
        %v6653 = vsel %vm3642, %v6605, 0.0
        %v6654 = vsel %vm3643, %v6606, 0.0
        %v6655 = vsel %vm3644, %v6607, 0.0
        %v6656 = vsel %vm3645, %v6608, 0.0
        %v6657 = vsel %vm3646, %v6609, 0.0
        %v6658 = vsel %vm3647, %v6610, 0.0
        %v6659 = vsel %vm3648, %v6611, 0.0
        %v6660 = vsel %vm3649, %v6612, 0.0
        %v6661 = vsel %vm3650, %v6613, 0.0
        %v6662 = vsel %vm3651, %v6614, 0.0
        %v6663 = vsel %vm3652, %v6615, 0.0
        %v6664 = vsel %vm3653, %v6616, 0.0
        %v6665 = vsel %vm3654, %v6617, 0.0
        %v6666 = vsel %vm3655, %v6618, 0.0
        %v6667 = vsel %vm3656, %v6619, 0.0
        %v6668 = vsel %vm3657, %v6620, 0.0
        %v6669 = vsel %vm3658, %v6621, 0.0
        %v6670 = vsel %vm3659, %v6622, 0.0
        %v6671 = vsel %vm3660, %v6623, 0.0
        %v6672 = vsel %vm3661, %v6624, 0.0
        %v6673 = vsel %vm3662, %v6625, 0.0
        %v6674 = vsel %vm3663, %v6626, 0.0
        %v6675 = vsel %vm3664, %v6627, 0.0
        %v6676 = vsel %vm3665, %v6628, 0.0
        %v6677 = vsel %vm3666, %v6629, 0.0
        %v6678 = vsel %vm3667, %v6630, 0.0
        %v6679 = vsel %vm3668, %v6631, 0.0
        %v6680 = vsel %vm3669, %v6632, 0.0
        %v6681 = vsel %vm3670, %v6633, 0.0
        %v6682 = vsel %vm3671, %v6634, 0.0
        %v6683 = vsel %vm3672, %v6635, 0.0
        %v6684 = vsel %vm3673, %v6636, 0.0
        %v6685 = vsel %vm3674, %v6637, 0.0
        %v6686 = vsel %vm3675, %v6638, 0.0
        %v6687 = vsel %vm3676, %v6639, 0.0
        %v6688 = vsel %vm3677, %v6640, 0.0
        %v6689 = vsel %vm3678, %v6641, 0.0
        %v6690 = vsel %vm3679, %v6642, 0.0
        %v6691 = vsel %vm3680, %v6643, 0.0
        %v6692 = vsel %vm3681, %v6644, 0.0
        %v6693 = vsel %vm3682, %v6645, 0.0
        %v6694 = vsel %vm3683, %v6646, 0.0
        %v6695 = vsel %vm3684, %v6647, 0.0
        %v6696 = vsel %vm3685, %v6648, 0.0
        %v6697 = vsel %vm3686, %v6649, 0.0
        %v6698 = vsel %vm3687, %v6650, 0.0
        %v6699 = vsel %vm3688, %v6651, 0.0
        %v6700 = vadd.f32 %v6652, %v6653
        %v6701 = vadd.f32 %v6700, %v6654
        %v6702 = vadd.f32 %v6701, %v6655
        %v6703 = vadd.f32 %v6702, %v6656
        %v6704 = vadd.f32 %v6703, %v6657
        %v6705 = vadd.f32 %v6704, %v6658
        %v6706 = vadd.f32 %v6705, %v6659
        %v6707 = vadd.f32 %v6706, %v6660
        %v6708 = vadd.f32 %v6707, %v6661
        %v6709 = vadd.f32 %v6708, %v6662
        %v6710 = vadd.f32 %v6709, %v6663
        %v6711 = vadd.f32 %v6710, %v6664
        %v6712 = vadd.f32 %v6711, %v6665
        %v6713 = vadd.f32 %v6712, %v6666
        %v6714 = vadd.f32 %v6713, %v6667
        %v6715 = vadd.f32 %v6714, %v6668
        %v6716 = vadd.f32 %v6715, %v6669
        %v6717 = vadd.f32 %v6716, %v6670
        %v6718 = vadd.f32 %v6717, %v6671
        %v6719 = vadd.f32 %v6718, %v6672
        %v6720 = vadd.f32 %v6719, %v6673
        %v6721 = vadd.f32 %v6720, %v6674
        %v6722 = vadd.f32 %v6721, %v6675
        %v6723 = vadd.f32 %v6722, %v6676
        %v6724 = vadd.f32 %v6723, %v6677
        %v6725 = vadd.f32 %v6724, %v6678
        %v6726 = vadd.f32 %v6725, %v6679
        %v6727 = vadd.f32 %v6726, %v6680
        %v6728 = vadd.f32 %v6727, %v6681
        %v6729 = vadd.f32 %v6728, %v6682
        %v6730 = vadd.f32 %v6729, %v6683
        %v6731 = vadd.f32 %v6730, %v6684
        %v6732 = vadd.f32 %v6731, %v6685
        %v6733 = vadd.f32 %v6732, %v6686
        %v6734 = vadd.f32 %v6733, %v6687
        %v6735 = vadd.f32 %v6734, %v6688
        %v6736 = vadd.f32 %v6735, %v6689
        %v6737 = vadd.f32 %v6736, %v6690
        %v6738 = vadd.f32 %v6737, %v6691
        %v6739 = vadd.f32 %v6738, %v6692
        %v6740 = vadd.f32 %v6739, %v6693
        %v6741 = vadd.f32 %v6740, %v6694
        %v6742 = vadd.f32 %v6741, %v6695
        %v6743 = vadd.f32 %v6742, %v6696
        %v6744 = vadd.f32 %v6743, %v6697
        %v6745 = vadd.f32 %v6744, %v6698
        %v6746 = vadd.f32 %v6745, %v6699
        %v6747 = vrot.slane %v6746, 4
        %v6748 = vadd.f32 %v6746, %v6747
        %v6749 = vrot.slane %v6748, 2
        %v6750 = vadd.f32 %v6748, %v6749
        %v6751 = vrot.slane %v6750, 1
        %v6752 = vadd.f32 %v6750, %v6751
        %v6753 = vmul.f32 %v6752, 0.00390625
        %v6754 = vmul.f32 %v6652, %v6652
        %v6755 = vmul.f32 %v6653, %v6653
        %v6756 = vmul.f32 %v6654, %v6654
        %v6757 = vmul.f32 %v6655, %v6655
        %v6758 = vmul.f32 %v6656, %v6656
        %v6759 = vmul.f32 %v6657, %v6657
        %v6760 = vmul.f32 %v6658, %v6658
        %v6761 = vmul.f32 %v6659, %v6659
        %v6762 = vmul.f32 %v6660, %v6660
        %v6763 = vmul.f32 %v6661, %v6661
        %v6764 = vmul.f32 %v6662, %v6662
        %v6765 = vmul.f32 %v6663, %v6663
        %v6766 = vmul.f32 %v6664, %v6664
        %v6767 = vmul.f32 %v6665, %v6665
        %v6768 = vmul.f32 %v6666, %v6666
        %v6769 = vmul.f32 %v6667, %v6667
        %v6770 = vmul.f32 %v6668, %v6668
        %v6771 = vmul.f32 %v6669, %v6669
        %v6772 = vmul.f32 %v6670, %v6670
        %v6773 = vmul.f32 %v6671, %v6671
        %v6774 = vmul.f32 %v6672, %v6672
        %v6775 = vmul.f32 %v6673, %v6673
        %v6776 = vmul.f32 %v6674, %v6674
        %v6777 = vmul.f32 %v6675, %v6675
        %v6778 = vmul.f32 %v6676, %v6676
        %v6779 = vmul.f32 %v6677, %v6677
        %v6780 = vmul.f32 %v6678, %v6678
        %v6781 = vmul.f32 %v6679, %v6679
        %v6782 = vmul.f32 %v6680, %v6680
        %v6783 = vmul.f32 %v6681, %v6681
        %v6784 = vmul.f32 %v6682, %v6682
        %v6785 = vmul.f32 %v6683, %v6683
        %v6786 = vmul.f32 %v6684, %v6684
        %v6787 = vmul.f32 %v6685, %v6685
        %v6788 = vmul.f32 %v6686, %v6686
        %v6789 = vmul.f32 %v6687, %v6687
        %v6790 = vmul.f32 %v6688, %v6688
        %v6791 = vmul.f32 %v6689, %v6689
        %v6792 = vmul.f32 %v6690, %v6690
        %v6793 = vmul.f32 %v6691, %v6691
        %v6794 = vmul.f32 %v6692, %v6692
        %v6795 = vmul.f32 %v6693, %v6693
        %v6796 = vmul.f32 %v6694, %v6694
        %v6797 = vmul.f32 %v6695, %v6695
        %v6798 = vmul.f32 %v6696, %v6696
        %v6799 = vmul.f32 %v6697, %v6697
        %v6800 = vmul.f32 %v6698, %v6698
        %v6801 = vmul.f32 %v6699, %v6699
        %v6802 = vadd.f32 %v6754, %v6755
        %v6803 = vadd.f32 %v6802, %v6756
        %v6804 = vadd.f32 %v6803, %v6757
        %v6805 = vadd.f32 %v6804, %v6758
        %v6806 = vadd.f32 %v6805, %v6759
        %v6807 = vadd.f32 %v6806, %v6760
        %v6808 = vadd.f32 %v6807, %v6761
        %v6809 = vadd.f32 %v6808, %v6762
        %v6810 = vadd.f32 %v6809, %v6763
        %v6811 = vadd.f32 %v6810, %v6764
        %v6812 = vadd.f32 %v6811, %v6765
        %v6813 = vadd.f32 %v6812, %v6766
        %v6814 = vadd.f32 %v6813, %v6767
        %v6815 = vadd.f32 %v6814, %v6768
        %v6816 = vadd.f32 %v6815, %v6769
        %v6817 = vadd.f32 %v6816, %v6770
        %v6818 = vadd.f32 %v6817, %v6771
        %v6819 = vadd.f32 %v6818, %v6772
        %v6820 = vadd.f32 %v6819, %v6773
        %v6821 = vadd.f32 %v6820, %v6774
        %v6822 = vadd.f32 %v6821, %v6775
        %v6823 = vadd.f32 %v6822, %v6776
        %v6824 = vadd.f32 %v6823, %v6777
        %v6825 = vadd.f32 %v6824, %v6778
        %v6826 = vadd.f32 %v6825, %v6779
        %v6827 = vadd.f32 %v6826, %v6780
        %v6828 = vadd.f32 %v6827, %v6781
        %v6829 = vadd.f32 %v6828, %v6782
        %v6830 = vadd.f32 %v6829, %v6783
        %v6831 = vadd.f32 %v6830, %v6784
        %v6832 = vadd.f32 %v6831, %v6785
        %v6833 = vadd.f32 %v6832, %v6786
        %v6834 = vadd.f32 %v6833, %v6787
        %v6835 = vadd.f32 %v6834, %v6788
        %v6836 = vadd.f32 %v6835, %v6789
        %v6837 = vadd.f32 %v6836, %v6790
        %v6838 = vadd.f32 %v6837, %v6791
        %v6839 = vadd.f32 %v6838, %v6792
        %v6840 = vadd.f32 %v6839, %v6793
        %v6841 = vadd.f32 %v6840, %v6794
        %v6842 = vadd.f32 %v6841, %v6795
        %v6843 = vadd.f32 %v6842, %v6796
        %v6844 = vadd.f32 %v6843, %v6797
        %v6845 = vadd.f32 %v6844, %v6798
        %v6846 = vadd.f32 %v6845, %v6799
        %v6847 = vadd.f32 %v6846, %v6800
        %v6848 = vadd.f32 %v6847, %v6801
        %v6849 = vrot.slane %v6848, 4
        %v6850 = vadd.f32 %v6848, %v6849
        %v6851 = vrot.slane %v6850, 2
        %v6852 = vadd.f32 %v6850, %v6851
        %v6853 = vrot.slane %v6852, 1
        %v6854 = vadd.f32 %v6852, %v6853
        %v6855 = vmul.f32 %v6854, 0.00390625
        %v6856 = vmul.f32 %v6753, %v6753
        %v6857 = vsub.f32 %v6855, %v6856
        %v6858 = vsub.f32 %v6604, %v6753
        %v6859 = vsub.f32 %v6605, %v6753
        %v6860 = vsub.f32 %v6606, %v6753
        %v6861 = vsub.f32 %v6607, %v6753
        %v6862 = vsub.f32 %v6608, %v6753
        %v6863 = vsub.f32 %v6609, %v6753
        %v6864 = vsub.f32 %v6610, %v6753
        %v6865 = vsub.f32 %v6611, %v6753
        %v6866 = vsub.f32 %v6612, %v6753
        %v6867 = vsub.f32 %v6613, %v6753
        %v6868 = vsub.f32 %v6614, %v6753
        %v6869 = vsub.f32 %v6615, %v6753
        %v6870 = vsub.f32 %v6616, %v6753
        %v6871 = vsub.f32 %v6617, %v6753
        %v6872 = vsub.f32 %v6618, %v6753
        %v6873 = vsub.f32 %v6619, %v6753
        %v6874 = vsub.f32 %v6620, %v6753
        %v6875 = vsub.f32 %v6621, %v6753
        %v6876 = vsub.f32 %v6622, %v6753
        %v6877 = vsub.f32 %v6623, %v6753
        %v6878 = vsub.f32 %v6624, %v6753
        %v6879 = vsub.f32 %v6625, %v6753
        %v6880 = vsub.f32 %v6626, %v6753
        %v6881 = vsub.f32 %v6627, %v6753
        %v6882 = vsub.f32 %v6628, %v6753
        %v6883 = vsub.f32 %v6629, %v6753
        %v6884 = vsub.f32 %v6630, %v6753
        %v6885 = vsub.f32 %v6631, %v6753
        %v6886 = vsub.f32 %v6632, %v6753
        %v6887 = vsub.f32 %v6633, %v6753
        %v6888 = vsub.f32 %v6634, %v6753
        %v6889 = vsub.f32 %v6635, %v6753
        %v6890 = vsub.f32 %v6636, %v6753
        %v6891 = vsub.f32 %v6637, %v6753
        %v6892 = vsub.f32 %v6638, %v6753
        %v6893 = vsub.f32 %v6639, %v6753
        %v6894 = vsub.f32 %v6640, %v6753
        %v6895 = vsub.f32 %v6641, %v6753
        %v6896 = vsub.f32 %v6642, %v6753
        %v6897 = vsub.f32 %v6643, %v6753
        %v6898 = vsub.f32 %v6644, %v6753
        %v6899 = vsub.f32 %v6645, %v6753
        %v6900 = vsub.f32 %v6646, %v6753
        %v6901 = vsub.f32 %v6647, %v6753
        %v6902 = vsub.f32 %v6648, %v6753
        %v6903 = vsub.f32 %v6649, %v6753
        %v6904 = vsub.f32 %v6650, %v6753
        %v6905 = vsub.f32 %v6651, %v6753
        %v6906 = vadd.f32 %v6857, 1e-05
        %v6907 = vrsqrt.pop %v6906
        %v6908 = vmul.f32 %v6858, %v6907
        %v6909 = vmul.f32 %v6859, %v6907
        %v6910 = vmul.f32 %v6860, %v6907
        %v6911 = vmul.f32 %v6861, %v6907
        %v6912 = vmul.f32 %v6862, %v6907
        %v6913 = vmul.f32 %v6863, %v6907
        %v6914 = vmul.f32 %v6864, %v6907
        %v6915 = vmul.f32 %v6865, %v6907
        %v6916 = vmul.f32 %v6866, %v6907
        %v6917 = vmul.f32 %v6867, %v6907
        %v6918 = vmul.f32 %v6868, %v6907
        %v6919 = vmul.f32 %v6869, %v6907
        %v6920 = vmul.f32 %v6870, %v6907
        %v6921 = vmul.f32 %v6871, %v6907
        %v6922 = vmul.f32 %v6872, %v6907
        %v6923 = vmul.f32 %v6873, %v6907
        %v6924 = vmul.f32 %v6874, %v6907
        %v6925 = vmul.f32 %v6875, %v6907
        %v6926 = vmul.f32 %v6876, %v6907
        %v6927 = vmul.f32 %v6877, %v6907
        %v6928 = vmul.f32 %v6878, %v6907
        %v6929 = vmul.f32 %v6879, %v6907
        %v6930 = vmul.f32 %v6880, %v6907
        %v6931 = vmul.f32 %v6881, %v6907
        %v6932 = vmul.f32 %v6882, %v6907
        %v6933 = vmul.f32 %v6883, %v6907
        %v6934 = vmul.f32 %v6884, %v6907
        %v6935 = vmul.f32 %v6885, %v6907
        %v6936 = vmul.f32 %v6886, %v6907
        %v6937 = vmul.f32 %v6887, %v6907
        %v6938 = vmul.f32 %v6888, %v6907
        %v6939 = vmul.f32 %v6889, %v6907
        %v6940 = vmul.f32 %v6890, %v6907
        %v6941 = vmul.f32 %v6891, %v6907
        %v6942 = vmul.f32 %v6892, %v6907
        %v6943 = vmul.f32 %v6893, %v6907
        %v6944 = vmul.f32 %v6894, %v6907
        %v6945 = vmul.f32 %v6895, %v6907
        %v6946 = vmul.f32 %v6896, %v6907
        %v6947 = vmul.f32 %v6897, %v6907
        %v6948 = vmul.f32 %v6898, %v6907
        %v6949 = vmul.f32 %v6899, %v6907
        %v6950 = vmul.f32 %v6900, %v6907
        %v6951 = vmul.f32 %v6901, %v6907
        %v6952 = vmul.f32 %v6902, %v6907
        %v6953 = vmul.f32 %v6903, %v6907
        %v6954 = vmul.f32 %v6904, %v6907
        %v6955 = vmul.f32 %v6905, %v6907
        %v6956 = vlaneseq
        %v6957 = vshrl.u32 %v6956, 7
        %v6958 = vsub.s32 4, %v6957
        %v6959 = vrot.slane %v1219, %v6958
        %v6960 = vmul.f32 %v6908, %v6959
        %v6961 = vmul.f32 %v6909, %v6959
        %v6962 = vmul.f32 %v6910, %v6959
        %v6963 = vmul.f32 %v6911, %v6959
        %v6964 = vmul.f32 %v6912, %v6959
        %v6965 = vmul.f32 %v6913, %v6959
        %v6966 = vmul.f32 %v6914, %v6959
        %v6967 = vmul.f32 %v6915, %v6959
        %v6968 = vmul.f32 %v6916, %v6959
        %v6969 = vmul.f32 %v6917, %v6959
        %v6970 = vmul.f32 %v6918, %v6959
        %v6971 = vmul.f32 %v6919, %v6959
        %v6972 = vmul.f32 %v6920, %v6959
        %v6973 = vmul.f32 %v6921, %v6959
        %v6974 = vmul.f32 %v6922, %v6959
        %v6975 = vmul.f32 %v6923, %v6959
        %v6976 = vmul.f32 %v6924, %v6959
        %v6977 = vmul.f32 %v6925, %v6959
        %v6978 = vmul.f32 %v6926, %v6959
        %v6979 = vmul.f32 %v6927, %v6959
        %v6980 = vmul.f32 %v6928, %v6959
        %v6981 = vmul.f32 %v6929, %v6959
        %v6982 = vmul.f32 %v6930, %v6959
        %v6983 = vmul.f32 %v6931, %v6959
        %v6984 = vmul.f32 %v6932, %v6959
        %v6985 = vmul.f32 %v6933, %v6959
        %v6986 = vmul.f32 %v6934, %v6959
        %v6987 = vmul.f32 %v6935, %v6959
        %v6988 = vmul.f32 %v6936, %v6959
        %v6989 = vmul.f32 %v6937, %v6959
        %v6990 = vmul.f32 %v6938, %v6959
        %v6991 = vmul.f32 %v6939, %v6959
        %v6992 = vmul.f32 %v6940, %v6959
        %v6993 = vmul.f32 %v6941, %v6959
        %v6994 = vmul.f32 %v6942, %v6959
        %v6995 = vmul.f32 %v6943, %v6959
        %v6996 = vmul.f32 %v6944, %v6959
        %v6997 = vmul.f32 %v6945, %v6959
        %v6998 = vmul.f32 %v6946, %v6959
        %v6999 = vmul.f32 %v6947, %v6959
        %v7000 = vmul.f32 %v6948, %v6959
        %v7001 = vmul.f32 %v6949, %v6959
        %v7002 = vmul.f32 %v6950, %v6959
        %v7003 = vmul.f32 %v6951, %v6959
        %v7004 = vmul.f32 %v6952, %v6959
        %v7005 = vmul.f32 %v6953, %v6959
        %v7006 = vmul.f32 %v6954, %v6959
        %v7007 = vmul.f32 %v6955, %v6959
        %v7008 = vlaneseq
        %v7009 = vshrl.u32 %v7008, 7
        %v7010 = vsub.s32 5, %v7009
        %v7011 = vrot.slane %v1219, %v7010
        %v7012 = vadd.f32 %v6960, %v7011
        %v7013 = vadd.f32 %v6961, %v7011
        %v7014 = vadd.f32 %v6962, %v7011
        %v7015 = vadd.f32 %v6963, %v7011
        %v7016 = vadd.f32 %v6964, %v7011
        %v7017 = vadd.f32 %v6965, %v7011
        %v7018 = vadd.f32 %v6966, %v7011
        %v7019 = vadd.f32 %v6967, %v7011
        %v7020 = vadd.f32 %v6968, %v7011
        %v7021 = vadd.f32 %v6969, %v7011
        %v7022 = vadd.f32 %v6970, %v7011
        %v7023 = vadd.f32 %v6971, %v7011
        %v7024 = vadd.f32 %v6972, %v7011
        %v7025 = vadd.f32 %v6973, %v7011
        %v7026 = vadd.f32 %v6974, %v7011
        %v7027 = vadd.f32 %v6975, %v7011
        %v7028 = vadd.f32 %v6976, %v7011
        %v7029 = vadd.f32 %v6977, %v7011
        %v7030 = vadd.f32 %v6978, %v7011
        %v7031 = vadd.f32 %v6979, %v7011
        %v7032 = vadd.f32 %v6980, %v7011
        %v7033 = vadd.f32 %v6981, %v7011
        %v7034 = vadd.f32 %v6982, %v7011
        %v7035 = vadd.f32 %v6983, %v7011
        %v7036 = vadd.f32 %v6984, %v7011
        %v7037 = vadd.f32 %v6985, %v7011
        %v7038 = vadd.f32 %v6986, %v7011
        %v7039 = vadd.f32 %v6987, %v7011
        %v7040 = vadd.f32 %v6988, %v7011
        %v7041 = vadd.f32 %v6989, %v7011
        %v7042 = vadd.f32 %v6990, %v7011
        %v7043 = vadd.f32 %v6991, %v7011
        %v7044 = vadd.f32 %v6992, %v7011
        %v7045 = vadd.f32 %v6993, %v7011
        %v7046 = vadd.f32 %v6994, %v7011
        %v7047 = vadd.f32 %v6995, %v7011
        %v7048 = vadd.f32 %v6996, %v7011
        %v7049 = vadd.f32 %v6997, %v7011
        %v7050 = vadd.f32 %v6998, %v7011
        %v7051 = vadd.f32 %v6999, %v7011
        %v7052 = vadd.f32 %v7000, %v7011
        %v7053 = vadd.f32 %v7001, %v7011
        %v7054 = vadd.f32 %v7002, %v7011
        %v7055 = vadd.f32 %v7003, %v7011
        %v7056 = vadd.f32 %v7004, %v7011
        %v7057 = vadd.f32 %v7005, %v7011
        %v7058 = vadd.f32 %v7006, %v7011
        %v7059 = vadd.f32 %v7007, %v7011
        %v7060 = vld [vmem:[%s221 + $0x20] sm:$0xff]
        %v7061 = vld [vmem:[%s221 + $0x28] sm:$0xff]
        %v7062 = vld [vmem:[%s221 + $0x30] sm:$0xff]
        %v7063 = vld [vmem:[%s221 + $0x38] sm:$0xff]
        %v7064 = vld [vmem:[%s221 + $0x40] sm:$0xff]
        %v7065 = vld [vmem:[%s221 + $0x48] sm:$0xff]
        %v7066 = vld [vmem:[%s221 + $0x50] sm:$0xff]
        %v7067 = vld [vmem:[%s221 + $0x58] sm:$0xff]
        %v7068 = vld [vmem:[%s221 + $0x60] sm:$0xff]
        %v7069 = vld [vmem:[%s221 + $0x68] sm:$0xff]
        %v7070 = vld [vmem:[%s221 + $0x70] sm:$0xff]
        %v7071 = vld [vmem:[%s221 + $0x78] sm:$0xff]
        %v7072 = vld [vmem:[%s221 + $0x80] sm:$0xff]
        %v7073 = vld [vmem:[%s221 + $0x88] sm:$0xff]
        %v7074 = vld [vmem:[%s221 + $0x90] sm:$0xff]
        %v7075 = vld [vmem:[%s221 + $0x98] sm:$0xff]
        %v7076 = vld [vmem:[%s221 + $0xa0] sm:$0xff]
        %v7077 = vld [vmem:[%s221 + $0xa8] sm:$0xff]
        %v7078 = vld [vmem:[%s221 + $0xb0] sm:$0xff]
        %v7079 = vld [vmem:[%s221 + $0xb8] sm:$0xff]
        %v7080 = vld [vmem:[%s221 + $0xc0] sm:$0xff]
        %v7081 = vld [vmem:[%s221 + $0xc8] sm:$0xff]
        %v7082 = vld [vmem:[%s221 + $0xd0] sm:$0xff]
        %v7083 = vld [vmem:[%s221 + $0xd8] sm:$0xff]
        %v7084 = vld [vmem:[%s221 + $0xe0] sm:$0xff]
        %v7085 = vld [vmem:[%s221 + $0xe8] sm:$0xff]
        %v7086 = vld [vmem:[%s221 + $0xf0] sm:$0xff]
        %v7087 = vld [vmem:[%s221 + $0xf8] sm:$0xff]
        %v7088 = vld [vmem:[%s221 + $0x100] sm:$0xff]
        %v7089 = vld [vmem:[%s221 + $0x108] sm:$0xff]
        %v7090 = vld [vmem:[%s221 + $0x110] sm:$0xff]
        %v7091 = vld [vmem:[%s221 + $0x118] sm:$0xff]
        %v7092 = vld [vmem:[%s221 + $0x120] sm:$0xff]
        %v7093 = vld [vmem:[%s221 + $0x128] sm:$0xff]
        %v7094 = vld [vmem:[%s221 + $0x130] sm:$0xff]
        %v7095 = vld [vmem:[%s221 + $0x138] sm:$0xff]
        %v7096 = vld [vmem:[%s221 + $0x140] sm:$0xff]
        %v7097 = vld [vmem:[%s221 + $0x148] sm:$0xff]
        %v7098 = vld [vmem:[%s221 + $0x150] sm:$0xff]
        %v7099 = vld [vmem:[%s221 + $0x158] sm:$0xff]
        %v7100 = vld [vmem:[%s221 + $0x160] sm:$0xff]
        %v7101 = vld [vmem:[%s221 + $0x168] sm:$0xff]
        %v7102 = vld [vmem:[%s221 + $0x170] sm:$0xff]
        %v7103 = vld [vmem:[%s221 + $0x178] sm:$0xff]
        %v7104 = vld [vmem:[%s221 + $0x180] sm:$0xff]
        %v7105 = vld [vmem:[%s221 + $0x188] sm:$0xff]
        %v7106 = vld [vmem:[%s221 + $0x190] sm:$0xff]
        %v7107 = vld [vmem:[%s221 + $0x198] sm:$0xff]
        %v7108 = vadd.f32 %v7012, %v7060
        %v7109 = vadd.f32 %v7013, %v7061
        %v7110 = vadd.f32 %v7014, %v7062
        %v7111 = vadd.f32 %v7015, %v7063
        %v7112 = vadd.f32 %v7016, %v7064
        %v7113 = vadd.f32 %v7017, %v7065
        %v7114 = vadd.f32 %v7018, %v7066
        %v7115 = vadd.f32 %v7019, %v7067
        %v7116 = vadd.f32 %v7020, %v7068
        %v7117 = vadd.f32 %v7021, %v7069
        %v7118 = vadd.f32 %v7022, %v7070
        %v7119 = vadd.f32 %v7023, %v7071
        %v7120 = vadd.f32 %v7024, %v7072
        %v7121 = vadd.f32 %v7025, %v7073
        %v7122 = vadd.f32 %v7026, %v7074
        %v7123 = vadd.f32 %v7027, %v7075
        %v7124 = vadd.f32 %v7028, %v7076
        %v7125 = vadd.f32 %v7029, %v7077
        %v7126 = vadd.f32 %v7030, %v7078
        %v7127 = vadd.f32 %v7031, %v7079
        %v7128 = vadd.f32 %v7032, %v7080
        %v7129 = vadd.f32 %v7033, %v7081
        %v7130 = vadd.f32 %v7034, %v7082
        %v7131 = vadd.f32 %v7035, %v7083
        %v7132 = vadd.f32 %v7036, %v7084
        %v7133 = vadd.f32 %v7037, %v7085
        %v7134 = vadd.f32 %v7038, %v7086
        %v7135 = vadd.f32 %v7039, %v7087
        %v7136 = vadd.f32 %v7040, %v7088
        %v7137 = vadd.f32 %v7041, %v7089
        %v7138 = vadd.f32 %v7042, %v7090
        %v7139 = vadd.f32 %v7043, %v7091
        %v7140 = vadd.f32 %v7044, %v7092
        %v7141 = vadd.f32 %v7045, %v7093
        %v7142 = vadd.f32 %v7046, %v7094
        %v7143 = vadd.f32 %v7047, %v7095
        %v7144 = vadd.f32 %v7048, %v7096
        %v7145 = vadd.f32 %v7049, %v7097
        %v7146 = vadd.f32 %v7050, %v7098
        %v7147 = vadd.f32 %v7051, %v7099
        %v7148 = vadd.f32 %v7052, %v7100
        %v7149 = vadd.f32 %v7053, %v7101
        %v7150 = vadd.f32 %v7054, %v7102
        %v7151 = vadd.f32 %v7055, %v7103
        %v7152 = vadd.f32 %v7056, %v7104
        %v7153 = vadd.f32 %v7057, %v7105
        %v7154 = vadd.f32 %v7058, %v7106
        %v7155 = vadd.f32 %v7059, %v7107
        %v7156 = vmax.f32 %v7108, 0.0
        %v7157 = vmax.f32 %v7109, 0.0
        %v7158 = vmax.f32 %v7110, 0.0
        %v7159 = vmax.f32 %v7111, 0.0
        %v7160 = vmax.f32 %v7112, 0.0
        %v7161 = vmax.f32 %v7113, 0.0
        %v7162 = vmax.f32 %v7114, 0.0
        %v7163 = vmax.f32 %v7115, 0.0
        %v7164 = vmax.f32 %v7116, 0.0
        %v7165 = vmax.f32 %v7117, 0.0
        %v7166 = vmax.f32 %v7118, 0.0
        %v7167 = vmax.f32 %v7119, 0.0
        %v7168 = vmax.f32 %v7120, 0.0
        %v7169 = vmax.f32 %v7121, 0.0
        %v7170 = vmax.f32 %v7122, 0.0
        %v7171 = vmax.f32 %v7123, 0.0
        %v7172 = vmax.f32 %v7124, 0.0
        %v7173 = vmax.f32 %v7125, 0.0
        %v7174 = vmax.f32 %v7126, 0.0
        %v7175 = vmax.f32 %v7127, 0.0
        %v7176 = vmax.f32 %v7128, 0.0
        %v7177 = vmax.f32 %v7129, 0.0
        %v7178 = vmax.f32 %v7130, 0.0
        %v7179 = vmax.f32 %v7131, 0.0
        %v7180 = vmax.f32 %v7132, 0.0
        %v7181 = vmax.f32 %v7133, 0.0
        %v7182 = vmax.f32 %v7134, 0.0
        %v7183 = vmax.f32 %v7135, 0.0
        %v7184 = vmax.f32 %v7136, 0.0
        %v7185 = vmax.f32 %v7137, 0.0
        %v7186 = vmax.f32 %v7138, 0.0
        %v7187 = vmax.f32 %v7139, 0.0
        %v7188 = vmax.f32 %v7140, 0.0
        %v7189 = vmax.f32 %v7141, 0.0
        %v7190 = vmax.f32 %v7142, 0.0
        %v7191 = vmax.f32 %v7143, 0.0
        %v7192 = vmax.f32 %v7144, 0.0
        %v7193 = vmax.f32 %v7145, 0.0
        %v7194 = vmax.f32 %v7146, 0.0
        %v7195 = vmax.f32 %v7147, 0.0
        %v7196 = vmax.f32 %v7148, 0.0
        %v7197 = vmax.f32 %v7149, 0.0
        %v7198 = vmax.f32 %v7150, 0.0
        %v7199 = vmax.f32 %v7151, 0.0
        %v7200 = vmax.f32 %v7152, 0.0
        %v7201 = vmax.f32 %v7153, 0.0
        %v7202 = vmax.f32 %v7154, 0.0
        %v7203 = vmax.f32 %v7155, 0.0
        %7204 = vst [vmem:[%s257] sm:$0xff] %v7156
        %7205 = vst [vmem:[%s257 + $0x8] sm:$0xff] %v7157
        %7206 = vst [vmem:[%s257 + $0x10] sm:$0xff] %v7158
        %7207 = vst [vmem:[%s257 + $0x18] sm:$0xff] %v7159
        %7208 = vst [vmem:[%s257 + $0x20] sm:$0xff] %v7160
        %7209 = vst [vmem:[%s257 + $0x28] sm:$0xff] %v7161
        %7210 = vst [vmem:[%s257 + $0x30] sm:$0xff] %v7162
        %7211 = vst [vmem:[%s257 + $0x38] sm:$0xff] %v7163
        %7212 = vst [vmem:[%s257 + $0x40] sm:$0xff] %v7164
        %7213 = vst [vmem:[%s257 + $0x48] sm:$0xff] %v7165
        %7214 = vst [vmem:[%s257 + $0x50] sm:$0xff] %v7166
        %7215 = vst [vmem:[%s257 + $0x58] sm:$0xff] %v7167
        %7216 = vst [vmem:[%s257 + $0x60] sm:$0xff] %v7168
        %7217 = vst [vmem:[%s257 + $0x68] sm:$0xff] %v7169
        %7218 = vst [vmem:[%s257 + $0x70] sm:$0xff] %v7170
        %7219 = vst [vmem:[%s257 + $0x78] sm:$0xff] %v7171
        %7220 = vst [vmem:[%s257 + $0x80] sm:$0xff] %v7172
        %7221 = vst [vmem:[%s257 + $0x88] sm:$0xff] %v7173
        %7222 = vst [vmem:[%s257 + $0x90] sm:$0xff] %v7174
        %7223 = vst [vmem:[%s257 + $0x98] sm:$0xff] %v7175
        %7224 = vst [vmem:[%s257 + $0xa0] sm:$0xff] %v7176
        %7225 = vst [vmem:[%s257 + $0xa8] sm:$0xff] %v7177
        %7226 = vst [vmem:[%s257 + $0xb0] sm:$0xff] %v7178
        %7227 = vst [vmem:[%s257 + $0xb8] sm:$0xff] %v7179
        %7228 = vst [vmem:[%s257 + $0xc0] sm:$0xff] %v7180
        %7229 = vst [vmem:[%s257 + $0xc8] sm:$0xff] %v7181
        %7230 = vst [vmem:[%s257 + $0xd0] sm:$0xff] %v7182
        %7231 = vst [vmem:[%s257 + $0xd8] sm:$0xff] %v7183
        %7232 = vst [vmem:[%s257 + $0xe0] sm:$0xff] %v7184
        %7233 = vst [vmem:[%s257 + $0xe8] sm:$0xff] %v7185
        %7234 = vst [vmem:[%s257 + $0xf0] sm:$0xff] %v7186
        %7235 = vst [vmem:[%s257 + $0xf8] sm:$0xff] %v7187
        %7236 = vst [vmem:[%s257 + $0x100] sm:$0xff] %v7188
        %7237 = vst [vmem:[%s257 + $0x108] sm:$0xff] %v7189
        %7238 = vst [vmem:[%s257 + $0x110] sm:$0xff] %v7190
        %7239 = vst [vmem:[%s257 + $0x118] sm:$0xff] %v7191
        %7240 = vst [vmem:[%s257 + $0x120] sm:$0xff] %v7192
        %7241 = vst [vmem:[%s257 + $0x128] sm:$0xff] %v7193
        %7242 = vst [vmem:[%s257 + $0x130] sm:$0xff] %v7194
        %7243 = vst [vmem:[%s257 + $0x138] sm:$0xff] %v7195
        %7244 = vst [vmem:[%s257 + $0x140] sm:$0xff] %v7196
        %7245 = vst [vmem:[%s257 + $0x148] sm:$0xff] %v7197
        %7246 = vst [vmem:[%s257 + $0x150] sm:$0xff] %v7198
        %7247 = vst [vmem:[%s257 + $0x158] sm:$0xff] %v7199
        %7248 = vst [vmem:[%s257 + $0x160] sm:$0xff] %v7200
        %7249 = vst [vmem:[%s257 + $0x168] sm:$0xff] %v7201
        %7250 = vst [vmem:[%s257 + $0x170] sm:$0xff] %v7202
        %7251 = vst [vmem:[%s257 + $0x178] sm:$0xff] %v7203
        %s7252 = sand.u32 %s120, 1
        %s7253 = scalar_lea.sflag [#allocation5], %s7252
        %s7254 = sand.u32 %s120, 1
        %s7255 = smul.addr %s7254, 384
        %s7256 = scalar_lea.vmem [#allocation11], %s7255
        // Predicated region
        $region53: #{tpu_custom_call.1} parent=35 // pred_check
          %p7257 = pneg %p130
        $region54: #{tpu_custom_call.1} parent=35 // pred_check_branch
          %7259 = sbr.rel (%p7257) target = $region56
        $region55: #{tpu_custom_call.1} parent=35 // pred_region
          %s7261 = ssub.s32 6144, 6144
          %7262 = vsyncadd %s7253, %s7261
          %s7263 = smul.addr %s23, 48
          %s7264 = smul.addr %s7263, 128
          %s7265 = scalar_lea.hbm %s4, %s7264
          %s7266 = sshll.u32 %s7256, 4
          %s7267 = int_to_ptr.vmem [resolvable:$true] %s7266
          %7272 = dma.vmem_to_hbm [thread:$0]  %s7267, 6144, %s7265, %s7253, 128, 128, 8
        $region56: #{tpu_custom_call.1} parent=35 // pred_fallthru
          _
      $region36: #{tpu_custom_call.1} parent=5 // pred_fallthru
        _
      %p7273 = scmp.le.s32.totalorder 2, %s18
      // Predicated region
      $region57: #{tpu_custom_call.1} parent=5 // pred_check
        %p7274 = pneg %p7273
      $region58: #{tpu_custom_call.1} parent=5 // pred_check_branch
        %7276 = sbr.rel (%p7274) target = $region60
      $region59: #{tpu_custom_call.1} parent=5 // pred_region
        %s7277 = ssub.s32 %s18, 2
        // Predicated region
        $region61: #{tpu_custom_call.1} parent=59 // pred_check
          %p7278 = pneg %p136
        $region62: #{tpu_custom_call.1} parent=59 // pred_check_branch
          %7280 = sbr.rel (%p7278) target = $region64
        $region63: #{tpu_custom_call.1} parent=59 // pred_region
          %s7281 = sand.u32 %s121, 1
          %s7282 = scalar_lea.sflag [#allocation5], %s7281
          %s7283 = sand.u32 %s121, 1
          %s7284 = smul.addr %s7283, 384
          %s7285 = scalar_lea.vmem [#allocation11], %s7284
          %7286 = dma.done %s7282, 6144
        $region64: #{tpu_custom_call.1} parent=59 // pred_fallthru
          _
      $region60: #{tpu_custom_call.1} parent=5 // pred_fallthru
        _
    $region6: #{tpu_custom_call.1} parent=1 // loop_footer
      %s22 = sadd.s32 1, %s18
    $region7: #{tpu_custom_call.1} parent=1 // loop_footer_branch
      %17 = sbr.rel target = $region3
    $region8: #{tpu_custom_call.1} parent=1 // loop_exit
      _
    %7287 = vsyncpa [#allocation4], 1
    %s7288 = scalar_lea.sflag [#allocation4], 1
    %7289 = vsyncpa %s7288, 1
    %7290 = vsyncpa [#allocation7], 1
    %7291 = vsyncpa [#allocation10], 1
    %7292 = vsyncpa [#allocation5], 1
    %s7293 = scalar_lea.sflag [#allocation5], 1
    %7294 = vsyncpa %s7293, 1

</llo_original>
